<compile_context>
chip_gen: v6e
topology: v6e:2x2x1
jax: 0.10.0
libtpu: 0.0.40
codegen_flags: <defaults>
</compile_context>

<pallas_src>
import functools

import jax
import jax.numpy as jnp
from jax.experimental import pallas as pl
from jax.experimental.pallas import tpu as pltpu

BN_EPS = 1e-5
LANE = 128
_VMEM_LIMIT = 32 * 1024 * 1024


def _round_up(x, m):
    return (x + m - 1) // m * m


def _pick_tile(dim, cap):
    for t in (512, 256, 128, 64, 32, 16, 8):
        if t <= cap and dim % t == 0:
            return t
    return dim


# ----------------------------- Pallas kernels -----------------------------

def _bgemm_kernel(p_ref, w_ref, o_ref, acc_ref, *, activation):
    """One (tm, tk) x (tk, tn) step of a batched GEMM; K is the last grid axis."""
    @pl.when(pl.program_id(3) == 0)
    def _init():
        acc_ref[...] = jnp.zeros_like(acc_ref)

    acc_ref[...] += jnp.dot(p_ref[...], w_ref[...],
                            preferred_element_type=jnp.float32)

    @pl.when(pl.program_id(3) == pl.num_programs(3) - 1)
    def _finalize():
        acc = acc_ref[...]
        if activation == "tanh":
            acc = jnp.tanh(acc)
        o_ref[...] = acc.astype(o_ref.dtype)


def batched_gemm(p, w, *, activation=None, out_dtype=jnp.float32,
                 tm_cap=256, tn_cap=256, tk_cap=512):
    """p: (B, M, K) bf16, w: (B, K, N) bf16 -> (B, M, N) out_dtype."""
    b, m, k = p.shape
    _, _, n = w.shape
    tm = _pick_tile(m, tm_cap)
    tn = _pick_tile(n, tn_cap)
    tk = _pick_tile(k, tk_cap)
    grid = (b, m // tm, n // tn, k // tk)
    kernel = functools.partial(_bgemm_kernel, activation=activation)
    return pl.pallas_call(
        kernel,
        out_shape=jax.ShapeDtypeStruct((b, m, n), out_dtype),
        grid_spec=pltpu.PrefetchScalarGridSpec(
            num_scalar_prefetch=0,
            grid=grid,
            in_specs=[
                pl.BlockSpec((pl.Squeezed(), tm, tk),
                             lambda bi, i, j, kk: (bi, i, kk)),
                pl.BlockSpec((pl.Squeezed(), tk, tn),
                             lambda bi, i, j, kk: (bi, kk, j)),
            ],
            out_specs=pl.BlockSpec((pl.Squeezed(), tm, tn),
                                   lambda bi, i, j, kk: (bi, i, j)),
            scratch_shapes=[pltpu.VMEM((tm, tn), jnp.float32)],
        ),
        compiler_params=pltpu.CompilerParams(
            dimension_semantics=("parallel", "parallel", "parallel", "arbitrary"),
            vmem_limit_bytes=_VMEM_LIMIT),
    )(p, w)


def _col_stats_kernel(y_ref, mean_ref, rstd_ref, sum_ref, ssq_ref, *,
                      inv_rows, eps):
    r = pl.program_id(1)

    @pl.when(r == 0)
    def _init():
        sum_ref[...] = jnp.zeros_like(sum_ref)
        ssq_ref[...] = jnp.zeros_like(ssq_ref)

    y = y_ref[...]
    sum_ref[...] += jnp.sum(y, axis=0, keepdims=True)
    ssq_ref[...] += jnp.sum(y * y, axis=0, keepdims=True)

    @pl.when(r == pl.num_programs(1) - 1)
    def _finalize():
        m = sum_ref[...] * inv_rows
        v = jnp.maximum(ssq_ref[...] * inv_rows - m * m, 0.0)  # biased var (PyTorch BN)
        mean_ref[...] = m
        rstd_ref[...] = jax.lax.rsqrt(v + eps)


def column_stats(y, rows_true):
    """Per-column (channel) batch mean and 1/sqrt(var+eps) of y: (R, C) f32."""
    r, c = y.shape
    tm = _pick_tile(r, 256)
    tn = _pick_tile(c, 256)
    kernel = functools.partial(_col_stats_kernel,
                               inv_rows=1.0 / float(rows_true), eps=BN_EPS)
    return pl.pallas_call(
        kernel,
        out_shape=(jax.ShapeDtypeStruct((1, c), jnp.float32),
                   jax.ShapeDtypeStruct((1, c), jnp.float32)),
        grid_spec=pltpu.PrefetchScalarGridSpec(
            num_scalar_prefetch=0,
            grid=(c // tn, r // tm),            # row-reduction axis last
            in_specs=[pl.BlockSpec((tm, tn), lambda j, i: (i, j))],
            out_specs=(pl.BlockSpec((1, tn), lambda j, i: (0, j)),
                       pl.BlockSpec((1, tn), lambda j, i: (0, j))),
            scratch_shapes=[pltpu.VMEM((1, tn), jnp.float32),
                            pltpu.VMEM((1, tn), jnp.float32)],
        ),
        compiler_params=pltpu.CompilerParams(
            dimension_semantics=("parallel", "arbitrary"),
            vmem_limit_bytes=_VMEM_LIMIT),
    )(y)


def _bn_relu_kernel(y_ref, mean_ref, rstd_ref, g_ref, b_ref, o_ref):
    y = y_ref[...]                                    # f32 epilogue (v5e-friendly)
    y_hat = (y - mean_ref[...]) * rstd_ref[...]
    o_ref[...] = jnp.maximum(y_hat * g_ref[...] + b_ref[...], 0.0).astype(o_ref.dtype)


def bn_relu_apply(y, mean, rstd, gamma, beta, out_dtype=jnp.bfloat16):
    r, c = y.shape
    tm = _pick_tile(r, 256)
    tn = _pick_tile(c, 256)
    col_spec = pl.BlockSpec((1, tn), lambda i, j: (0, j))
    return pl.pallas_call(
        _bn_relu_kernel,
        out_shape=jax.ShapeDtypeStruct((r, c), out_dtype),
        grid_spec=pltpu.PrefetchScalarGridSpec(
            num_scalar_prefetch=0,
            grid=(r // tm, c // tn),
            in_specs=[pl.BlockSpec((tm, tn), lambda i, j: (i, j)),
                      col_spec, col_spec, col_spec, col_spec],
            out_specs=pl.BlockSpec((tm, tn), lambda i, j: (i, j)),
        ),
        compiler_params=pltpu.CompilerParams(
            dimension_semantics=("parallel", "parallel"),
            vmem_limit_bytes=_VMEM_LIMIT),
    )(y, mean, rstd, gamma, beta)


# ------------------- sub-pixel (phase) decomposition glue -------------------
# ConvTranspose2d(k=4, s=2, p=1): output pixel (2y+ry, 2x+rx) only touches a
# 2x2 input window {y-1+ry+a, x-1+rx+b | a,b in {0,1}}; the kernel taps used for
# window offsets (a=0, a=1) along a dim are KTAPS[parity].
KTAPS = ((3, 1), (2, 0))


def subpixel_phase_patches(x_nhwc, k_pad):
    """x_nhwc: (N, H, W, Ci) -> (4, N*H*W, k_pad) patches; phase order (ry, rx)."""
    n, h, w, ci = x_nhwc.shape
    phases = []
    for ry in (0, 1):
        for rx in (0, 1):
            xp = jnp.pad(x_nhwc, ((0, 0), (1 - ry, ry), (1 - rx, rx), (0, 0)))
            wins = jnp.stack(
                [jnp.stack([xp[:, a:a + h, b:b + w, :] for b in (0, 1)], axis=3)
                 for a in (0, 1)],
                axis=3)                                    # (N, H, W, a, b, Ci)
            phases.append(wins.reshape(n * h * w, 4 * ci))
    patches = jnp.stack(phases, axis=0)                    # (4, N*H*W, 4*Ci)
    pad_k = k_pad - patches.shape[-1]
    if pad_k:
        patches = jnp.pad(patches, ((0, 0), (0, 0), (0, pad_k)))
    return patches


def build_phase_weights(wt, co_pad, k_pad):
    """wt: (Ci, Co, 4, 4) -> (4, k_pad, co_pad) bf16 GEMM weights, one per phase."""
    ci, co = wt.shape[:2]
    mats = []
    for ry in (0, 1):
        for rx in (0, 1):
            rows = jnp.array(KTAPS[ry])
            cols = jnp.array(KTAPS[rx])
            wsel = wt[:, :, rows, :][:, :, :, cols]        # (Ci, Co, a, b)
            m = wsel.transpose(2, 3, 0, 1).reshape(4 * ci, co)  # rows = (a, b, ci)
            m = jnp.pad(m, ((0, k_pad - 4 * ci), (0, co_pad - co)))
            mats.append(m)
    return jnp.stack(mats, axis=0).astype(jnp.bfloat16)


def build_dense_weight(wt, co_pad, k_pad):
    """Layer-0 weight (Ci, Co, 4, 4) -> (1, k_pad, 16*co_pad) bf16; cols = (kh, kw, co)."""
    ci, co, kh, kw = wt.shape
    m = wt.transpose(0, 2, 3, 1)                           # (Ci, kh, kw, Co)
    m = jnp.pad(m, ((0, 0), (0, 0), (0, 0), (0, co_pad - co)))
    m = m.reshape(ci, kh * kw * co_pad)
    m = jnp.pad(m, ((0, k_pad - ci), (0, 0)))
    return m[None].astype(jnp.bfloat16)


# ----------------------------- Generator module -----------------------------

class GeneratorPallas:
    """ConvT(4,1,0)+BN+ReLU, 3x [ConvT(4,2,1)+BN+ReLU], ConvT(4,2,1)+Tanh."""

    def __init__(self, key, nc, latent_size, ngf):
        self.nc = nc
        self.latent_size = latent_size
        self.ngf = ngf
        self.cfgs = [
            (latent_size, ngf * 8),
            (ngf * 8, ngf * 4),
            (ngf * 4, ngf * 2),
            (ngf * 2, ngf),
            (ngf, nc),
        ]
        self.raw_weights, self.raw_gammas, self.raw_betas = [], [], []
        self.wmats, self.gammas, self.betas = [], [], []
        self.co_pads, self.k_pads = [], []
        for i, (ci, co) in enumerate(self.cfgs):
            key, wk, gk, bk = jax.random.split(key, 4)
            w = 0.02 * jax.random.normal(wk, (ci, co, 4, 4), jnp.float32)
            self.raw_weights.append(w)
            co_pad = _round_up(co, LANE)
            self.co_pads.append(co_pad)
            if i == 0:
                k_pad = _round_up(ci, LANE)
                self.wmats.append(build_dense_weight(w, co_pad, k_pad))
            else:
                k_pad = _round_up(4 * ci, LANE)
                self.wmats.append(build_phase_weights(w, co_pad, k_pad))
            self.k_pads.append(k_pad)
            if i < len(self.cfgs) - 1:  # BN on all but the last conv
                g = 1.0 + 0.02 * jax.random.normal(gk, (co,), jnp.float32)
                b = 0.02 * jax.random.normal(bk, (co,), jnp.float32)
                self.raw_gammas.append(g)
                self.raw_betas.append(b)
                self.gammas.append(jnp.pad(g, (0, co_pad - co)).reshape(1, co_pad))
                self.betas.append(jnp.pad(b, (0, co_pad - co)).reshape(1, co_pad))

    def __call__(self, x):
        # x: (N, latent_size, 1, 1) float32, NCHW.
        n = x.shape[0]

        # ---- Layer 0: 1x1 spatial input -> plain dense GEMM (no im2col). ----
        ci, co = self.cfgs[0]
        co_pad = self.co_pads[0]
        xin = x.reshape(n, ci).astype(jnp.bfloat16)
        m_pad = _round_up(n, 8)
        xin = jnp.pad(xin, ((0, m_pad - n), (0, self.k_pads[0] - ci)))[None]
        y = batched_gemm(xin, self.wmats[0])[0]            # (m_pad, 16*co_pad) f32
        y = y[:n].reshape(n * 16, co_pad)                  # rows ordered (n, kh, kw)
        mean, rstd = column_stats(y, rows_true=n * 16)
        a = bn_relu_apply(y, mean, rstd, self.gammas[0], self.betas[0])
        x_nhwc = a.reshape(n, 4, 4, co_pad)[:, :, :, :co]  # NHWC bf16
        h = w = 4

        # ---- Layers 1..4: stride-2 sub-pixel decomposition (4 phase GEMMs). ----
        for i in range(1, len(self.cfgs)):
            ci, co = self.cfgs[i]
            co_pad = self.co_pads[i]
            last = i == len(self.cfgs) - 1
            patches = subpixel_phase_patches(x_nhwc, self.k_pads[i])  # (4, M, Kp)
            y = batched_gemm(patches, self.wmats[i],
                             activation="tanh" if last else None)     # (4, M, Cp)
            m = n * h * w
            if last:
                a = y.reshape(4 * m, co_pad)
            else:
                y = y.reshape(4 * m, co_pad)
                mean, rstd = column_stats(y, rows_true=4 * m)
                a = bn_relu_apply(y, mean, rstd, self.gammas[i], self.betas[i])
            # Interleave the 4 phases back to (N, 2H, 2W, C).
            a = a.reshape(2, 2, n, h, w, co_pad)[..., :co]
            x_nhwc = a.transpose(2, 3, 0, 4, 1, 5).reshape(n, 2 * h, 2 * w, co)
            h, w = 2 * h, 2 * w

        # NCHW only at the module boundary.
        return x_nhwc.astype(jnp.float32).transpose(0, 3, 1, 2)


# ----------------------------- pure-JAX reference -----------------------------

def _ref_conv_transpose(x, wt, stride, pad):
    """Reference ConvTranspose2d via zero-dilation + pad + im2col (f32, NCHW)."""
    n, ci, h, w = x.shape
    k = wt.shape[2]
    hd, wd = (h - 1) * stride + 1, (w - 1) * stride + 1
    xd = jnp.zeros((n, ci, hd, wd), x.dtype).at[:, :, ::stride, ::stride].set(x)
    pt = k - 1 - pad
    xp = jnp.pad(xd, ((0, 0), (0, 0), (pt, pt), (pt, pt)))
    ho = hd + 2 * pt - (k - 1)
    wo = wd + 2 * pt - (k - 1)
    wf = wt[:, :, ::-1, ::-1]
    cols = []
    for kh in range(k):
        for kw in range(k):
            cols.append(xp[:, :, kh:kh + ho, kw:kw + wo])
    pat = jnp.stack(cols, axis=2)                          # (N, Ci, k*k, Ho, Wo)
    pat = pat.transpose(0, 3, 4, 1, 2).reshape(n * ho * wo, ci * k * k)
    wm = wf.transpose(0, 2, 3, 1).reshape(ci * k * k, -1)
    y = pat @ wm
    return y.reshape(n, ho, wo, wt.shape[1]).transpose(0, 3, 1, 2)


def reference_forward(gen, x):
    """Pure-JAX f32 reference (training-mode BN, same parameters)."""
    hcur = x
    for i in range(len(gen.cfgs)):
        stride, pad = (1, 0) if i == 0 else (2, 1)
        y = _ref_conv_transpose(hcur, gen.raw_weights[i], stride, pad)
        if i < len(gen.cfgs) - 1:
            m = jnp.mean(y, axis=(0, 2, 3), keepdims=True)
            v = jnp.mean(jnp.square(y - m), axis=(0, 2, 3), keepdims=True)
            y_hat = (y - m) * jax.lax.rsqrt(v + BN_EPS)
            g = gen.raw_gammas[i].reshape(1, -1, 1, 1)
            b = gen.raw_betas[i].reshape(1, -1, 1, 1)
            hcur = jnp.maximum(y_hat * g + b, 0.0)
        else:
            hcur = jnp.tanh(y)
    return hcur


# ----------------------------- main -----------------------------

if __name__ == "__main__":
    key = jax.random.PRNGKey(0)
    key, pkey, xkey = jax.random.split(key, 3)

    # Small but structurally faithful config.
    batch, nc, latent_size, ngf = 2, 3, 16, 8
    gen = GeneratorPallas(pkey, nc=nc, latent_size=latent_size, ngf=ngf)

    z = jax.random.normal(xkey, (batch, latent_size, 1, 1), jnp.float32)

    forward = jax.jit(lambda v: gen(v))
    out = jax.block_until_ready(forward(z))

    expected_shape = (batch, nc, 64, 64)
    assert out.shape == expected_shape, (out.shape, expected_shape)
    assert bool(jnp.all(jnp.isfinite(out)))
    assert bool(jnp.all(jnp.abs(out) <= 1.0 + 1e-6))  # tanh range

    # Correctness vs. pure-JAX f32 reference (bf16 GEMM -> loose tolerance).
    ref = jax.block_until_ready(jax.jit(lambda v: reference_forward(gen, v))(z))
    max_err = float(jnp.max(jnp.abs(out - ref)))
    assert max_err < 0.1, max_err

    print("KERNEL_OK")
</pallas_src>

<mosaic_0001>
module attributes {stable_mosaic.version = 11 : i64} {
  func.func @_bgemm_kernel(%arg0: i32, %arg1: i32, %arg2: i32, %arg3: i32, %arg4: memref<1x8x128xbf16, #tpu.memory_space<vmem>>, %arg5: memref<1x128x256xbf16, #tpu.memory_space<vmem>>, %arg6: memref<1x8x256xf32, #tpu.memory_space<vmem>>, %arg7: memref<8x256xf32, #tpu.memory_space<vmem>>) attributes {dimension_semantics = [#tpu.dimension_semantics<parallel>, #tpu.dimension_semantics<parallel>, #tpu.dimension_semantics<parallel>, #tpu.dimension_semantics<arbitrary>], iteration_bounds = array<i64: 1, 1, 8, 1>, scalar_prefetch = 0 : i64, scratch_operands = 1 : i64, tpu.core_type = #tpu.core_type<tc>, window_params = [{transform_indices = @transform_0, window_bounds = array<i64: 1, 8, 128>}, {transform_indices = @transform_1, window_bounds = array<i64: 1, 128, 256>}, {transform_indices = @transform_2, window_bounds = array<i64: 1, 8, 256>}]} {
    %c0_i32 = arith.constant 0 : i32
    %0 = arith.cmpi eq, %arg3, %c0_i32 : i32
    %1 = arith.extui %0 : i1 to i32
    %c0_i32_0 = arith.constant 0 : i32
    %2 = arith.cmpi ne, %1, %c0_i32_0 : i32
    scf.if %2 {
      %cst_12 = arith.constant 0.000000e+00 : f32
      %14 = vector.broadcast %cst_12 : f32 to vector<8x256xf32>
      %c0_13 = arith.constant 0 : index
      %c0_14 = arith.constant 0 : index
      %15 = vector.load %arg7[%c0_13, %c0_14] : memref<8x256xf32, #tpu.memory_space<vmem>>, vector<8x256xf32>
      tpu.vector_store %arg7[%c0_13, %c0_14], %14 {strides = array<i32>} : memref<8x256xf32, #tpu.memory_space<vmem>>, vector<8x256xf32>,
    } else {
    }
    %c0 = arith.constant 0 : index
    %c0_1 = arith.constant 0 : index
    %3 = vector.load %arg7[%c0, %c0_1] : memref<8x256xf32, #tpu.memory_space<vmem>>, vector<8x256xf32>
    %c0_2 = arith.constant 0 : index
    %c0_3 = arith.constant 0 : index
    %c0_4 = arith.constant 0 : index
    %4 = vector.load %arg4[%c0_2, %c0_3, %c0_4] : memref<1x8x128xbf16, #tpu.memory_space<vmem>>, vector<1x8x128xbf16>
    %5 = vector.shape_cast %4 : vector<1x8x128xbf16> to vector<8x128xbf16>
    %c0_5 = arith.constant 0 : index
    %c0_6 = arith.constant 0 : index
    %c0_7 = arith.constant 0 : index
    %6 = vector.load %arg5[%c0_5, %c0_6, %c0_7] : memref<1x128x256xbf16, #tpu.memory_space<vmem>>, vector<1x128x256xbf16>
    %7 = vector.shape_cast %6 : vector<1x128x256xbf16> to vector<128x256xbf16>
    %cst = arith.constant dense<0.000000e+00> : vector<8x256xf32>
    %8 = tpu.matmul %5, %7, %cst {dimension_numbers = #tpu.dot_dimension_numbers<[1], [0], [0], [1], [0, 0, 1, 1], [], []>} : vector<8x128xbf16>, vector<128x256xbf16>, vector<8x256xf32> -> vector<8x256xf32>
    %9 = arith.addf %3, %8 : vector<8x256xf32>
    %c0_8 = arith.constant 0 : index
    %c0_9 = arith.constant 0 : index
    %10 = vector.load %arg7[%c0_8, %c0_9] : memref<8x256xf32, #tpu.memory_space<vmem>>, vector<8x256xf32>
    tpu.vector_store %arg7[%c0_8, %c0_9], %9 {strides = array<i32>} : memref<8x256xf32, #tpu.memory_space<vmem>>, vector<8x256xf32>,
    %c0_i32_10 = arith.constant 0 : i32
    %11 = arith.cmpi eq, %arg3, %c0_i32_10 : i32
    %12 = arith.extui %11 : i1 to i32
    %c0_i32_11 = arith.constant 0 : i32
    %13 = arith.cmpi ne, %12, %c0_i32_11 : i32
    scf.if %13 {
      %c0_12 = arith.constant 0 : index
      %c0_13 = arith.constant 0 : index
      %14 = vector.load %arg7[%c0_12, %c0_13] : memref<8x256xf32, #tpu.memory_space<vmem>>, vector<8x256xf32>
      %c0_14 = arith.constant 0 : index
      %c0_15 = arith.constant 0 : index
      %c0_16 = arith.constant 0 : index
      %15 = vector.load %arg6[%c0_14, %c0_15, %c0_16] : memref<1x8x256xf32, #tpu.memory_space<vmem>>, vector<1x8x256xf32>
      %16 = vector.shape_cast %15 : vector<1x8x256xf32> to vector<8x256xf32>
      %17 = vector.shape_cast %14 : vector<8x256xf32> to vector<1x8x256xf32>
      tpu.vector_store %arg6[%c0_14, %c0_15, %c0_16], %17 {strides = array<i32>} : memref<1x8x256xf32, #tpu.memory_space<vmem>>, vector<1x8x256xf32>,
    } else {
    }
    return
  }
  func.func @transform_0(%arg0: i32, %arg1: i32, %arg2: i32, %arg3: i32) -> (i32, i32, i32) {
    %c0_i32 = arith.constant 0 : i32
    return %arg0, %arg1, %arg3 : i32, i32, i32
  }
  func.func @transform_1(%arg0: i32, %arg1: i32, %arg2: i32, %arg3: i32) -> (i32, i32, i32) {
    %c0_i32 = arith.constant 0 : i32
    return %arg0, %arg3, %arg2 : i32, i32, i32
  }
  func.func @transform_2(%arg0: i32, %arg1: i32, %arg2: i32, %arg3: i32) -> (i32, i32, i32) {
    %c0_i32 = arith.constant 0 : i32
    return %arg0, %arg1, %arg2 : i32, i32, i32
  }
}

module attributes {stable_mosaic.version = 11 : i64} {
  func.func @_col_stats_kernel(%arg0: i32, %arg1: i32, %arg2: memref<32x128xf32, #tpu.memory_space<vmem>>, %arg3: memref<1x128xf32, #tpu.memory_space<vmem>>, %arg4: memref<1x128xf32, #tpu.memory_space<vmem>>, %arg5: memref<1x128xf32, #tpu.memory_space<vmem>>, %arg6: memref<1x128xf32, #tpu.memory_space<vmem>>) attributes {dimension_semantics = [#tpu.dimension_semantics<parallel>, #tpu.dimension_semantics<arbitrary>], iteration_bounds = array<i64: 1, 1>, scalar_prefetch = 0 : i64, scratch_operands = 2 : i64, tpu.core_type = #tpu.core_type<tc>, window_params = [{transform_indices = @transform_0, window_bounds = array<i64: 32, 128>}, {transform_indices = @transform_1, window_bounds = array<i64: 1, 128>}, {transform_indices = @transform_2, window_bounds = array<i64: 1, 128>}]} {
    %c0_i32 = arith.constant 0 : i32
    %0 = arith.cmpi eq, %arg1, %c0_i32 : i32
    %1 = arith.extui %0 : i1 to i32
    %c0_i32_0 = arith.constant 0 : i32
    %2 = arith.cmpi ne, %1, %c0_i32_0 : i32
    scf.if %2 {
      %cst_13 = arith.constant 0.000000e+00 : f32
      %18 = vector.broadcast %cst_13 : f32 to vector<1x128xf32>
      %c0_14 = arith.constant 0 : index
      %c0_15 = arith.constant 0 : index
      %19 = vector.load %arg5[%c0_14, %c0_15] : memref<1x128xf32, #tpu.memory_space<vmem>>, vector<1x128xf32>
      tpu.vector_store %arg5[%c0_14, %c0_15], %18 {strides = array<i32>} : memref<1x128xf32, #tpu.memory_space<vmem>>, vector<1x128xf32>,
      %cst_16 = arith.constant 0.000000e+00 : f32
      %20 = vector.broadcast %cst_16 : f32 to vector<1x128xf32>
      %c0_17 = arith.constant 0 : index
      %c0_18 = arith.constant 0 : index
      %21 = vector.load %arg6[%c0_17, %c0_18] : memref<1x128xf32, #tpu.memory_space<vmem>>, vector<1x128xf32>
      tpu.vector_store %arg6[%c0_17, %c0_18], %20 {strides = array<i32>} : memref<1x128xf32, #tpu.memory_space<vmem>>, vector<1x128xf32>,
    } else {
    }
    %c0 = arith.constant 0 : index
    %c0_1 = arith.constant 0 : index
    %3 = vector.load %arg2[%c0, %c0_1] : memref<32x128xf32, #tpu.memory_space<vmem>>, vector<32x128xf32>
    %c0_2 = arith.constant 0 : index
    %c0_3 = arith.constant 0 : index
    %4 = vector.load %arg5[%c0_2, %c0_3] : memref<1x128xf32, #tpu.memory_space<vmem>>, vector<1x128xf32>
    %cst = arith.constant dense<0.000000e+00> : vector<128xf32>
    %5 = vector.multi_reduction <add>, %3, %cst [0] : vector<32x128xf32> to vector<128xf32>
    %6 = vector.shape_cast %5 : vector<128xf32> to vector<1x128xf32>
    %7 = arith.addf %4, %6 : vector<1x128xf32>
    %c0_4 = arith.constant 0 : index
    %c0_5 = arith.constant 0 : index
    %8 = vector.load %arg5[%c0_4, %c0_5] : memref<1x128xf32, #tpu.memory_space<vmem>>, vector<1x128xf32>
    tpu.vector_store %arg5[%c0_4, %c0_5], %7 {strides = array<i32>} : memref<1x128xf32, #tpu.memory_space<vmem>>, vector<1x128xf32>,
    %c0_6 = arith.constant 0 : index
    %c0_7 = arith.constant 0 : index
    %9 = vector.load %arg6[%c0_6, %c0_7] : memref<1x128xf32, #tpu.memory_space<vmem>>, vector<1x128xf32>
    %10 = arith.mulf %3, %3 : vector<32x128xf32>
    %cst_8 = arith.constant dense<0.000000e+00> : vector<128xf32>
    %11 = vector.multi_reduction <add>, %10, %cst_8 [0] : vector<32x128xf32> to vector<128xf32>
    %12 = vector.shape_cast %11 : vector<128xf32> to vector<1x128xf32>
    %13 = arith.addf %9, %12 : vector<1x128xf32>
    %c0_9 = arith.constant 0 : index
    %c0_10 = arith.constant 0 : index
    %14 = vector.load %arg6[%c0_9, %c0_10] : memref<1x128xf32, #tpu.memory_space<vmem>>, vector<1x128xf32>
    tpu.vector_store %arg6[%c0_9, %c0_10], %13 {strides = array<i32>} : memref<1x128xf32, #tpu.memory_space<vmem>>, vector<1x128xf32>,
    %c0_i32_11 = arith.constant 0 : i32
    %15 = arith.cmpi eq, %arg1, %c0_i32_11 : i32
    %16 = arith.extui %15 : i1 to i32
    %c0_i32_12 = arith.constant 0 : i32
    %17 = arith.cmpi ne, %16, %c0_i32_12 : i32
    scf.if %17 {
      %c0_13 = arith.constant 0 : index
      %c0_14 = arith.constant 0 : index
      %18 = vector.load %arg5[%c0_13, %c0_14] : memref<1x128xf32, #tpu.memory_space<vmem>>, vector<1x128xf32>
      %cst_15 = arith.constant 3.125000e-02 : f32
      %19 = vector.broadcast %cst_15 : f32 to vector<1x128xf32>
      %20 = arith.mulf %18, %19 : vector<1x128xf32>
      %c0_16 = arith.constant 0 : index
      %c0_17 = arith.constant 0 : index
      %21 = vector.load %arg6[%c0_16, %c0_17] : memref<1x128xf32, #tpu.memory_space<vmem>>, vector<1x128xf32>
      %cst_18 = arith.constant 3.125000e-02 : f32
      %22 = vector.broadcast %cst_18 : f32 to vector<1x128xf32>
      %23 = arith.mulf %21, %22 : vector<1x128xf32>
      %24 = arith.mulf %20, %20 : vector<1x128xf32>
      %25 = arith.subf %23, %24 : vector<1x128xf32>
      %cst_19 = arith.constant 0.000000e+00 : f32
      %26 = vector.broadcast %cst_19 : f32 to vector<1x128xf32>
      %27 = arith.maximumf %25, %26 : vector<1x128xf32>
      %c0_20 = arith.constant 0 : index
      %c0_21 = arith.constant 0 : index
      %28 = vector.load %arg3[%c0_20, %c0_21] : memref<1x128xf32, #tpu.memory_space<vmem>>, vector<1x128xf32>
      tpu.vector_store %arg3[%c0_20, %c0_21], %20 {strides = array<i32>} : memref<1x128xf32, #tpu.memory_space<vmem>>, vector<1x128xf32>,
      %cst_22 = arith.constant 9.99999974E-6 : f32
      %29 = vector.broadcast %cst_22 : f32 to vector<1x128xf32>
      %30 = arith.addf %27, %29 : vector<1x128xf32>
      %31 = math.rsqrt %30 : vector<1x128xf32>
      %c0_23 = arith.constant 0 : index
      %c0_24 = arith.constant 0 : index
      %32 = vector.load %arg4[%c0_23, %c0_24] : memref<1x128xf32, #tpu.memory_space<vmem>>, vector<1x128xf32>
      tpu.vector_store %arg4[%c0_23, %c0_24], %31 {strides = array<i32>} : memref<1x128xf32, #tpu.memory_space<vmem>>, vector<1x128xf32>,
    } else {
    }
    return
  }
  func.func @transform_0(%arg0: i32, %arg1: i32) -> (i32, i32) {
    %c0_i32 = arith.constant 0 : i32
    return %arg1, %arg0 : i32, i32
  }
  func.func @transform_1(%arg0: i32, %arg1: i32) -> (i32, i32) {
    %c0_i32 = arith.constant 0 : i32
    %c0_i32_0 = arith.constant 0 : i32
    return %c0_i32, %arg0 : i32, i32
  }
  func.func @transform_2(%arg0: i32, %arg1: i32) -> (i32, i32) {
    %c0_i32 = arith.constant 0 : i32
    %c0_i32_0 = arith.constant 0 : i32
    return %c0_i32, %arg0 : i32, i32
  }
}

module attributes {stable_mosaic.version = 11 : i64} {
  func.func @_bn_relu_kernel(%arg0: i32, %arg1: i32, %arg2: memref<32x128xf32, #tpu.memory_space<vmem>>, %arg3: memref<1x128xf32, #tpu.memory_space<vmem>>, %arg4: memref<1x128xf32, #tpu.memory_space<vmem>>, %arg5: memref<1x128xf32, #tpu.memory_space<vmem>>, %arg6: memref<1x128xf32, #tpu.memory_space<vmem>>, %arg7: memref<32x128xbf16, #tpu.memory_space<vmem>>) attributes {dimension_semantics = [#tpu.dimension_semantics<parallel>, #tpu.dimension_semantics<parallel>], iteration_bounds = array<i64: 1, 1>, scalar_prefetch = 0 : i64, scratch_operands = 0 : i64, tpu.core_type = #tpu.core_type<tc>, window_params = [{transform_indices = @transform_0, window_bounds = array<i64: 32, 128>}, {transform_indices = @transform_1, window_bounds = array<i64: 1, 128>}, {transform_indices = @transform_2, window_bounds = array<i64: 1, 128>}, {transform_indices = @transform_3, window_bounds = array<i64: 1, 128>}, {transform_indices = @transform_4, window_bounds = array<i64: 1, 128>}, {transform_indices = @transform_5, window_bounds = array<i64: 32, 128>}]} {
    %c0 = arith.constant 0 : index
    %c0_0 = arith.constant 0 : index
    %0 = vector.load %arg2[%c0, %c0_0] : memref<32x128xf32, #tpu.memory_space<vmem>>, vector<32x128xf32>
    %c0_1 = arith.constant 0 : index
    %c0_2 = arith.constant 0 : index
    %1 = vector.load %arg3[%c0_1, %c0_2] : memref<1x128xf32, #tpu.memory_space<vmem>>, vector<1x128xf32>
    %2 = vector.broadcast %1 : vector<1x128xf32> to vector<32x128xf32>
    %3 = arith.subf %0, %2 : vector<32x128xf32>
    %c0_3 = arith.constant 0 : index
    %c0_4 = arith.constant 0 : index
    %4 = vector.load %arg4[%c0_3, %c0_4] : memref<1x128xf32, #tpu.memory_space<vmem>>, vector<1x128xf32>
    %5 = vector.broadcast %4 : vector<1x128xf32> to vector<32x128xf32>
    %6 = arith.mulf %3, %5 : vector<32x128xf32>
    %c0_5 = arith.constant 0 : index
    %c0_6 = arith.constant 0 : index
    %7 = vector.load %arg5[%c0_5, %c0_6] : memref<1x128xf32, #tpu.memory_space<vmem>>, vector<1x128xf32>
    %8 = vector.broadcast %7 : vector<1x128xf32> to vector<32x128xf32>
    %9 = arith.mulf %6, %8 : vector<32x128xf32>
    %c0_7 = arith.constant 0 : index
    %c0_8 = arith.constant 0 : index
    %10 = vector.load %arg6[%c0_7, %c0_8] : memref<1x128xf32, #tpu.memory_space<vmem>>, vector<1x128xf32>
    %11 = vector.broadcast %10 : vector<1x128xf32> to vector<32x128xf32>
    %12 = arith.addf %9, %11 : vector<32x128xf32>
    %cst = arith.constant 0.000000e+00 : f32
    %13 = vector.broadcast %cst : f32 to vector<32x128xf32>
    %14 = arith.maximumf %12, %13 : vector<32x128xf32>
    %15 = arith.truncf %14 : vector<32x128xf32> to vector<32x128xbf16>
    %c0_9 = arith.constant 0 : index
    %c0_10 = arith.constant 0 : index
    %16 = vector.load %arg7[%c0_9, %c0_10] : memref<32x128xbf16, #tpu.memory_space<vmem>>, vector<32x128xbf16>
    tpu.vector_store %arg7[%c0_9, %c0_10], %15 {strides = array<i32>} : memref<32x128xbf16, #tpu.memory_space<vmem>>, vector<32x128xbf16>,
    return
  }
  func.func @transform_0(%arg0: i32, %arg1: i32) -> (i32, i32) {
    %c0_i32 = arith.constant 0 : i32
    return %arg0, %arg1 : i32, i32
  }
  func.func @transform_1(%arg0: i32, %arg1: i32) -> (i32, i32) {
    %c0_i32 = arith.constant 0 : i32
    %c0_i32_0 = arith.constant 0 : i32
    return %c0_i32, %arg1 : i32, i32
  }
  func.func @transform_2(%arg0: i32, %arg1: i32) -> (i32, i32) {
    %c0_i32 = arith.constant 0 : i32
    %c0_i32_0 = arith.constant 0 : i32
    return %c0_i32, %arg1 : i32, i32
  }
  func.func @transform_3(%arg0: i32, %arg1: i32) -> (i32, i32) {
    %c0_i32 = arith.constant 0 : i32
    %c0_i32_0 = arith.constant 0 : i32
    return %c0_i32, %arg1 : i32, i32
  }
  func.func @transform_4(%arg0: i32, %arg1: i32) -> (i32, i32) {
    %c0_i32 = arith.constant 0 : i32
    %c0_i32_0 = arith.constant 0 : i32
    return %c0_i32, %arg1 : i32, i32
  }
  func.func @transform_5(%arg0: i32, %arg1: i32) -> (i32, i32) {
    %c0_i32 = arith.constant 0 : i32
    return %arg0, %arg1 : i32, i32
  }
}

module attributes {stable_mosaic.version = 11 : i64} {
  func.func @_bgemm_kernel(%arg0: i32, %arg1: i32, %arg2: i32, %arg3: i32, %arg4: memref<1x32x256xbf16, #tpu.memory_space<vmem>>, %arg5: memref<1x256x128xbf16, #tpu.memory_space<vmem>>, %arg6: memref<1x32x128xf32, #tpu.memory_space<vmem>>, %arg7: memref<32x128xf32, #tpu.memory_space<vmem>>) attributes {dimension_semantics = [#tpu.dimension_semantics<parallel>, #tpu.dimension_semantics<parallel>, #tpu.dimension_semantics<parallel>, #tpu.dimension_semantics<arbitrary>], iteration_bounds = array<i64: 4, 1, 1, 1>, scalar_prefetch = 0 : i64, scratch_operands = 1 : i64, tpu.core_type = #tpu.core_type<tc>, window_params = [{transform_indices = @transform_0, window_bounds = array<i64: 1, 32, 256>}, {transform_indices = @transform_1, window_bounds = array<i64: 1, 256, 128>}, {transform_indices = @transform_2, window_bounds = array<i64: 1, 32, 128>}]} {
    %c0_i32 = arith.constant 0 : i32
    %0 = arith.cmpi eq, %arg3, %c0_i32 : i32
    %1 = arith.extui %0 : i1 to i32
    %c0_i32_0 = arith.constant 0 : i32
    %2 = arith.cmpi ne, %1, %c0_i32_0 : i32
    scf.if %2 {
      %cst_12 = arith.constant 0.000000e+00 : f32
      %14 = vector.broadcast %cst_12 : f32 to vector<32x128xf32>
      %c0_13 = arith.constant 0 : index
      %c0_14 = arith.constant 0 : index
      %15 = vector.load %arg7[%c0_13, %c0_14] : memref<32x128xf32, #tpu.memory_space<vmem>>, vector<32x128xf32>
      tpu.vector_store %arg7[%c0_13, %c0_14], %14 {strides = array<i32>} : memref<32x128xf32, #tpu.memory_space<vmem>>, vector<32x128xf32>,
    } else {
    }
    %c0 = arith.constant 0 : index
    %c0_1 = arith.constant 0 : index
    %3 = vector.load %arg7[%c0, %c0_1] : memref<32x128xf32, #tpu.memory_space<vmem>>, vector<32x128xf32>
    %c0_2 = arith.constant 0 : index
    %c0_3 = arith.constant 0 : index
    %c0_4 = arith.constant 0 : index
    %4 = vector.load %arg4[%c0_2, %c0_3, %c0_4] : memref<1x32x256xbf16, #tpu.memory_space<vmem>>, vector<1x32x256xbf16>
    %5 = vector.shape_cast %4 : vector<1x32x256xbf16> to vector<32x256xbf16>
    %c0_5 = arith.constant 0 : index
    %c0_6 = arith.constant 0 : index
    %c0_7 = arith.constant 0 : index
    %6 = vector.load %arg5[%c0_5, %c0_6, %c0_7] : memref<1x256x128xbf16, #tpu.memory_space<vmem>>, vector<1x256x128xbf16>
    %7 = vector.shape_cast %6 : vector<1x256x128xbf16> to vector<256x128xbf16>
    %cst = arith.constant dense<0.000000e+00> : vector<32x128xf32>
    %8 = tpu.matmul %5, %7, %cst {dimension_numbers = #tpu.dot_dimension_numbers<[1], [0], [0], [1], [0, 0, 1, 1], [], []>} : vector<32x256xbf16>, vector<256x128xbf16>, vector<32x128xf32> -> vector<32x128xf32>
    %9 = arith.addf %3, %8 : vector<32x128xf32>
    %c0_8 = arith.constant 0 : index
    %c0_9 = arith.constant 0 : index
    %10 = vector.load %arg7[%c0_8, %c0_9] : memref<32x128xf32, #tpu.memory_space<vmem>>, vector<32x128xf32>
    tpu.vector_store %arg7[%c0_8, %c0_9], %9 {strides = array<i32>} : memref<32x128xf32, #tpu.memory_space<vmem>>, vector<32x128xf32>,
    %c0_i32_10 = arith.constant 0 : i32
    %11 = arith.cmpi eq, %arg3, %c0_i32_10 : i32
    %12 = arith.extui %11 : i1 to i32
    %c0_i32_11 = arith.constant 0 : i32
    %13 = arith.cmpi ne, %12, %c0_i32_11 : i32
    scf.if %13 {
      %c0_12 = arith.constant 0 : index
      %c0_13 = arith.constant 0 : index
      %14 = vector.load %arg7[%c0_12, %c0_13] : memref<32x128xf32, #tpu.memory_space<vmem>>, vector<32x128xf32>
      %c0_14 = arith.constant 0 : index
      %c0_15 = arith.constant 0 : index
      %c0_16 = arith.constant 0 : index
      %15 = vector.load %arg6[%c0_14, %c0_15, %c0_16] : memref<1x32x128xf32, #tpu.memory_space<vmem>>, vector<1x32x128xf32>
      %16 = vector.shape_cast %15 : vector<1x32x128xf32> to vector<32x128xf32>
      %17 = vector.shape_cast %14 : vector<32x128xf32> to vector<1x32x128xf32>
      tpu.vector_store %arg6[%c0_14, %c0_15, %c0_16], %17 {strides = array<i32>} : memref<1x32x128xf32, #tpu.memory_space<vmem>>, vector<1x32x128xf32>,
    } else {
    }
    return
  }
  func.func @transform_0(%arg0: i32, %arg1: i32, %arg2: i32, %arg3: i32) -> (i32, i32, i32) {
    %c0_i32 = arith.constant 0 : i32
    return %arg0, %arg1, %arg3 : i32, i32, i32
  }
  func.func @transform_1(%arg0: i32, %arg1: i32, %arg2: i32, %arg3: i32) -> (i32, i32, i32) {
    %c0_i32 = arith.constant 0 : i32
    return %arg0, %arg3, %arg2 : i32, i32, i32
  }
  func.func @transform_2(%arg0: i32, %arg1: i32, %arg2: i32, %arg3: i32) -> (i32, i32, i32) {
    %c0_i32 = arith.constant 0 : i32
    return %arg0, %arg1, %arg2 : i32, i32, i32
  }
}

module attributes {stable_mosaic.version = 11 : i64} {
  func.func @_bn_relu_kernel(%arg0: i32, %arg1: i32, %arg2: memref<128x128xf32, #tpu.memory_space<vmem>>, %arg3: memref<1x128xf32, #tpu.memory_space<vmem>>, %arg4: memref<1x128xf32, #tpu.memory_space<vmem>>, %arg5: memref<1x128xf32, #tpu.memory_space<vmem>>, %arg6: memref<1x128xf32, #tpu.memory_space<vmem>>, %arg7: memref<128x128xbf16, #tpu.memory_space<vmem>>) attributes {dimension_semantics = [#tpu.dimension_semantics<parallel>, #tpu.dimension_semantics<parallel>], iteration_bounds = array<i64: 1, 1>, scalar_prefetch = 0 : i64, scratch_operands = 0 : i64, tpu.core_type = #tpu.core_type<tc>, window_params = [{transform_indices = @transform_0, window_bounds = array<i64: 128, 128>}, {transform_indices = @transform_1, window_bounds = array<i64: 1, 128>}, {transform_indices = @transform_2, window_bounds = array<i64: 1, 128>}, {transform_indices = @transform_3, window_bounds = array<i64: 1, 128>}, {transform_indices = @transform_4, window_bounds = array<i64: 1, 128>}, {transform_indices = @transform_5, window_bounds = array<i64: 128, 128>}]} {
    %c0 = arith.constant 0 : index
    %c0_0 = arith.constant 0 : index
    %0 = vector.load %arg2[%c0, %c0_0] : memref<128x128xf32, #tpu.memory_space<vmem>>, vector<128x128xf32>
    %c0_1 = arith.constant 0 : index
    %c0_2 = arith.constant 0 : index
    %1 = vector.load %arg3[%c0_1, %c0_2] : memref<1x128xf32, #tpu.memory_space<vmem>>, vector<1x128xf32>
    %2 = vector.broadcast %1 : vector<1x128xf32> to vector<128x128xf32>
    %3 = arith.subf %0, %2 : vector<128x128xf32>
    %c0_3 = arith.constant 0 : index
    %c0_4 = arith.constant 0 : index
    %4 = vector.load %arg4[%c0_3, %c0_4] : memref<1x128xf32, #tpu.memory_space<vmem>>, vector<1x128xf32>
    %5 = vector.broadcast %4 : vector<1x128xf32> to vector<128x128xf32>
    %6 = arith.mulf %3, %5 : vector<128x128xf32>
    %c0_5 = arith.constant 0 : index
    %c0_6 = arith.constant 0 : index
    %7 = vector.load %arg5[%c0_5, %c0_6] : memref<1x128xf32, #tpu.memory_space<vmem>>, vector<1x128xf32>
    %8 = vector.broadcast %7 : vector<1x128xf32> to vector<128x128xf32>
    %9 = arith.mulf %6, %8 : vector<128x128xf32>
    %c0_7 = arith.constant 0 : index
    %c0_8 = arith.constant 0 : index
    %10 = vector.load %arg6[%c0_7, %c0_8] : memref<1x128xf32, #tpu.memory_space<vmem>>, vector<1x128xf32>
    %11 = vector.broadcast %10 : vector<1x128xf32> to vector<128x128xf32>
    %12 = arith.addf %9, %11 : vector<128x128xf32>
    %cst = arith.constant 0.000000e+00 : f32
    %13 = vector.broadcast %cst : f32 to vector<128x128xf32>
    %14 = arith.maximumf %12, %13 : vector<128x128xf32>
    %15 = arith.truncf %14 : vector<128x128xf32> to vector<128x128xbf16>
    %c0_9 = arith.constant 0 : index
    %c0_10 = arith.constant 0 : index
    %16 = vector.load %arg7[%c0_9, %c0_10] : memref<128x128xbf16, #tpu.memory_space<vmem>>, vector<128x128xbf16>
    tpu.vector_store %arg7[%c0_9, %c0_10], %15 {strides = array<i32>} : memref<128x128xbf16, #tpu.memory_space<vmem>>, vector<128x128xbf16>,
    return
  }
  func.func @transform_0(%arg0: i32, %arg1: i32) -> (i32, i32) {
    %c0_i32 = arith.constant 0 : i32
    return %arg0, %arg1 : i32, i32
  }
  func.func @transform_1(%arg0: i32, %arg1: i32) -> (i32, i32) {
    %c0_i32 = arith.constant 0 : i32
    %c0_i32_0 = arith.constant 0 : i32
    return %c0_i32, %arg1 : i32, i32
  }
  func.func @transform_2(%arg0: i32, %arg1: i32) -> (i32, i32) {
    %c0_i32 = arith.constant 0 : i32
    %c0_i32_0 = arith.constant 0 : i32
    return %c0_i32, %arg1 : i32, i32
  }
  func.func @transform_3(%arg0: i32, %arg1: i32) -> (i32, i32) {
    %c0_i32 = arith.constant 0 : i32
    %c0_i32_0 = arith.constant 0 : i32
    return %c0_i32, %arg1 : i32, i32
  }
  func.func @transform_4(%arg0: i32, %arg1: i32) -> (i32, i32) {
    %c0_i32 = arith.constant 0 : i32
    %c0_i32_0 = arith.constant 0 : i32
    return %c0_i32, %arg1 : i32, i32
  }
  func.func @transform_5(%arg0: i32, %arg1: i32) -> (i32, i32) {
    %c0_i32 = arith.constant 0 : i32
    return %arg0, %arg1 : i32, i32
  }
}

module attributes {stable_mosaic.version = 11 : i64} {
  func.func @_col_stats_kernel(%arg0: i32, %arg1: i32, %arg2: memref<128x128xf32, #tpu.memory_space<vmem>>, %arg3: memref<1x128xf32, #tpu.memory_space<vmem>>, %arg4: memref<1x128xf32, #tpu.memory_space<vmem>>, %arg5: memref<1x128xf32, #tpu.memory_space<vmem>>, %arg6: memref<1x128xf32, #tpu.memory_space<vmem>>) attributes {dimension_semantics = [#tpu.dimension_semantics<parallel>, #tpu.dimension_semantics<arbitrary>], iteration_bounds = array<i64: 1, 1>, scalar_prefetch = 0 : i64, scratch_operands = 2 : i64, tpu.core_type = #tpu.core_type<tc>, window_params = [{transform_indices = @transform_0, window_bounds = array<i64: 128, 128>}, {transform_indices = @transform_1, window_bounds = array<i64: 1, 128>}, {transform_indices = @transform_2, window_bounds = array<i64: 1, 128>}]} {
    %c0_i32 = arith.constant 0 : i32
    %0 = arith.cmpi eq, %arg1, %c0_i32 : i32
    %1 = arith.extui %0 : i1 to i32
    %c0_i32_0 = arith.constant 0 : i32
    %2 = arith.cmpi ne, %1, %c0_i32_0 : i32
    scf.if %2 {
      %cst_13 = arith.constant 0.000000e+00 : f32
      %18 = vector.broadcast %cst_13 : f32 to vector<1x128xf32>
      %c0_14 = arith.constant 0 : index
      %c0_15 = arith.constant 0 : index
      %19 = vector.load %arg5[%c0_14, %c0_15] : memref<1x128xf32, #tpu.memory_space<vmem>>, vector<1x128xf32>
      tpu.vector_store %arg5[%c0_14, %c0_15], %18 {strides = array<i32>} : memref<1x128xf32, #tpu.memory_space<vmem>>, vector<1x128xf32>,
      %cst_16 = arith.constant 0.000000e+00 : f32
      %20 = vector.broadcast %cst_16 : f32 to vector<1x128xf32>
      %c0_17 = arith.constant 0 : index
      %c0_18 = arith.constant 0 : index
      %21 = vector.load %arg6[%c0_17, %c0_18] : memref<1x128xf32, #tpu.memory_space<vmem>>, vector<1x128xf32>
      tpu.vector_store %arg6[%c0_17, %c0_18], %20 {strides = array<i32>} : memref<1x128xf32, #tpu.memory_space<vmem>>, vector<1x128xf32>,
    } else {
    }
    %c0 = arith.constant 0 : index
    %c0_1 = arith.constant 0 : index
    %3 = vector.load %arg2[%c0, %c0_1] : memref<128x128xf32, #tpu.memory_space<vmem>>, vector<128x128xf32>
    %c0_2 = arith.constant 0 : index
    %c0_3 = arith.constant 0 : index
    %4 = vector.load %arg5[%c0_2, %c0_3] : memref<1x128xf32, #tpu.memory_space<vmem>>, vector<1x128xf32>
    %cst = arith.constant dense<0.000000e+00> : vector<128xf32>
    %5 = vector.multi_reduction <add>, %3, %cst [0] : vector<128x128xf32> to vector<128xf32>
    %6 = vector.shape_cast %5 : vector<128xf32> to vector<1x128xf32>
    %7 = arith.addf %4, %6 : vector<1x128xf32>
    %c0_4 = arith.constant 0 : index
    %c0_5 = arith.constant 0 : index
    %8 = vector.load %arg5[%c0_4, %c0_5] : memref<1x128xf32, #tpu.memory_space<vmem>>, vector<1x128xf32>
    tpu.vector_store %arg5[%c0_4, %c0_5], %7 {strides = array<i32>} : memref<1x128xf32, #tpu.memory_space<vmem>>, vector<1x128xf32>,
    %c0_6 = arith.constant 0 : index
    %c0_7 = arith.constant 0 : index
    %9 = vector.load %arg6[%c0_6, %c0_7] : memref<1x128xf32, #tpu.memory_space<vmem>>, vector<1x128xf32>
    %10 = arith.mulf %3, %3 : vector<128x128xf32>
    %cst_8 = arith.constant dense<0.000000e+00> : vector<128xf32>
    %11 = vector.multi_reduction <add>, %10, %cst_8 [0] : vector<128x128xf32> to vector<128xf32>
    %12 = vector.shape_cast %11 : vector<128xf32> to vector<1x128xf32>
    %13 = arith.addf %9, %12 : vector<1x128xf32>
    %c0_9 = arith.constant 0 : index
    %c0_10 = arith.constant 0 : index
    %14 = vector.load %arg6[%c0_9, %c0_10] : memref<1x128xf32, #tpu.memory_space<vmem>>, vector<1x128xf32>
    tpu.vector_store %arg6[%c0_9, %c0_10], %13 {strides = array<i32>} : memref<1x128xf32, #tpu.memory_space<vmem>>, vector<1x128xf32>,
    %c0_i32_11 = arith.constant 0 : i32
    %15 = arith.cmpi eq, %arg1, %c0_i32_11 : i32
    %16 = arith.extui %15 : i1 to i32
    %c0_i32_12 = arith.constant 0 : i32
    %17 = arith.cmpi ne, %16, %c0_i32_12 : i32
    scf.if %17 {
      %c0_13 = arith.constant 0 : index
      %c0_14 = arith.constant 0 : index
      %18 = vector.load %arg5[%c0_13, %c0_14] : memref<1x128xf32, #tpu.memory_space<vmem>>, vector<1x128xf32>
      %cst_15 = arith.constant 7.812500e-03 : f32
      %19 = vector.broadcast %cst_15 : f32 to vector<1x128xf32>
      %20 = arith.mulf %18, %19 : vector<1x128xf32>
      %c0_16 = arith.constant 0 : index
      %c0_17 = arith.constant 0 : index
      %21 = vector.load %arg6[%c0_16, %c0_17] : memref<1x128xf32, #tpu.memory_space<vmem>>, vector<1x128xf32>
      %cst_18 = arith.constant 7.812500e-03 : f32
      %22 = vector.broadcast %cst_18 : f32 to vector<1x128xf32>
      %23 = arith.mulf %21, %22 : vector<1x128xf32>
      %24 = arith.mulf %20, %20 : vector<1x128xf32>
      %25 = arith.subf %23, %24 : vector<1x128xf32>
      %cst_19 = arith.constant 0.000000e+00 : f32
      %26 = vector.broadcast %cst_19 : f32 to vector<1x128xf32>
      %27 = arith.maximumf %25, %26 : vector<1x128xf32>
      %c0_20 = arith.constant 0 : index
      %c0_21 = arith.constant 0 : index
      %28 = vector.load %arg3[%c0_20, %c0_21] : memref<1x128xf32, #tpu.memory_space<vmem>>, vector<1x128xf32>
      tpu.vector_store %arg3[%c0_20, %c0_21], %20 {strides = array<i32>} : memref<1x128xf32, #tpu.memory_space<vmem>>, vector<1x128xf32>,
      %cst_22 = arith.constant 9.99999974E-6 : f32
      %29 = vector.broadcast %cst_22 : f32 to vector<1x128xf32>
      %30 = arith.addf %27, %29 : vector<1x128xf32>
      %31 = math.rsqrt %30 : vector<1x128xf32>
      %c0_23 = arith.constant 0 : index
      %c0_24 = arith.constant 0 : index
      %32 = vector.load %arg4[%c0_23, %c0_24] : memref<1x128xf32, #tpu.memory_space<vmem>>, vector<1x128xf32>
      tpu.vector_store %arg4[%c0_23, %c0_24], %31 {strides = array<i32>} : memref<1x128xf32, #tpu.memory_space<vmem>>, vector<1x128xf32>,
    } else {
    }
    return
  }
  func.func @transform_0(%arg0: i32, %arg1: i32) -> (i32, i32) {
    %c0_i32 = arith.constant 0 : i32
    return %arg1, %arg0 : i32, i32
  }
  func.func @transform_1(%arg0: i32, %arg1: i32) -> (i32, i32) {
    %c0_i32 = arith.constant 0 : i32
    %c0_i32_0 = arith.constant 0 : i32
    return %c0_i32, %arg0 : i32, i32
  }
  func.func @transform_2(%arg0: i32, %arg1: i32) -> (i32, i32) {
    %c0_i32 = arith.constant 0 : i32
    %c0_i32_0 = arith.constant 0 : i32
    return %c0_i32, %arg0 : i32, i32
  }
}

module attributes {stable_mosaic.version = 11 : i64} {
  func.func @_bgemm_kernel(%arg0: i32, %arg1: i32, %arg2: i32, %arg3: i32, %arg4: memref<1x128x128xbf16, #tpu.memory_space<vmem>>, %arg5: memref<1x128x128xbf16, #tpu.memory_space<vmem>>, %arg6: memref<1x128x128xf32, #tpu.memory_space<vmem>>, %arg7: memref<128x128xf32, #tpu.memory_space<vmem>>) attributes {dimension_semantics = [#tpu.dimension_semantics<parallel>, #tpu.dimension_semantics<parallel>, #tpu.dimension_semantics<parallel>, #tpu.dimension_semantics<arbitrary>], iteration_bounds = array<i64: 4, 1, 1, 1>, scalar_prefetch = 0 : i64, scratch_operands = 1 : i64, tpu.core_type = #tpu.core_type<tc>, window_params = [{transform_indices = @transform_0, window_bounds = array<i64: 1, 128, 128>}, {transform_indices = @transform_1, window_bounds = array<i64: 1, 128, 128>}, {transform_indices = @transform_2, window_bounds = array<i64: 1, 128, 128>}]} {
    %c0_i32 = arith.constant 0 : i32
    %0 = arith.cmpi eq, %arg3, %c0_i32 : i32
    %1 = arith.extui %0 : i1 to i32
    %c0_i32_0 = arith.constant 0 : i32
    %2 = arith.cmpi ne, %1, %c0_i32_0 : i32
    scf.if %2 {
      %cst_12 = arith.constant 0.000000e+00 : f32
      %14 = vector.broadcast %cst_12 : f32 to vector<128x128xf32>
      %c0_13 = arith.constant 0 : index
      %c0_14 = arith.constant 0 : index
      %15 = vector.load %arg7[%c0_13, %c0_14] : memref<128x128xf32, #tpu.memory_space<vmem>>, vector<128x128xf32>
      tpu.vector_store %arg7[%c0_13, %c0_14], %14 {strides = array<i32>} : memref<128x128xf32, #tpu.memory_space<vmem>>, vector<128x128xf32>,
    } else {
    }
    %c0 = arith.constant 0 : index
    %c0_1 = arith.constant 0 : index
    %3 = vector.load %arg7[%c0, %c0_1] : memref<128x128xf32, #tpu.memory_space<vmem>>, vector<128x128xf32>
    %c0_2 = arith.constant 0 : index
    %c0_3 = arith.constant 0 : index
    %c0_4 = arith.constant 0 : index
    %4 = vector.load %arg4[%c0_2, %c0_3, %c0_4] : memref<1x128x128xbf16, #tpu.memory_space<vmem>>, vector<1x128x128xbf16>
    %5 = vector.shape_cast %4 : vector<1x128x128xbf16> to vector<128x128xbf16>
    %c0_5 = arith.constant 0 : index
    %c0_6 = arith.constant 0 : index
    %c0_7 = arith.constant 0 : index
    %6 = vector.load %arg5[%c0_5, %c0_6, %c0_7] : memref<1x128x128xbf16, #tpu.memory_space<vmem>>, vector<1x128x128xbf16>
    %7 = vector.shape_cast %6 : vector<1x128x128xbf16> to vector<128x128xbf16>
    %cst = arith.constant dense<0.000000e+00> : vector<128x128xf32>
    %8 = tpu.matmul %5, %7, %cst {dimension_numbers = #tpu.dot_dimension_numbers<[1], [0], [0], [1], [0, 0, 1, 1], [], []>} : vector<128x128xbf16>, vector<128x128xbf16>, vector<128x128xf32> -> vector<128x128xf32>
    %9 = arith.addf %3, %8 : vector<128x128xf32>
    %c0_8 = arith.constant 0 : index
    %c0_9 = arith.constant 0 : index
    %10 = vector.load %arg7[%c0_8, %c0_9] : memref<128x128xf32, #tpu.memory_space<vmem>>, vector<128x128xf32>
    tpu.vector_store %arg7[%c0_8, %c0_9], %9 {strides = array<i32>} : memref<128x128xf32, #tpu.memory_space<vmem>>, vector<128x128xf32>,
    %c0_i32_10 = arith.constant 0 : i32
    %11 = arith.cmpi eq, %arg3, %c0_i32_10 : i32
    %12 = arith.extui %11 : i1 to i32
    %c0_i32_11 = arith.constant 0 : i32
    %13 = arith.cmpi ne, %12, %c0_i32_11 : i32
    scf.if %13 {
      %c0_12 = arith.constant 0 : index
      %c0_13 = arith.constant 0 : index
      %14 = vector.load %arg7[%c0_12, %c0_13] : memref<128x128xf32, #tpu.memory_space<vmem>>, vector<128x128xf32>
      %c0_14 = arith.constant 0 : index
      %c0_15 = arith.constant 0 : index
      %c0_16 = arith.constant 0 : index
      %15 = vector.load %arg6[%c0_14, %c0_15, %c0_16] : memref<1x128x128xf32, #tpu.memory_space<vmem>>, vector<1x128x128xf32>
      %16 = vector.shape_cast %15 : vector<1x128x128xf32> to vector<128x128xf32>
      %17 = vector.shape_cast %14 : vector<128x128xf32> to vector<1x128x128xf32>
      tpu.vector_store %arg6[%c0_14, %c0_15, %c0_16], %17 {strides = array<i32>} : memref<1x128x128xf32, #tpu.memory_space<vmem>>, vector<1x128x128xf32>,
    } else {
    }
    return
  }
  func.func @transform_0(%arg0: i32, %arg1: i32, %arg2: i32, %arg3: i32) -> (i32, i32, i32) {
    %c0_i32 = arith.constant 0 : i32
    return %arg0, %arg1, %arg3 : i32, i32, i32
  }
  func.func @transform_1(%arg0: i32, %arg1: i32, %arg2: i32, %arg3: i32) -> (i32, i32, i32) {
    %c0_i32 = arith.constant 0 : i32
    return %arg0, %arg3, %arg2 : i32, i32, i32
  }
  func.func @transform_2(%arg0: i32, %arg1: i32, %arg2: i32, %arg3: i32) -> (i32, i32, i32) {
    %c0_i32 = arith.constant 0 : i32
    return %arg0, %arg1, %arg2 : i32, i32, i32
  }
}

module attributes {stable_mosaic.version = 11 : i64} {
  func.func @_col_stats_kernel(%arg0: i32, %arg1: i32, %arg2: memref<256x128xf32, #tpu.memory_space<vmem>>, %arg3: memref<1x128xf32, #tpu.memory_space<vmem>>, %arg4: memref<1x128xf32, #tpu.memory_space<vmem>>, %arg5: memref<1x128xf32, #tpu.memory_space<vmem>>, %arg6: memref<1x128xf32, #tpu.memory_space<vmem>>) attributes {dimension_semantics = [#tpu.dimension_semantics<parallel>, #tpu.dimension_semantics<arbitrary>], iteration_bounds = array<i64: 1, 2>, scalar_prefetch = 0 : i64, scratch_operands = 2 : i64, tpu.core_type = #tpu.core_type<tc>, window_params = [{transform_indices = @transform_0, window_bounds = array<i64: 256, 128>}, {transform_indices = @transform_1, window_bounds = array<i64: 1, 128>}, {transform_indices = @transform_2, window_bounds = array<i64: 1, 128>}]} {
    %c0_i32 = arith.constant 0 : i32
    %0 = arith.cmpi eq, %arg1, %c0_i32 : i32
    %1 = arith.extui %0 : i1 to i32
    %c0_i32_0 = arith.constant 0 : i32
    %2 = arith.cmpi ne, %1, %c0_i32_0 : i32
    scf.if %2 {
      %cst_12 = arith.constant 0.000000e+00 : f32
      %18 = vector.broadcast %cst_12 : f32 to vector<1x128xf32>
      %c0_13 = arith.constant 0 : index
      %c0_14 = arith.constant 0 : index
      %19 = vector.load %arg5[%c0_13, %c0_14] : memref<1x128xf32, #tpu.memory_space<vmem>>, vector<1x128xf32>
      tpu.vector_store %arg5[%c0_13, %c0_14], %18 {strides = array<i32>} : memref<1x128xf32, #tpu.memory_space<vmem>>, vector<1x128xf32>,
      %cst_15 = arith.constant 0.000000e+00 : f32
      %20 = vector.broadcast %cst_15 : f32 to vector<1x128xf32>
      %c0_16 = arith.constant 0 : index
      %c0_17 = arith.constant 0 : index
      %21 = vector.load %arg6[%c0_16, %c0_17] : memref<1x128xf32, #tpu.memory_space<vmem>>, vector<1x128xf32>
      tpu.vector_store %arg6[%c0_16, %c0_17], %20 {strides = array<i32>} : memref<1x128xf32, #tpu.memory_space<vmem>>, vector<1x128xf32>,
    } else {
    }
    %c0 = arith.constant 0 : index
    %c0_1 = arith.constant 0 : index
    %3 = vector.load %arg2[%c0, %c0_1] : memref<256x128xf32, #tpu.memory_space<vmem>>, vector<256x128xf32>
    %c0_2 = arith.constant 0 : index
    %c0_3 = arith.constant 0 : index
    %4 = vector.load %arg5[%c0_2, %c0_3] : memref<1x128xf32, #tpu.memory_space<vmem>>, vector<1x128xf32>
    %cst = arith.constant dense<0.000000e+00> : vector<128xf32>
    %5 = vector.multi_reduction <add>, %3, %cst [0] : vector<256x128xf32> to vector<128xf32>
    %6 = vector.shape_cast %5 : vector<128xf32> to vector<1x128xf32>
    %7 = arith.addf %4, %6 : vector<1x128xf32>
    %c0_4 = arith.constant 0 : index
    %c0_5 = arith.constant 0 : index
    %8 = vector.load %arg5[%c0_4, %c0_5] : memref<1x128xf32, #tpu.memory_space<vmem>>, vector<1x128xf32>
    tpu.vector_store %arg5[%c0_4, %c0_5], %7 {strides = array<i32>} : memref<1x128xf32, #tpu.memory_space<vmem>>, vector<1x128xf32>,
    %c0_6 = arith.constant 0 : index
    %c0_7 = arith.constant 0 : index
    %9 = vector.load %arg6[%c0_6, %c0_7] : memref<1x128xf32, #tpu.memory_space<vmem>>, vector<1x128xf32>
    %10 = arith.mulf %3, %3 : vector<256x128xf32>
    %cst_8 = arith.constant dense<0.000000e+00> : vector<128xf32>
    %11 = vector.multi_reduction <add>, %10, %cst_8 [0] : vector<256x128xf32> to vector<128xf32>
    %12 = vector.shape_cast %11 : vector<128xf32> to vector<1x128xf32>
    %13 = arith.addf %9, %12 : vector<1x128xf32>
    %c0_9 = arith.constant 0 : index
    %c0_10 = arith.constant 0 : index
    %14 = vector.load %arg6[%c0_9, %c0_10] : memref<1x128xf32, #tpu.memory_space<vmem>>, vector<1x128xf32>
    tpu.vector_store %arg6[%c0_9, %c0_10], %13 {strides = array<i32>} : memref<1x128xf32, #tpu.memory_space<vmem>>, vector<1x128xf32>,
    %c1_i32 = arith.constant 1 : i32
    %15 = arith.cmpi eq, %arg1, %c1_i32 : i32
    %16 = arith.extui %15 : i1 to i32
    %c0_i32_11 = arith.constant 0 : i32
    %17 = arith.cmpi ne, %16, %c0_i32_11 : i32
    scf.if %17 {
      %c0_12 = arith.constant 0 : index
      %c0_13 = arith.constant 0 : index
      %18 = vector.load %arg5[%c0_12, %c0_13] : memref<1x128xf32, #tpu.memory_space<vmem>>, vector<1x128xf32>
      %cst_14 = arith.constant 0.001953125 : f32
      %19 = vector.broadcast %cst_14 : f32 to vector<1x128xf32>
      %20 = arith.mulf %18, %19 : vector<1x128xf32>
      %c0_15 = arith.constant 0 : index
      %c0_16 = arith.constant 0 : index
      %21 = vector.load %arg6[%c0_15, %c0_16] : memref<1x128xf32, #tpu.memory_space<vmem>>, vector<1x128xf32>
      %cst_17 = arith.constant 0.001953125 : f32
      %22 = vector.broadcast %cst_17 : f32 to vector<1x128xf32>
      %23 = arith.mulf %21, %22 : vector<1x128xf32>
      %24 = arith.mulf %20, %20 : vector<1x128xf32>
      %25 = arith.subf %23, %24 : vector<1x128xf32>
      %cst_18 = arith.constant 0.000000e+00 : f32
      %26 = vector.broadcast %cst_18 : f32 to vector<1x128xf32>
      %27 = arith.maximumf %25, %26 : vector<1x128xf32>
      %c0_19 = arith.constant 0 : index
      %c0_20 = arith.constant 0 : index
      %28 = vector.load %arg3[%c0_19, %c0_20] : memref<1x128xf32, #tpu.memory_space<vmem>>, vector<1x128xf32>
      tpu.vector_store %arg3[%c0_19, %c0_20], %20 {strides = array<i32>} : memref<1x128xf32, #tpu.memory_space<vmem>>, vector<1x128xf32>,
      %cst_21 = arith.constant 9.99999974E-6 : f32
      %29 = vector.broadcast %cst_21 : f32 to vector<1x128xf32>
      %30 = arith.addf %27, %29 : vector<1x128xf32>
      %31 = math.rsqrt %30 : vector<1x128xf32>
      %c0_22 = arith.constant 0 : index
      %c0_23 = arith.constant 0 : index
      %32 = vector.load %arg4[%c0_22, %c0_23] : memref<1x128xf32, #tpu.memory_space<vmem>>, vector<1x128xf32>
      tpu.vector_store %arg4[%c0_22, %c0_23], %31 {strides = array<i32>} : memref<1x128xf32, #tpu.memory_space<vmem>>, vector<1x128xf32>,
    } else {
    }
    return
  }
  func.func @transform_0(%arg0: i32, %arg1: i32) -> (i32, i32) {
    %c0_i32 = arith.constant 0 : i32
    return %arg1, %arg0 : i32, i32
  }
  func.func @transform_1(%arg0: i32, %arg1: i32) -> (i32, i32) {
    %c0_i32 = arith.constant 0 : i32
    %c0_i32_0 = arith.constant 0 : i32
    return %c0_i32, %arg0 : i32, i32
  }
  func.func @transform_2(%arg0: i32, %arg1: i32) -> (i32, i32) {
    %c0_i32 = arith.constant 0 : i32
    %c0_i32_0 = arith.constant 0 : i32
    return %c0_i32, %arg0 : i32, i32
  }
}

module attributes {stable_mosaic.version = 11 : i64} {
  func.func @_bn_relu_kernel(%arg0: i32, %arg1: i32, %arg2: memref<256x128xf32, #tpu.memory_space<vmem>>, %arg3: memref<1x128xf32, #tpu.memory_space<vmem>>, %arg4: memref<1x128xf32, #tpu.memory_space<vmem>>, %arg5: memref<1x128xf32, #tpu.memory_space<vmem>>, %arg6: memref<1x128xf32, #tpu.memory_space<vmem>>, %arg7: memref<256x128xbf16, #tpu.memory_space<vmem>>) attributes {dimension_semantics = [#tpu.dimension_semantics<parallel>, #tpu.dimension_semantics<parallel>], iteration_bounds = array<i64: 2, 1>, scalar_prefetch = 0 : i64, scratch_operands = 0 : i64, tpu.core_type = #tpu.core_type<tc>, window_params = [{transform_indices = @transform_0, window_bounds = array<i64: 256, 128>}, {transform_indices = @transform_1, window_bounds = array<i64: 1, 128>}, {transform_indices = @transform_2, window_bounds = array<i64: 1, 128>}, {transform_indices = @transform_3, window_bounds = array<i64: 1, 128>}, {transform_indices = @transform_4, window_bounds = array<i64: 1, 128>}, {transform_indices = @transform_5, window_bounds = array<i64: 256, 128>}]} {
    %c0 = arith.constant 0 : index
    %c0_0 = arith.constant 0 : index
    %0 = vector.load %arg2[%c0, %c0_0] : memref<256x128xf32, #tpu.memory_space<vmem>>, vector<256x128xf32>
    %c0_1 = arith.constant 0 : index
    %c0_2 = arith.constant 0 : index
    %1 = vector.load %arg3[%c0_1, %c0_2] : memref<1x128xf32, #tpu.memory_space<vmem>>, vector<1x128xf32>
    %2 = vector.broadcast %1 : vector<1x128xf32> to vector<256x128xf32>
    %3 = arith.subf %0, %2 : vector<256x128xf32>
    %c0_3 = arith.constant 0 : index
    %c0_4 = arith.constant 0 : index
    %4 = vector.load %arg4[%c0_3, %c0_4] : memref<1x128xf32, #tpu.memory_space<vmem>>, vector<1x128xf32>
    %5 = vector.broadcast %4 : vector<1x128xf32> to vector<256x128xf32>
    %6 = arith.mulf %3, %5 : vector<256x128xf32>
    %c0_5 = arith.constant 0 : index
    %c0_6 = arith.constant 0 : index
    %7 = vector.load %arg5[%c0_5, %c0_6] : memref<1x128xf32, #tpu.memory_space<vmem>>, vector<1x128xf32>
    %8 = vector.broadcast %7 : vector<1x128xf32> to vector<256x128xf32>
    %9 = arith.mulf %6, %8 : vector<256x128xf32>
    %c0_7 = arith.constant 0 : index
    %c0_8 = arith.constant 0 : index
    %10 = vector.load %arg6[%c0_7, %c0_8] : memref<1x128xf32, #tpu.memory_space<vmem>>, vector<1x128xf32>
    %11 = vector.broadcast %10 : vector<1x128xf32> to vector<256x128xf32>
    %12 = arith.addf %9, %11 : vector<256x128xf32>
    %cst = arith.constant 0.000000e+00 : f32
    %13 = vector.broadcast %cst : f32 to vector<256x128xf32>
    %14 = arith.maximumf %12, %13 : vector<256x128xf32>
    %15 = arith.truncf %14 : vector<256x128xf32> to vector<256x128xbf16>
    %c0_9 = arith.constant 0 : index
    %c0_10 = arith.constant 0 : index
    %16 = vector.load %arg7[%c0_9, %c0_10] : memref<256x128xbf16, #tpu.memory_space<vmem>>, vector<256x128xbf16>
    tpu.vector_store %arg7[%c0_9, %c0_10], %15 {strides = array<i32>} : memref<256x128xbf16, #tpu.memory_space<vmem>>, vector<256x128xbf16>,
    return
  }
  func.func @transform_0(%arg0: i32, %arg1: i32) -> (i32, i32) {
    %c0_i32 = arith.constant 0 : i32
    return %arg0, %arg1 : i32, i32
  }
  func.func @transform_1(%arg0: i32, %arg1: i32) -> (i32, i32) {
    %c0_i32 = arith.constant 0 : i32
    %c0_i32_0 = arith.constant 0 : i32
    return %c0_i32, %arg1 : i32, i32
  }
  func.func @transform_2(%arg0: i32, %arg1: i32) -> (i32, i32) {
    %c0_i32 = arith.constant 0 : i32
    %c0_i32_0 = arith.constant 0 : i32
    return %c0_i32, %arg1 : i32, i32
  }
  func.func @transform_3(%arg0: i32, %arg1: i32) -> (i32, i32) {
    %c0_i32 = arith.constant 0 : i32
    %c0_i32_0 = arith.constant 0 : i32
    return %c0_i32, %arg1 : i32, i32
  }
  func.func @transform_4(%arg0: i32, %arg1: i32) -> (i32, i32) {
    %c0_i32 = arith.constant 0 : i32
    %c0_i32_0 = arith.constant 0 : i32
    return %c0_i32, %arg1 : i32, i32
  }
  func.func @transform_5(%arg0: i32, %arg1: i32) -> (i32, i32) {
    %c0_i32 = arith.constant 0 : i32
    return %arg0, %arg1 : i32, i32
  }
}

module attributes {stable_mosaic.version = 11 : i64} {
  func.func @_bgemm_kernel(%arg0: i32, %arg1: i32, %arg2: i32, %arg3: i32, %arg4: memref<1x256x128xbf16, #tpu.memory_space<vmem>>, %arg5: memref<1x128x128xbf16, #tpu.memory_space<vmem>>, %arg6: memref<1x256x128xf32, #tpu.memory_space<vmem>>, %arg7: memref<256x128xf32, #tpu.memory_space<vmem>>) attributes {dimension_semantics = [#tpu.dimension_semantics<parallel>, #tpu.dimension_semantics<parallel>, #tpu.dimension_semantics<parallel>, #tpu.dimension_semantics<arbitrary>], iteration_bounds = array<i64: 4, 2, 1, 1>, scalar_prefetch = 0 : i64, scratch_operands = 1 : i64, tpu.core_type = #tpu.core_type<tc>, window_params = [{transform_indices = @transform_0, window_bounds = array<i64: 1, 256, 128>}, {transform_indices = @transform_1, window_bounds = array<i64: 1, 128, 128>}, {transform_indices = @transform_2, window_bounds = array<i64: 1, 256, 128>}]} {
    %c0_i32 = arith.constant 0 : i32
    %0 = arith.cmpi eq, %arg3, %c0_i32 : i32
    %1 = arith.extui %0 : i1 to i32
    %c0_i32_0 = arith.constant 0 : i32
    %2 = arith.cmpi ne, %1, %c0_i32_0 : i32
    scf.if %2 {
      %cst_12 = arith.constant 0.000000e+00 : f32
      %14 = vector.broadcast %cst_12 : f32 to vector<256x128xf32>
      %c0_13 = arith.constant 0 : index
      %c0_14 = arith.constant 0 : index
      %15 = vector.load %arg7[%c0_13, %c0_14] : memref<256x128xf32, #tpu.memory_space<vmem>>, vector<256x128xf32>
      tpu.vector_store %arg7[%c0_13, %c0_14], %14 {strides = array<i32>} : memref<256x128xf32, #tpu.memory_space<vmem>>, vector<256x128xf32>,
    } else {
    }
    %c0 = arith.constant 0 : index
    %c0_1 = arith.constant 0 : index
    %3 = vector.load %arg7[%c0, %c0_1] : memref<256x128xf32, #tpu.memory_space<vmem>>, vector<256x128xf32>
    %c0_2 = arith.constant 0 : index
    %c0_3 = arith.constant 0 : index
    %c0_4 = arith.constant 0 : index
    %4 = vector.load %arg4[%c0_2, %c0_3, %c0_4] : memref<1x256x128xbf16, #tpu.memory_space<vmem>>, vector<1x256x128xbf16>
    %5 = vector.shape_cast %4 : vector<1x256x128xbf16> to vector<256x128xbf16>
    %c0_5 = arith.constant 0 : index
    %c0_6 = arith.constant 0 : index
    %c0_7 = arith.constant 0 : index
    %6 = vector.load %arg5[%c0_5, %c0_6, %c0_7] : memref<1x128x128xbf16, #tpu.memory_space<vmem>>, vector<1x128x128xbf16>
    %7 = vector.shape_cast %6 : vector<1x128x128xbf16> to vector<128x128xbf16>
    %cst = arith.constant dense<0.000000e+00> : vector<256x128xf32>
    %8 = tpu.matmul %5, %7, %cst {dimension_numbers = #tpu.dot_dimension_numbers<[1], [0], [0], [1], [0, 0, 1, 1], [], []>} : vector<256x128xbf16>, vector<128x128xbf16>, vector<256x128xf32> -> vector<256x128xf32>
    %9 = arith.addf %3, %8 : vector<256x128xf32>
    %c0_8 = arith.constant 0 : index
    %c0_9 = arith.constant 0 : index
    %10 = vector.load %arg7[%c0_8, %c0_9] : memref<256x128xf32, #tpu.memory_space<vmem>>, vector<256x128xf32>
    tpu.vector_store %arg7[%c0_8, %c0_9], %9 {strides = array<i32>} : memref<256x128xf32, #tpu.memory_space<vmem>>, vector<256x128xf32>,
    %c0_i32_10 = arith.constant 0 : i32
    %11 = arith.cmpi eq, %arg3, %c0_i32_10 : i32
    %12 = arith.extui %11 : i1 to i32
    %c0_i32_11 = arith.constant 0 : i32
    %13 = arith.cmpi ne, %12, %c0_i32_11 : i32
    scf.if %13 {
      %c0_12 = arith.constant 0 : index
      %c0_13 = arith.constant 0 : index
      %14 = vector.load %arg7[%c0_12, %c0_13] : memref<256x128xf32, #tpu.memory_space<vmem>>, vector<256x128xf32>
      %c0_14 = arith.constant 0 : index
      %c0_15 = arith.constant 0 : index
      %c0_16 = arith.constant 0 : index
      %15 = vector.load %arg6[%c0_14, %c0_15, %c0_16] : memref<1x256x128xf32, #tpu.memory_space<vmem>>, vector<1x256x128xf32>
      %16 = vector.shape_cast %15 : vector<1x256x128xf32> to vector<256x128xf32>
      %17 = vector.shape_cast %14 : vector<256x128xf32> to vector<1x256x128xf32>
      tpu.vector_store %arg6[%c0_14, %c0_15, %c0_16], %17 {strides = array<i32>} : memref<1x256x128xf32, #tpu.memory_space<vmem>>, vector<1x256x128xf32>,
    } else {
    }
    return
  }
  func.func @transform_0(%arg0: i32, %arg1: i32, %arg2: i32, %arg3: i32) -> (i32, i32, i32) {
    %c0_i32 = arith.constant 0 : i32
    return %arg0, %arg1, %arg3 : i32, i32, i32
  }
  func.func @transform_1(%arg0: i32, %arg1: i32, %arg2: i32, %arg3: i32) -> (i32, i32, i32) {
    %c0_i32 = arith.constant 0 : i32
    return %arg0, %arg3, %arg2 : i32, i32, i32
  }
  func.func @transform_2(%arg0: i32, %arg1: i32, %arg2: i32, %arg3: i32) -> (i32, i32, i32) {
    %c0_i32 = arith.constant 0 : i32
    return %arg0, %arg1, %arg2 : i32, i32, i32
  }
}

module attributes {stable_mosaic.version = 11 : i64} {
  func.func @_col_stats_kernel(%arg0: i32, %arg1: i32, %arg2: memref<256x128xf32, #tpu.memory_space<vmem>>, %arg3: memref<1x128xf32, #tpu.memory_space<vmem>>, %arg4: memref<1x128xf32, #tpu.memory_space<vmem>>, %arg5: memref<1x128xf32, #tpu.memory_space<vmem>>, %arg6: memref<1x128xf32, #tpu.memory_space<vmem>>) attributes {dimension_semantics = [#tpu.dimension_semantics<parallel>, #tpu.dimension_semantics<arbitrary>], iteration_bounds = array<i64: 1, 8>, scalar_prefetch = 0 : i64, scratch_operands = 2 : i64, tpu.core_type = #tpu.core_type<tc>, window_params = [{transform_indices = @transform_0, window_bounds = array<i64: 256, 128>}, {transform_indices = @transform_1, window_bounds = array<i64: 1, 128>}, {transform_indices = @transform_2, window_bounds = array<i64: 1, 128>}]} {
    %c0_i32 = arith.constant 0 : i32
    %0 = arith.cmpi eq, %arg1, %c0_i32 : i32
    %1 = arith.extui %0 : i1 to i32
    %c0_i32_0 = arith.constant 0 : i32
    %2 = arith.cmpi ne, %1, %c0_i32_0 : i32
    scf.if %2 {
      %cst_12 = arith.constant 0.000000e+00 : f32
      %18 = vector.broadcast %cst_12 : f32 to vector<1x128xf32>
      %c0_13 = arith.constant 0 : index
      %c0_14 = arith.constant 0 : index
      %19 = vector.load %arg5[%c0_13, %c0_14] : memref<1x128xf32, #tpu.memory_space<vmem>>, vector<1x128xf32>
      tpu.vector_store %arg5[%c0_13, %c0_14], %18 {strides = array<i32>} : memref<1x128xf32, #tpu.memory_space<vmem>>, vector<1x128xf32>,
      %cst_15 = arith.constant 0.000000e+00 : f32
      %20 = vector.broadcast %cst_15 : f32 to vector<1x128xf32>
      %c0_16 = arith.constant 0 : index
      %c0_17 = arith.constant 0 : index
      %21 = vector.load %arg6[%c0_16, %c0_17] : memref<1x128xf32, #tpu.memory_space<vmem>>, vector<1x128xf32>
      tpu.vector_store %arg6[%c0_16, %c0_17], %20 {strides = array<i32>} : memref<1x128xf32, #tpu.memory_space<vmem>>, vector<1x128xf32>,
    } else {
    }
    %c0 = arith.constant 0 : index
    %c0_1 = arith.constant 0 : index
    %3 = vector.load %arg2[%c0, %c0_1] : memref<256x128xf32, #tpu.memory_space<vmem>>, vector<256x128xf32>
    %c0_2 = arith.constant 0 : index
    %c0_3 = arith.constant 0 : index
    %4 = vector.load %arg5[%c0_2, %c0_3] : memref<1x128xf32, #tpu.memory_space<vmem>>, vector<1x128xf32>
    %cst = arith.constant dense<0.000000e+00> : vector<128xf32>
    %5 = vector.multi_reduction <add>, %3, %cst [0] : vector<256x128xf32> to vector<128xf32>
    %6 = vector.shape_cast %5 : vector<128xf32> to vector<1x128xf32>
    %7 = arith.addf %4, %6 : vector<1x128xf32>
    %c0_4 = arith.constant 0 : index
    %c0_5 = arith.constant 0 : index
    %8 = vector.load %arg5[%c0_4, %c0_5] : memref<1x128xf32, #tpu.memory_space<vmem>>, vector<1x128xf32>
    tpu.vector_store %arg5[%c0_4, %c0_5], %7 {strides = array<i32>} : memref<1x128xf32, #tpu.memory_space<vmem>>, vector<1x128xf32>,
    %c0_6 = arith.constant 0 : index
    %c0_7 = arith.constant 0 : index
    %9 = vector.load %arg6[%c0_6, %c0_7] : memref<1x128xf32, #tpu.memory_space<vmem>>, vector<1x128xf32>
    %10 = arith.mulf %3, %3 : vector<256x128xf32>
    %cst_8 = arith.constant dense<0.000000e+00> : vector<128xf32>
    %11 = vector.multi_reduction <add>, %10, %cst_8 [0] : vector<256x128xf32> to vector<128xf32>
    %12 = vector.shape_cast %11 : vector<128xf32> to vector<1x128xf32>
    %13 = arith.addf %9, %12 : vector<1x128xf32>
    %c0_9 = arith.constant 0 : index
    %c0_10 = arith.constant 0 : index
    %14 = vector.load %arg6[%c0_9, %c0_10] : memref<1x128xf32, #tpu.memory_space<vmem>>, vector<1x128xf32>
    tpu.vector_store %arg6[%c0_9, %c0_10], %13 {strides = array<i32>} : memref<1x128xf32, #tpu.memory_space<vmem>>, vector<1x128xf32>,
    %c7_i32 = arith.constant 7 : i32
    %15 = arith.cmpi eq, %arg1, %c7_i32 : i32
    %16 = arith.extui %15 : i1 to i32
    %c0_i32_11 = arith.constant 0 : i32
    %17 = arith.cmpi ne, %16, %c0_i32_11 : i32
    scf.if %17 {
      %c0_12 = arith.constant 0 : index
      %c0_13 = arith.constant 0 : index
      %18 = vector.load %arg5[%c0_12, %c0_13] : memref<1x128xf32, #tpu.memory_space<vmem>>, vector<1x128xf32>
      %cst_14 = arith.constant 4.8828125E-4 : f32
      %19 = vector.broadcast %cst_14 : f32 to vector<1x128xf32>
      %20 = arith.mulf %18, %19 : vector<1x128xf32>
      %c0_15 = arith.constant 0 : index
      %c0_16 = arith.constant 0 : index
      %21 = vector.load %arg6[%c0_15, %c0_16] : memref<1x128xf32, #tpu.memory_space<vmem>>, vector<1x128xf32>
      %cst_17 = arith.constant 4.8828125E-4 : f32
      %22 = vector.broadcast %cst_17 : f32 to vector<1x128xf32>
      %23 = arith.mulf %21, %22 : vector<1x128xf32>
      %24 = arith.mulf %20, %20 : vector<1x128xf32>
      %25 = arith.subf %23, %24 : vector<1x128xf32>
      %cst_18 = arith.constant 0.000000e+00 : f32
      %26 = vector.broadcast %cst_18 : f32 to vector<1x128xf32>
      %27 = arith.maximumf %25, %26 : vector<1x128xf32>
      %c0_19 = arith.constant 0 : index
      %c0_20 = arith.constant 0 : index
      %28 = vector.load %arg3[%c0_19, %c0_20] : memref<1x128xf32, #tpu.memory_space<vmem>>, vector<1x128xf32>
      tpu.vector_store %arg3[%c0_19, %c0_20], %20 {strides = array<i32>} : memref<1x128xf32, #tpu.memory_space<vmem>>, vector<1x128xf32>,
      %cst_21 = arith.constant 9.99999974E-6 : f32
      %29 = vector.broadcast %cst_21 : f32 to vector<1x128xf32>
      %30 = arith.addf %27, %29 : vector<1x128xf32>
      %31 = math.rsqrt %30 : vector<1x128xf32>
      %c0_22 = arith.constant 0 : index
      %c0_23 = arith.constant 0 : index
      %32 = vector.load %arg4[%c0_22, %c0_23] : memref<1x128xf32, #tpu.memory_space<vmem>>, vector<1x128xf32>
      tpu.vector_store %arg4[%c0_22, %c0_23], %31 {strides = array<i32>} : memref<1x128xf32, #tpu.memory_space<vmem>>, vector<1x128xf32>,
    } else {
    }
    return
  }
  func.func @transform_0(%arg0: i32, %arg1: i32) -> (i32, i32) {
    %c0_i32 = arith.constant 0 : i32
    return %arg1, %arg0 : i32, i32
  }
  func.func @transform_1(%arg0: i32, %arg1: i32) -> (i32, i32) {
    %c0_i32 = arith.constant 0 : i32
    %c0_i32_0 = arith.constant 0 : i32
    return %c0_i32, %arg0 : i32, i32
  }
  func.func @transform_2(%arg0: i32, %arg1: i32) -> (i32, i32) {
    %c0_i32 = arith.constant 0 : i32
    %c0_i32_0 = arith.constant 0 : i32
    return %c0_i32, %arg0 : i32, i32
  }
}

module attributes {stable_mosaic.version = 11 : i64} {
  func.func @_bn_relu_kernel(%arg0: i32, %arg1: i32, %arg2: memref<256x128xf32, #tpu.memory_space<vmem>>, %arg3: memref<1x128xf32, #tpu.memory_space<vmem>>, %arg4: memref<1x128xf32, #tpu.memory_space<vmem>>, %arg5: memref<1x128xf32, #tpu.memory_space<vmem>>, %arg6: memref<1x128xf32, #tpu.memory_space<vmem>>, %arg7: memref<256x128xbf16, #tpu.memory_space<vmem>>) attributes {dimension_semantics = [#tpu.dimension_semantics<parallel>, #tpu.dimension_semantics<parallel>], iteration_bounds = array<i64: 8, 1>, scalar_prefetch = 0 : i64, scratch_operands = 0 : i64, tpu.core_type = #tpu.core_type<tc>, window_params = [{transform_indices = @transform_0, window_bounds = array<i64: 256, 128>}, {transform_indices = @transform_1, window_bounds = array<i64: 1, 128>}, {transform_indices = @transform_2, window_bounds = array<i64: 1, 128>}, {transform_indices = @transform_3, window_bounds = array<i64: 1, 128>}, {transform_indices = @transform_4, window_bounds = array<i64: 1, 128>}, {transform_indices = @transform_5, window_bounds = array<i64: 256, 128>}]} {
    %c0 = arith.constant 0 : index
    %c0_0 = arith.constant 0 : index
    %0 = vector.load %arg2[%c0, %c0_0] : memref<256x128xf32, #tpu.memory_space<vmem>>, vector<256x128xf32>
    %c0_1 = arith.constant 0 : index
    %c0_2 = arith.constant 0 : index
    %1 = vector.load %arg3[%c0_1, %c0_2] : memref<1x128xf32, #tpu.memory_space<vmem>>, vector<1x128xf32>
    %2 = vector.broadcast %1 : vector<1x128xf32> to vector<256x128xf32>
    %3 = arith.subf %0, %2 : vector<256x128xf32>
    %c0_3 = arith.constant 0 : index
    %c0_4 = arith.constant 0 : index
    %4 = vector.load %arg4[%c0_3, %c0_4] : memref<1x128xf32, #tpu.memory_space<vmem>>, vector<1x128xf32>
    %5 = vector.broadcast %4 : vector<1x128xf32> to vector<256x128xf32>
    %6 = arith.mulf %3, %5 : vector<256x128xf32>
    %c0_5 = arith.constant 0 : index
    %c0_6 = arith.constant 0 : index
    %7 = vector.load %arg5[%c0_5, %c0_6] : memref<1x128xf32, #tpu.memory_space<vmem>>, vector<1x128xf32>
    %8 = vector.broadcast %7 : vector<1x128xf32> to vector<256x128xf32>
    %9 = arith.mulf %6, %8 : vector<256x128xf32>
    %c0_7 = arith.constant 0 : index
    %c0_8 = arith.constant 0 : index
    %10 = vector.load %arg6[%c0_7, %c0_8] : memref<1x128xf32, #tpu.memory_space<vmem>>, vector<1x128xf32>
    %11 = vector.broadcast %10 : vector<1x128xf32> to vector<256x128xf32>
    %12 = arith.addf %9, %11 : vector<256x128xf32>
    %cst = arith.constant 0.000000e+00 : f32
    %13 = vector.broadcast %cst : f32 to vector<256x128xf32>
    %14 = arith.maximumf %12, %13 : vector<256x128xf32>
    %15 = arith.truncf %14 : vector<256x128xf32> to vector<256x128xbf16>
    %c0_9 = arith.constant 0 : index
    %c0_10 = arith.constant 0 : index
    %16 = vector.load %arg7[%c0_9, %c0_10] : memref<256x128xbf16, #tpu.memory_space<vmem>>, vector<256x128xbf16>
    tpu.vector_store %arg7[%c0_9, %c0_10], %15 {strides = array<i32>} : memref<256x128xbf16, #tpu.memory_space<vmem>>, vector<256x128xbf16>,
    return
  }
  func.func @transform_0(%arg0: i32, %arg1: i32) -> (i32, i32) {
    %c0_i32 = arith.constant 0 : i32
    return %arg0, %arg1 : i32, i32
  }
  func.func @transform_1(%arg0: i32, %arg1: i32) -> (i32, i32) {
    %c0_i32 = arith.constant 0 : i32
    %c0_i32_0 = arith.constant 0 : i32
    return %c0_i32, %arg1 : i32, i32
  }
  func.func @transform_2(%arg0: i32, %arg1: i32) -> (i32, i32) {
    %c0_i32 = arith.constant 0 : i32
    %c0_i32_0 = arith.constant 0 : i32
    return %c0_i32, %arg1 : i32, i32
  }
  func.func @transform_3(%arg0: i32, %arg1: i32) -> (i32, i32) {
    %c0_i32 = arith.constant 0 : i32
    %c0_i32_0 = arith.constant 0 : i32
    return %c0_i32, %arg1 : i32, i32
  }
  func.func @transform_4(%arg0: i32, %arg1: i32) -> (i32, i32) {
    %c0_i32 = arith.constant 0 : i32
    %c0_i32_0 = arith.constant 0 : i32
    return %c0_i32, %arg1 : i32, i32
  }
  func.func @transform_5(%arg0: i32, %arg1: i32) -> (i32, i32) {
    %c0_i32 = arith.constant 0 : i32
    return %arg0, %arg1 : i32, i32
  }
}

module attributes {stable_mosaic.version = 11 : i64} {
  func.func @_bgemm_kernel(%arg0: i32, %arg1: i32, %arg2: i32, %arg3: i32, %arg4: memref<1x256x128xbf16, #tpu.memory_space<vmem>>, %arg5: memref<1x128x128xbf16, #tpu.memory_space<vmem>>, %arg6: memref<1x256x128xf32, #tpu.memory_space<vmem>>, %arg7: memref<256x128xf32, #tpu.memory_space<vmem>>) attributes {dimension_semantics = [#tpu.dimension_semantics<parallel>, #tpu.dimension_semantics<parallel>, #tpu.dimension_semantics<parallel>, #tpu.dimension_semantics<arbitrary>], iteration_bounds = array<i64: 4, 8, 1, 1>, scalar_prefetch = 0 : i64, scratch_operands = 1 : i64, tpu.core_type = #tpu.core_type<tc>, window_params = [{transform_indices = @transform_0, window_bounds = array<i64: 1, 256, 128>}, {transform_indices = @transform_1, window_bounds = array<i64: 1, 128, 128>}, {transform_indices = @transform_2, window_bounds = array<i64: 1, 256, 128>}]} {
    %c0_i32 = arith.constant 0 : i32
    %0 = arith.cmpi eq, %arg3, %c0_i32 : i32
    %1 = arith.extui %0 : i1 to i32
    %c0_i32_0 = arith.constant 0 : i32
    %2 = arith.cmpi ne, %1, %c0_i32_0 : i32
    scf.if %2 {
      %cst_12 = arith.constant 0.000000e+00 : f32
      %14 = vector.broadcast %cst_12 : f32 to vector<256x128xf32>
      %c0_13 = arith.constant 0 : index
      %c0_14 = arith.constant 0 : index
      %15 = vector.load %arg7[%c0_13, %c0_14] : memref<256x128xf32, #tpu.memory_space<vmem>>, vector<256x128xf32>
      tpu.vector_store %arg7[%c0_13, %c0_14], %14 {strides = array<i32>} : memref<256x128xf32, #tpu.memory_space<vmem>>, vector<256x128xf32>,
    } else {
    }
    %c0 = arith.constant 0 : index
    %c0_1 = arith.constant 0 : index
    %3 = vector.load %arg7[%c0, %c0_1] : memref<256x128xf32, #tpu.memory_space<vmem>>, vector<256x128xf32>
    %c0_2 = arith.constant 0 : index
    %c0_3 = arith.constant 0 : index
    %c0_4 = arith.constant 0 : index
    %4 = vector.load %arg4[%c0_2, %c0_3, %c0_4] : memref<1x256x128xbf16, #tpu.memory_space<vmem>>, vector<1x256x128xbf16>
    %5 = vector.shape_cast %4 : vector<1x256x128xbf16> to vector<256x128xbf16>
    %c0_5 = arith.constant 0 : index
    %c0_6 = arith.constant 0 : index
    %c0_7 = arith.constant 0 : index
    %6 = vector.load %arg5[%c0_5, %c0_6, %c0_7] : memref<1x128x128xbf16, #tpu.memory_space<vmem>>, vector<1x128x128xbf16>
    %7 = vector.shape_cast %6 : vector<1x128x128xbf16> to vector<128x128xbf16>
    %cst = arith.constant dense<0.000000e+00> : vector<256x128xf32>
    %8 = tpu.matmul %5, %7, %cst {dimension_numbers = #tpu.dot_dimension_numbers<[1], [0], [0], [1], [0, 0, 1, 1], [], []>} : vector<256x128xbf16>, vector<128x128xbf16>, vector<256x128xf32> -> vector<256x128xf32>
    %9 = arith.addf %3, %8 : vector<256x128xf32>
    %c0_8 = arith.constant 0 : index
    %c0_9 = arith.constant 0 : index
    %10 = vector.load %arg7[%c0_8, %c0_9] : memref<256x128xf32, #tpu.memory_space<vmem>>, vector<256x128xf32>
    tpu.vector_store %arg7[%c0_8, %c0_9], %9 {strides = array<i32>} : memref<256x128xf32, #tpu.memory_space<vmem>>, vector<256x128xf32>,
    %c0_i32_10 = arith.constant 0 : i32
    %11 = arith.cmpi eq, %arg3, %c0_i32_10 : i32
    %12 = arith.extui %11 : i1 to i32
    %c0_i32_11 = arith.constant 0 : i32
    %13 = arith.cmpi ne, %12, %c0_i32_11 : i32
    scf.if %13 {
      %c0_12 = arith.constant 0 : index
      %c0_13 = arith.constant 0 : index
      %14 = vector.load %arg7[%c0_12, %c0_13] : memref<256x128xf32, #tpu.memory_space<vmem>>, vector<256x128xf32>
      %15 = math.tanh %14 : vector<256x128xf32>
      %c0_14 = arith.constant 0 : index
      %c0_15 = arith.constant 0 : index
      %c0_16 = arith.constant 0 : index
      %16 = vector.load %arg6[%c0_14, %c0_15, %c0_16] : memref<1x256x128xf32, #tpu.memory_space<vmem>>, vector<1x256x128xf32>
      %17 = vector.shape_cast %16 : vector<1x256x128xf32> to vector<256x128xf32>
      %18 = vector.shape_cast %15 : vector<256x128xf32> to vector<1x256x128xf32>
      tpu.vector_store %arg6[%c0_14, %c0_15, %c0_16], %18 {strides = array<i32>} : memref<1x256x128xf32, #tpu.memory_space<vmem>>, vector<1x256x128xf32>,
    } else {
    }
    return
  }
  func.func @transform_0(%arg0: i32, %arg1: i32, %arg2: i32, %arg3: i32) -> (i32, i32, i32) {
    %c0_i32 = arith.constant 0 : i32
    return %arg0, %arg1, %arg3 : i32, i32, i32
  }
  func.func @transform_1(%arg0: i32, %arg1: i32, %arg2: i32, %arg3: i32) -> (i32, i32, i32) {
    %c0_i32 = arith.constant 0 : i32
    return %arg0, %arg3, %arg2 : i32, i32, i32
  }
  func.func @transform_2(%arg0: i32, %arg1: i32, %arg2: i32, %arg3: i32) -> (i32, i32, i32) {
    %c0_i32 = arith.constant 0 : i32
    return %arg0, %arg1, %arg2 : i32, i32, i32
  }
}

</mosaic_0001>

<llo_original>
// kernel: _lambda_.13
$region0: #{_lambda_.13}
  #allocation0 [shape = 'u32[]', space=smem, size = 0x4, offset = 0x4, fixed_abs, tag = 'smem constant byte address 0x4 - core index']
  #allocation1 [shape = 'u32[144,128]{1,0:T(1,128)}', space=vmem, size = 0x12000, scoped, tag = 'internal scratch']
  #allocation2 [shape = 'f32[8,256]{1,0:T(8,128)}', space=vmem, size = 0x2000, scoped, tag = 'scratch operand']
  %s0 = inlined_call_operand.vmem [shape: bf16[1,8,128], index: 0, kind: input, shape index: {}]
  %s1 = inlined_call_operand.hbm [shape: bf16[1,128,2048], index: 1, kind: input, shape index: {}]
  %s2 = inlined_call_operand.vmem [shape: f32[1,8,2048], index: 2, kind: output, shape index: {}]
  %s3 = sld [smem:[#allocation0]]
  $region53: #{_lambda_.13} parent=0
    _
  %s5 = ssub.s32 1, %s3
  %s6 = scalar_select 0, %s5, %s3
  $region1: #{_lambda_.13} parent=0
    #allocation3 [shape = 'u8[131072]{0}', space=vmem, size = 0x20000, scoped, tag = 'input window, operand 1']
    #allocation4 [shape = 's32[2]{0}', space=sflag, size = 0x8, scoped, tag = 'scoped memory for _lambda_.13']
    %7 = vsyncpa [#allocation4], 0
    %s8 = scalar_lea.sflag [#allocation4], 1
    %9 = vsyncpa %s8, 0
    loop: start=0, step=1, limit=10
    $region2: #{_lambda_.13} parent=1 // loop_pre_header
      _
    $region3: #{_lambda_.13} parent=1 // loop_header
      %s11 = sphi 0, %s15
      %p12 = scmp.ge.s32.totalorder %s11, 10
      %s18 = sphi 0, %s44
      %s19 = sphi 0, %s40
      %s20 = sphi 0, %s36
      %s21 = sphi 0, %s32
      %s22 = sphi 0, %s18
      %s23 = sphi 0, %s19
      %s24 = sphi 0, %s20
      %s25 = sphi 0, %s21
      %s26 = sphi 0, %s22
      %s27 = sphi 0, %s23
      %s28 = sphi 0, %s24
      %s29 = sphi 0, %s25
      %s51 = sphi 0, %s53
      %s54 = sphi 0, %s51
      %s55 = sphi 0, %s54
      %s71 = sphi 0, %s55
      %s81 = sphi 0, %s83
      %s84 = sphi 0, %s81
      %s85 = sphi 0, %s84
      %s101 = sphi 0, %s85
      %s111 = sphi 0, %s113
      %s114 = sphi 0, %s111
      %s115 = sphi 0, %s114
      %s131 = sphi 0, %s115
    $region4: #{_lambda_.13} parent=1 // loop_header_branch
      %14 = sbr.rel (%p12) target = $region8
    $region5: #{_lambda_.13} parent=1 // loop_body
      %s16 = ssub.s32 %s11, 1
      %s17 = ssub.s32 %s11, 2
      %s30 = sadd.s32 1, %s21
      %p31 = scmp.ge.s32.totalorder %s30, 1
      %s32 = scalar_select %p31, 0, %s30
      %s33 = sadd.s32 1, %s20
      %s34 = scalar_select %p31, %s33, %s20
      %p35 = scmp.ge.s32.totalorder %s34, 8
      %s36 = scalar_select %p35, 0, %s34
      %s37 = sadd.s32 1, %s19
      %s38 = scalar_select %p35, %s37, %s19
      %p39 = scmp.ge.s32.totalorder %s38, 1
      %s40 = scalar_select %p39, 0, %s38
      %s41 = sadd.s32 1, %s18
      %s42 = scalar_select %p39, %s41, %s18
      %p43 = scmp.ge.s32.totalorder %s42, 1
      %s44 = scalar_select %p43, 0, %s42
      %s45 = ssub.s32 %s18, %s44
      %s46 = ssub.s32 %s19, %s40
      %s47 = sor.u32 %s45, %s46
      %s48 = ssub.s32 %s21, %s32
      %s49 = sor.u32 %s47, %s48
      %p50 = scmp.eq.s32.totalorder %s49, 0
      %s52 = sadd.s32 %s51, 1
      %s53 = scalar_select %p50, %s51, %s52
      %p56 = pneg %p50
      %p57 = scmp.eq.s32.totalorder %s11, 7
      %p58 = por %p56, %p57
      %p59 = scmp.ne.s32.totalorder %s51, %s54
      %p60 = scmp.eq.s32.totalorder %s11, 0
      %p61 = por %p59, %p60
      %p62 = scmp.ne.s32.totalorder %s51, %s54
      %p63 = scmp.eq.s32.totalorder %s16, 7
      %p64 = por %p62, %p63
      %p65 = scmp.ne.s32.totalorder %s54, %s55
      %p66 = scmp.eq.s32.totalorder %s16, 0
      %p67 = por %p65, %p66
      %p68 = scmp.ne.s32.totalorder %s54, %s55
      %p69 = scmp.eq.s32.totalorder %s17, 7
      %p70 = por %p68, %p69
      %p72 = scmp.ne.s32.totalorder %s55, %s71
      %p73 = scmp.eq.s32.totalorder %s17, 0
      %p74 = por %p72, %p73
      %s75 = ssub.s32 %s18, %s44
      %s76 = ssub.s32 %s21, %s32
      %s77 = sor.u32 %s75, %s76
      %s78 = ssub.s32 %s20, %s36
      %s79 = sor.u32 %s77, %s78
      %p80 = scmp.eq.s32.totalorder %s79, 0
      %s82 = sadd.s32 %s81, 1
      %s83 = scalar_select %p80, %s81, %s82
      %p86 = pneg %p80
      %p87 = scmp.eq.s32.totalorder %s11, 7
      %p88 = por %p86, %p87
      %p89 = scmp.ne.s32.totalorder %s81, %s84
      %p90 = scmp.eq.s32.totalorder %s11, 0
      %p91 = por %p89, %p90
      %p92 = scmp.ne.s32.totalorder %s81, %s84
      %p93 = scmp.eq.s32.totalorder %s16, 7
      %p94 = por %p92, %p93
      %p95 = scmp.ne.s32.totalorder %s84, %s85
      %p96 = scmp.eq.s32.totalorder %s16, 0
      %p97 = por %p95, %p96
      %p98 = scmp.ne.s32.totalorder %s84, %s85
      %p99 = scmp.eq.s32.totalorder %s17, 7
      %p100 = por %p98, %p99
      %p102 = scmp.ne.s32.totalorder %s85, %s101
      %p103 = scmp.eq.s32.totalorder %s17, 0
      %p104 = por %p102, %p103
      %s105 = ssub.s32 %s18, %s44
      %s106 = ssub.s32 %s19, %s40
      %s107 = sor.u32 %s105, %s106
      %s108 = ssub.s32 %s20, %s36
      %s109 = sor.u32 %s107, %s108
      %p110 = scmp.eq.s32.totalorder %s109, 0
      %s112 = sadd.s32 %s111, 1
      %s113 = scalar_select %p110, %s111, %s112
      %p116 = pneg %p110
      %p117 = scmp.eq.s32.totalorder %s11, 7
      %p118 = por %p116, %p117
      %p119 = scmp.ne.s32.totalorder %s111, %s114
      %p120 = scmp.eq.s32.totalorder %s11, 0
      %p121 = por %p119, %p120
      %p122 = scmp.ne.s32.totalorder %s111, %s114
      %p123 = scmp.eq.s32.totalorder %s16, 7
      %p124 = por %p122, %p123
      %p125 = scmp.ne.s32.totalorder %s114, %s115
      %p126 = scmp.eq.s32.totalorder %s16, 0
      %p127 = por %p125, %p126
      %p128 = scmp.ne.s32.totalorder %s114, %s115
      %p129 = scmp.eq.s32.totalorder %s17, 7
      %p130 = por %p128, %p129
      %p132 = scmp.ne.s32.totalorder %s115, %s131
      %p133 = scmp.eq.s32.totalorder %s17, 0
      %p134 = por %p132, %p133
      %p135 = scmp.le.s32.totalorder 1, %s11
      %p136 = scmp.lt.s32.totalorder %s11, 9
      %p137 = pnand %p135, %p136
      %p138 = pneg %p137
      // Predicated region
      $region9: #{_lambda_.13} parent=5 // pred_check
        _
      $region10: #{_lambda_.13} parent=5 // pred_check_branch
        %140 = sbr.rel (%p137) target = $region12
      $region11: #{_lambda_.13} parent=5 // pred_region
        %s141 = ssub.s32 %s11, 1
        // Predicated region
        $region13: #{_lambda_.13} parent=11 // pred_check
          %p142 = pneg %p67
        $region14: #{_lambda_.13} parent=11 // pred_check_branch
          %144 = sbr.rel (%p142) target = $region16
        $region15: #{_lambda_.13} parent=11 // pred_region
          %p145 = scmp.lt.s32.totalorder %s22, 0
          %s146 = scalar_select %p145, %s22, 0
          %p147 = scmp.lt.s32.totalorder %s23, 0
          %s148 = scalar_select %p147, %s23, 0
          %p149 = scmp.lt.s32.totalorder %s25, 0
          %s150 = scalar_select %p149, %s25, 0
          %s151 = sadd.s32 %s150, %s148
          %s152 = sadd.s32 %s151, %s146
          %s153 = smul.addr %s152, 4
          %s154 = scalar_lea.vmem %s0, %s153
        $region16: #{_lambda_.13} parent=11 // pred_fallthru
          _
      $region12: #{_lambda_.13} parent=5 // pred_fallthru
        _
      %p155 = scmp.lt.s32.totalorder %s11, 8
      // Predicated region
      $region17: #{_lambda_.13} parent=5 // pred_check
        %p156 = pneg %p155
      $region18: #{_lambda_.13} parent=5 // pred_check_branch
        %158 = sbr.rel (%p156) target = $region20
      $region19: #{_lambda_.13} parent=5 // pred_region
        // Predicated region
        $region21: #{_lambda_.13} parent=19 // pred_check
          %p159 = pneg %p91
        $region22: #{_lambda_.13} parent=19 // pred_check_branch
          %161 = sbr.rel (%p159) target = $region24
        $region23: #{_lambda_.13} parent=19 // pred_region
          %s162 = sand.u32 %s81, 1
          %s163 = scalar_lea.sflag [#allocation4], %s162
          %s164 = sand.u32 %s81, 1
          %s165 = smul.addr %s164, 128
          %s166 = scalar_lea.vmem [#allocation3], %s165
          %s167 = smul.u32 16, %s21
          %s168 = smul.u32 2, %s20
          %s170 = ssub.s32 2048, 2048
          %171 = vsyncadd %s163, %s170
          %s172 = smul.addr %s167, 16
          %s173 = sadd.s32 %s168, %s172
          %s174 = smul.addr %s18, 256
          %s175 = sadd.s32 %s173, %s174
          %s176 = smul.addr %s175, 64
          %s177 = scalar_lea.hbm %s1, %s176
          %s178 = sshll.u32 %s166, 4
          %s179 = int_to_ptr.vmem [resolvable:$true] %s178
          %184 = dma.hbm_to_vmem [thread:$0]  %s177, 2048, %s179, %s163, 1024, 128, 8
        $region24: #{_lambda_.13} parent=19 // pred_fallthru
          _
      $region20: #{_lambda_.13} parent=5 // pred_fallthru
        _
      %p185 = scmp.le.s32.totalorder 1, %s11
      %p186 = scmp.lt.s32.totalorder %s11, 9
      %p187 = pnand %p185, %p186
      %p188 = pneg %p187
      // Predicated region
      $region25: #{_lambda_.13} parent=5 // pred_check
        _
      $region26: #{_lambda_.13} parent=5 // pred_check_branch
        %190 = sbr.rel (%p187) target = $region28
      $region27: #{_lambda_.13} parent=5 // pred_region
        %s191 = ssub.s32 %s11, 1
        %s192 = sand.u32 %s84, 1
        %s193 = scalar_lea.sflag [#allocation4], %s192
        %s194 = sand.u32 %s84, 1
        %s195 = smul.addr %s194, 128
        %s196 = scalar_lea.vmem [#allocation3], %s195
        // Predicated region
        $region29: #{_lambda_.13} parent=27 // pred_check
          %p197 = pneg %p97
        $region30: #{_lambda_.13} parent=27 // pred_check_branch
          %199 = sbr.rel (%p197) target = $region32
        $region31: #{_lambda_.13} parent=27 // pred_region
          %200 = dma.done %s193, 2048
        $region32: #{_lambda_.13} parent=27 // pred_fallthru
          _
        %p201 = scmp.lt.s32.totalorder %s22, 0
        %s202 = scalar_select %p201, %s22, 0
        %p203 = scmp.lt.s32.totalorder %s23, 0
        %s204 = scalar_select %p203, %s23, 0
        %p205 = scmp.lt.s32.totalorder %s25, 0
        %s206 = scalar_select %p205, %s25, 0
        %s207 = sadd.s32 %s206, %s204
        %s208 = sadd.s32 %s207, %s202
        %s209 = smul.addr %s208, 4
        %s210 = scalar_lea.vmem %s0, %s209
        %p211 = pneg %p67
        %p212 = pneg %p64
        %s213 = sand.u32 %s84, 1
        %s214 = scalar_lea.sflag [#allocation4], %s213
        %s215 = sand.u32 %s84, 1
        %s216 = smul.addr %s215, 128
        %s217 = scalar_lea.vmem [#allocation3], %s216
        %p218 = pneg %p97
        %p219 = pneg %p94
        %p220 = pneg %p127
        %p221 = pneg %p124
        %s222 = smul.u32 2, %s24
        %p223 = scmp.lt.s32.totalorder %s22, 0
        %s224 = scalar_select %p223, %s22, 0
        %p225 = scmp.lt.s32.totalorder %s23, 0
        %s226 = scalar_select %p225, %s23, 0
        %p227 = scmp.lt.s32.totalorder %s222, 15
        %s228 = scalar_select %p227, %s222, 15
        %s229 = smul.addr %s226, 16
        %s230 = sadd.s32 %s228, %s229
        %s231 = smul.addr %s224, 16
        %s232 = sadd.s32 %s230, %s231
        %s233 = smul.addr %s232, 8
        %s234 = scalar_lea.vmem %s2, %s233
        %p235 = scmp.lt.s32.totalorder %s22, 0
        %s236 = scalar_select %p235, %s22, 0
        %p237 = scmp.lt.s32.totalorder %s23, 0
        %s238 = scalar_select %p237, %s23, 0
        %p239 = scmp.lt.s32.totalorder %s25, 0
        %s240 = scalar_select %p239, %s25, 0
        %s241 = sadd.s32 %s240, %s238
        %s242 = sadd.s32 %s241, %s236
        %s243 = smul.addr %s242, 4
        %s244 = scalar_lea.vmem %s0, %s243
        %s245 = smul.u32 16, %s25
        %s246 = smul.u32 2, %s24
        %s247 = smul.u32 2, %s24
        %p248 = scmp.lt.s32.totalorder %s22, 0
        %s249 = scalar_select %p248, %s22, 0
        %p250 = scmp.lt.s32.totalorder %s23, 0
        %s251 = scalar_select %p250, %s23, 0
        %p252 = scmp.lt.s32.totalorder %s247, 15
        %s253 = scalar_select %p252, %s247, 15
        %s254 = smul.addr %s251, 16
        %s255 = sadd.s32 %s253, %s254
        %s256 = smul.addr %s249, 16
        %s257 = sadd.s32 %s255, %s256
        %s258 = smul.addr %s257, 8
        %s259 = scalar_lea.vmem %s2, %s258
        %s260 = smul.u32 2, %s24
        %p262 = scmp.eq.s32.totalorder %s25, 0
        // Predicated region
        $region33: #{_lambda_.13} parent=27 // pred_check
          %p263 = pneg %p262
        $region34: #{_lambda_.13} parent=27 // pred_check_branch
          %265 = sbr.rel (%p263) target = $region36
        $region35: #{_lambda_.13} parent=27 // pred_region
          %266 = vst [vmem:[#allocation2] sm:$0xff] 0.0
          %267 = vst [vmem:[#allocation2 + $0x8] sm:$0xff] 0.0
        $region36: #{_lambda_.13} parent=27 // pred_fallthru
          _
        %v268 = vld [vmem:[#allocation2] sm:$0xff]
        %v269 = vld [vmem:[#allocation2 + $0x8] sm:$0xff]
        %v270 = vld [vmem:[%s244] sm:$0xf]
        %v271 = vld [vmem:[%s196] sm:$0xff]
        %v272 = vld [vmem:[%s196 + $0x8] sm:$0xff]
        %v273 = vld [vmem:[%s196 + $0x10] sm:$0xff]
        %v274 = vld [vmem:[%s196 + $0x18] sm:$0xff]
        %v275 = vld [vmem:[%s196 + $0x20] sm:$0xff]
        %v276 = vld [vmem:[%s196 + $0x28] sm:$0xff]
        %v277 = vld [vmem:[%s196 + $0x30] sm:$0xff]
        %v278 = vld [vmem:[%s196 + $0x38] sm:$0xff]
        %v279 = vld [vmem:[%s196 + $0x40] sm:$0xff]
        %v280 = vld [vmem:[%s196 + $0x48] sm:$0xff]
        %v281 = vld [vmem:[%s196 + $0x50] sm:$0xff]
        %v282 = vld [vmem:[%s196 + $0x58] sm:$0xff]
        %v283 = vld [vmem:[%s196 + $0x60] sm:$0xff]
        %v284 = vld [vmem:[%s196 + $0x68] sm:$0xff]
        %v285 = vld [vmem:[%s196 + $0x70] sm:$0xff]
        %v286 = vld [vmem:[%s196 + $0x78] sm:$0xff]
        %v303 = vunpack.c.l.b16 %v271
        %v304 = vunpack.c.h.b16 %v271
        %v305 = vunpack.c.l.b16 %v272
        %v306 = vunpack.c.h.b16 %v272
        %v307 = vunpack.c.l.b16 %v273
        %v308 = vunpack.c.h.b16 %v273
        %v309 = vunpack.c.l.b16 %v274
        %v310 = vunpack.c.h.b16 %v274
        %v311 = vunpack.c.l.b16 %v275
        %v312 = vunpack.c.h.b16 %v275
        %v313 = vunpack.c.l.b16 %v276
        %v314 = vunpack.c.h.b16 %v276
        %v315 = vunpack.c.l.b16 %v277
        %v316 = vunpack.c.h.b16 %v277
        %v317 = vunpack.c.l.b16 %v278
        %v318 = vunpack.c.h.b16 %v278
        %v319 = vunpack.c.l.b16 %v279
        %v320 = vunpack.c.h.b16 %v279
        %v321 = vunpack.c.l.b16 %v280
        %v322 = vunpack.c.h.b16 %v280
        %v323 = vunpack.c.l.b16 %v281
        %v324 = vunpack.c.h.b16 %v281
        %v325 = vunpack.c.l.b16 %v282
        %v326 = vunpack.c.h.b16 %v282
        %v327 = vunpack.c.l.b16 %v283
        %v328 = vunpack.c.h.b16 %v283
        %v329 = vunpack.c.l.b16 %v284
        %v330 = vunpack.c.h.b16 %v284
        %v331 = vunpack.c.l.b16 %v285
        %v332 = vunpack.c.h.b16 %v285
        %v333 = vunpack.c.l.b16 %v286
        %v334 = vunpack.c.h.b16 %v286
        %v335 = vpack.c.b16 %v305, %v303
        %v336 = vpack.c.b16 %v306, %v304
        %v337 = vpack.c.b16 %v309, %v307
        %v338 = vpack.c.b16 %v310, %v308
        %v339 = vpack.c.b16 %v313, %v311
        %v340 = vpack.c.b16 %v314, %v312
        %v341 = vpack.c.b16 %v317, %v315
        %v342 = vpack.c.b16 %v318, %v316
        %v343 = vpack.c.b16 %v321, %v319
        %v344 = vpack.c.b16 %v322, %v320
        %v345 = vpack.c.b16 %v325, %v323
        %v346 = vpack.c.b16 %v326, %v324
        %v347 = vpack.c.b16 %v329, %v327
        %v348 = vpack.c.b16 %v330, %v328
        %v349 = vpack.c.b16 %v333, %v331
        %v350 = vpack.c.b16 %v334, %v332
        %367 = vmatprep.subr.bf16.mxu0 %v350
        %368 = vmatpush1.bf16.msra.mxu0 %v349
        %369 = vmatprep.subr.bf16.mxu0 %v348
        %370 = vmatpush1.bf16.msra.mxu0 %v347
        %371 = vmatprep.subr.bf16.mxu0 %v346
        %372 = vmatpush1.bf16.msra.mxu0 %v345
        %373 = vmatprep.subr.bf16.mxu0 %v344
        %374 = vmatpush1.bf16.msra.mxu0 %v343
        %375 = vmatprep.subr.bf16.mxu0 %v342
        %376 = vmatpush1.bf16.msra.mxu0 %v341
        %377 = vmatprep.subr.bf16.mxu0 %v340
        %378 = vmatpush1.bf16.msra.mxu0 %v339
        %379 = vmatprep.subr.bf16.mxu0 %v338
        %380 = vmatpush1.bf16.msra.mxu0 %v337
        %381 = vmatprep.subr.bf16.mxu0 %v336
        %382 = vmatpush1.bf16.msra.mxu0 %v335
        %383 = vmatprep.subr.bf16.mxu0 0
        %384 = vmatpush2.bf16.msra.mxu0 0
        %385 = vmatprep.subr.bf16.mxu0 0
        %386 = vmatpush2.bf16.msra.mxu0 0
        %387 = vmatprep.subr.bf16.mxu0 0
        %388 = vmatpush2.bf16.msra.mxu0 0
        %389 = vmatprep.subr.bf16.mxu0 0
        %390 = vmatpush2.bf16.msra.mxu0 0
        %391 = vmatprep.subr.bf16.mxu0 0
        %392 = vmatpush2.bf16.msra.mxu0 0
        %393 = vmatprep.subr.bf16.mxu0 0
        %394 = vmatpush2.bf16.msra.mxu0 0
        %395 = vmatprep.subr.bf16.mxu0 0
        %396 = vmatpush2.bf16.msra.mxu0 0
        %397 = vmatprep.subr.bf16.mxu0 0
        %398 = vmatpush2.bf16.msra.mxu0 0
        %399 = vmatprep.mubr.bf16.mxu0 0
        %400 = vmatmul.mubr.bf16.gmra.mxu0 %v270
        %v401 = vpop.f32.mrf.mxu0
        %v402 = vadd.f32 0.0, %v401
        %v403 = vpop.f32.mrf.mxu0
        %v404 = vadd.f32 0.0, %v403
        %v405 = vpop.f32.mrf.mxu0
        %v406 = vpop.f32.mrf.mxu0
        %407 = vdwg.mxu0
        %v408 = vadd.f32 %v268, %v402
        %v409 = vadd.f32 %v269, %v404
        %410 = vst [vmem:[#allocation2] sm:$0xff] %v408
        %411 = vst [vmem:[#allocation2 + $0x8] sm:$0xff] %v409
        // Predicated region
        $region37: #{_lambda_.13} parent=27 // pred_check
          %p412 = pneg %p262
        $region38: #{_lambda_.13} parent=27 // pred_check_branch
          %414 = sbr.rel (%p412) target = $region40
        $region39: #{_lambda_.13} parent=27 // pred_region
          %v415 = vld [vmem:[#allocation2] sm:$0xff]
          %v416 = vld [vmem:[#allocation2 + $0x8] sm:$0xff]
          %417 = vst [vmem:[%s259] sm:$0xff] %v415
          %418 = vst [vmem:[%s259 + $0x8] sm:$0xff] %v416
        $region40: #{_lambda_.13} parent=27 // pred_fallthru
          _
        %s419 = smul.u32 2, %s24
        %p420 = scmp.lt.s32.totalorder %s22, 0
        %s421 = scalar_select %p420, %s22, 0
        %p422 = scmp.lt.s32.totalorder %s23, 0
        %s423 = scalar_select %p422, %s23, 0
        %p424 = scmp.lt.s32.totalorder %s419, 15
        %s425 = scalar_select %p424, %s419, 15
        %s426 = smul.addr %s423, 16
        %s427 = sadd.s32 %s425, %s426
        %s428 = smul.addr %s421, 16
        %s429 = sadd.s32 %s427, %s428
        %s430 = smul.addr %s429, 8
        %s431 = scalar_lea.vmem %s2, %s430
        // Predicated region
        $region41: #{_lambda_.13} parent=27 // pred_check
          %p432 = pneg %p124
        $region42: #{_lambda_.13} parent=27 // pred_check_branch
          %434 = sbr.rel (%p432) target = $region44
        $region43: #{_lambda_.13} parent=27 // pred_region
          %s435 = smul.u32 2, %s24
        $region44: #{_lambda_.13} parent=27 // pred_fallthru
          _
      $region28: #{_lambda_.13} parent=5 // pred_fallthru
        _
      %p436 = scmp.le.s32.totalorder 2, %s11
      // Predicated region
      $region45: #{_lambda_.13} parent=5 // pred_check
        %p437 = pneg %p436
      $region46: #{_lambda_.13} parent=5 // pred_check_branch
        %439 = sbr.rel (%p437) target = $region48
      $region47: #{_lambda_.13} parent=5 // pred_region
        %s440 = ssub.s32 %s11, 2
        // Predicated region
        $region49: #{_lambda_.13} parent=47 // pred_check
          %p441 = pneg %p130
        $region50: #{_lambda_.13} parent=47 // pred_check_branch
          %443 = sbr.rel (%p441) target = $region52
        $region51: #{_lambda_.13} parent=47 // pred_region
          %s444 = smul.u32 2, %s28
          %p445 = scmp.lt.s32.totalorder %s26, 0
          %s446 = scalar_select %p445, %s26, 0
          %p447 = scmp.lt.s32.totalorder %s27, 0
          %s448 = scalar_select %p447, %s27, 0
          %p449 = scmp.lt.s32.totalorder %s444, 15
          %s450 = scalar_select %p449, %s444, 15
          %s451 = smul.addr %s448, 16
          %s452 = sadd.s32 %s450, %s451
          %s453 = smul.addr %s446, 16
          %s454 = sadd.s32 %s452, %s453
          %s455 = smul.addr %s454, 8
          %s456 = scalar_lea.vmem %s2, %s455
        $region52: #{_lambda_.13} parent=47 // pred_fallthru
          _
      $region48: #{_lambda_.13} parent=5 // pred_fallthru
        _
    $region6: #{_lambda_.13} parent=1 // loop_footer
      %s15 = sadd.s32 1, %s11
    $region7: #{_lambda_.13} parent=1 // loop_footer_branch
      %10 = sbr.rel target = $region3
    $region8: #{_lambda_.13} parent=1 // loop_exit
      _
    %457 = vsyncpa [#allocation4], 1
    %s458 = scalar_lea.sflag [#allocation4], 1
    %459 = vsyncpa %s458, 1

// kernel: _lambda_.14
$region0: #{_lambda_.14}
  #allocation0 [shape = 'u32[]', space=smem, size = 0x4, offset = 0x4, fixed_abs, tag = 'smem constant byte address 0x4 - core index']
  #allocation1 [shape = 'u32[144,128]{1,0:T(1,128)}', space=vmem, size = 0x12000, scoped, tag = 'internal scratch']
  #allocation2 [shape = 'f32[1,128]{1,0:T(1,128)}', space=vmem, size = 0x200, scoped, tag = 'scratch operand']
  #allocation3 [shape = 'f32[1,128]{1,0:T(1,128)}', space=vmem, size = 0x200, scoped, tag = 'scratch operand']
  %s0 = inlined_call_operand.vmem [shape: f32[32,128], index: 0, kind: input, shape index: {}]
  %s1 = inlined_call_operand.vmem [shape: f32[1,128], index: 1, kind: output, shape index: {0}]
  %s2 = inlined_call_operand.vmem [shape: f32[1,128], index: 2, kind: output, shape index: {1}]
  %3 = xla_tuple %s1, %s2
  %s4 = sld [smem:[#allocation0]]
  $region30: #{_lambda_.14} parent=0
    _
  %s6 = ssub.s32 1, %s4
  %s7 = scalar_select 0, %s6, %s4
  // Predicated region
  $region2: #{_lambda_.14} parent=0 // pred_check
    _
  $region3: #{_lambda_.14} parent=0 // pred_check_branch
    %9 = sbr.rel (0) target = $region5
  $region4: #{_lambda_.14} parent=0 // pred_region
    _
  $region5: #{_lambda_.14} parent=0 // pred_fallthru
    _
  %p10 = scmp.eq.s32.totalorder 0, 0
  // Predicated region
  $region6: #{_lambda_.14} parent=0 // pred_check
    %p11 = pneg %p10
  $region7: #{_lambda_.14} parent=0 // pred_check_branch
    %13 = sbr.rel (%p11) target = $region9
  $region8: #{_lambda_.14} parent=0 // pred_region
    %14 = vst [vmem:[#allocation2] sm:$0x1] 0.0
    %15 = vst [vmem:[#allocation3] sm:$0x1] 0.0
  $region9: #{_lambda_.14} parent=0 // pred_fallthru
    _
  %v16 = vld [vmem:[%s0] sm:$0xff]
  %v17 = vld [vmem:[%s0 + $0x8] sm:$0xff]
  %v18 = vld [vmem:[%s0 + $0x10] sm:$0xff]
  %v19 = vld [vmem:[%s0 + $0x18] sm:$0xff]
  %v20 = vld [vmem:[#allocation2] sm:$0x1]
  %v21 = vadd.f32 %v16, %v17
  %v22 = vadd.f32 %v21, %v18
  %v23 = vadd.f32 %v22, %v19
  %v24 = vrot.slane %v23, 4
  %v25 = vadd.f32 %v23, %v24
  %v26 = vrot.slane %v25, 2
  %v27 = vadd.f32 %v25, %v26
  %v28 = vrot.slane %v27, 1
  %v29 = vadd.f32 %v27, %v28
  %v30 = vadd.f32 %v20, %v29
  %31 = vst [vmem:[#allocation2] sm:$0x1] %v30
  %v32 = vld [vmem:[#allocation3] sm:$0x1]
  %v33 = vmul.f32 %v16, %v16
  %v34 = vmul.f32 %v17, %v17
  %v35 = vmul.f32 %v18, %v18
  %v36 = vmul.f32 %v19, %v19
  %v37 = vadd.f32 %v33, %v34
  %v38 = vadd.f32 %v37, %v35
  %v39 = vadd.f32 %v38, %v36
  %v40 = vrot.slane %v39, 4
  %v41 = vadd.f32 %v39, %v40
  %v42 = vrot.slane %v41, 2
  %v43 = vadd.f32 %v41, %v42
  %v44 = vrot.slane %v43, 1
  %v45 = vadd.f32 %v43, %v44
  %v46 = vadd.f32 %v32, %v45
  %47 = vst [vmem:[#allocation3] sm:$0x1] %v46
  // Predicated region
  $region10: #{_lambda_.14} parent=0 // pred_check
    %p48 = pneg %p10
  $region11: #{_lambda_.14} parent=0 // pred_check_branch
    %50 = sbr.rel (%p48) target = $region13
  $region12: #{_lambda_.14} parent=0 // pred_region
    %v51 = vld [vmem:[#allocation2] sm:$0x1]
    %v52 = vmul.f32 %v51, 0.03125
    %v53 = vld [vmem:[#allocation3] sm:$0x1]
    %v54 = vmul.f32 %v53, 0.03125
    %v55 = vmul.f32 %v52, %v52
    %v56 = vsub.f32 %v54, %v55
    %v57 = vmax.f32 %v56, 0.0
    %58 = vst [vmem:[%s1] sm:$0x1] %v52
    %v59 = vadd.f32 %v57, 1e-05
    %v60 = vrsqrt.pop %v59
    %61 = vst [vmem:[%s2] sm:$0x1] %v60
  $region13: #{_lambda_.14} parent=0 // pred_fallthru
    _
  // Predicated region
  $region14: #{_lambda_.14} parent=0 // pred_check
    _
  $region15: #{_lambda_.14} parent=0 // pred_check_branch
    %63 = sbr.rel (0) target = $region17
  $region16: #{_lambda_.14} parent=0 // pred_region
    _
  $region17: #{_lambda_.14} parent=0 // pred_fallthru
    _
  // Predicated region
  $region18: #{_lambda_.14} parent=0 // pred_check
    _
  $region19: #{_lambda_.14} parent=0 // pred_check_branch
    %65 = sbr.rel (0) target = $region21
  $region20: #{_lambda_.14} parent=0 // pred_region
    _
  $region21: #{_lambda_.14} parent=0 // pred_fallthru
    _
  // Predicated region
  $region22: #{_lambda_.14} parent=0 // pred_check
    _
  $region23: #{_lambda_.14} parent=0 // pred_check_branch
    %67 = sbr.rel (0) target = $region25
  $region24: #{_lambda_.14} parent=0 // pred_region
    _
  $region25: #{_lambda_.14} parent=0 // pred_fallthru
    _
  // Predicated region
  $region26: #{_lambda_.14} parent=0 // pred_check
    _
  $region27: #{_lambda_.14} parent=0 // pred_check_branch
    %69 = sbr.rel (0) target = $region29
  $region28: #{_lambda_.14} parent=0 // pred_region
    _
  $region29: #{_lambda_.14} parent=0 // pred_fallthru
    _

// kernel: _lambda_.15
$region0: #{_lambda_.15}
  #allocation0 [shape = 'u32[]', space=smem, size = 0x4, offset = 0x4, fixed_abs, tag = 'smem constant byte address 0x4 - core index']
  #allocation1 [shape = 'u32[144,128]{1,0:T(1,128)}', space=vmem, size = 0x12000, scoped, tag = 'internal scratch']
  %s0 = inlined_call_operand.vmem [shape: f32[32,128], index: 0, kind: input, shape index: {}]
  %s1 = inlined_call_operand.vmem [shape: f32[1,128], index: 1, kind: input, shape index: {}]
  %s2 = inlined_call_operand.vmem [shape: f32[1,128], index: 2, kind: input, shape index: {}]
  %s3 = inlined_call_operand.hbm [shape: f32[1,128], index: 3, kind: input, shape index: {}]
  %s4 = inlined_call_operand.hbm [shape: f32[1,128], index: 4, kind: input, shape index: {}]
  %s5 = inlined_call_operand.vmem [shape: bf16[32,128], index: 5, kind: output, shape index: {}]
  %s6 = sld [smem:[#allocation0]]
  $region38: #{_lambda_.15} parent=0
    _
  %s8 = ssub.s32 1, %s6
  %s9 = scalar_select 0, %s8, %s6
  $region1: #{_lambda_.15} parent=0
    #allocation2 [shape = 'u8[512]{0}', space=vmem, size = 0x400, scoped, tag = 'input window, operand 3, single buffered']
    #allocation3 [shape = 's32[1]{0}', space=sflag, size = 0x4, scoped, tag = 'scoped memory for _lambda_.15']
    #allocation4 [shape = 'u8[512]{0}', space=vmem, size = 0x400, scoped, tag = 'input window, operand 4, single buffered']
    #allocation5 [shape = 's32[1]{0}', space=sflag, size = 0x4, scoped, tag = 'scoped memory for _lambda_.15']
    %10 = vsyncpa [#allocation3], 0
    %11 = vsyncpa [#allocation5], 0
    // Predicated region
    $region2: #{_lambda_.15} parent=1 // pred_check
      _
    $region3: #{_lambda_.15} parent=1 // pred_check_branch
      %13 = sbr.rel (0) target = $region5
    $region4: #{_lambda_.15} parent=1 // pred_region
      _
    $region5: #{_lambda_.15} parent=1 // pred_fallthru
      _
    // Predicated region
    $region6: #{_lambda_.15} parent=1 // pred_check
      _
    $region7: #{_lambda_.15} parent=1 // pred_check_branch
      %15 = sbr.rel (0) target = $region9
    $region8: #{_lambda_.15} parent=1 // pred_region
      _
    $region9: #{_lambda_.15} parent=1 // pred_fallthru
      _
    // Predicated region
    $region10: #{_lambda_.15} parent=1 // pred_check
      _
    $region11: #{_lambda_.15} parent=1 // pred_check_branch
      %17 = sbr.rel (0) target = $region13
    $region12: #{_lambda_.15} parent=1 // pred_region
      _
    $region13: #{_lambda_.15} parent=1 // pred_fallthru
      _
    // Predicated region
    $region14: #{_lambda_.15} parent=1 // pred_check
      _
    $region15: #{_lambda_.15} parent=1 // pred_check_branch
      %19 = sbr.rel (0) target = $region17
    $region16: #{_lambda_.15} parent=1 // pred_region
      %s21 = ssub.s32 16, 16
      %22 = vsyncadd [#allocation3], %s21
      %s24 = sshll.u32 [#allocation2], 4
      %s25 = int_to_ptr.vmem [resolvable:$true] %s24
      %27 = dma.hbm_to_vmem [thread:$0]  %s3, 16, %s25, [#allocation3]
    $region17: #{_lambda_.15} parent=1 // pred_fallthru
      _
    // Predicated region
    $region18: #{_lambda_.15} parent=1 // pred_check
      _
    $region19: #{_lambda_.15} parent=1 // pred_check_branch
      %29 = sbr.rel (0) target = $region21
    $region20: #{_lambda_.15} parent=1 // pred_region
      %s31 = ssub.s32 16, 16
      %32 = vsyncadd [#allocation5], %s31
      %s34 = sshll.u32 [#allocation4], 4
      %s35 = int_to_ptr.vmem [resolvable:$true] %s34
      %37 = dma.hbm_to_vmem [thread:$0]  %s4, 16, %s35, [#allocation5]
    $region21: #{_lambda_.15} parent=1 // pred_fallthru
      _
    // Predicated region
    $region22: #{_lambda_.15} parent=1 // pred_check
      _
    $region23: #{_lambda_.15} parent=1 // pred_check_branch
      %39 = sbr.rel (0) target = $region25
    $region24: #{_lambda_.15} parent=1 // pred_region
      %40 = dma.done [#allocation3], 16
    $region25: #{_lambda_.15} parent=1 // pred_fallthru
      _
    // Predicated region
    $region26: #{_lambda_.15} parent=1 // pred_check
      _
    $region27: #{_lambda_.15} parent=1 // pred_check_branch
      %42 = sbr.rel (0) target = $region29
    $region28: #{_lambda_.15} parent=1 // pred_region
      %43 = dma.done [#allocation5], 16
    $region29: #{_lambda_.15} parent=1 // pred_fallthru
      _
    %v44 = vld [vmem:[%s0] sm:$0xff]
    %v45 = vld [vmem:[%s0 + $0x8] sm:$0xff]
    %v46 = vld [vmem:[%s0 + $0x10] sm:$0xff]
    %v47 = vld [vmem:[%s0 + $0x18] sm:$0xff]
    %v48 = vld [vmem:[%s1] sm:$0x1]
    %v50 = vlaneseq
    %v51 = vshrl.u32 %v50, 7
    %v52 = vsub.s32 0, %v51
    %v53 = vrot.slane %v48, %v52
    %v55 = vsub.f32 %v44, %v53
    %v56 = vsub.f32 %v45, %v53
    %v57 = vsub.f32 %v46, %v53
    %v58 = vsub.f32 %v47, %v53
    %v59 = vld [vmem:[%s2] sm:$0x1]
    %v61 = vlaneseq
    %v62 = vshrl.u32 %v61, 7
    %v63 = vsub.s32 0, %v62
    %v64 = vrot.slane %v59, %v63
    %v66 = vmul.f32 %v55, %v64
    %v67 = vmul.f32 %v56, %v64
    %v68 = vmul.f32 %v57, %v64
    %v69 = vmul.f32 %v58, %v64
    %v70 = vld [vmem:[#allocation2] sm:$0x1]
    %v72 = vlaneseq
    %v73 = vshrl.u32 %v72, 7
    %v74 = vsub.s32 0, %v73
    %v75 = vrot.slane %v70, %v74
    %v77 = vmul.f32 %v66, %v75
    %v78 = vmul.f32 %v67, %v75
    %v79 = vmul.f32 %v68, %v75
    %v80 = vmul.f32 %v69, %v75
    %v81 = vld [vmem:[#allocation4] sm:$0x1]
    %v83 = vlaneseq
    %v84 = vshrl.u32 %v83, 7
    %v85 = vsub.s32 0, %v84
    %v86 = vrot.slane %v81, %v85
    %v88 = vadd.f32 %v77, %v86
    %v89 = vadd.f32 %v78, %v86
    %v90 = vadd.f32 %v79, %v86
    %v91 = vadd.f32 %v80, %v86
    %v92 = vmax.f32 %v88, 0.0
    %v93 = vmax.f32 %v89, 0.0
    %v94 = vmax.f32 %v90, 0.0
    %v95 = vmax.f32 %v91, 0.0
    %v96 = vpack.c.bf16 %v93, %v92
    %v97 = vpack.c.bf16 %v95, %v94
    %v100 = vunpack.c.l.b16 %v96
    %v101 = vunpack.c.h.b16 %v96
    %v102 = vunpack.c.l.b16 %v97
    %v103 = vunpack.c.h.b16 %v97
    %v104 = vpack.c.b16 %v100, %v100
    %v105 = vpack.c.b16 %v101, %v101
    %v106 = vpack.c.b16 %v102, %v102
    %v107 = vpack.c.b16 %v103, %v103
    %112 = vst [vmem:[%s5] sm:$0xf] %v104
    %113 = vst [vmem:[%s5 + $0x4] sm:$0xf] %v105
    %114 = vst [vmem:[%s5 + $0x8] sm:$0xf] %v106
    %115 = vst [vmem:[%s5 + $0xc] sm:$0xf] %v107
    // Predicated region
    $region30: #{_lambda_.15} parent=1 // pred_check
      _
    $region31: #{_lambda_.15} parent=1 // pred_check_branch
      %117 = sbr.rel (0) target = $region33
    $region32: #{_lambda_.15} parent=1 // pred_region
      _
    $region33: #{_lambda_.15} parent=1 // pred_fallthru
      _
    // Predicated region
    $region34: #{_lambda_.15} parent=1 // pred_check
      _
    $region35: #{_lambda_.15} parent=1 // pred_check_branch
      %119 = sbr.rel (0) target = $region37
    $region36: #{_lambda_.15} parent=1 // pred_region
      _
    $region37: #{_lambda_.15} parent=1 // pred_fallthru
      _
    %120 = vsyncpa [#allocation3], 1
    %121 = vsyncpa [#allocation5], 1

// kernel: _lambda_.17
$region0: #{_lambda_.17}
  #allocation0 [shape = 'u32[]', space=smem, size = 0x4, offset = 0x4, fixed_abs, tag = 'smem constant byte address 0x4 - core index']
  #allocation1 [shape = 'u32[144,128]{1,0:T(1,128)}', space=vmem, size = 0x12000, scoped, tag = 'internal scratch']
  #allocation2 [shape = 'f32[1,128]{1,0:T(1,128)}', space=vmem, size = 0x200, scoped, tag = 'scratch operand']
  #allocation3 [shape = 'f32[1,128]{1,0:T(1,128)}', space=vmem, size = 0x200, scoped, tag = 'scratch operand']
  %s0 = inlined_call_operand.vmem [shape: f32[128,128], index: 0, kind: input, shape index: {}]
  %s1 = inlined_call_operand.vmem [shape: f32[1,128], index: 1, kind: output, shape index: {0}]
  %s2 = inlined_call_operand.vmem [shape: f32[1,128], index: 2, kind: output, shape index: {1}]
  %3 = xla_tuple %s1, %s2
  %s4 = sld [smem:[#allocation0]]
  $region30: #{_lambda_.17} parent=0
    _
  %s6 = ssub.s32 1, %s4
  %s7 = scalar_select 0, %s6, %s4
  // Predicated region
  $region2: #{_lambda_.17} parent=0 // pred_check
    _
  $region3: #{_lambda_.17} parent=0 // pred_check_branch
    %9 = sbr.rel (0) target = $region5
  $region4: #{_lambda_.17} parent=0 // pred_region
    _
  $region5: #{_lambda_.17} parent=0 // pred_fallthru
    _
  %p10 = scmp.eq.s32.totalorder 0, 0
  // Predicated region
  $region6: #{_lambda_.17} parent=0 // pred_check
    %p11 = pneg %p10
  $region7: #{_lambda_.17} parent=0 // pred_check_branch
    %13 = sbr.rel (%p11) target = $region9
  $region8: #{_lambda_.17} parent=0 // pred_region
    %14 = vst [vmem:[#allocation2] sm:$0x1] 0.0
    %15 = vst [vmem:[#allocation3] sm:$0x1] 0.0
  $region9: #{_lambda_.17} parent=0 // pred_fallthru
    _
  %v16 = vld [vmem:[%s0] sm:$0xff]
  %v17 = vld [vmem:[%s0 + $0x8] sm:$0xff]
  %v18 = vld [vmem:[%s0 + $0x10] sm:$0xff]
  %v19 = vld [vmem:[%s0 + $0x18] sm:$0xff]
  %v20 = vld [vmem:[%s0 + $0x20] sm:$0xff]
  %v21 = vld [vmem:[%s0 + $0x28] sm:$0xff]
  %v22 = vld [vmem:[%s0 + $0x30] sm:$0xff]
  %v23 = vld [vmem:[%s0 + $0x38] sm:$0xff]
  %v24 = vld [vmem:[%s0 + $0x40] sm:$0xff]
  %v25 = vld [vmem:[%s0 + $0x48] sm:$0xff]
  %v26 = vld [vmem:[%s0 + $0x50] sm:$0xff]
  %v27 = vld [vmem:[%s0 + $0x58] sm:$0xff]
  %v28 = vld [vmem:[%s0 + $0x60] sm:$0xff]
  %v29 = vld [vmem:[%s0 + $0x68] sm:$0xff]
  %v30 = vld [vmem:[%s0 + $0x70] sm:$0xff]
  %v31 = vld [vmem:[%s0 + $0x78] sm:$0xff]
  %v32 = vld [vmem:[#allocation2] sm:$0x1]
  %v33 = vadd.f32 %v16, %v17
  %v34 = vadd.f32 %v33, %v18
  %v35 = vadd.f32 %v34, %v19
  %v36 = vadd.f32 %v35, %v20
  %v37 = vadd.f32 %v36, %v21
  %v38 = vadd.f32 %v37, %v22
  %v39 = vadd.f32 %v38, %v23
  %v40 = vadd.f32 %v39, %v24
  %v41 = vadd.f32 %v40, %v25
  %v42 = vadd.f32 %v41, %v26
  %v43 = vadd.f32 %v42, %v27
  %v44 = vadd.f32 %v43, %v28
  %v45 = vadd.f32 %v44, %v29
  %v46 = vadd.f32 %v45, %v30
  %v47 = vadd.f32 %v46, %v31
  %v48 = vrot.slane %v47, 4
  %v49 = vadd.f32 %v47, %v48
  %v50 = vrot.slane %v49, 2
  %v51 = vadd.f32 %v49, %v50
  %v52 = vrot.slane %v51, 1
  %v53 = vadd.f32 %v51, %v52
  %v54 = vadd.f32 %v32, %v53
  %55 = vst [vmem:[#allocation2] sm:$0x1] %v54
  %v56 = vld [vmem:[#allocation3] sm:$0x1]
  %v57 = vmul.f32 %v16, %v16
  %v58 = vmul.f32 %v17, %v17
  %v59 = vmul.f32 %v18, %v18
  %v60 = vmul.f32 %v19, %v19
  %v61 = vmul.f32 %v20, %v20
  %v62 = vmul.f32 %v21, %v21
  %v63 = vmul.f32 %v22, %v22
  %v64 = vmul.f32 %v23, %v23
  %v65 = vmul.f32 %v24, %v24
  %v66 = vmul.f32 %v25, %v25
  %v67 = vmul.f32 %v26, %v26
  %v68 = vmul.f32 %v27, %v27
  %v69 = vmul.f32 %v28, %v28
  %v70 = vmul.f32 %v29, %v29
  %v71 = vmul.f32 %v30, %v30
  %v72 = vmul.f32 %v31, %v31
  %v73 = vadd.f32 %v57, %v58
  %v74 = vadd.f32 %v73, %v59
  %v75 = vadd.f32 %v74, %v60
  %v76 = vadd.f32 %v75, %v61
  %v77 = vadd.f32 %v76, %v62
  %v78 = vadd.f32 %v77, %v63
  %v79 = vadd.f32 %v78, %v64
  %v80 = vadd.f32 %v79, %v65
  %v81 = vadd.f32 %v80, %v66
  %v82 = vadd.f32 %v81, %v67
  %v83 = vadd.f32 %v82, %v68
  %v84 = vadd.f32 %v83, %v69
  %v85 = vadd.f32 %v84, %v70
  %v86 = vadd.f32 %v85, %v71
  %v87 = vadd.f32 %v86, %v72
  %v88 = vrot.slane %v87, 4
  %v89 = vadd.f32 %v87, %v88
  %v90 = vrot.slane %v89, 2
  %v91 = vadd.f32 %v89, %v90
  %v92 = vrot.slane %v91, 1
  %v93 = vadd.f32 %v91, %v92
  %v94 = vadd.f32 %v56, %v93
  %95 = vst [vmem:[#allocation3] sm:$0x1] %v94
  // Predicated region
  $region10: #{_lambda_.17} parent=0 // pred_check
    %p96 = pneg %p10
  $region11: #{_lambda_.17} parent=0 // pred_check_branch
    %98 = sbr.rel (%p96) target = $region13
  $region12: #{_lambda_.17} parent=0 // pred_region
    %v99 = vld [vmem:[#allocation2] sm:$0x1]
    %v100 = vmul.f32 %v99, 0.0078125
    %v101 = vld [vmem:[#allocation3] sm:$0x1]
    %v102 = vmul.f32 %v101, 0.0078125
    %v103 = vmul.f32 %v100, %v100
    %v104 = vsub.f32 %v102, %v103
    %v105 = vmax.f32 %v104, 0.0
    %106 = vst [vmem:[%s1] sm:$0x1] %v100
    %v107 = vadd.f32 %v105, 1e-05
    %v108 = vrsqrt.pop %v107
    %109 = vst [vmem:[%s2] sm:$0x1] %v108
  $region13: #{_lambda_.17} parent=0 // pred_fallthru
    _
  // Predicated region
  $region14: #{_lambda_.17} parent=0 // pred_check
    _
  $region15: #{_lambda_.17} parent=0 // pred_check_branch
    %111 = sbr.rel (0) target = $region17
  $region16: #{_lambda_.17} parent=0 // pred_region
    _
  $region17: #{_lambda_.17} parent=0 // pred_fallthru
    _
  // Predicated region
  $region18: #{_lambda_.17} parent=0 // pred_check
    _
  $region19: #{_lambda_.17} parent=0 // pred_check_branch
    %113 = sbr.rel (0) target = $region21
  $region20: #{_lambda_.17} parent=0 // pred_region
    _
  $region21: #{_lambda_.17} parent=0 // pred_fallthru
    _
  // Predicated region
  $region22: #{_lambda_.17} parent=0 // pred_check
    _
  $region23: #{_lambda_.17} parent=0 // pred_check_branch
    %115 = sbr.rel (0) target = $region25
  $region24: #{_lambda_.17} parent=0 // pred_region
    _
  $region25: #{_lambda_.17} parent=0 // pred_fallthru
    _
  // Predicated region
  $region26: #{_lambda_.17} parent=0 // pred_check
    _
  $region27: #{_lambda_.17} parent=0 // pred_check_branch
    %117 = sbr.rel (0) target = $region29
  $region28: #{_lambda_.17} parent=0 // pred_region
    _
  $region29: #{_lambda_.17} parent=0 // pred_fallthru
    _

// kernel: _lambda_.16
$region0: #{_lambda_.16}
  #allocation0 [shape = 'u32[]', space=smem, size = 0x4, offset = 0x4, fixed_abs, tag = 'smem constant byte address 0x4 - core index']
  #allocation1 [shape = 'u32[144,128]{1,0:T(1,128)}', space=vmem, size = 0x12000, scoped, tag = 'internal scratch']
  #allocation2 [shape = 'f32[32,128]{1,0:T(8,128)}', space=vmem, size = 0x4000, scoped, tag = 'scratch operand']
  %s0 = inlined_call_operand.vmem [shape: bf16[4,32,256], index: 0, kind: input, shape index: {}]
  %s1 = inlined_call_operand.hbm [shape: bf16[4,256,128], index: 1, kind: input, shape index: {}]
  %s2 = inlined_call_operand.vmem [shape: f32[4,32,128], index: 2, kind: output, shape index: {}]
  %s3 = sld [smem:[#allocation0]]
  $region53: #{_lambda_.16} parent=0
    _
  %s5 = ssub.s32 1, %s3
  %s6 = scalar_select 0, %s5, %s3
  $region1: #{_lambda_.16} parent=0
    #allocation3 [shape = 'u8[131072]{0}', space=vmem, size = 0x20000, scoped, tag = 'input window, operand 1']
    #allocation4 [shape = 's32[2]{0}', space=sflag, size = 0x8, scoped, tag = 'scoped memory for _lambda_.16']
    %7 = vsyncpa [#allocation4], 0
    %s8 = scalar_lea.sflag [#allocation4], 1
    %9 = vsyncpa %s8, 0
    loop: start=0, step=1, limit=6
    $region2: #{_lambda_.16} parent=1 // loop_pre_header
      _
    $region3: #{_lambda_.16} parent=1 // loop_header
      %s11 = sphi 0, %s15
      %p12 = scmp.ge.s32.totalorder %s11, 6
      %s18 = sphi 0, %s44
      %s19 = sphi 0, %s40
      %s20 = sphi 0, %s36
      %s21 = sphi 0, %s32
      %s22 = sphi 0, %s18
      %s23 = sphi 0, %s19
      %s24 = sphi 0, %s20
      %s25 = sphi 0, %s21
      %s26 = sphi 0, %s22
      %s27 = sphi 0, %s23
      %s28 = sphi 0, %s24
      %s29 = sphi 0, %s25
      %s51 = sphi 0, %s53
      %s54 = sphi 0, %s51
      %s55 = sphi 0, %s54
      %s71 = sphi 0, %s55
      %s81 = sphi 0, %s83
      %s84 = sphi 0, %s81
      %s85 = sphi 0, %s84
      %s101 = sphi 0, %s85
      %s111 = sphi 0, %s113
      %s114 = sphi 0, %s111
      %s115 = sphi 0, %s114
      %s131 = sphi 0, %s115
    $region4: #{_lambda_.16} parent=1 // loop_header_branch
      %14 = sbr.rel (%p12) target = $region8
    $region5: #{_lambda_.16} parent=1 // loop_body
      %s16 = ssub.s32 %s11, 1
      %s17 = ssub.s32 %s11, 2
      %s30 = sadd.s32 1, %s21
      %p31 = scmp.ge.s32.totalorder %s30, 1
      %s32 = scalar_select %p31, 0, %s30
      %s33 = sadd.s32 1, %s20
      %s34 = scalar_select %p31, %s33, %s20
      %p35 = scmp.ge.s32.totalorder %s34, 1
      %s36 = scalar_select %p35, 0, %s34
      %s37 = sadd.s32 1, %s19
      %s38 = scalar_select %p35, %s37, %s19
      %p39 = scmp.ge.s32.totalorder %s38, 1
      %s40 = scalar_select %p39, 0, %s38
      %s41 = sadd.s32 1, %s18
      %s42 = scalar_select %p39, %s41, %s18
      %p43 = scmp.ge.s32.totalorder %s42, 4
      %s44 = scalar_select %p43, 0, %s42
      %s45 = ssub.s32 %s18, %s44
      %s46 = ssub.s32 %s19, %s40
      %s47 = sor.u32 %s45, %s46
      %s48 = ssub.s32 %s21, %s32
      %s49 = sor.u32 %s47, %s48
      %p50 = scmp.eq.s32.totalorder %s49, 0
      %s52 = sadd.s32 %s51, 1
      %s53 = scalar_select %p50, %s51, %s52
      %p56 = pneg %p50
      %p57 = scmp.eq.s32.totalorder %s11, 3
      %p58 = por %p56, %p57
      %p59 = scmp.ne.s32.totalorder %s51, %s54
      %p60 = scmp.eq.s32.totalorder %s11, 0
      %p61 = por %p59, %p60
      %p62 = scmp.ne.s32.totalorder %s51, %s54
      %p63 = scmp.eq.s32.totalorder %s16, 3
      %p64 = por %p62, %p63
      %p65 = scmp.ne.s32.totalorder %s54, %s55
      %p66 = scmp.eq.s32.totalorder %s16, 0
      %p67 = por %p65, %p66
      %p68 = scmp.ne.s32.totalorder %s54, %s55
      %p69 = scmp.eq.s32.totalorder %s17, 3
      %p70 = por %p68, %p69
      %p72 = scmp.ne.s32.totalorder %s55, %s71
      %p73 = scmp.eq.s32.totalorder %s17, 0
      %p74 = por %p72, %p73
      %s75 = ssub.s32 %s18, %s44
      %s76 = ssub.s32 %s21, %s32
      %s77 = sor.u32 %s75, %s76
      %s78 = ssub.s32 %s20, %s36
      %s79 = sor.u32 %s77, %s78
      %p80 = scmp.eq.s32.totalorder %s79, 0
      %s82 = sadd.s32 %s81, 1
      %s83 = scalar_select %p80, %s81, %s82
      %p86 = pneg %p80
      %p87 = scmp.eq.s32.totalorder %s11, 3
      %p88 = por %p86, %p87
      %p89 = scmp.ne.s32.totalorder %s81, %s84
      %p90 = scmp.eq.s32.totalorder %s11, 0
      %p91 = por %p89, %p90
      %p92 = scmp.ne.s32.totalorder %s81, %s84
      %p93 = scmp.eq.s32.totalorder %s16, 3
      %p94 = por %p92, %p93
      %p95 = scmp.ne.s32.totalorder %s84, %s85
      %p96 = scmp.eq.s32.totalorder %s16, 0
      %p97 = por %p95, %p96
      %p98 = scmp.ne.s32.totalorder %s84, %s85
      %p99 = scmp.eq.s32.totalorder %s17, 3
      %p100 = por %p98, %p99
      %p102 = scmp.ne.s32.totalorder %s85, %s101
      %p103 = scmp.eq.s32.totalorder %s17, 0
      %p104 = por %p102, %p103
      %s105 = ssub.s32 %s18, %s44
      %s106 = ssub.s32 %s19, %s40
      %s107 = sor.u32 %s105, %s106
      %s108 = ssub.s32 %s20, %s36
      %s109 = sor.u32 %s107, %s108
      %p110 = scmp.eq.s32.totalorder %s109, 0
      %s112 = sadd.s32 %s111, 1
      %s113 = scalar_select %p110, %s111, %s112
      %p116 = pneg %p110
      %p117 = scmp.eq.s32.totalorder %s11, 3
      %p118 = por %p116, %p117
      %p119 = scmp.ne.s32.totalorder %s111, %s114
      %p120 = scmp.eq.s32.totalorder %s11, 0
      %p121 = por %p119, %p120
      %p122 = scmp.ne.s32.totalorder %s111, %s114
      %p123 = scmp.eq.s32.totalorder %s16, 3
      %p124 = por %p122, %p123
      %p125 = scmp.ne.s32.totalorder %s114, %s115
      %p126 = scmp.eq.s32.totalorder %s16, 0
      %p127 = por %p125, %p126
      %p128 = scmp.ne.s32.totalorder %s114, %s115
      %p129 = scmp.eq.s32.totalorder %s17, 3
      %p130 = por %p128, %p129
      %p132 = scmp.ne.s32.totalorder %s115, %s131
      %p133 = scmp.eq.s32.totalorder %s17, 0
      %p134 = por %p132, %p133
      %p135 = scmp.le.s32.totalorder 1, %s11
      %p136 = scmp.lt.s32.totalorder %s11, 5
      %p137 = pnand %p135, %p136
      %p138 = pneg %p137
      // Predicated region
      $region9: #{_lambda_.16} parent=5 // pred_check
        _
      $region10: #{_lambda_.16} parent=5 // pred_check_branch
        %140 = sbr.rel (%p137) target = $region12
      $region11: #{_lambda_.16} parent=5 // pred_region
        %s141 = ssub.s32 %s11, 1
      $region12: #{_lambda_.16} parent=5 // pred_fallthru
        _
      %p142 = scmp.lt.s32.totalorder %s11, 4
      // Predicated region
      $region13: #{_lambda_.16} parent=5 // pred_check
        %p143 = pneg %p142
      $region14: #{_lambda_.16} parent=5 // pred_check_branch
        %145 = sbr.rel (%p143) target = $region16
      $region15: #{_lambda_.16} parent=5 // pred_region
        // Predicated region
        $region17: #{_lambda_.16} parent=15 // pred_check
          %p146 = pneg %p61
        $region18: #{_lambda_.16} parent=15 // pred_check_branch
          %148 = sbr.rel (%p146) target = $region20
        $region19: #{_lambda_.16} parent=15 // pred_region
          %s149 = smul.u32 4, %s19
          %s150 = smul.u32 2, %s21
          %p151 = scmp.lt.s32.totalorder %s18, 3
          %s152 = scalar_select %p151, %s18, 3
          %p153 = scmp.lt.s32.totalorder %s149, 3
          %s154 = scalar_select %p153, %s149, 3
          %p155 = scmp.lt.s32.totalorder %s150, 1
          %s156 = scalar_select %p155, %s150, 1
          %s157 = smul.addr %s154, 2
          %s158 = sadd.s32 %s156, %s157
          %s159 = smul.addr %s152, 8
          %s160 = sadd.s32 %s158, %s159
          %s161 = smul.addr %s160, 4
          %s162 = scalar_lea.vmem %s0, %s161
          %s163 = smul.u32 4, %s19
          %s164 = smul.u32 2, %s21
        $region20: #{_lambda_.16} parent=15 // pred_fallthru
          _
        // Predicated region
        $region21: #{_lambda_.16} parent=15 // pred_check
          %p165 = pneg %p91
        $region22: #{_lambda_.16} parent=15 // pred_check_branch
          %167 = sbr.rel (%p165) target = $region24
        $region23: #{_lambda_.16} parent=15 // pred_region
          %s168 = sand.u32 %s81, 1
          %s169 = scalar_lea.sflag [#allocation4], %s168
          %s170 = sand.u32 %s81, 1
          %s171 = smul.addr %s170, 128
          %s172 = scalar_lea.vmem [#allocation3], %s171
          %s173 = smul.u32 32, %s21
          %s175 = ssub.s32 2048, 2048
          %176 = vsyncadd %s169, %s175
          %s177 = sadd.s32 %s20, %s173
          %s178 = smul.addr %s18, 32
          %s179 = sadd.s32 %s177, %s178
          %s180 = smul.addr %s179, 64
          %s181 = scalar_lea.hbm %s1, %s180
          %s182 = sshll.u32 %s172, 4
          %s183 = int_to_ptr.vmem [resolvable:$true] %s182
          %188 = dma.hbm_to_vmem [thread:$0]  %s181, 2048, %s183, %s169, 64, 64, 4
        $region24: #{_lambda_.16} parent=15 // pred_fallthru
          _
      $region16: #{_lambda_.16} parent=5 // pred_fallthru
        _
      %p189 = scmp.le.s32.totalorder 1, %s11
      %p190 = scmp.lt.s32.totalorder %s11, 5
      %p191 = pnand %p189, %p190
      %p192 = pneg %p191
      // Predicated region
      $region25: #{_lambda_.16} parent=5 // pred_check
        _
      $region26: #{_lambda_.16} parent=5 // pred_check_branch
        %194 = sbr.rel (%p191) target = $region28
      $region27: #{_lambda_.16} parent=5 // pred_region
        %s195 = ssub.s32 %s11, 1
        %s196 = sand.u32 %s84, 1
        %s197 = scalar_lea.sflag [#allocation4], %s196
        %s198 = sand.u32 %s84, 1
        %s199 = smul.addr %s198, 128
        %s200 = scalar_lea.vmem [#allocation3], %s199
        // Predicated region
        $region29: #{_lambda_.16} parent=27 // pred_check
          %p201 = pneg %p97
        $region30: #{_lambda_.16} parent=27 // pred_check_branch
          %203 = sbr.rel (%p201) target = $region32
        $region31: #{_lambda_.16} parent=27 // pred_region
          %204 = dma.done %s197, 2048
        $region32: #{_lambda_.16} parent=27 // pred_fallthru
          _
        %s205 = smul.u32 4, %s23
        %s206 = smul.u32 2, %s25
        %p207 = scmp.lt.s32.totalorder %s22, 3
        %s208 = scalar_select %p207, %s22, 3
        %p209 = scmp.lt.s32.totalorder %s205, 3
        %s210 = scalar_select %p209, %s205, 3
        %p211 = scmp.lt.s32.totalorder %s206, 1
        %s212 = scalar_select %p211, %s206, 1
        %s213 = smul.addr %s210, 2
        %s214 = sadd.s32 %s212, %s213
        %s215 = smul.addr %s208, 8
        %s216 = sadd.s32 %s214, %s215
        %s217 = smul.addr %s216, 4
        %s218 = scalar_lea.vmem %s0, %s217
        %p219 = pneg %p67
        %p220 = pneg %p64
        %s221 = sand.u32 %s84, 1
        %s222 = scalar_lea.sflag [#allocation4], %s221
        %s223 = sand.u32 %s84, 1
        %s224 = smul.addr %s223, 128
        %s225 = scalar_lea.vmem [#allocation3], %s224
        %p226 = pneg %p97
        %p227 = pneg %p94
        %p228 = pneg %p127
        %p229 = pneg %p124
        %s230 = smul.u32 4, %s23
        %p231 = scmp.lt.s32.totalorder %s22, 3
        %s232 = scalar_select %p231, %s22, 3
        %p233 = scmp.lt.s32.totalorder %s230, 3
        %s234 = scalar_select %p233, %s230, 3
        %p235 = scmp.lt.s32.totalorder %s24, 0
        %s236 = scalar_select %p235, %s24, 0
        %s237 = sadd.s32 %s236, %s234
        %s238 = smul.addr %s232, 4
        %s239 = sadd.s32 %s237, %s238
        %s240 = smul.addr %s239, 8
        %s241 = scalar_lea.vmem %s2, %s240
        %s242 = smul.u32 4, %s23
        %s243 = smul.u32 2, %s25
        %p244 = scmp.lt.s32.totalorder %s22, 3
        %s245 = scalar_select %p244, %s22, 3
        %p246 = scmp.lt.s32.totalorder %s242, 3
        %s247 = scalar_select %p246, %s242, 3
        %p248 = scmp.lt.s32.totalorder %s243, 1
        %s249 = scalar_select %p248, %s243, 1
        %s250 = smul.addr %s247, 2
        %s251 = sadd.s32 %s249, %s250
        %s252 = smul.addr %s245, 8
        %s253 = sadd.s32 %s251, %s252
        %s254 = smul.addr %s253, 4
        %s255 = scalar_lea.vmem %s0, %s254
        %s256 = smul.u32 4, %s23
        %s257 = smul.u32 2, %s25
        %s258 = smul.u32 32, %s25
        %s259 = smul.u32 4, %s23
        %p260 = scmp.lt.s32.totalorder %s22, 3
        %s261 = scalar_select %p260, %s22, 3
        %p262 = scmp.lt.s32.totalorder %s259, 3
        %s263 = scalar_select %p262, %s259, 3
        %p264 = scmp.lt.s32.totalorder %s24, 0
        %s265 = scalar_select %p264, %s24, 0
        %s266 = sadd.s32 %s265, %s263
        %s267 = smul.addr %s261, 4
        %s268 = sadd.s32 %s266, %s267
        %s269 = smul.addr %s268, 8
        %s270 = scalar_lea.vmem %s2, %s269
        %s271 = smul.u32 4, %s23
        %p273 = scmp.eq.s32.totalorder %s25, 0
        // Predicated region
        $region33: #{_lambda_.16} parent=27 // pred_check
          %p274 = pneg %p273
        $region34: #{_lambda_.16} parent=27 // pred_check_branch
          %276 = sbr.rel (%p274) target = $region36
        $region35: #{_lambda_.16} parent=27 // pred_region
          %277 = vst [vmem:[#allocation2] sm:$0xff] 0.0
          %278 = vst [vmem:[#allocation2 + $0x8] sm:$0xff] 0.0
          %279 = vst [vmem:[#allocation2 + $0x10] sm:$0xff] 0.0
          %280 = vst [vmem:[#allocation2 + $0x18] sm:$0xff] 0.0
        $region36: #{_lambda_.16} parent=27 // pred_fallthru
          _
        %v281 = vld [vmem:[#allocation2] sm:$0xff]
        %v282 = vld [vmem:[#allocation2 + $0x8] sm:$0xff]
        %v283 = vld [vmem:[#allocation2 + $0x10] sm:$0xff]
        %v284 = vld [vmem:[#allocation2 + $0x18] sm:$0xff]
        %v285 = vld [vmem:[%s255] sm:$0xff]
        %v286 = vld [vmem:[%s255 + $0x8] sm:$0xff]
        %v287 = vld [vmem:[%s255 + $0x10] sm:$0xff]
        %v288 = vld [vmem:[%s255 + $0x18] sm:$0xff]
        %v289 = vld [vmem:[%s200] sm:$0xf]
        %v290 = vld [vmem:[%s200 + $0x4] sm:$0xf]
        %v291 = vld [vmem:[%s200 + $0x8] sm:$0xf]
        %v292 = vld [vmem:[%s200 + $0xc] sm:$0xf]
        %v293 = vld [vmem:[%s200 + $0x10] sm:$0xf]
        %v294 = vld [vmem:[%s200 + $0x14] sm:$0xf]
        %v295 = vld [vmem:[%s200 + $0x18] sm:$0xf]
        %v296 = vld [vmem:[%s200 + $0x1c] sm:$0xf]
        %v297 = vld [vmem:[%s200 + $0x20] sm:$0xf]
        %v298 = vld [vmem:[%s200 + $0x24] sm:$0xf]
        %v299 = vld [vmem:[%s200 + $0x28] sm:$0xf]
        %v300 = vld [vmem:[%s200 + $0x2c] sm:$0xf]
        %v301 = vld [vmem:[%s200 + $0x30] sm:$0xf]
        %v302 = vld [vmem:[%s200 + $0x34] sm:$0xf]
        %v303 = vld [vmem:[%s200 + $0x38] sm:$0xf]
        %v304 = vld [vmem:[%s200 + $0x3c] sm:$0xf]
        %v305 = vld [vmem:[%s200 + $0x40] sm:$0xf]
        %v306 = vld [vmem:[%s200 + $0x44] sm:$0xf]
        %v307 = vld [vmem:[%s200 + $0x48] sm:$0xf]
        %v308 = vld [vmem:[%s200 + $0x4c] sm:$0xf]
        %v309 = vld [vmem:[%s200 + $0x50] sm:$0xf]
        %v310 = vld [vmem:[%s200 + $0x54] sm:$0xf]
        %v311 = vld [vmem:[%s200 + $0x58] sm:$0xf]
        %v312 = vld [vmem:[%s200 + $0x5c] sm:$0xf]
        %v313 = vld [vmem:[%s200 + $0x60] sm:$0xf]
        %v314 = vld [vmem:[%s200 + $0x64] sm:$0xf]
        %v315 = vld [vmem:[%s200 + $0x68] sm:$0xf]
        %v316 = vld [vmem:[%s200 + $0x6c] sm:$0xf]
        %v317 = vld [vmem:[%s200 + $0x70] sm:$0xf]
        %v318 = vld [vmem:[%s200 + $0x74] sm:$0xf]
        %v319 = vld [vmem:[%s200 + $0x78] sm:$0xf]
        %v320 = vld [vmem:[%s200 + $0x7c] sm:$0xf]
        %v325 = vunpack.c.l.b16 %v285
        %v326 = vunpack.c.h.b16 %v285
        %v327 = vunpack.c.l.b16 %v286
        %v328 = vunpack.c.h.b16 %v286
        %v329 = vunpack.c.l.b16 %v287
        %v330 = vunpack.c.h.b16 %v287
        %v331 = vunpack.c.l.b16 %v288
        %v332 = vunpack.c.h.b16 %v288
        %v333 = vpack.c.b16 %v327, %v325
        %v334 = vpack.c.b16 %v328, %v326
        %v335 = vpack.c.b16 %v331, %v329
        %v336 = vpack.c.b16 %v332, %v330
        %v373 = vunpack.c.l.b16 %v289
        %v374 = vunpack.c.l.b16 %v290
        %v375 = vunpack.c.l.b16 %v291
        %v376 = vunpack.c.l.b16 %v292
        %v377 = vunpack.c.l.b16 %v293
        %v378 = vunpack.c.l.b16 %v294
        %v379 = vunpack.c.l.b16 %v295
        %v380 = vunpack.c.l.b16 %v296
        %v381 = vunpack.c.l.b16 %v297
        %v382 = vunpack.c.l.b16 %v298
        %v383 = vunpack.c.l.b16 %v299
        %v384 = vunpack.c.l.b16 %v300
        %v385 = vunpack.c.l.b16 %v301
        %v386 = vunpack.c.l.b16 %v302
        %v387 = vunpack.c.l.b16 %v303
        %v388 = vunpack.c.l.b16 %v304
        %v389 = vunpack.c.l.b16 %v305
        %v390 = vunpack.c.l.b16 %v306
        %v391 = vunpack.c.l.b16 %v307
        %v392 = vunpack.c.l.b16 %v308
        %v393 = vunpack.c.l.b16 %v309
        %v394 = vunpack.c.l.b16 %v310
        %v395 = vunpack.c.l.b16 %v311
        %v396 = vunpack.c.l.b16 %v312
        %v397 = vunpack.c.l.b16 %v313
        %v398 = vunpack.c.l.b16 %v314
        %v399 = vunpack.c.l.b16 %v315
        %v400 = vunpack.c.l.b16 %v316
        %v401 = vunpack.c.l.b16 %v317
        %v402 = vunpack.c.l.b16 %v318
        %v403 = vunpack.c.l.b16 %v319
        %v404 = vunpack.c.l.b16 %v320
        %v405 = vpack.c.b16 %v374, %v373
        %v406 = vpack.c.b16 %v376, %v375
        %v407 = vpack.c.b16 %v378, %v377
        %v408 = vpack.c.b16 %v380, %v379
        %v409 = vpack.c.b16 %v382, %v381
        %v410 = vpack.c.b16 %v384, %v383
        %v411 = vpack.c.b16 %v386, %v385
        %v412 = vpack.c.b16 %v388, %v387
        %v413 = vpack.c.b16 %v390, %v389
        %v414 = vpack.c.b16 %v392, %v391
        %v415 = vpack.c.b16 %v394, %v393
        %v416 = vpack.c.b16 %v396, %v395
        %v417 = vpack.c.b16 %v398, %v397
        %v418 = vpack.c.b16 %v400, %v399
        %v419 = vpack.c.b16 %v402, %v401
        %v420 = vpack.c.b16 %v404, %v403
        %437 = vmatprep.subr.bf16.mxu0 0
        %438 = vmatpush1.bf16.msra.mxu0 %v412
        %439 = vmatprep.subr.bf16.mxu0 0
        %440 = vmatpush1.bf16.msra.mxu0 %v411
        %441 = vmatprep.subr.bf16.mxu0 0
        %442 = vmatpush1.bf16.msra.mxu0 %v410
        %443 = vmatprep.subr.bf16.mxu0 0
        %444 = vmatpush1.bf16.msra.mxu0 %v409
        %445 = vmatprep.subr.bf16.mxu0 0
        %446 = vmatpush1.bf16.msra.mxu0 %v408
        %447 = vmatprep.subr.bf16.mxu0 0
        %448 = vmatpush1.bf16.msra.mxu0 %v407
        %449 = vmatprep.subr.bf16.mxu0 0
        %450 = vmatpush1.bf16.msra.mxu0 %v406
        %451 = vmatprep.subr.bf16.mxu0 0
        %452 = vmatpush1.bf16.msra.mxu0 %v405
        %453 = vmatprep.subr.bf16.mxu0 0
        %454 = vmatpush2.bf16.msra.mxu0 %v420
        %455 = vmatprep.subr.bf16.mxu0 0
        %456 = vmatpush2.bf16.msra.mxu0 %v419
        %457 = vmatprep.subr.bf16.mxu0 0
        %458 = vmatpush2.bf16.msra.mxu0 %v418
        %459 = vmatprep.subr.bf16.mxu0 0
        %460 = vmatpush2.bf16.msra.mxu0 %v417
        %461 = vmatprep.subr.bf16.mxu0 0
        %462 = vmatpush2.bf16.msra.mxu0 %v416
        %463 = vmatprep.subr.bf16.mxu0 0
        %464 = vmatpush2.bf16.msra.mxu0 %v415
        %465 = vmatprep.subr.bf16.mxu0 0
        %466 = vmatpush2.bf16.msra.mxu0 %v414
        %467 = vmatprep.subr.bf16.mxu0 0
        %468 = vmatpush2.bf16.msra.mxu0 %v413
        %469 = vmatprep.mubr.bf16.mxu0 %v334
        %470 = vmatmul.mubr.bf16.gmra.mxu0 %v333
        %v471 = vpop.f32.mrf.mxu0
        %v472 = vadd.f32 0.0, %v471
        %v473 = vpop.f32.mrf.mxu0
        %v474 = vpop.f32.mrf.mxu0
        %v475 = vadd.f32 0.0, %v474
        %v476 = vpop.f32.mrf.mxu0
        %477 = vmatprep.mubr.bf16.mxu0 %v336
        %478 = vmatmul.mubr.bf16.gmra.mxu0 %v335
        %v479 = vpop.f32.mrf.mxu0
        %v480 = vadd.f32 0.0, %v479
        %v481 = vpop.f32.mrf.mxu0
        %v482 = vpop.f32.mrf.mxu0
        %v483 = vadd.f32 0.0, %v482
        %v484 = vpop.f32.mrf.mxu0
        %485 = vdwg.mxu0
        %v486 = vadd.f32 %v281, %v472
        %v487 = vadd.f32 %v282, %v475
        %v488 = vadd.f32 %v283, %v480
        %v489 = vadd.f32 %v284, %v483
        %490 = vst [vmem:[#allocation2] sm:$0xff] %v486
        %491 = vst [vmem:[#allocation2 + $0x8] sm:$0xff] %v487
        %492 = vst [vmem:[#allocation2 + $0x10] sm:$0xff] %v488
        %493 = vst [vmem:[#allocation2 + $0x18] sm:$0xff] %v489
        // Predicated region
        $region37: #{_lambda_.16} parent=27 // pred_check
          %p494 = pneg %p273
        $region38: #{_lambda_.16} parent=27 // pred_check_branch
          %496 = sbr.rel (%p494) target = $region40
        $region39: #{_lambda_.16} parent=27 // pred_region
          %v497 = vld [vmem:[#allocation2] sm:$0xff]
          %v498 = vld [vmem:[#allocation2 + $0x8] sm:$0xff]
          %v499 = vld [vmem:[#allocation2 + $0x10] sm:$0xff]
          %v500 = vld [vmem:[#allocation2 + $0x18] sm:$0xff]
          %501 = vst [vmem:[%s270] sm:$0xff] %v497
          %502 = vst [vmem:[%s270 + $0x8] sm:$0xff] %v498
          %503 = vst [vmem:[%s270 + $0x10] sm:$0xff] %v499
          %504 = vst [vmem:[%s270 + $0x18] sm:$0xff] %v500
        $region40: #{_lambda_.16} parent=27 // pred_fallthru
          _
        %s505 = smul.u32 4, %s23
        %p506 = scmp.lt.s32.totalorder %s22, 3
        %s507 = scalar_select %p506, %s22, 3
        %p508 = scmp.lt.s32.totalorder %s505, 3
        %s509 = scalar_select %p508, %s505, 3
        %p510 = scmp.lt.s32.totalorder %s24, 0
        %s511 = scalar_select %p510, %s24, 0
        %s512 = sadd.s32 %s511, %s509
        %s513 = smul.addr %s507, 4
        %s514 = sadd.s32 %s512, %s513
        %s515 = smul.addr %s514, 8
        %s516 = scalar_lea.vmem %s2, %s515
        // Predicated region
        $region41: #{_lambda_.16} parent=27 // pred_check
          %p517 = pneg %p124
        $region42: #{_lambda_.16} parent=27 // pred_check_branch
          %519 = sbr.rel (%p517) target = $region44
        $region43: #{_lambda_.16} parent=27 // pred_region
          %s520 = smul.u32 4, %s23
        $region44: #{_lambda_.16} parent=27 // pred_fallthru
          _
      $region28: #{_lambda_.16} parent=5 // pred_fallthru
        _
      %p521 = scmp.le.s32.totalorder 2, %s11
      // Predicated region
      $region45: #{_lambda_.16} parent=5 // pred_check
        %p522 = pneg %p521
      $region46: #{_lambda_.16} parent=5 // pred_check_branch
        %524 = sbr.rel (%p522) target = $region48
      $region47: #{_lambda_.16} parent=5 // pred_region
        %s525 = ssub.s32 %s11, 2
        // Predicated region
        $region49: #{_lambda_.16} parent=47 // pred_check
          %p526 = pneg %p130
        $region50: #{_lambda_.16} parent=47 // pred_check_branch
          %528 = sbr.rel (%p526) target = $region52
        $region51: #{_lambda_.16} parent=47 // pred_region
          %s529 = smul.u32 4, %s27
          %p530 = scmp.lt.s32.totalorder %s26, 3
          %s531 = scalar_select %p530, %s26, 3
          %p532 = scmp.lt.s32.totalorder %s529, 3
          %s533 = scalar_select %p532, %s529, 3
          %p534 = scmp.lt.s32.totalorder %s28, 0
          %s535 = scalar_select %p534, %s28, 0
          %s536 = sadd.s32 %s535, %s533
          %s537 = smul.addr %s531, 4
          %s538 = sadd.s32 %s536, %s537
          %s539 = smul.addr %s538, 8
          %s540 = scalar_lea.vmem %s2, %s539
        $region52: #{_lambda_.16} parent=47 // pred_fallthru
          _
      $region48: #{_lambda_.16} parent=5 // pred_fallthru
        _
    $region6: #{_lambda_.16} parent=1 // loop_footer
      %s15 = sadd.s32 1, %s11
    $region7: #{_lambda_.16} parent=1 // loop_footer_branch
      %10 = sbr.rel target = $region3
    $region8: #{_lambda_.16} parent=1 // loop_exit
      _
    %541 = vsyncpa [#allocation4], 1
    %s542 = scalar_lea.sflag [#allocation4], 1
    %543 = vsyncpa %s542, 1

// kernel: _lambda_.18
$region0: #{_lambda_.18}
  #allocation0 [shape = 'u32[]', space=smem, size = 0x4, offset = 0x4, fixed_abs, tag = 'smem constant byte address 0x4 - core index']
  #allocation1 [shape = 'u32[144,128]{1,0:T(1,128)}', space=vmem, size = 0x12000, scoped, tag = 'internal scratch']
  %s0 = inlined_call_operand.vmem [shape: f32[128,128], index: 0, kind: input, shape index: {}]
  %s1 = inlined_call_operand.vmem [shape: f32[1,128], index: 1, kind: input, shape index: {}]
  %s2 = inlined_call_operand.vmem [shape: f32[1,128], index: 2, kind: input, shape index: {}]
  %s3 = inlined_call_operand.hbm [shape: f32[1,128], index: 3, kind: input, shape index: {}]
  %s4 = inlined_call_operand.hbm [shape: f32[1,128], index: 4, kind: input, shape index: {}]
  %s5 = inlined_call_operand.vmem [shape: bf16[128,128], index: 5, kind: output, shape index: {}]
  %s6 = sld [smem:[#allocation0]]
  $region38: #{_lambda_.18} parent=0
    _
  %s8 = ssub.s32 1, %s6
  %s9 = scalar_select 0, %s8, %s6
  $region1: #{_lambda_.18} parent=0
    #allocation2 [shape = 'u8[512]{0}', space=vmem, size = 0x400, scoped, tag = 'input window, operand 3, single buffered']
    #allocation3 [shape = 's32[1]{0}', space=sflag, size = 0x4, scoped, tag = 'scoped memory for _lambda_.18']
    #allocation4 [shape = 'u8[512]{0}', space=vmem, size = 0x400, scoped, tag = 'input window, operand 4, single buffered']
    #allocation5 [shape = 's32[1]{0}', space=sflag, size = 0x4, scoped, tag = 'scoped memory for _lambda_.18']
    %10 = vsyncpa [#allocation3], 0
    %11 = vsyncpa [#allocation5], 0
    // Predicated region
    $region2: #{_lambda_.18} parent=1 // pred_check
      _
    $region3: #{_lambda_.18} parent=1 // pred_check_branch
      %13 = sbr.rel (0) target = $region5
    $region4: #{_lambda_.18} parent=1 // pred_region
      _
    $region5: #{_lambda_.18} parent=1 // pred_fallthru
      _
    // Predicated region
    $region6: #{_lambda_.18} parent=1 // pred_check
      _
    $region7: #{_lambda_.18} parent=1 // pred_check_branch
      %15 = sbr.rel (0) target = $region9
    $region8: #{_lambda_.18} parent=1 // pred_region
      _
    $region9: #{_lambda_.18} parent=1 // pred_fallthru
      _
    // Predicated region
    $region10: #{_lambda_.18} parent=1 // pred_check
      _
    $region11: #{_lambda_.18} parent=1 // pred_check_branch
      %17 = sbr.rel (0) target = $region13
    $region12: #{_lambda_.18} parent=1 // pred_region
      _
    $region13: #{_lambda_.18} parent=1 // pred_fallthru
      _
    // Predicated region
    $region14: #{_lambda_.18} parent=1 // pred_check
      _
    $region15: #{_lambda_.18} parent=1 // pred_check_branch
      %19 = sbr.rel (0) target = $region17
    $region16: #{_lambda_.18} parent=1 // pred_region
      %s21 = ssub.s32 16, 16
      %22 = vsyncadd [#allocation3], %s21
      %s24 = sshll.u32 [#allocation2], 4
      %s25 = int_to_ptr.vmem [resolvable:$true] %s24
      %27 = dma.hbm_to_vmem [thread:$0]  %s3, 16, %s25, [#allocation3]
    $region17: #{_lambda_.18} parent=1 // pred_fallthru
      _
    // Predicated region
    $region18: #{_lambda_.18} parent=1 // pred_check
      _
    $region19: #{_lambda_.18} parent=1 // pred_check_branch
      %29 = sbr.rel (0) target = $region21
    $region20: #{_lambda_.18} parent=1 // pred_region
      %s31 = ssub.s32 16, 16
      %32 = vsyncadd [#allocation5], %s31
      %s34 = sshll.u32 [#allocation4], 4
      %s35 = int_to_ptr.vmem [resolvable:$true] %s34
      %37 = dma.hbm_to_vmem [thread:$0]  %s4, 16, %s35, [#allocation5]
    $region21: #{_lambda_.18} parent=1 // pred_fallthru
      _
    // Predicated region
    $region22: #{_lambda_.18} parent=1 // pred_check
      _
    $region23: #{_lambda_.18} parent=1 // pred_check_branch
      %39 = sbr.rel (0) target = $region25
    $region24: #{_lambda_.18} parent=1 // pred_region
      %40 = dma.done [#allocation3], 16
    $region25: #{_lambda_.18} parent=1 // pred_fallthru
      _
    // Predicated region
    $region26: #{_lambda_.18} parent=1 // pred_check
      _
    $region27: #{_lambda_.18} parent=1 // pred_check_branch
      %42 = sbr.rel (0) target = $region29
    $region28: #{_lambda_.18} parent=1 // pred_region
      %43 = dma.done [#allocation5], 16
    $region29: #{_lambda_.18} parent=1 // pred_fallthru
      _
    %v44 = vld [vmem:[%s0] sm:$0xff]
    %v45 = vld [vmem:[%s0 + $0x8] sm:$0xff]
    %v46 = vld [vmem:[%s0 + $0x10] sm:$0xff]
    %v47 = vld [vmem:[%s0 + $0x18] sm:$0xff]
    %v48 = vld [vmem:[%s0 + $0x20] sm:$0xff]
    %v49 = vld [vmem:[%s0 + $0x28] sm:$0xff]
    %v50 = vld [vmem:[%s0 + $0x30] sm:$0xff]
    %v51 = vld [vmem:[%s0 + $0x38] sm:$0xff]
    %v52 = vld [vmem:[%s0 + $0x40] sm:$0xff]
    %v53 = vld [vmem:[%s0 + $0x48] sm:$0xff]
    %v54 = vld [vmem:[%s0 + $0x50] sm:$0xff]
    %v55 = vld [vmem:[%s0 + $0x58] sm:$0xff]
    %v56 = vld [vmem:[%s0 + $0x60] sm:$0xff]
    %v57 = vld [vmem:[%s0 + $0x68] sm:$0xff]
    %v58 = vld [vmem:[%s0 + $0x70] sm:$0xff]
    %v59 = vld [vmem:[%s0 + $0x78] sm:$0xff]
    %v60 = vld [vmem:[%s1] sm:$0x1]
    %v62 = vlaneseq
    %v63 = vshrl.u32 %v62, 7
    %v64 = vsub.s32 0, %v63
    %v65 = vrot.slane %v60, %v64
    %v67 = vsub.f32 %v44, %v65
    %v68 = vsub.f32 %v45, %v65
    %v69 = vsub.f32 %v46, %v65
    %v70 = vsub.f32 %v47, %v65
    %v71 = vsub.f32 %v48, %v65
    %v72 = vsub.f32 %v49, %v65
    %v73 = vsub.f32 %v50, %v65
    %v74 = vsub.f32 %v51, %v65
    %v75 = vsub.f32 %v52, %v65
    %v76 = vsub.f32 %v53, %v65
    %v77 = vsub.f32 %v54, %v65
    %v78 = vsub.f32 %v55, %v65
    %v79 = vsub.f32 %v56, %v65
    %v80 = vsub.f32 %v57, %v65
    %v81 = vsub.f32 %v58, %v65
    %v82 = vsub.f32 %v59, %v65
    %v83 = vld [vmem:[%s2] sm:$0x1]
    %v85 = vlaneseq
    %v86 = vshrl.u32 %v85, 7
    %v87 = vsub.s32 0, %v86
    %v88 = vrot.slane %v83, %v87
    %v90 = vmul.f32 %v67, %v88
    %v91 = vmul.f32 %v68, %v88
    %v92 = vmul.f32 %v69, %v88
    %v93 = vmul.f32 %v70, %v88
    %v94 = vmul.f32 %v71, %v88
    %v95 = vmul.f32 %v72, %v88
    %v96 = vmul.f32 %v73, %v88
    %v97 = vmul.f32 %v74, %v88
    %v98 = vmul.f32 %v75, %v88
    %v99 = vmul.f32 %v76, %v88
    %v100 = vmul.f32 %v77, %v88
    %v101 = vmul.f32 %v78, %v88
    %v102 = vmul.f32 %v79, %v88
    %v103 = vmul.f32 %v80, %v88
    %v104 = vmul.f32 %v81, %v88
    %v105 = vmul.f32 %v82, %v88
    %v106 = vld [vmem:[#allocation2] sm:$0x1]
    %v108 = vlaneseq
    %v109 = vshrl.u32 %v108, 7
    %v110 = vsub.s32 0, %v109
    %v111 = vrot.slane %v106, %v110
    %v113 = vmul.f32 %v90, %v111
    %v114 = vmul.f32 %v91, %v111
    %v115 = vmul.f32 %v92, %v111
    %v116 = vmul.f32 %v93, %v111
    %v117 = vmul.f32 %v94, %v111
    %v118 = vmul.f32 %v95, %v111
    %v119 = vmul.f32 %v96, %v111
    %v120 = vmul.f32 %v97, %v111
    %v121 = vmul.f32 %v98, %v111
    %v122 = vmul.f32 %v99, %v111
    %v123 = vmul.f32 %v100, %v111
    %v124 = vmul.f32 %v101, %v111
    %v125 = vmul.f32 %v102, %v111
    %v126 = vmul.f32 %v103, %v111
    %v127 = vmul.f32 %v104, %v111
    %v128 = vmul.f32 %v105, %v111
    %v129 = vld [vmem:[#allocation4] sm:$0x1]
    %v131 = vlaneseq
    %v132 = vshrl.u32 %v131, 7
    %v133 = vsub.s32 0, %v132
    %v134 = vrot.slane %v129, %v133
    %v136 = vadd.f32 %v113, %v134
    %v137 = vadd.f32 %v114, %v134
    %v138 = vadd.f32 %v115, %v134
    %v139 = vadd.f32 %v116, %v134
    %v140 = vadd.f32 %v117, %v134
    %v141 = vadd.f32 %v118, %v134
    %v142 = vadd.f32 %v119, %v134
    %v143 = vadd.f32 %v120, %v134
    %v144 = vadd.f32 %v121, %v134
    %v145 = vadd.f32 %v122, %v134
    %v146 = vadd.f32 %v123, %v134
    %v147 = vadd.f32 %v124, %v134
    %v148 = vadd.f32 %v125, %v134
    %v149 = vadd.f32 %v126, %v134
    %v150 = vadd.f32 %v127, %v134
    %v151 = vadd.f32 %v128, %v134
    %v152 = vmax.f32 %v136, 0.0
    %v153 = vmax.f32 %v137, 0.0
    %v154 = vmax.f32 %v138, 0.0
    %v155 = vmax.f32 %v139, 0.0
    %v156 = vmax.f32 %v140, 0.0
    %v157 = vmax.f32 %v141, 0.0
    %v158 = vmax.f32 %v142, 0.0
    %v159 = vmax.f32 %v143, 0.0
    %v160 = vmax.f32 %v144, 0.0
    %v161 = vmax.f32 %v145, 0.0
    %v162 = vmax.f32 %v146, 0.0
    %v163 = vmax.f32 %v147, 0.0
    %v164 = vmax.f32 %v148, 0.0
    %v165 = vmax.f32 %v149, 0.0
    %v166 = vmax.f32 %v150, 0.0
    %v167 = vmax.f32 %v151, 0.0
    %v168 = vpack.c.bf16 %v153, %v152
    %v169 = vpack.c.bf16 %v155, %v154
    %v170 = vpack.c.bf16 %v157, %v156
    %v171 = vpack.c.bf16 %v159, %v158
    %v172 = vpack.c.bf16 %v161, %v160
    %v173 = vpack.c.bf16 %v163, %v162
    %v174 = vpack.c.bf16 %v165, %v164
    %v175 = vpack.c.bf16 %v167, %v166
    %v184 = vunpack.c.l.b16 %v168
    %v185 = vunpack.c.h.b16 %v168
    %v186 = vunpack.c.l.b16 %v169
    %v187 = vunpack.c.h.b16 %v169
    %v188 = vunpack.c.l.b16 %v170
    %v189 = vunpack.c.h.b16 %v170
    %v190 = vunpack.c.l.b16 %v171
    %v191 = vunpack.c.h.b16 %v171
    %v192 = vunpack.c.l.b16 %v172
    %v193 = vunpack.c.h.b16 %v172
    %v194 = vunpack.c.l.b16 %v173
    %v195 = vunpack.c.h.b16 %v173
    %v196 = vunpack.c.l.b16 %v174
    %v197 = vunpack.c.h.b16 %v174
    %v198 = vunpack.c.l.b16 %v175
    %v199 = vunpack.c.h.b16 %v175
    %v200 = vpack.c.b16 %v184, %v184
    %v201 = vpack.c.b16 %v185, %v185
    %v202 = vpack.c.b16 %v186, %v186
    %v203 = vpack.c.b16 %v187, %v187
    %v204 = vpack.c.b16 %v188, %v188
    %v205 = vpack.c.b16 %v189, %v189
    %v206 = vpack.c.b16 %v190, %v190
    %v207 = vpack.c.b16 %v191, %v191
    %v208 = vpack.c.b16 %v192, %v192
    %v209 = vpack.c.b16 %v193, %v193
    %v210 = vpack.c.b16 %v194, %v194
    %v211 = vpack.c.b16 %v195, %v195
    %v212 = vpack.c.b16 %v196, %v196
    %v213 = vpack.c.b16 %v197, %v197
    %v214 = vpack.c.b16 %v198, %v198
    %v215 = vpack.c.b16 %v199, %v199
    %232 = vst [vmem:[%s5] sm:$0xf] %v200
    %233 = vst [vmem:[%s5 + $0x4] sm:$0xf] %v201
    %234 = vst [vmem:[%s5 + $0x8] sm:$0xf] %v202
    %235 = vst [vmem:[%s5 + $0xc] sm:$0xf] %v203
    %236 = vst [vmem:[%s5 + $0x10] sm:$0xf] %v204
    %237 = vst [vmem:[%s5 + $0x14] sm:$0xf] %v205
    %238 = vst [vmem:[%s5 + $0x18] sm:$0xf] %v206
    %239 = vst [vmem:[%s5 + $0x1c] sm:$0xf] %v207
    %240 = vst [vmem:[%s5 + $0x20] sm:$0xf] %v208
    %241 = vst [vmem:[%s5 + $0x24] sm:$0xf] %v209
    %242 = vst [vmem:[%s5 + $0x28] sm:$0xf] %v210
    %243 = vst [vmem:[%s5 + $0x2c] sm:$0xf] %v211
    %244 = vst [vmem:[%s5 + $0x30] sm:$0xf] %v212
    %245 = vst [vmem:[%s5 + $0x34] sm:$0xf] %v213
    %246 = vst [vmem:[%s5 + $0x38] sm:$0xf] %v214
    %247 = vst [vmem:[%s5 + $0x3c] sm:$0xf] %v215
    // Predicated region
    $region30: #{_lambda_.18} parent=1 // pred_check
      _
    $region31: #{_lambda_.18} parent=1 // pred_check_branch
      %249 = sbr.rel (0) target = $region33
    $region32: #{_lambda_.18} parent=1 // pred_region
      _
    $region33: #{_lambda_.18} parent=1 // pred_fallthru
      _
    // Predicated region
    $region34: #{_lambda_.18} parent=1 // pred_check
      _
    $region35: #{_lambda_.18} parent=1 // pred_check_branch
      %251 = sbr.rel (0) target = $region37
    $region36: #{_lambda_.18} parent=1 // pred_region
      _
    $region37: #{_lambda_.18} parent=1 // pred_fallthru
      _
    %252 = vsyncpa [#allocation3], 1
    %253 = vsyncpa [#allocation5], 1

// kernel: _lambda_.20
$region0: #{_lambda_.20}
  #allocation0 [shape = 'u32[]', space=smem, size = 0x4, offset = 0x4, fixed_abs, tag = 'smem constant byte address 0x4 - core index']
  #allocation1 [shape = 'u32[144,128]{1,0:T(1,128)}', space=vmem, size = 0x12000, scoped, tag = 'internal scratch']
  #allocation2 [shape = 'f32[1,128]{1,0:T(1,128)}', space=vmem, size = 0x200, scoped, tag = 'scratch operand']
  #allocation3 [shape = 'f32[1,128]{1,0:T(1,128)}', space=vmem, size = 0x200, scoped, tag = 'scratch operand']
  %s0 = inlined_call_operand.vmem [shape: f32[512,128], index: 0, kind: input, shape index: {}]
  %s1 = inlined_call_operand.vmem [shape: f32[1,128], index: 1, kind: output, shape index: {0}]
  %s2 = inlined_call_operand.vmem [shape: f32[1,128], index: 2, kind: output, shape index: {1}]
  %3 = xla_tuple %s1, %s2
  %s4 = sld [smem:[#allocation0]]
  $region53: #{_lambda_.20} parent=0
    _
  %s6 = ssub.s32 1, %s4
  %s7 = scalar_select 0, %s6, %s4
  loop: start=0, step=1, limit=4
  $region2: #{_lambda_.20} parent=0 // loop_pre_header
    _
  $region3: #{_lambda_.20} parent=0 // loop_header
    %s9 = sphi 0, %s13
    %p10 = scmp.ge.s32.totalorder %s9, 4
    %s16 = sphi 0, %s28
    %s17 = sphi 0, %s24
    %s18 = sphi 0, %s16
    %s19 = sphi 0, %s17
    %s20 = sphi 0, %s18
    %s21 = sphi 0, %s19
    %s33 = sphi 0, %s35
    %s36 = sphi 0, %s33
    %s37 = sphi 0, %s36
    %s53 = sphi 0, %s37
    %s59 = sphi 0, %s61
    %s62 = sphi 0, %s59
    %s63 = sphi 0, %s62
    %s79 = sphi 0, %s63
    %s85 = sphi 0, %s87
    %s88 = sphi 0, %s85
    %s89 = sphi 0, %s88
    %s105 = sphi 0, %s89
  $region4: #{_lambda_.20} parent=0 // loop_header_branch
    %12 = sbr.rel (%p10) target = $region8
  $region5: #{_lambda_.20} parent=0 // loop_body
    %s14 = ssub.s32 %s9, 1
    %s15 = ssub.s32 %s9, 2
    %s22 = sadd.s32 1, %s17
    %p23 = scmp.ge.s32.totalorder %s22, 2
    %s24 = scalar_select %p23, 0, %s22
    %s25 = sadd.s32 1, %s16
    %s26 = scalar_select %p23, %s25, %s16
    %p27 = scmp.ge.s32.totalorder %s26, 1
    %s28 = scalar_select %p27, 0, %s26
    %s29 = ssub.s32 %s17, %s24
    %s30 = ssub.s32 %s16, %s28
    %s31 = sor.u32 %s29, %s30
    %p32 = scmp.eq.s32.totalorder %s31, 0
    %s34 = sadd.s32 %s33, 1
    %s35 = scalar_select %p32, %s33, %s34
    %p38 = pneg %p32
    %p39 = scmp.eq.s32.totalorder %s9, 1
    %p40 = por %p38, %p39
    %p41 = scmp.ne.s32.totalorder %s33, %s36
    %p42 = scmp.eq.s32.totalorder %s9, 0
    %p43 = por %p41, %p42
    %p44 = scmp.ne.s32.totalorder %s33, %s36
    %p45 = scmp.eq.s32.totalorder %s14, 1
    %p46 = por %p44, %p45
    %p47 = scmp.ne.s32.totalorder %s36, %s37
    %p48 = scmp.eq.s32.totalorder %s14, 0
    %p49 = por %p47, %p48
    %p50 = scmp.ne.s32.totalorder %s36, %s37
    %p51 = scmp.eq.s32.totalorder %s15, 1
    %p52 = por %p50, %p51
    %p54 = scmp.ne.s32.totalorder %s37, %s53
    %p55 = scmp.eq.s32.totalorder %s15, 0
    %p56 = por %p54, %p55
    %s57 = ssub.s32 %s16, %s28
    %p58 = scmp.eq.s32.totalorder %s57, 0
    %s60 = sadd.s32 %s59, 1
    %s61 = scalar_select %p58, %s59, %s60
    %p64 = pneg %p58
    %p65 = scmp.eq.s32.totalorder %s9, 1
    %p66 = por %p64, %p65
    %p67 = scmp.ne.s32.totalorder %s59, %s62
    %p68 = scmp.eq.s32.totalorder %s9, 0
    %p69 = por %p67, %p68
    %p70 = scmp.ne.s32.totalorder %s59, %s62
    %p71 = scmp.eq.s32.totalorder %s14, 1
    %p72 = por %p70, %p71
    %p73 = scmp.ne.s32.totalorder %s62, %s63
    %p74 = scmp.eq.s32.totalorder %s14, 0
    %p75 = por %p73, %p74
    %p76 = scmp.ne.s32.totalorder %s62, %s63
    %p77 = scmp.eq.s32.totalorder %s15, 1
    %p78 = por %p76, %p77
    %p80 = scmp.ne.s32.totalorder %s63, %s79
    %p81 = scmp.eq.s32.totalorder %s15, 0
    %p82 = por %p80, %p81
    %s83 = ssub.s32 %s16, %s28
    %p84 = scmp.eq.s32.totalorder %s83, 0
    %s86 = sadd.s32 %s85, 1
    %s87 = scalar_select %p84, %s85, %s86
    %p90 = pneg %p84
    %p91 = scmp.eq.s32.totalorder %s9, 1
    %p92 = por %p90, %p91
    %p93 = scmp.ne.s32.totalorder %s85, %s88
    %p94 = scmp.eq.s32.totalorder %s9, 0
    %p95 = por %p93, %p94
    %p96 = scmp.ne.s32.totalorder %s85, %s88
    %p97 = scmp.eq.s32.totalorder %s14, 1
    %p98 = por %p96, %p97
    %p99 = scmp.ne.s32.totalorder %s88, %s89
    %p100 = scmp.eq.s32.totalorder %s14, 0
    %p101 = por %p99, %p100
    %p102 = scmp.ne.s32.totalorder %s88, %s89
    %p103 = scmp.eq.s32.totalorder %s15, 1
    %p104 = por %p102, %p103
    %p106 = scmp.ne.s32.totalorder %s89, %s105
    %p107 = scmp.eq.s32.totalorder %s15, 0
    %p108 = por %p106, %p107
    %p109 = scmp.le.s32.totalorder 1, %s9
    %p110 = scmp.lt.s32.totalorder %s9, 3
    %p111 = pnand %p109, %p110
    %p112 = pneg %p111
    // Predicated region
    $region9: #{_lambda_.20} parent=5 // pred_check
      _
    $region10: #{_lambda_.20} parent=5 // pred_check_branch
      %114 = sbr.rel (%p111) target = $region12
    $region11: #{_lambda_.20} parent=5 // pred_region
      %s115 = ssub.s32 %s9, 1
    $region12: #{_lambda_.20} parent=5 // pred_fallthru
      _
    %p116 = scmp.lt.s32.totalorder %s9, 2
    // Predicated region
    $region13: #{_lambda_.20} parent=5 // pred_check
      %p117 = pneg %p116
    $region14: #{_lambda_.20} parent=5 // pred_check_branch
      %119 = sbr.rel (%p117) target = $region16
    $region15: #{_lambda_.20} parent=5 // pred_region
      // Predicated region
      $region17: #{_lambda_.20} parent=15 // pred_check
        %p120 = pneg %p43
      $region18: #{_lambda_.20} parent=15 // pred_check_branch
        %122 = sbr.rel (%p120) target = $region20
      $region19: #{_lambda_.20} parent=15 // pred_region
        %s123 = smul.u32 32, %s17
        %p124 = scmp.lt.s32.totalorder %s123, 63
        %s125 = scalar_select %p124, %s123, 63
        %p126 = scmp.lt.s32.totalorder %s16, 0
        %s127 = scalar_select %p126, %s16, 0
        %s128 = sadd.s32 %s127, %s125
        %s129 = smul.addr %s128, 8
        %s130 = scalar_lea.vmem %s0, %s129
        %s131 = smul.u32 32, %s17
      $region20: #{_lambda_.20} parent=15 // pred_fallthru
        _
    $region16: #{_lambda_.20} parent=5 // pred_fallthru
      _
    %p132 = scmp.le.s32.totalorder 1, %s9
    %p133 = scmp.lt.s32.totalorder %s9, 3
    %p134 = pnand %p132, %p133
    %p135 = pneg %p134
    // Predicated region
    $region21: #{_lambda_.20} parent=5 // pred_check
      _
    $region22: #{_lambda_.20} parent=5 // pred_check_branch
      %137 = sbr.rel (%p134) target = $region24
    $region23: #{_lambda_.20} parent=5 // pred_region
      %s138 = ssub.s32 %s9, 1
      %s139 = smul.u32 32, %s19
      %p140 = scmp.lt.s32.totalorder %s139, 63
      %s141 = scalar_select %p140, %s139, 63
      %p142 = scmp.lt.s32.totalorder %s18, 0
      %s143 = scalar_select %p142, %s18, 0
      %s144 = sadd.s32 %s143, %s141
      %s145 = smul.addr %s144, 8
      %s146 = scalar_lea.vmem %s0, %s145
      %p147 = pneg %p49
      %p148 = pneg %p46
      %p149 = pneg %p75
      %p150 = pneg %p72
      %p151 = scmp.lt.s32.totalorder %s18, 0
      %s152 = scalar_select %p151, %s18, 0
      %s153 = scalar_lea.vmem %s1, %s152
      %p154 = pneg %p101
      %p155 = pneg %p98
      %p156 = scmp.lt.s32.totalorder %s18, 0
      %s157 = scalar_select %p156, %s18, 0
      %s158 = scalar_lea.vmem %s2, %s157
      %s159 = smul.u32 32, %s19
      %p160 = scmp.lt.s32.totalorder %s159, 63
      %s161 = scalar_select %p160, %s159, 63
      %p162 = scmp.lt.s32.totalorder %s18, 0
      %s163 = scalar_select %p162, %s18, 0
      %s164 = sadd.s32 %s163, %s161
      %s165 = smul.addr %s164, 8
      %s166 = scalar_lea.vmem %s0, %s165
      %s167 = smul.u32 32, %s19
      %p168 = scmp.lt.s32.totalorder %s18, 0
      %s169 = scalar_select %p168, %s18, 0
      %s170 = scalar_lea.vmem %s1, %s169
      %p171 = scmp.lt.s32.totalorder %s18, 0
      %s172 = scalar_select %p171, %s18, 0
      %s173 = scalar_lea.vmem %s2, %s172
      %p174 = scmp.eq.s32.totalorder %s19, 0
      // Predicated region
      $region25: #{_lambda_.20} parent=23 // pred_check
        %p175 = pneg %p174
      $region26: #{_lambda_.20} parent=23 // pred_check_branch
        %177 = sbr.rel (%p175) target = $region28
      $region27: #{_lambda_.20} parent=23 // pred_region
        %178 = vst [vmem:[#allocation2] sm:$0x1] 0.0
        %179 = vst [vmem:[#allocation3] sm:$0x1] 0.0
      $region28: #{_lambda_.20} parent=23 // pred_fallthru
        _
      %v180 = vld [vmem:[%s166] sm:$0xff]
      %v181 = vld [vmem:[%s166 + $0x8] sm:$0xff]
      %v182 = vld [vmem:[%s166 + $0x10] sm:$0xff]
      %v183 = vld [vmem:[%s166 + $0x18] sm:$0xff]
      %v184 = vld [vmem:[%s166 + $0x20] sm:$0xff]
      %v185 = vld [vmem:[%s166 + $0x28] sm:$0xff]
      %v186 = vld [vmem:[%s166 + $0x30] sm:$0xff]
      %v187 = vld [vmem:[%s166 + $0x38] sm:$0xff]
      %v188 = vld [vmem:[%s166 + $0x40] sm:$0xff]
      %v189 = vld [vmem:[%s166 + $0x48] sm:$0xff]
      %v190 = vld [vmem:[%s166 + $0x50] sm:$0xff]
      %v191 = vld [vmem:[%s166 + $0x58] sm:$0xff]
      %v192 = vld [vmem:[%s166 + $0x60] sm:$0xff]
      %v193 = vld [vmem:[%s166 + $0x68] sm:$0xff]
      %v194 = vld [vmem:[%s166 + $0x70] sm:$0xff]
      %v195 = vld [vmem:[%s166 + $0x78] sm:$0xff]
      %v196 = vld [vmem:[%s166 + $0x80] sm:$0xff]
      %v197 = vld [vmem:[%s166 + $0x88] sm:$0xff]
      %v198 = vld [vmem:[%s166 + $0x90] sm:$0xff]
      %v199 = vld [vmem:[%s166 + $0x98] sm:$0xff]
      %v200 = vld [vmem:[%s166 + $0xa0] sm:$0xff]
      %v201 = vld [vmem:[%s166 + $0xa8] sm:$0xff]
      %v202 = vld [vmem:[%s166 + $0xb0] sm:$0xff]
      %v203 = vld [vmem:[%s166 + $0xb8] sm:$0xff]
      %v204 = vld [vmem:[%s166 + $0xc0] sm:$0xff]
      %v205 = vld [vmem:[%s166 + $0xc8] sm:$0xff]
      %v206 = vld [vmem:[%s166 + $0xd0] sm:$0xff]
      %v207 = vld [vmem:[%s166 + $0xd8] sm:$0xff]
      %v208 = vld [vmem:[%s166 + $0xe0] sm:$0xff]
      %v209 = vld [vmem:[%s166 + $0xe8] sm:$0xff]
      %v210 = vld [vmem:[%s166 + $0xf0] sm:$0xff]
      %v211 = vld [vmem:[%s166 + $0xf8] sm:$0xff]
      %v212 = vld [vmem:[#allocation2] sm:$0x1]
      %v213 = vadd.f32 %v180, %v181
      %v214 = vadd.f32 %v213, %v182
      %v215 = vadd.f32 %v214, %v183
      %v216 = vadd.f32 %v215, %v184
      %v217 = vadd.f32 %v216, %v185
      %v218 = vadd.f32 %v217, %v186
      %v219 = vadd.f32 %v218, %v187
      %v220 = vadd.f32 %v219, %v188
      %v221 = vadd.f32 %v220, %v189
      %v222 = vadd.f32 %v221, %v190
      %v223 = vadd.f32 %v222, %v191
      %v224 = vadd.f32 %v223, %v192
      %v225 = vadd.f32 %v224, %v193
      %v226 = vadd.f32 %v225, %v194
      %v227 = vadd.f32 %v226, %v195
      %v228 = vadd.f32 %v227, %v196
      %v229 = vadd.f32 %v228, %v197
      %v230 = vadd.f32 %v229, %v198
      %v231 = vadd.f32 %v230, %v199
      %v232 = vadd.f32 %v231, %v200
      %v233 = vadd.f32 %v232, %v201
      %v234 = vadd.f32 %v233, %v202
      %v235 = vadd.f32 %v234, %v203
      %v236 = vadd.f32 %v235, %v204
      %v237 = vadd.f32 %v236, %v205
      %v238 = vadd.f32 %v237, %v206
      %v239 = vadd.f32 %v238, %v207
      %v240 = vadd.f32 %v239, %v208
      %v241 = vadd.f32 %v240, %v209
      %v242 = vadd.f32 %v241, %v210
      %v243 = vadd.f32 %v242, %v211
      %v244 = vrot.slane %v243, 4
      %v245 = vadd.f32 %v243, %v244
      %v246 = vrot.slane %v245, 2
      %v247 = vadd.f32 %v245, %v246
      %v248 = vrot.slane %v247, 1
      %v249 = vadd.f32 %v247, %v248
      %v250 = vadd.f32 %v212, %v249
      %251 = vst [vmem:[#allocation2] sm:$0x1] %v250
      %v252 = vld [vmem:[#allocation3] sm:$0x1]
      %v253 = vmul.f32 %v180, %v180
      %v254 = vmul.f32 %v181, %v181
      %v255 = vmul.f32 %v182, %v182
      %v256 = vmul.f32 %v183, %v183
      %v257 = vmul.f32 %v184, %v184
      %v258 = vmul.f32 %v185, %v185
      %v259 = vmul.f32 %v186, %v186
      %v260 = vmul.f32 %v187, %v187
      %v261 = vmul.f32 %v188, %v188
      %v262 = vmul.f32 %v189, %v189
      %v263 = vmul.f32 %v190, %v190
      %v264 = vmul.f32 %v191, %v191
      %v265 = vmul.f32 %v192, %v192
      %v266 = vmul.f32 %v193, %v193
      %v267 = vmul.f32 %v194, %v194
      %v268 = vmul.f32 %v195, %v195
      %v269 = vmul.f32 %v196, %v196
      %v270 = vmul.f32 %v197, %v197
      %v271 = vmul.f32 %v198, %v198
      %v272 = vmul.f32 %v199, %v199
      %v273 = vmul.f32 %v200, %v200
      %v274 = vmul.f32 %v201, %v201
      %v275 = vmul.f32 %v202, %v202
      %v276 = vmul.f32 %v203, %v203
      %v277 = vmul.f32 %v204, %v204
      %v278 = vmul.f32 %v205, %v205
      %v279 = vmul.f32 %v206, %v206
      %v280 = vmul.f32 %v207, %v207
      %v281 = vmul.f32 %v208, %v208
      %v282 = vmul.f32 %v209, %v209
      %v283 = vmul.f32 %v210, %v210
      %v284 = vmul.f32 %v211, %v211
      %v285 = vadd.f32 %v253, %v254
      %v286 = vadd.f32 %v285, %v255
      %v287 = vadd.f32 %v286, %v256
      %v288 = vadd.f32 %v287, %v257
      %v289 = vadd.f32 %v288, %v258
      %v290 = vadd.f32 %v289, %v259
      %v291 = vadd.f32 %v290, %v260
      %v292 = vadd.f32 %v291, %v261
      %v293 = vadd.f32 %v292, %v262
      %v294 = vadd.f32 %v293, %v263
      %v295 = vadd.f32 %v294, %v264
      %v296 = vadd.f32 %v295, %v265
      %v297 = vadd.f32 %v296, %v266
      %v298 = vadd.f32 %v297, %v267
      %v299 = vadd.f32 %v298, %v268
      %v300 = vadd.f32 %v299, %v269
      %v301 = vadd.f32 %v300, %v270
      %v302 = vadd.f32 %v301, %v271
      %v303 = vadd.f32 %v302, %v272
      %v304 = vadd.f32 %v303, %v273
      %v305 = vadd.f32 %v304, %v274
      %v306 = vadd.f32 %v305, %v275
      %v307 = vadd.f32 %v306, %v276
      %v308 = vadd.f32 %v307, %v277
      %v309 = vadd.f32 %v308, %v278
      %v310 = vadd.f32 %v309, %v279
      %v311 = vadd.f32 %v310, %v280
      %v312 = vadd.f32 %v311, %v281
      %v313 = vadd.f32 %v312, %v282
      %v314 = vadd.f32 %v313, %v283
      %v315 = vadd.f32 %v314, %v284
      %v316 = vrot.slane %v315, 4
      %v317 = vadd.f32 %v315, %v316
      %v318 = vrot.slane %v317, 2
      %v319 = vadd.f32 %v317, %v318
      %v320 = vrot.slane %v319, 1
      %v321 = vadd.f32 %v319, %v320
      %v322 = vadd.f32 %v252, %v321
      %323 = vst [vmem:[#allocation3] sm:$0x1] %v322
      %p324 = scmp.eq.s32.totalorder %s19, 1
      // Predicated region
      $region29: #{_lambda_.20} parent=23 // pred_check
        %p325 = pneg %p324
      $region30: #{_lambda_.20} parent=23 // pred_check_branch
        %327 = sbr.rel (%p325) target = $region32
      $region31: #{_lambda_.20} parent=23 // pred_region
        %v328 = vld [vmem:[#allocation2] sm:$0x1]
        %v329 = vmul.f32 %v328, 0.001953125
        %v330 = vld [vmem:[#allocation3] sm:$0x1]
        %v331 = vmul.f32 %v330, 0.001953125
        %v332 = vmul.f32 %v329, %v329
        %v333 = vsub.f32 %v331, %v332
        %v334 = vmax.f32 %v333, 0.0
        %335 = vst [vmem:[%s170] sm:$0x1] %v329
        %v336 = vadd.f32 %v334, 1e-05
        %v337 = vrsqrt.pop %v336
        %338 = vst [vmem:[%s173] sm:$0x1] %v337
      $region32: #{_lambda_.20} parent=23 // pred_fallthru
        _
      %p339 = scmp.lt.s32.totalorder %s18, 0
      %s340 = scalar_select %p339, %s18, 0
      %s341 = scalar_lea.vmem %s1, %s340
      %p342 = scmp.lt.s32.totalorder %s18, 0
      %s343 = scalar_select %p342, %s18, 0
      %s344 = scalar_lea.vmem %s2, %s343
      // Predicated region
      $region33: #{_lambda_.20} parent=23 // pred_check
        %p345 = pneg %p72
      $region34: #{_lambda_.20} parent=23 // pred_check_branch
        %347 = sbr.rel (%p345) target = $region36
      $region35: #{_lambda_.20} parent=23 // pred_region
        _
      $region36: #{_lambda_.20} parent=23 // pred_fallthru
        _
      // Predicated region
      $region37: #{_lambda_.20} parent=23 // pred_check
        %p348 = pneg %p98
      $region38: #{_lambda_.20} parent=23 // pred_check_branch
        %350 = sbr.rel (%p348) target = $region40
      $region39: #{_lambda_.20} parent=23 // pred_region
        _
      $region40: #{_lambda_.20} parent=23 // pred_fallthru
        _
      // Predicated region
      $region41: #{_lambda_.20} parent=23 // pred_check
        %p351 = pneg %p72
      $region42: #{_lambda_.20} parent=23 // pred_check_branch
        %353 = sbr.rel (%p351) target = $region44
      $region43: #{_lambda_.20} parent=23 // pred_region
        %p354 = scmp.lt.s32.totalorder %s18, 0
        %s355 = scalar_select %p354, %s18, 0
        %s356 = scalar_lea.vmem %s1, %s355
      $region44: #{_lambda_.20} parent=23 // pred_fallthru
        _
      // Predicated region
      $region45: #{_lambda_.20} parent=23 // pred_check
        %p357 = pneg %p98
      $region46: #{_lambda_.20} parent=23 // pred_check_branch
        %359 = sbr.rel (%p357) target = $region48
      $region47: #{_lambda_.20} parent=23 // pred_region
        %p360 = scmp.lt.s32.totalorder %s18, 0
        %s361 = scalar_select %p360, %s18, 0
        %s362 = scalar_lea.vmem %s2, %s361
      $region48: #{_lambda_.20} parent=23 // pred_fallthru
        _
    $region24: #{_lambda_.20} parent=5 // pred_fallthru
      _
    %p363 = scmp.le.s32.totalorder 2, %s9
    // Predicated region
    $region49: #{_lambda_.20} parent=5 // pred_check
      %p364 = pneg %p363
    $region50: #{_lambda_.20} parent=5 // pred_check_branch
      %366 = sbr.rel (%p364) target = $region52
    $region51: #{_lambda_.20} parent=5 // pred_region
      %s367 = ssub.s32 %s9, 2
    $region52: #{_lambda_.20} parent=5 // pred_fallthru
      _
  $region6: #{_lambda_.20} parent=0 // loop_footer
    %s13 = sadd.s32 1, %s9
  $region7: #{_lambda_.20} parent=0 // loop_footer_branch
    %8 = sbr.rel target = $region3
  $region8: #{_lambda_.20} parent=0 // loop_exit
    _

// kernel: _lambda_.19
$region0: #{_lambda_.19}
  #allocation0 [shape = 'u32[]', space=smem, size = 0x4, offset = 0x4, fixed_abs, tag = 'smem constant byte address 0x4 - core index']
  #allocation1 [shape = 'u32[144,128]{1,0:T(1,128)}', space=vmem, size = 0x12000, scoped, tag = 'internal scratch']
  #allocation2 [shape = 'f32[128,128]{1,0:T(8,128)}', space=vmem, size = 0x10000, scoped, tag = 'scratch operand']
  %s0 = inlined_call_operand.vmem [shape: bf16[4,128,128], index: 0, kind: input, shape index: {}]
  %s1 = inlined_call_operand.vmem [shape: bf16[4,128,128], index: 1, kind: input, shape index: {}]
  %s2 = inlined_call_operand.vmem [shape: f32[4,128,128], index: 2, kind: output, shape index: {}]
  %s3 = sld [smem:[#allocation0]]
  $region49: #{_lambda_.19} parent=0
    _
  %s5 = ssub.s32 1, %s3
  %s6 = scalar_select 0, %s5, %s3
  loop: start=0, step=1, limit=6
  $region2: #{_lambda_.19} parent=0 // loop_pre_header
    _
  $region3: #{_lambda_.19} parent=0 // loop_header
    %s8 = sphi 0, %s12
    %p9 = scmp.ge.s32.totalorder %s8, 6
    %s15 = sphi 0, %s41
    %s16 = sphi 0, %s37
    %s17 = sphi 0, %s33
    %s18 = sphi 0, %s29
    %s19 = sphi 0, %s15
    %s20 = sphi 0, %s16
    %s21 = sphi 0, %s17
    %s22 = sphi 0, %s18
    %s23 = sphi 0, %s19
    %s24 = sphi 0, %s20
    %s25 = sphi 0, %s21
    %s26 = sphi 0, %s22
    %s48 = sphi 0, %s50
    %s51 = sphi 0, %s48
    %s52 = sphi 0, %s51
    %s68 = sphi 0, %s52
    %s78 = sphi 0, %s80
    %s81 = sphi 0, %s78
    %s82 = sphi 0, %s81
    %s98 = sphi 0, %s82
    %s108 = sphi 0, %s110
    %s111 = sphi 0, %s108
    %s112 = sphi 0, %s111
    %s128 = sphi 0, %s112
  $region4: #{_lambda_.19} parent=0 // loop_header_branch
    %11 = sbr.rel (%p9) target = $region8
  $region5: #{_lambda_.19} parent=0 // loop_body
    %s13 = ssub.s32 %s8, 1
    %s14 = ssub.s32 %s8, 2
    %s27 = sadd.s32 1, %s18
    %p28 = scmp.ge.s32.totalorder %s27, 1
    %s29 = scalar_select %p28, 0, %s27
    %s30 = sadd.s32 1, %s17
    %s31 = scalar_select %p28, %s30, %s17
    %p32 = scmp.ge.s32.totalorder %s31, 1
    %s33 = scalar_select %p32, 0, %s31
    %s34 = sadd.s32 1, %s16
    %s35 = scalar_select %p32, %s34, %s16
    %p36 = scmp.ge.s32.totalorder %s35, 1
    %s37 = scalar_select %p36, 0, %s35
    %s38 = sadd.s32 1, %s15
    %s39 = scalar_select %p36, %s38, %s15
    %p40 = scmp.ge.s32.totalorder %s39, 4
    %s41 = scalar_select %p40, 0, %s39
    %s42 = ssub.s32 %s15, %s41
    %s43 = ssub.s32 %s16, %s37
    %s44 = sor.u32 %s42, %s43
    %s45 = ssub.s32 %s18, %s29
    %s46 = sor.u32 %s44, %s45
    %p47 = scmp.eq.s32.totalorder %s46, 0
    %s49 = sadd.s32 %s48, 1
    %s50 = scalar_select %p47, %s48, %s49
    %p53 = pneg %p47
    %p54 = scmp.eq.s32.totalorder %s8, 3
    %p55 = por %p53, %p54
    %p56 = scmp.ne.s32.totalorder %s48, %s51
    %p57 = scmp.eq.s32.totalorder %s8, 0
    %p58 = por %p56, %p57
    %p59 = scmp.ne.s32.totalorder %s48, %s51
    %p60 = scmp.eq.s32.totalorder %s13, 3
    %p61 = por %p59, %p60
    %p62 = scmp.ne.s32.totalorder %s51, %s52
    %p63 = scmp.eq.s32.totalorder %s13, 0
    %p64 = por %p62, %p63
    %p65 = scmp.ne.s32.totalorder %s51, %s52
    %p66 = scmp.eq.s32.totalorder %s14, 3
    %p67 = por %p65, %p66
    %p69 = scmp.ne.s32.totalorder %s52, %s68
    %p70 = scmp.eq.s32.totalorder %s14, 0
    %p71 = por %p69, %p70
    %s72 = ssub.s32 %s15, %s41
    %s73 = ssub.s32 %s18, %s29
    %s74 = sor.u32 %s72, %s73
    %s75 = ssub.s32 %s17, %s33
    %s76 = sor.u32 %s74, %s75
    %p77 = scmp.eq.s32.totalorder %s76, 0
    %s79 = sadd.s32 %s78, 1
    %s80 = scalar_select %p77, %s78, %s79
    %p83 = pneg %p77
    %p84 = scmp.eq.s32.totalorder %s8, 3
    %p85 = por %p83, %p84
    %p86 = scmp.ne.s32.totalorder %s78, %s81
    %p87 = scmp.eq.s32.totalorder %s8, 0
    %p88 = por %p86, %p87
    %p89 = scmp.ne.s32.totalorder %s78, %s81
    %p90 = scmp.eq.s32.totalorder %s13, 3
    %p91 = por %p89, %p90
    %p92 = scmp.ne.s32.totalorder %s81, %s82
    %p93 = scmp.eq.s32.totalorder %s13, 0
    %p94 = por %p92, %p93
    %p95 = scmp.ne.s32.totalorder %s81, %s82
    %p96 = scmp.eq.s32.totalorder %s14, 3
    %p97 = por %p95, %p96
    %p99 = scmp.ne.s32.totalorder %s82, %s98
    %p100 = scmp.eq.s32.totalorder %s14, 0
    %p101 = por %p99, %p100
    %s102 = ssub.s32 %s15, %s41
    %s103 = ssub.s32 %s16, %s37
    %s104 = sor.u32 %s102, %s103
    %s105 = ssub.s32 %s17, %s33
    %s106 = sor.u32 %s104, %s105
    %p107 = scmp.eq.s32.totalorder %s106, 0
    %s109 = sadd.s32 %s108, 1
    %s110 = scalar_select %p107, %s108, %s109
    %p113 = pneg %p107
    %p114 = scmp.eq.s32.totalorder %s8, 3
    %p115 = por %p113, %p114
    %p116 = scmp.ne.s32.totalorder %s108, %s111
    %p117 = scmp.eq.s32.totalorder %s8, 0
    %p118 = por %p116, %p117
    %p119 = scmp.ne.s32.totalorder %s108, %s111
    %p120 = scmp.eq.s32.totalorder %s13, 3
    %p121 = por %p119, %p120
    %p122 = scmp.ne.s32.totalorder %s111, %s112
    %p123 = scmp.eq.s32.totalorder %s13, 0
    %p124 = por %p122, %p123
    %p125 = scmp.ne.s32.totalorder %s111, %s112
    %p126 = scmp.eq.s32.totalorder %s14, 3
    %p127 = por %p125, %p126
    %p129 = scmp.ne.s32.totalorder %s112, %s128
    %p130 = scmp.eq.s32.totalorder %s14, 0
    %p131 = por %p129, %p130
    %p132 = scmp.le.s32.totalorder 1, %s8
    %p133 = scmp.lt.s32.totalorder %s8, 5
    %p134 = pnand %p132, %p133
    %p135 = pneg %p134
    // Predicated region
    $region9: #{_lambda_.19} parent=5 // pred_check
      _
    $region10: #{_lambda_.19} parent=5 // pred_check_branch
      %137 = sbr.rel (%p134) target = $region12
    $region11: #{_lambda_.19} parent=5 // pred_region
      %s138 = ssub.s32 %s8, 1
    $region12: #{_lambda_.19} parent=5 // pred_fallthru
      _
    %p139 = scmp.lt.s32.totalorder %s8, 4
    // Predicated region
    $region13: #{_lambda_.19} parent=5 // pred_check
      %p140 = pneg %p139
    $region14: #{_lambda_.19} parent=5 // pred_check_branch
      %142 = sbr.rel (%p140) target = $region16
    $region15: #{_lambda_.19} parent=5 // pred_region
      // Predicated region
      $region17: #{_lambda_.19} parent=15 // pred_check
        %p143 = pneg %p58
      $region18: #{_lambda_.19} parent=15 // pred_check_branch
        %145 = sbr.rel (%p143) target = $region20
      $region19: #{_lambda_.19} parent=15 // pred_region
        %s146 = smul.u32 16, %s16
        %p147 = scmp.lt.s32.totalorder %s15, 3
        %s148 = scalar_select %p147, %s15, 3
        %p149 = scmp.lt.s32.totalorder %s146, 15
        %s150 = scalar_select %p149, %s146, 15
        %p151 = scmp.lt.s32.totalorder %s18, 0
        %s152 = scalar_select %p151, %s18, 0
        %s153 = sadd.s32 %s152, %s150
        %s154 = smul.addr %s148, 16
        %s155 = sadd.s32 %s153, %s154
        %s156 = smul.addr %s155, 4
        %s157 = scalar_lea.vmem %s0, %s156
        %s158 = smul.u32 16, %s16
      $region20: #{_lambda_.19} parent=15 // pred_fallthru
        _
      // Predicated region
      $region21: #{_lambda_.19} parent=15 // pred_check
        %p159 = pneg %p88
      $region22: #{_lambda_.19} parent=15 // pred_check_branch
        %161 = sbr.rel (%p159) target = $region24
      $region23: #{_lambda_.19} parent=15 // pred_region
        %s162 = smul.u32 16, %s18
        %p163 = scmp.lt.s32.totalorder %s15, 3
        %s164 = scalar_select %p163, %s15, 3
        %p165 = scmp.lt.s32.totalorder %s162, 15
        %s166 = scalar_select %p165, %s162, 15
        %p167 = scmp.lt.s32.totalorder %s17, 0
        %s168 = scalar_select %p167, %s17, 0
        %s169 = sadd.s32 %s168, %s166
        %s170 = smul.addr %s164, 16
        %s171 = sadd.s32 %s169, %s170
        %s172 = smul.addr %s171, 4
        %s173 = scalar_lea.vmem %s1, %s172
        %s174 = smul.u32 16, %s18
      $region24: #{_lambda_.19} parent=15 // pred_fallthru
        _
    $region16: #{_lambda_.19} parent=5 // pred_fallthru
      _
    %p175 = scmp.le.s32.totalorder 1, %s8
    %p176 = scmp.lt.s32.totalorder %s8, 5
    %p177 = pnand %p175, %p176
    %p178 = pneg %p177
    // Predicated region
    $region25: #{_lambda_.19} parent=5 // pred_check
      _
    $region26: #{_lambda_.19} parent=5 // pred_check_branch
      %180 = sbr.rel (%p177) target = $region28
    $region27: #{_lambda_.19} parent=5 // pred_region
      %s181 = ssub.s32 %s8, 1
      %s182 = smul.u32 16, %s20
      %p183 = scmp.lt.s32.totalorder %s19, 3
      %s184 = scalar_select %p183, %s19, 3
      %p185 = scmp.lt.s32.totalorder %s182, 15
      %s186 = scalar_select %p185, %s182, 15
      %p187 = scmp.lt.s32.totalorder %s22, 0
      %s188 = scalar_select %p187, %s22, 0
      %s189 = sadd.s32 %s188, %s186
      %s190 = smul.addr %s184, 16
      %s191 = sadd.s32 %s189, %s190
      %s192 = smul.addr %s191, 4
      %s193 = scalar_lea.vmem %s0, %s192
      %p194 = pneg %p64
      %p195 = pneg %p61
      %s196 = smul.u32 16, %s22
      %p197 = scmp.lt.s32.totalorder %s19, 3
      %s198 = scalar_select %p197, %s19, 3
      %p199 = scmp.lt.s32.totalorder %s196, 15
      %s200 = scalar_select %p199, %s196, 15
      %p201 = scmp.lt.s32.totalorder %s21, 0
      %s202 = scalar_select %p201, %s21, 0
      %s203 = sadd.s32 %s202, %s200
      %s204 = smul.addr %s198, 16
      %s205 = sadd.s32 %s203, %s204
      %s206 = smul.addr %s205, 4
      %s207 = scalar_lea.vmem %s1, %s206
      %p208 = pneg %p94
      %p209 = pneg %p91
      %p210 = pneg %p124
      %p211 = pneg %p121
      %s212 = smul.u32 16, %s20
      %p213 = scmp.lt.s32.totalorder %s19, 3
      %s214 = scalar_select %p213, %s19, 3
      %p215 = scmp.lt.s32.totalorder %s212, 15
      %s216 = scalar_select %p215, %s212, 15
      %p217 = scmp.lt.s32.totalorder %s21, 0
      %s218 = scalar_select %p217, %s21, 0
      %s219 = sadd.s32 %s218, %s216
      %s220 = smul.addr %s214, 16
      %s221 = sadd.s32 %s219, %s220
      %s222 = smul.addr %s221, 8
      %s223 = scalar_lea.vmem %s2, %s222
      %s224 = smul.u32 16, %s20
      %p225 = scmp.lt.s32.totalorder %s19, 3
      %s226 = scalar_select %p225, %s19, 3
      %p227 = scmp.lt.s32.totalorder %s224, 15
      %s228 = scalar_select %p227, %s224, 15
      %p229 = scmp.lt.s32.totalorder %s22, 0
      %s230 = scalar_select %p229, %s22, 0
      %s231 = sadd.s32 %s230, %s228
      %s232 = smul.addr %s226, 16
      %s233 = sadd.s32 %s231, %s232
      %s234 = smul.addr %s233, 4
      %s235 = scalar_lea.vmem %s0, %s234
      %s236 = smul.u32 16, %s20
      %s237 = smul.u32 16, %s22
      %p238 = scmp.lt.s32.totalorder %s19, 3
      %s239 = scalar_select %p238, %s19, 3
      %p240 = scmp.lt.s32.totalorder %s237, 15
      %s241 = scalar_select %p240, %s237, 15
      %p242 = scmp.lt.s32.totalorder %s21, 0
      %s243 = scalar_select %p242, %s21, 0
      %s244 = sadd.s32 %s243, %s241
      %s245 = smul.addr %s239, 16
      %s246 = sadd.s32 %s244, %s245
      %s247 = smul.addr %s246, 4
      %s248 = scalar_lea.vmem %s1, %s247
      %s249 = smul.u32 16, %s22
      %s250 = smul.u32 16, %s20
      %p251 = scmp.lt.s32.totalorder %s19, 3
      %s252 = scalar_select %p251, %s19, 3
      %p253 = scmp.lt.s32.totalorder %s250, 15
      %s254 = scalar_select %p253, %s250, 15
      %p255 = scmp.lt.s32.totalorder %s21, 0
      %s256 = scalar_select %p255, %s21, 0
      %s257 = sadd.s32 %s256, %s254
      %s258 = smul.addr %s252, 16
      %s259 = sadd.s32 %s257, %s258
      %s260 = smul.addr %s259, 8
      %s261 = scalar_lea.vmem %s2, %s260
      %s262 = smul.u32 16, %s20
      %p264 = scmp.eq.s32.totalorder %s22, 0
      // Predicated region
      $region29: #{_lambda_.19} parent=27 // pred_check
        %p265 = pneg %p264
      $region30: #{_lambda_.19} parent=27 // pred_check_branch
        %267 = sbr.rel (%p265) target = $region32
      $region31: #{_lambda_.19} parent=27 // pred_region
        %268 = vst [vmem:[#allocation2] sm:$0xff] 0.0
        %269 = vst [vmem:[#allocation2 + $0x8] sm:$0xff] 0.0
        %270 = vst [vmem:[#allocation2 + $0x10] sm:$0xff] 0.0
        %271 = vst [vmem:[#allocation2 + $0x18] sm:$0xff] 0.0
        %272 = vst [vmem:[#allocation2 + $0x20] sm:$0xff] 0.0
        %273 = vst [vmem:[#allocation2 + $0x28] sm:$0xff] 0.0
        %274 = vst [vmem:[#allocation2 + $0x30] sm:$0xff] 0.0
        %275 = vst [vmem:[#allocation2 + $0x38] sm:$0xff] 0.0
        %276 = vst [vmem:[#allocation2 + $0x40] sm:$0xff] 0.0
        %277 = vst [vmem:[#allocation2 + $0x48] sm:$0xff] 0.0
        %278 = vst [vmem:[#allocation2 + $0x50] sm:$0xff] 0.0
        %279 = vst [vmem:[#allocation2 + $0x58] sm:$0xff] 0.0
        %280 = vst [vmem:[#allocation2 + $0x60] sm:$0xff] 0.0
        %281 = vst [vmem:[#allocation2 + $0x68] sm:$0xff] 0.0
        %282 = vst [vmem:[#allocation2 + $0x70] sm:$0xff] 0.0
        %283 = vst [vmem:[#allocation2 + $0x78] sm:$0xff] 0.0
      $region32: #{_lambda_.19} parent=27 // pred_fallthru
        _
      %v284 = vld [vmem:[#allocation2] sm:$0xff]
      %v285 = vld [vmem:[#allocation2 + $0x8] sm:$0xff]
      %v286 = vld [vmem:[#allocation2 + $0x10] sm:$0xff]
      %v287 = vld [vmem:[#allocation2 + $0x18] sm:$0xff]
      %v288 = vld [vmem:[#allocation2 + $0x20] sm:$0xff]
      %v289 = vld [vmem:[#allocation2 + $0x28] sm:$0xff]
      %v290 = vld [vmem:[#allocation2 + $0x30] sm:$0xff]
      %v291 = vld [vmem:[#allocation2 + $0x38] sm:$0xff]
      %v292 = vld [vmem:[#allocation2 + $0x40] sm:$0xff]
      %v293 = vld [vmem:[#allocation2 + $0x48] sm:$0xff]
      %v294 = vld [vmem:[#allocation2 + $0x50] sm:$0xff]
      %v295 = vld [vmem:[#allocation2 + $0x58] sm:$0xff]
      %v296 = vld [vmem:[#allocation2 + $0x60] sm:$0xff]
      %v297 = vld [vmem:[#allocation2 + $0x68] sm:$0xff]
      %v298 = vld [vmem:[#allocation2 + $0x70] sm:$0xff]
      %v299 = vld [vmem:[#allocation2 + $0x78] sm:$0xff]
      %v300 = vld [vmem:[%s235] sm:$0xf]
      %v301 = vld [vmem:[%s235 + $0x4] sm:$0xf]
      %v302 = vld [vmem:[%s235 + $0x8] sm:$0xf]
      %v303 = vld [vmem:[%s235 + $0xc] sm:$0xf]
      %v304 = vld [vmem:[%s235 + $0x10] sm:$0xf]
      %v305 = vld [vmem:[%s235 + $0x14] sm:$0xf]
      %v306 = vld [vmem:[%s235 + $0x18] sm:$0xf]
      %v307 = vld [vmem:[%s235 + $0x1c] sm:$0xf]
      %v308 = vld [vmem:[%s235 + $0x20] sm:$0xf]
      %v309 = vld [vmem:[%s235 + $0x24] sm:$0xf]
      %v310 = vld [vmem:[%s235 + $0x28] sm:$0xf]
      %v311 = vld [vmem:[%s235 + $0x2c] sm:$0xf]
      %v312 = vld [vmem:[%s235 + $0x30] sm:$0xf]
      %v313 = vld [vmem:[%s235 + $0x34] sm:$0xf]
      %v314 = vld [vmem:[%s235 + $0x38] sm:$0xf]
      %v315 = vld [vmem:[%s235 + $0x3c] sm:$0xf]
      %v316 = vld [vmem:[%s248] sm:$0xf]
      %v317 = vld [vmem:[%s248 + $0x4] sm:$0xf]
      %v318 = vld [vmem:[%s248 + $0x8] sm:$0xf]
      %v319 = vld [vmem:[%s248 + $0xc] sm:$0xf]
      %v320 = vld [vmem:[%s248 + $0x10] sm:$0xf]
      %v321 = vld [vmem:[%s248 + $0x14] sm:$0xf]
      %v322 = vld [vmem:[%s248 + $0x18] sm:$0xf]
      %v323 = vld [vmem:[%s248 + $0x1c] sm:$0xf]
      %v324 = vld [vmem:[%s248 + $0x20] sm:$0xf]
      %v325 = vld [vmem:[%s248 + $0x24] sm:$0xf]
      %v326 = vld [vmem:[%s248 + $0x28] sm:$0xf]
      %v327 = vld [vmem:[%s248 + $0x2c] sm:$0xf]
      %v328 = vld [vmem:[%s248 + $0x30] sm:$0xf]
      %v329 = vld [vmem:[%s248 + $0x34] sm:$0xf]
      %v330 = vld [vmem:[%s248 + $0x38] sm:$0xf]
      %v331 = vld [vmem:[%s248 + $0x3c] sm:$0xf]
      %v348 = vunpack.c.l.b16 %v300
      %v349 = vunpack.c.l.b16 %v301
      %v350 = vunpack.c.l.b16 %v302
      %v351 = vunpack.c.l.b16 %v303
      %v352 = vunpack.c.l.b16 %v304
      %v353 = vunpack.c.l.b16 %v305
      %v354 = vunpack.c.l.b16 %v306
      %v355 = vunpack.c.l.b16 %v307
      %v356 = vunpack.c.l.b16 %v308
      %v357 = vunpack.c.l.b16 %v309
      %v358 = vunpack.c.l.b16 %v310
      %v359 = vunpack.c.l.b16 %v311
      %v360 = vunpack.c.l.b16 %v312
      %v361 = vunpack.c.l.b16 %v313
      %v362 = vunpack.c.l.b16 %v314
      %v363 = vunpack.c.l.b16 %v315
      %v364 = vpack.c.b16 %v349, %v348
      %v365 = vpack.c.b16 %v351, %v350
      %v366 = vpack.c.b16 %v353, %v352
      %v367 = vpack.c.b16 %v355, %v354
      %v368 = vpack.c.b16 %v357, %v356
      %v369 = vpack.c.b16 %v359, %v358
      %v370 = vpack.c.b16 %v361, %v360
      %v371 = vpack.c.b16 %v363, %v362
      %v396 = vunpack.c.l.b16 %v316
      %v397 = vunpack.c.l.b16 %v317
      %v398 = vunpack.c.l.b16 %v318
      %v399 = vunpack.c.l.b16 %v319
      %v400 = vunpack.c.l.b16 %v320
      %v401 = vunpack.c.l.b16 %v321
      %v402 = vunpack.c.l.b16 %v322
      %v403 = vunpack.c.l.b16 %v323
      %v404 = vunpack.c.l.b16 %v324
      %v405 = vunpack.c.l.b16 %v325
      %v406 = vunpack.c.l.b16 %v326
      %v407 = vunpack.c.l.b16 %v327
      %v408 = vunpack.c.l.b16 %v328
      %v409 = vunpack.c.l.b16 %v329
      %v410 = vunpack.c.l.b16 %v330
      %v411 = vunpack.c.l.b16 %v331
      %v412 = vpack.c.b16 %v397, %v396
      %v413 = vpack.c.b16 %v399, %v398
      %v414 = vpack.c.b16 %v401, %v400
      %v415 = vpack.c.b16 %v403, %v402
      %v416 = vpack.c.b16 %v405, %v404
      %v417 = vpack.c.b16 %v407, %v406
      %v418 = vpack.c.b16 %v409, %v408
      %v419 = vpack.c.b16 %v411, %v410
      %428 = vmatprep.subr.bf16.mxu0 0
      %429 = vmatpush1.bf16.msra.mxu0 %v419
      %430 = vmatprep.subr.bf16.mxu0 0
      %431 = vmatpush1.bf16.msra.mxu0 %v418
      %432 = vmatprep.subr.bf16.mxu0 0
      %433 = vmatpush1.bf16.msra.mxu0 %v417
      %434 = vmatprep.subr.bf16.mxu0 0
      %435 = vmatpush1.bf16.msra.mxu0 %v416
      %436 = vmatprep.subr.bf16.mxu0 0
      %437 = vmatpush1.bf16.msra.mxu0 %v415
      %438 = vmatprep.subr.bf16.mxu0 0
      %439 = vmatpush1.bf16.msra.mxu0 %v414
      %440 = vmatprep.subr.bf16.mxu0 0
      %441 = vmatpush1.bf16.msra.mxu0 %v413
      %442 = vmatprep.subr.bf16.mxu0 0
      %443 = vmatpush1.bf16.msra.mxu0 %v412
      %444 = vmatprep.subr.bf16.mxu0 0
      %445 = vmatpush2.bf16.msra.mxu0 0
      %446 = vmatprep.subr.bf16.mxu0 0
      %447 = vmatpush2.bf16.msra.mxu0 0
      %448 = vmatprep.subr.bf16.mxu0 0
      %449 = vmatpush2.bf16.msra.mxu0 0
      %450 = vmatprep.subr.bf16.mxu0 0
      %451 = vmatpush2.bf16.msra.mxu0 0
      %452 = vmatprep.subr.bf16.mxu0 0
      %453 = vmatpush2.bf16.msra.mxu0 0
      %454 = vmatprep.subr.bf16.mxu0 0
      %455 = vmatpush2.bf16.msra.mxu0 0
      %456 = vmatprep.subr.bf16.mxu0 0
      %457 = vmatpush2.bf16.msra.mxu0 0
      %458 = vmatprep.subr.bf16.mxu0 0
      %459 = vmatpush2.bf16.msra.mxu0 0
      %460 = vmatprep.mubr.bf16.mxu0 0
      %461 = vmatmul.mubr.bf16.gmra.mxu0 %v364
      %v462 = vpop.f32.mrf.mxu0
      %v463 = vadd.f32 0.0, %v462
      %v464 = vpop.f32.mrf.mxu0
      %v465 = vpop.f32.mrf.mxu0
      %v466 = vadd.f32 0.0, %v465
      %v467 = vpop.f32.mrf.mxu0
      %468 = vmatprep.mubr.bf16.mxu0 0
      %469 = vmatmul.mubr.bf16.gmra.mxu0 %v365
      %v470 = vpop.f32.mrf.mxu0
      %v471 = vadd.f32 0.0, %v470
      %v472 = vpop.f32.mrf.mxu0
      %v473 = vpop.f32.mrf.mxu0
      %v474 = vadd.f32 0.0, %v473
      %v475 = vpop.f32.mrf.mxu0
      %476 = vmatprep.mubr.bf16.mxu0 0
      %477 = vmatmul.mubr.bf16.gmra.mxu0 %v366
      %v478 = vpop.f32.mrf.mxu0
      %v479 = vadd.f32 0.0, %v478
      %v480 = vpop.f32.mrf.mxu0
      %v481 = vpop.f32.mrf.mxu0
      %v482 = vadd.f32 0.0, %v481
      %v483 = vpop.f32.mrf.mxu0
      %484 = vmatprep.mubr.bf16.mxu0 0
      %485 = vmatmul.mubr.bf16.gmra.mxu0 %v367
      %v486 = vpop.f32.mrf.mxu0
      %v487 = vadd.f32 0.0, %v486
      %v488 = vpop.f32.mrf.mxu0
      %v489 = vpop.f32.mrf.mxu0
      %v490 = vadd.f32 0.0, %v489
      %v491 = vpop.f32.mrf.mxu0
      %492 = vmatprep.mubr.bf16.mxu0 0
      %493 = vmatmul.mubr.bf16.gmra.mxu0 %v368
      %v494 = vpop.f32.mrf.mxu0
      %v495 = vadd.f32 0.0, %v494
      %v496 = vpop.f32.mrf.mxu0
      %v497 = vpop.f32.mrf.mxu0
      %v498 = vadd.f32 0.0, %v497
      %v499 = vpop.f32.mrf.mxu0
      %500 = vmatprep.mubr.bf16.mxu0 0
      %501 = vmatmul.mubr.bf16.gmra.mxu0 %v369
      %v502 = vpop.f32.mrf.mxu0
      %v503 = vadd.f32 0.0, %v502
      %v504 = vpop.f32.mrf.mxu0
      %v505 = vpop.f32.mrf.mxu0
      %v506 = vadd.f32 0.0, %v505
      %v507 = vpop.f32.mrf.mxu0
      %508 = vmatprep.mubr.bf16.mxu0 0
      %509 = vmatmul.mubr.bf16.gmra.mxu0 %v370
      %v510 = vpop.f32.mrf.mxu0
      %v511 = vadd.f32 0.0, %v510
      %v512 = vpop.f32.mrf.mxu0
      %v513 = vpop.f32.mrf.mxu0
      %v514 = vadd.f32 0.0, %v513
      %v515 = vpop.f32.mrf.mxu0
      %516 = vmatprep.mubr.bf16.mxu0 0
      %517 = vmatmul.mubr.bf16.gmra.mxu0 %v371
      %v518 = vpop.f32.mrf.mxu0
      %v519 = vadd.f32 0.0, %v518
      %v520 = vpop.f32.mrf.mxu0
      %v521 = vpop.f32.mrf.mxu0
      %v522 = vadd.f32 0.0, %v521
      %v523 = vpop.f32.mrf.mxu0
      %524 = vdwg.mxu0
      %v525 = vadd.f32 %v284, %v463
      %v526 = vadd.f32 %v285, %v466
      %v527 = vadd.f32 %v286, %v471
      %v528 = vadd.f32 %v287, %v474
      %v529 = vadd.f32 %v288, %v479
      %v530 = vadd.f32 %v289, %v482
      %v531 = vadd.f32 %v290, %v487
      %v532 = vadd.f32 %v291, %v490
      %v533 = vadd.f32 %v292, %v495
      %v534 = vadd.f32 %v293, %v498
      %v535 = vadd.f32 %v294, %v503
      %v536 = vadd.f32 %v295, %v506
      %v537 = vadd.f32 %v296, %v511
      %v538 = vadd.f32 %v297, %v514
      %v539 = vadd.f32 %v298, %v519
      %v540 = vadd.f32 %v299, %v522
      %541 = vst [vmem:[#allocation2] sm:$0xff] %v525
      %542 = vst [vmem:[#allocation2 + $0x8] sm:$0xff] %v526
      %543 = vst [vmem:[#allocation2 + $0x10] sm:$0xff] %v527
      %544 = vst [vmem:[#allocation2 + $0x18] sm:$0xff] %v528
      %545 = vst [vmem:[#allocation2 + $0x20] sm:$0xff] %v529
      %546 = vst [vmem:[#allocation2 + $0x28] sm:$0xff] %v530
      %547 = vst [vmem:[#allocation2 + $0x30] sm:$0xff] %v531
      %548 = vst [vmem:[#allocation2 + $0x38] sm:$0xff] %v532
      %549 = vst [vmem:[#allocation2 + $0x40] sm:$0xff] %v533
      %550 = vst [vmem:[#allocation2 + $0x48] sm:$0xff] %v534
      %551 = vst [vmem:[#allocation2 + $0x50] sm:$0xff] %v535
      %552 = vst [vmem:[#allocation2 + $0x58] sm:$0xff] %v536
      %553 = vst [vmem:[#allocation2 + $0x60] sm:$0xff] %v537
      %554 = vst [vmem:[#allocation2 + $0x68] sm:$0xff] %v538
      %555 = vst [vmem:[#allocation2 + $0x70] sm:$0xff] %v539
      %556 = vst [vmem:[#allocation2 + $0x78] sm:$0xff] %v540
      // Predicated region
      $region33: #{_lambda_.19} parent=27 // pred_check
        %p557 = pneg %p264
      $region34: #{_lambda_.19} parent=27 // pred_check_branch
        %559 = sbr.rel (%p557) target = $region36
      $region35: #{_lambda_.19} parent=27 // pred_region
        %v560 = vld [vmem:[#allocation2] sm:$0xff]
        %v561 = vld [vmem:[#allocation2 + $0x8] sm:$0xff]
        %v562 = vld [vmem:[#allocation2 + $0x10] sm:$0xff]
        %v563 = vld [vmem:[#allocation2 + $0x18] sm:$0xff]
        %v564 = vld [vmem:[#allocation2 + $0x20] sm:$0xff]
        %v565 = vld [vmem:[#allocation2 + $0x28] sm:$0xff]
        %v566 = vld [vmem:[#allocation2 + $0x30] sm:$0xff]
        %v567 = vld [vmem:[#allocation2 + $0x38] sm:$0xff]
        %v568 = vld [vmem:[#allocation2 + $0x40] sm:$0xff]
        %v569 = vld [vmem:[#allocation2 + $0x48] sm:$0xff]
        %v570 = vld [vmem:[#allocation2 + $0x50] sm:$0xff]
        %v571 = vld [vmem:[#allocation2 + $0x58] sm:$0xff]
        %v572 = vld [vmem:[#allocation2 + $0x60] sm:$0xff]
        %v573 = vld [vmem:[#allocation2 + $0x68] sm:$0xff]
        %v574 = vld [vmem:[#allocation2 + $0x70] sm:$0xff]
        %v575 = vld [vmem:[#allocation2 + $0x78] sm:$0xff]
        %576 = vst [vmem:[%s261] sm:$0xff] %v560
        %577 = vst [vmem:[%s261 + $0x8] sm:$0xff] %v561
        %578 = vst [vmem:[%s261 + $0x10] sm:$0xff] %v562
        %579 = vst [vmem:[%s261 + $0x18] sm:$0xff] %v563
        %580 = vst [vmem:[%s261 + $0x20] sm:$0xff] %v564
        %581 = vst [vmem:[%s261 + $0x28] sm:$0xff] %v565
        %582 = vst [vmem:[%s261 + $0x30] sm:$0xff] %v566
        %583 = vst [vmem:[%s261 + $0x38] sm:$0xff] %v567
        %584 = vst [vmem:[%s261 + $0x40] sm:$0xff] %v568
        %585 = vst [vmem:[%s261 + $0x48] sm:$0xff] %v569
        %586 = vst [vmem:[%s261 + $0x50] sm:$0xff] %v570
        %587 = vst [vmem:[%s261 + $0x58] sm:$0xff] %v571
        %588 = vst [vmem:[%s261 + $0x60] sm:$0xff] %v572
        %589 = vst [vmem:[%s261 + $0x68] sm:$0xff] %v573
        %590 = vst [vmem:[%s261 + $0x70] sm:$0xff] %v574
        %591 = vst [vmem:[%s261 + $0x78] sm:$0xff] %v575
      $region36: #{_lambda_.19} parent=27 // pred_fallthru
        _
      %s592 = smul.u32 16, %s20
      %p593 = scmp.lt.s32.totalorder %s19, 3
      %s594 = scalar_select %p593, %s19, 3
      %p595 = scmp.lt.s32.totalorder %s592, 15
      %s596 = scalar_select %p595, %s592, 15
      %p597 = scmp.lt.s32.totalorder %s21, 0
      %s598 = scalar_select %p597, %s21, 0
      %s599 = sadd.s32 %s598, %s596
      %s600 = smul.addr %s594, 16
      %s601 = sadd.s32 %s599, %s600
      %s602 = smul.addr %s601, 8
      %s603 = scalar_lea.vmem %s2, %s602
      // Predicated region
      $region37: #{_lambda_.19} parent=27 // pred_check
        %p604 = pneg %p121
      $region38: #{_lambda_.19} parent=27 // pred_check_branch
        %606 = sbr.rel (%p604) target = $region40
      $region39: #{_lambda_.19} parent=27 // pred_region
        %s607 = smul.u32 16, %s20
      $region40: #{_lambda_.19} parent=27 // pred_fallthru
        _
    $region28: #{_lambda_.19} parent=5 // pred_fallthru
      _
    %p608 = scmp.le.s32.totalorder 2, %s8
    // Predicated region
    $region41: #{_lambda_.19} parent=5 // pred_check
      %p609 = pneg %p608
    $region42: #{_lambda_.19} parent=5 // pred_check_branch
      %611 = sbr.rel (%p609) target = $region44
    $region43: #{_lambda_.19} parent=5 // pred_region
      %s612 = ssub.s32 %s8, 2
      // Predicated region
      $region45: #{_lambda_.19} parent=43 // pred_check
        %p613 = pneg %p127
      $region46: #{_lambda_.19} parent=43 // pred_check_branch
        %615 = sbr.rel (%p613) target = $region48
      $region47: #{_lambda_.19} parent=43 // pred_region
        %s616 = smul.u32 16, %s24
        %p617 = scmp.lt.s32.totalorder %s23, 3
        %s618 = scalar_select %p617, %s23, 3
        %p619 = scmp.lt.s32.totalorder %s616, 15
        %s620 = scalar_select %p619, %s616, 15
        %p621 = scmp.lt.s32.totalorder %s25, 0
        %s622 = scalar_select %p621, %s25, 0
        %s623 = sadd.s32 %s622, %s620
        %s624 = smul.addr %s618, 16
        %s625 = sadd.s32 %s623, %s624
        %s626 = smul.addr %s625, 8
        %s627 = scalar_lea.vmem %s2, %s626
      $region48: #{_lambda_.19} parent=43 // pred_fallthru
        _
    $region44: #{_lambda_.19} parent=5 // pred_fallthru
      _
  $region6: #{_lambda_.19} parent=0 // loop_footer
    %s12 = sadd.s32 1, %s8
  $region7: #{_lambda_.19} parent=0 // loop_footer_branch
    %7 = sbr.rel target = $region3
  $region8: #{_lambda_.19} parent=0 // loop_exit
    _

// kernel: _lambda_.21
$region0: #{_lambda_.21}
  #allocation0 [shape = 'u32[]', space=smem, size = 0x4, offset = 0x4, fixed_abs, tag = 'smem constant byte address 0x4 - core index']
  #allocation1 [shape = 'u32[144,128]{1,0:T(1,128)}', space=vmem, size = 0x12000, scoped, tag = 'internal scratch']
  %s0 = inlined_call_operand.vmem [shape: f32[512,128], index: 0, kind: input, shape index: {}]
  %s1 = inlined_call_operand.vmem [shape: f32[1,128], index: 1, kind: input, shape index: {}]
  %s2 = inlined_call_operand.vmem [shape: f32[1,128], index: 2, kind: input, shape index: {}]
  %s3 = inlined_call_operand.vmem [shape: f32[1,128], index: 3, kind: input, shape index: {}]
  %s4 = inlined_call_operand.vmem [shape: f32[1,128], index: 4, kind: input, shape index: {}]
  %s5 = inlined_call_operand.vmem [shape: bf16[512,128], index: 5, kind: output, shape index: {}]
  %s6 = sld [smem:[#allocation0]]
  $region53: #{_lambda_.21} parent=0
    _
  %s8 = ssub.s32 1, %s6
  %s9 = scalar_select 0, %s8, %s6
  loop: start=0, step=1, limit=4
  $region2: #{_lambda_.21} parent=0 // loop_pre_header
    _
  $region3: #{_lambda_.21} parent=0 // loop_header
    %s11 = sphi 0, %s15
    %p12 = scmp.ge.s32.totalorder %s11, 4
    %s18 = sphi 0, %s30
    %s19 = sphi 0, %s26
    %s20 = sphi 0, %s18
    %s21 = sphi 0, %s19
    %s22 = sphi 0, %s20
    %s23 = sphi 0, %s21
    %s35 = sphi 0, %s37
    %s38 = sphi 0, %s35
    %s39 = sphi 0, %s38
    %s55 = sphi 0, %s39
    %s61 = sphi 0, %s63
    %s64 = sphi 0, %s61
    %s65 = sphi 0, %s64
    %s81 = sphi 0, %s65
    %s87 = sphi 0, %s89
    %s90 = sphi 0, %s87
    %s91 = sphi 0, %s90
    %s107 = sphi 0, %s91
    %s113 = sphi 0, %s115
    %s116 = sphi 0, %s113
    %s117 = sphi 0, %s116
    %s133 = sphi 0, %s117
    %s139 = sphi 0, %s141
    %s142 = sphi 0, %s139
    %s143 = sphi 0, %s142
    %s159 = sphi 0, %s143
    %s167 = sphi 0, %s169
    %s170 = sphi 0, %s167
    %s171 = sphi 0, %s170
    %s187 = sphi 0, %s171
  $region4: #{_lambda_.21} parent=0 // loop_header_branch
    %14 = sbr.rel (%p12) target = $region8
  $region5: #{_lambda_.21} parent=0 // loop_body
    %s16 = ssub.s32 %s11, 1
    %s17 = ssub.s32 %s11, 2
    %s24 = sadd.s32 1, %s19
    %p25 = scmp.ge.s32.totalorder %s24, 1
    %s26 = scalar_select %p25, 0, %s24
    %s27 = sadd.s32 1, %s18
    %s28 = scalar_select %p25, %s27, %s18
    %p29 = scmp.ge.s32.totalorder %s28, 2
    %s30 = scalar_select %p29, 0, %s28
    %s31 = ssub.s32 %s18, %s30
    %s32 = ssub.s32 %s19, %s26
    %s33 = sor.u32 %s31, %s32
    %p34 = scmp.eq.s32.totalorder %s33, 0
    %s36 = sadd.s32 %s35, 1
    %s37 = scalar_select %p34, %s35, %s36
    %p40 = pneg %p34
    %p41 = scmp.eq.s32.totalorder %s11, 1
    %p42 = por %p40, %p41
    %p43 = scmp.ne.s32.totalorder %s35, %s38
    %p44 = scmp.eq.s32.totalorder %s11, 0
    %p45 = por %p43, %p44
    %p46 = scmp.ne.s32.totalorder %s35, %s38
    %p47 = scmp.eq.s32.totalorder %s16, 1
    %p48 = por %p46, %p47
    %p49 = scmp.ne.s32.totalorder %s38, %s39
    %p50 = scmp.eq.s32.totalorder %s16, 0
    %p51 = por %p49, %p50
    %p52 = scmp.ne.s32.totalorder %s38, %s39
    %p53 = scmp.eq.s32.totalorder %s17, 1
    %p54 = por %p52, %p53
    %p56 = scmp.ne.s32.totalorder %s39, %s55
    %p57 = scmp.eq.s32.totalorder %s17, 0
    %p58 = por %p56, %p57
    %s59 = ssub.s32 %s19, %s26
    %p60 = scmp.eq.s32.totalorder %s59, 0
    %s62 = sadd.s32 %s61, 1
    %s63 = scalar_select %p60, %s61, %s62
    %p66 = pneg %p60
    %p67 = scmp.eq.s32.totalorder %s11, 1
    %p68 = por %p66, %p67
    %p69 = scmp.ne.s32.totalorder %s61, %s64
    %p70 = scmp.eq.s32.totalorder %s11, 0
    %p71 = por %p69, %p70
    %p72 = scmp.ne.s32.totalorder %s61, %s64
    %p73 = scmp.eq.s32.totalorder %s16, 1
    %p74 = por %p72, %p73
    %p75 = scmp.ne.s32.totalorder %s64, %s65
    %p76 = scmp.eq.s32.totalorder %s16, 0
    %p77 = por %p75, %p76
    %p78 = scmp.ne.s32.totalorder %s64, %s65
    %p79 = scmp.eq.s32.totalorder %s17, 1
    %p80 = por %p78, %p79
    %p82 = scmp.ne.s32.totalorder %s65, %s81
    %p83 = scmp.eq.s32.totalorder %s17, 0
    %p84 = por %p82, %p83
    %s85 = ssub.s32 %s19, %s26
    %p86 = scmp.eq.s32.totalorder %s85, 0
    %s88 = sadd.s32 %s87, 1
    %s89 = scalar_select %p86, %s87, %s88
    %p92 = pneg %p86
    %p93 = scmp.eq.s32.totalorder %s11, 1
    %p94 = por %p92, %p93
    %p95 = scmp.ne.s32.totalorder %s87, %s90
    %p96 = scmp.eq.s32.totalorder %s11, 0
    %p97 = por %p95, %p96
    %p98 = scmp.ne.s32.totalorder %s87, %s90
    %p99 = scmp.eq.s32.totalorder %s16, 1
    %p100 = por %p98, %p99
    %p101 = scmp.ne.s32.totalorder %s90, %s91
    %p102 = scmp.eq.s32.totalorder %s16, 0
    %p103 = por %p101, %p102
    %p104 = scmp.ne.s32.totalorder %s90, %s91
    %p105 = scmp.eq.s32.totalorder %s17, 1
    %p106 = por %p104, %p105
    %p108 = scmp.ne.s32.totalorder %s91, %s107
    %p109 = scmp.eq.s32.totalorder %s17, 0
    %p110 = por %p108, %p109
    %s111 = ssub.s32 %s19, %s26
    %p112 = scmp.eq.s32.totalorder %s111, 0
    %s114 = sadd.s32 %s113, 1
    %s115 = scalar_select %p112, %s113, %s114
    %p118 = pneg %p112
    %p119 = scmp.eq.s32.totalorder %s11, 1
    %p120 = por %p118, %p119
    %p121 = scmp.ne.s32.totalorder %s113, %s116
    %p122 = scmp.eq.s32.totalorder %s11, 0
    %p123 = por %p121, %p122
    %p124 = scmp.ne.s32.totalorder %s113, %s116
    %p125 = scmp.eq.s32.totalorder %s16, 1
    %p126 = por %p124, %p125
    %p127 = scmp.ne.s32.totalorder %s116, %s117
    %p128 = scmp.eq.s32.totalorder %s16, 0
    %p129 = por %p127, %p128
    %p130 = scmp.ne.s32.totalorder %s116, %s117
    %p131 = scmp.eq.s32.totalorder %s17, 1
    %p132 = por %p130, %p131
    %p134 = scmp.ne.s32.totalorder %s117, %s133
    %p135 = scmp.eq.s32.totalorder %s17, 0
    %p136 = por %p134, %p135
    %s137 = ssub.s32 %s19, %s26
    %p138 = scmp.eq.s32.totalorder %s137, 0
    %s140 = sadd.s32 %s139, 1
    %s141 = scalar_select %p138, %s139, %s140
    %p144 = pneg %p138
    %p145 = scmp.eq.s32.totalorder %s11, 1
    %p146 = por %p144, %p145
    %p147 = scmp.ne.s32.totalorder %s139, %s142
    %p148 = scmp.eq.s32.totalorder %s11, 0
    %p149 = por %p147, %p148
    %p150 = scmp.ne.s32.totalorder %s139, %s142
    %p151 = scmp.eq.s32.totalorder %s16, 1
    %p152 = por %p150, %p151
    %p153 = scmp.ne.s32.totalorder %s142, %s143
    %p154 = scmp.eq.s32.totalorder %s16, 0
    %p155 = por %p153, %p154
    %p156 = scmp.ne.s32.totalorder %s142, %s143
    %p157 = scmp.eq.s32.totalorder %s17, 1
    %p158 = por %p156, %p157
    %p160 = scmp.ne.s32.totalorder %s143, %s159
    %p161 = scmp.eq.s32.totalorder %s17, 0
    %p162 = por %p160, %p161
    %s163 = ssub.s32 %s18, %s30
    %s164 = ssub.s32 %s19, %s26
    %s165 = sor.u32 %s163, %s164
    %p166 = scmp.eq.s32.totalorder %s165, 0
    %s168 = sadd.s32 %s167, 1
    %s169 = scalar_select %p166, %s167, %s168
    %p172 = pneg %p166
    %p173 = scmp.eq.s32.totalorder %s11, 1
    %p174 = por %p172, %p173
    %p175 = scmp.ne.s32.totalorder %s167, %s170
    %p176 = scmp.eq.s32.totalorder %s11, 0
    %p177 = por %p175, %p176
    %p178 = scmp.ne.s32.totalorder %s167, %s170
    %p179 = scmp.eq.s32.totalorder %s16, 1
    %p180 = por %p178, %p179
    %p181 = scmp.ne.s32.totalorder %s170, %s171
    %p182 = scmp.eq.s32.totalorder %s16, 0
    %p183 = por %p181, %p182
    %p184 = scmp.ne.s32.totalorder %s170, %s171
    %p185 = scmp.eq.s32.totalorder %s17, 1
    %p186 = por %p184, %p185
    %p188 = scmp.ne.s32.totalorder %s171, %s187
    %p189 = scmp.eq.s32.totalorder %s17, 0
    %p190 = por %p188, %p189
    %p191 = scmp.le.s32.totalorder 1, %s11
    %p192 = scmp.lt.s32.totalorder %s11, 3
    %p193 = pnand %p191, %p192
    %p194 = pneg %p193
    // Predicated region
    $region9: #{_lambda_.21} parent=5 // pred_check
      _
    $region10: #{_lambda_.21} parent=5 // pred_check_branch
      %196 = sbr.rel (%p193) target = $region12
    $region11: #{_lambda_.21} parent=5 // pred_region
      %s197 = ssub.s32 %s11, 1
      // Predicated region
      $region13: #{_lambda_.21} parent=11 // pred_check
        %p198 = pneg %p77
      $region14: #{_lambda_.21} parent=11 // pred_check_branch
        %200 = sbr.rel (%p198) target = $region16
      $region15: #{_lambda_.21} parent=11 // pred_region
        %p201 = scmp.lt.s32.totalorder %s21, 0
        %s202 = scalar_select %p201, %s21, 0
        %s203 = scalar_lea.vmem %s1, %s202
      $region16: #{_lambda_.21} parent=11 // pred_fallthru
        _
      // Predicated region
      $region17: #{_lambda_.21} parent=11 // pred_check
        %p204 = pneg %p103
      $region18: #{_lambda_.21} parent=11 // pred_check_branch
        %206 = sbr.rel (%p204) target = $region20
      $region19: #{_lambda_.21} parent=11 // pred_region
        %p207 = scmp.lt.s32.totalorder %s21, 0
        %s208 = scalar_select %p207, %s21, 0
        %s209 = scalar_lea.vmem %s2, %s208
      $region20: #{_lambda_.21} parent=11 // pred_fallthru
        _
      // Predicated region
      $region21: #{_lambda_.21} parent=11 // pred_check
        %p210 = pneg %p129
      $region22: #{_lambda_.21} parent=11 // pred_check_branch
        %212 = sbr.rel (%p210) target = $region24
      $region23: #{_lambda_.21} parent=11 // pred_region
        %p213 = scmp.lt.s32.totalorder %s21, 0
        %s214 = scalar_select %p213, %s21, 0
        %s215 = scalar_lea.vmem %s3, %s214
      $region24: #{_lambda_.21} parent=11 // pred_fallthru
        _
      // Predicated region
      $region25: #{_lambda_.21} parent=11 // pred_check
        %p216 = pneg %p155
      $region26: #{_lambda_.21} parent=11 // pred_check_branch
        %218 = sbr.rel (%p216) target = $region28
      $region27: #{_lambda_.21} parent=11 // pred_region
        %p219 = scmp.lt.s32.totalorder %s21, 0
        %s220 = scalar_select %p219, %s21, 0
        %s221 = scalar_lea.vmem %s4, %s220
      $region28: #{_lambda_.21} parent=11 // pred_fallthru
        _
    $region12: #{_lambda_.21} parent=5 // pred_fallthru
      _
    %p222 = scmp.lt.s32.totalorder %s11, 2
    // Predicated region
    $region29: #{_lambda_.21} parent=5 // pred_check
      %p223 = pneg %p222
    $region30: #{_lambda_.21} parent=5 // pred_check_branch
      %225 = sbr.rel (%p223) target = $region32
    $region31: #{_lambda_.21} parent=5 // pred_region
      // Predicated region
      $region33: #{_lambda_.21} parent=31 // pred_check
        %p226 = pneg %p45
      $region34: #{_lambda_.21} parent=31 // pred_check_branch
        %228 = sbr.rel (%p226) target = $region36
      $region35: #{_lambda_.21} parent=31 // pred_region
        %s229 = smul.u32 32, %s18
        %p230 = scmp.lt.s32.totalorder %s229, 63
        %s231 = scalar_select %p230, %s229, 63
        %p232 = scmp.lt.s32.totalorder %s19, 0
        %s233 = scalar_select %p232, %s19, 0
        %s234 = sadd.s32 %s233, %s231
        %s235 = smul.addr %s234, 8
        %s236 = scalar_lea.vmem %s0, %s235
        %s237 = smul.u32 32, %s18
      $region36: #{_lambda_.21} parent=31 // pred_fallthru
        _
    $region32: #{_lambda_.21} parent=5 // pred_fallthru
      _
    %p238 = scmp.le.s32.totalorder 1, %s11
    %p239 = scmp.lt.s32.totalorder %s11, 3
    %p240 = pnand %p238, %p239
    %p241 = pneg %p240
    // Predicated region
    $region37: #{_lambda_.21} parent=5 // pred_check
      _
    $region38: #{_lambda_.21} parent=5 // pred_check_branch
      %243 = sbr.rel (%p240) target = $region40
    $region39: #{_lambda_.21} parent=5 // pred_region
      %s244 = ssub.s32 %s11, 1
      %s245 = smul.u32 32, %s20
      %p246 = scmp.lt.s32.totalorder %s245, 63
      %s247 = scalar_select %p246, %s245, 63
      %p248 = scmp.lt.s32.totalorder %s21, 0
      %s249 = scalar_select %p248, %s21, 0
      %s250 = sadd.s32 %s249, %s247
      %s251 = smul.addr %s250, 8
      %s252 = scalar_lea.vmem %s0, %s251
      %p253 = pneg %p51
      %p254 = pneg %p48
      %p255 = scmp.lt.s32.totalorder %s21, 0
      %s256 = scalar_select %p255, %s21, 0
      %s257 = scalar_lea.vmem %s1, %s256
      %p258 = pneg %p77
      %p259 = pneg %p74
      %p260 = scmp.lt.s32.totalorder %s21, 0
      %s261 = scalar_select %p260, %s21, 0
      %s262 = scalar_lea.vmem %s2, %s261
      %p263 = pneg %p103
      %p264 = pneg %p100
      %p265 = scmp.lt.s32.totalorder %s21, 0
      %s266 = scalar_select %p265, %s21, 0
      %s267 = scalar_lea.vmem %s3, %s266
      %p268 = pneg %p129
      %p269 = pneg %p126
      %p270 = scmp.lt.s32.totalorder %s21, 0
      %s271 = scalar_select %p270, %s21, 0
      %s272 = scalar_lea.vmem %s4, %s271
      %p273 = pneg %p155
      %p274 = pneg %p152
      %p275 = pneg %p183
      %p276 = pneg %p180
      %s277 = smul.u32 32, %s20
      %p278 = scmp.lt.s32.totalorder %s277, 63
      %s279 = scalar_select %p278, %s277, 63
      %p280 = scmp.lt.s32.totalorder %s21, 0
      %s281 = scalar_select %p280, %s21, 0
      %s282 = sadd.s32 %s281, %s279
      %s283 = smul.addr %s282, 4
      %s284 = scalar_lea.vmem %s5, %s283
      %s285 = smul.u32 32, %s20
      %p286 = scmp.lt.s32.totalorder %s285, 63
      %s287 = scalar_select %p286, %s285, 63
      %p288 = scmp.lt.s32.totalorder %s21, 0
      %s289 = scalar_select %p288, %s21, 0
      %s290 = sadd.s32 %s289, %s287
      %s291 = smul.addr %s290, 8
      %s292 = scalar_lea.vmem %s0, %s291
      %s293 = smul.u32 32, %s20
      %p294 = scmp.lt.s32.totalorder %s21, 0
      %s295 = scalar_select %p294, %s21, 0
      %s296 = scalar_lea.vmem %s1, %s295
      %p297 = scmp.lt.s32.totalorder %s21, 0
      %s298 = scalar_select %p297, %s21, 0
      %s299 = scalar_lea.vmem %s2, %s298
      %p300 = scmp.lt.s32.totalorder %s21, 0
      %s301 = scalar_select %p300, %s21, 0
      %s302 = scalar_lea.vmem %s3, %s301
      %p303 = scmp.lt.s32.totalorder %s21, 0
      %s304 = scalar_select %p303, %s21, 0
      %s305 = scalar_lea.vmem %s4, %s304
      %s306 = smul.u32 32, %s20
      %p307 = scmp.lt.s32.totalorder %s306, 63
      %s308 = scalar_select %p307, %s306, 63
      %p309 = scmp.lt.s32.totalorder %s21, 0
      %s310 = scalar_select %p309, %s21, 0
      %s311 = sadd.s32 %s310, %s308
      %s312 = smul.addr %s311, 4
      %s313 = scalar_lea.vmem %s5, %s312
      %s314 = smul.u32 32, %s20
      %v315 = vld [vmem:[%s292] sm:$0xff]
      %v316 = vld [vmem:[%s292 + $0x8] sm:$0xff]
      %v317 = vld [vmem:[%s292 + $0x10] sm:$0xff]
      %v318 = vld [vmem:[%s292 + $0x18] sm:$0xff]
      %v319 = vld [vmem:[%s292 + $0x20] sm:$0xff]
      %v320 = vld [vmem:[%s292 + $0x28] sm:$0xff]
      %v321 = vld [vmem:[%s292 + $0x30] sm:$0xff]
      %v322 = vld [vmem:[%s292 + $0x38] sm:$0xff]
      %v323 = vld [vmem:[%s292 + $0x40] sm:$0xff]
      %v324 = vld [vmem:[%s292 + $0x48] sm:$0xff]
      %v325 = vld [vmem:[%s292 + $0x50] sm:$0xff]
      %v326 = vld [vmem:[%s292 + $0x58] sm:$0xff]
      %v327 = vld [vmem:[%s292 + $0x60] sm:$0xff]
      %v328 = vld [vmem:[%s292 + $0x68] sm:$0xff]
      %v329 = vld [vmem:[%s292 + $0x70] sm:$0xff]
      %v330 = vld [vmem:[%s292 + $0x78] sm:$0xff]
      %v331 = vld [vmem:[%s292 + $0x80] sm:$0xff]
      %v332 = vld [vmem:[%s292 + $0x88] sm:$0xff]
      %v333 = vld [vmem:[%s292 + $0x90] sm:$0xff]
      %v334 = vld [vmem:[%s292 + $0x98] sm:$0xff]
      %v335 = vld [vmem:[%s292 + $0xa0] sm:$0xff]
      %v336 = vld [vmem:[%s292 + $0xa8] sm:$0xff]
      %v337 = vld [vmem:[%s292 + $0xb0] sm:$0xff]
      %v338 = vld [vmem:[%s292 + $0xb8] sm:$0xff]
      %v339 = vld [vmem:[%s292 + $0xc0] sm:$0xff]
      %v340 = vld [vmem:[%s292 + $0xc8] sm:$0xff]
      %v341 = vld [vmem:[%s292 + $0xd0] sm:$0xff]
      %v342 = vld [vmem:[%s292 + $0xd8] sm:$0xff]
      %v343 = vld [vmem:[%s292 + $0xe0] sm:$0xff]
      %v344 = vld [vmem:[%s292 + $0xe8] sm:$0xff]
      %v345 = vld [vmem:[%s292 + $0xf0] sm:$0xff]
      %v346 = vld [vmem:[%s292 + $0xf8] sm:$0xff]
      %v347 = vld [vmem:[%s296] sm:$0x1]
      %v349 = vlaneseq
      %v350 = vshrl.u32 %v349, 7
      %v351 = vsub.s32 0, %v350
      %v352 = vrot.slane %v347, %v351
      %v354 = vsub.f32 %v315, %v352
      %v355 = vsub.f32 %v316, %v352
      %v356 = vsub.f32 %v317, %v352
      %v357 = vsub.f32 %v318, %v352
      %v358 = vsub.f32 %v319, %v352
      %v359 = vsub.f32 %v320, %v352
      %v360 = vsub.f32 %v321, %v352
      %v361 = vsub.f32 %v322, %v352
      %v362 = vsub.f32 %v323, %v352
      %v363 = vsub.f32 %v324, %v352
      %v364 = vsub.f32 %v325, %v352
      %v365 = vsub.f32 %v326, %v352
      %v366 = vsub.f32 %v327, %v352
      %v367 = vsub.f32 %v328, %v352
      %v368 = vsub.f32 %v329, %v352
      %v369 = vsub.f32 %v330, %v352
      %v370 = vsub.f32 %v331, %v352
      %v371 = vsub.f32 %v332, %v352
      %v372 = vsub.f32 %v333, %v352
      %v373 = vsub.f32 %v334, %v352
      %v374 = vsub.f32 %v335, %v352
      %v375 = vsub.f32 %v336, %v352
      %v376 = vsub.f32 %v337, %v352
      %v377 = vsub.f32 %v338, %v352
      %v378 = vsub.f32 %v339, %v352
      %v379 = vsub.f32 %v340, %v352
      %v380 = vsub.f32 %v341, %v352
      %v381 = vsub.f32 %v342, %v352
      %v382 = vsub.f32 %v343, %v352
      %v383 = vsub.f32 %v344, %v352
      %v384 = vsub.f32 %v345, %v352
      %v385 = vsub.f32 %v346, %v352
      %v386 = vld [vmem:[%s299] sm:$0x1]
      %v388 = vlaneseq
      %v389 = vshrl.u32 %v388, 7
      %v390 = vsub.s32 0, %v389
      %v391 = vrot.slane %v386, %v390
      %v393 = vmul.f32 %v354, %v391
      %v394 = vmul.f32 %v355, %v391
      %v395 = vmul.f32 %v356, %v391
      %v396 = vmul.f32 %v357, %v391
      %v397 = vmul.f32 %v358, %v391
      %v398 = vmul.f32 %v359, %v391
      %v399 = vmul.f32 %v360, %v391
      %v400 = vmul.f32 %v361, %v391
      %v401 = vmul.f32 %v362, %v391
      %v402 = vmul.f32 %v363, %v391
      %v403 = vmul.f32 %v364, %v391
      %v404 = vmul.f32 %v365, %v391
      %v405 = vmul.f32 %v366, %v391
      %v406 = vmul.f32 %v367, %v391
      %v407 = vmul.f32 %v368, %v391
      %v408 = vmul.f32 %v369, %v391
      %v409 = vmul.f32 %v370, %v391
      %v410 = vmul.f32 %v371, %v391
      %v411 = vmul.f32 %v372, %v391
      %v412 = vmul.f32 %v373, %v391
      %v413 = vmul.f32 %v374, %v391
      %v414 = vmul.f32 %v375, %v391
      %v415 = vmul.f32 %v376, %v391
      %v416 = vmul.f32 %v377, %v391
      %v417 = vmul.f32 %v378, %v391
      %v418 = vmul.f32 %v379, %v391
      %v419 = vmul.f32 %v380, %v391
      %v420 = vmul.f32 %v381, %v391
      %v421 = vmul.f32 %v382, %v391
      %v422 = vmul.f32 %v383, %v391
      %v423 = vmul.f32 %v384, %v391
      %v424 = vmul.f32 %v385, %v391
      %v425 = vld [vmem:[%s302] sm:$0x1]
      %v427 = vlaneseq
      %v428 = vshrl.u32 %v427, 7
      %v429 = vsub.s32 0, %v428
      %v430 = vrot.slane %v425, %v429
      %v432 = vmul.f32 %v393, %v430
      %v433 = vmul.f32 %v394, %v430
      %v434 = vmul.f32 %v395, %v430
      %v435 = vmul.f32 %v396, %v430
      %v436 = vmul.f32 %v397, %v430
      %v437 = vmul.f32 %v398, %v430
      %v438 = vmul.f32 %v399, %v430
      %v439 = vmul.f32 %v400, %v430
      %v440 = vmul.f32 %v401, %v430
      %v441 = vmul.f32 %v402, %v430
      %v442 = vmul.f32 %v403, %v430
      %v443 = vmul.f32 %v404, %v430
      %v444 = vmul.f32 %v405, %v430
      %v445 = vmul.f32 %v406, %v430
      %v446 = vmul.f32 %v407, %v430
      %v447 = vmul.f32 %v408, %v430
      %v448 = vmul.f32 %v409, %v430
      %v449 = vmul.f32 %v410, %v430
      %v450 = vmul.f32 %v411, %v430
      %v451 = vmul.f32 %v412, %v430
      %v452 = vmul.f32 %v413, %v430
      %v453 = vmul.f32 %v414, %v430
      %v454 = vmul.f32 %v415, %v430
      %v455 = vmul.f32 %v416, %v430
      %v456 = vmul.f32 %v417, %v430
      %v457 = vmul.f32 %v418, %v430
      %v458 = vmul.f32 %v419, %v430
      %v459 = vmul.f32 %v420, %v430
      %v460 = vmul.f32 %v421, %v430
      %v461 = vmul.f32 %v422, %v430
      %v462 = vmul.f32 %v423, %v430
      %v463 = vmul.f32 %v424, %v430
      %v464 = vld [vmem:[%s305] sm:$0x1]
      %v466 = vlaneseq
      %v467 = vshrl.u32 %v466, 7
      %v468 = vsub.s32 0, %v467
      %v469 = vrot.slane %v464, %v468
      %v471 = vadd.f32 %v432, %v469
      %v472 = vadd.f32 %v433, %v469
      %v473 = vadd.f32 %v434, %v469
      %v474 = vadd.f32 %v435, %v469
      %v475 = vadd.f32 %v436, %v469
      %v476 = vadd.f32 %v437, %v469
      %v477 = vadd.f32 %v438, %v469
      %v478 = vadd.f32 %v439, %v469
      %v479 = vadd.f32 %v440, %v469
      %v480 = vadd.f32 %v441, %v469
      %v481 = vadd.f32 %v442, %v469
      %v482 = vadd.f32 %v443, %v469
      %v483 = vadd.f32 %v444, %v469
      %v484 = vadd.f32 %v445, %v469
      %v485 = vadd.f32 %v446, %v469
      %v486 = vadd.f32 %v447, %v469
      %v487 = vadd.f32 %v448, %v469
      %v488 = vadd.f32 %v449, %v469
      %v489 = vadd.f32 %v450, %v469
      %v490 = vadd.f32 %v451, %v469
      %v491 = vadd.f32 %v452, %v469
      %v492 = vadd.f32 %v453, %v469
      %v493 = vadd.f32 %v454, %v469
      %v494 = vadd.f32 %v455, %v469
      %v495 = vadd.f32 %v456, %v469
      %v496 = vadd.f32 %v457, %v469
      %v497 = vadd.f32 %v458, %v469
      %v498 = vadd.f32 %v459, %v469
      %v499 = vadd.f32 %v460, %v469
      %v500 = vadd.f32 %v461, %v469
      %v501 = vadd.f32 %v462, %v469
      %v502 = vadd.f32 %v463, %v469
      %v503 = vmax.f32 %v471, 0.0
      %v504 = vmax.f32 %v472, 0.0
      %v505 = vmax.f32 %v473, 0.0
      %v506 = vmax.f32 %v474, 0.0
      %v507 = vmax.f32 %v475, 0.0
      %v508 = vmax.f32 %v476, 0.0
      %v509 = vmax.f32 %v477, 0.0
      %v510 = vmax.f32 %v478, 0.0
      %v511 = vmax.f32 %v479, 0.0
      %v512 = vmax.f32 %v480, 0.0
      %v513 = vmax.f32 %v481, 0.0
      %v514 = vmax.f32 %v482, 0.0
      %v515 = vmax.f32 %v483, 0.0
      %v516 = vmax.f32 %v484, 0.0
      %v517 = vmax.f32 %v485, 0.0
      %v518 = vmax.f32 %v486, 0.0
      %v519 = vmax.f32 %v487, 0.0
      %v520 = vmax.f32 %v488, 0.0
      %v521 = vmax.f32 %v489, 0.0
      %v522 = vmax.f32 %v490, 0.0
      %v523 = vmax.f32 %v491, 0.0
      %v524 = vmax.f32 %v492, 0.0
      %v525 = vmax.f32 %v493, 0.0
      %v526 = vmax.f32 %v494, 0.0
      %v527 = vmax.f32 %v495, 0.0
      %v528 = vmax.f32 %v496, 0.0
      %v529 = vmax.f32 %v497, 0.0
      %v530 = vmax.f32 %v498, 0.0
      %v531 = vmax.f32 %v499, 0.0
      %v532 = vmax.f32 %v500, 0.0
      %v533 = vmax.f32 %v501, 0.0
      %v534 = vmax.f32 %v502, 0.0
      %v535 = vpack.c.bf16 %v504, %v503
      %v536 = vpack.c.bf16 %v506, %v505
      %v537 = vpack.c.bf16 %v508, %v507
      %v538 = vpack.c.bf16 %v510, %v509
      %v539 = vpack.c.bf16 %v512, %v511
      %v540 = vpack.c.bf16 %v514, %v513
      %v541 = vpack.c.bf16 %v516, %v515
      %v542 = vpack.c.bf16 %v518, %v517
      %v543 = vpack.c.bf16 %v520, %v519
      %v544 = vpack.c.bf16 %v522, %v521
      %v545 = vpack.c.bf16 %v524, %v523
      %v546 = vpack.c.bf16 %v526, %v525
      %v547 = vpack.c.bf16 %v528, %v527
      %v548 = vpack.c.bf16 %v530, %v529
      %v549 = vpack.c.bf16 %v532, %v531
      %v550 = vpack.c.bf16 %v534, %v533
      %v567 = vunpack.c.l.b16 %v535
      %v568 = vunpack.c.h.b16 %v535
      %v569 = vunpack.c.l.b16 %v536
      %v570 = vunpack.c.h.b16 %v536
      %v571 = vunpack.c.l.b16 %v537
      %v572 = vunpack.c.h.b16 %v537
      %v573 = vunpack.c.l.b16 %v538
      %v574 = vunpack.c.h.b16 %v538
      %v575 = vunpack.c.l.b16 %v539
      %v576 = vunpack.c.h.b16 %v539
      %v577 = vunpack.c.l.b16 %v540
      %v578 = vunpack.c.h.b16 %v540
      %v579 = vunpack.c.l.b16 %v541
      %v580 = vunpack.c.h.b16 %v541
      %v581 = vunpack.c.l.b16 %v542
      %v582 = vunpack.c.h.b16 %v542
      %v583 = vunpack.c.l.b16 %v543
      %v584 = vunpack.c.h.b16 %v543
      %v585 = vunpack.c.l.b16 %v544
      %v586 = vunpack.c.h.b16 %v544
      %v587 = vunpack.c.l.b16 %v545
      %v588 = vunpack.c.h.b16 %v545
      %v589 = vunpack.c.l.b16 %v546
      %v590 = vunpack.c.h.b16 %v546
      %v591 = vunpack.c.l.b16 %v547
      %v592 = vunpack.c.h.b16 %v547
      %v593 = vunpack.c.l.b16 %v548
      %v594 = vunpack.c.h.b16 %v548
      %v595 = vunpack.c.l.b16 %v549
      %v596 = vunpack.c.h.b16 %v549
      %v597 = vunpack.c.l.b16 %v550
      %v598 = vunpack.c.h.b16 %v550
      %v599 = vpack.c.b16 %v567, %v567
      %v600 = vpack.c.b16 %v568, %v568
      %v601 = vpack.c.b16 %v569, %v569
      %v602 = vpack.c.b16 %v570, %v570
      %v603 = vpack.c.b16 %v571, %v571
      %v604 = vpack.c.b16 %v572, %v572
      %v605 = vpack.c.b16 %v573, %v573
      %v606 = vpack.c.b16 %v574, %v574
      %v607 = vpack.c.b16 %v575, %v575
      %v608 = vpack.c.b16 %v576, %v576
      %v609 = vpack.c.b16 %v577, %v577
      %v610 = vpack.c.b16 %v578, %v578
      %v611 = vpack.c.b16 %v579, %v579
      %v612 = vpack.c.b16 %v580, %v580
      %v613 = vpack.c.b16 %v581, %v581
      %v614 = vpack.c.b16 %v582, %v582
      %v615 = vpack.c.b16 %v583, %v583
      %v616 = vpack.c.b16 %v584, %v584
      %v617 = vpack.c.b16 %v585, %v585
      %v618 = vpack.c.b16 %v586, %v586
      %v619 = vpack.c.b16 %v587, %v587
      %v620 = vpack.c.b16 %v588, %v588
      %v621 = vpack.c.b16 %v589, %v589
      %v622 = vpack.c.b16 %v590, %v590
      %v623 = vpack.c.b16 %v591, %v591
      %v624 = vpack.c.b16 %v592, %v592
      %v625 = vpack.c.b16 %v593, %v593
      %v626 = vpack.c.b16 %v594, %v594
      %v627 = vpack.c.b16 %v595, %v595
      %v628 = vpack.c.b16 %v596, %v596
      %v629 = vpack.c.b16 %v597, %v597
      %v630 = vpack.c.b16 %v598, %v598
      %663 = vst [vmem:[%s313] sm:$0xf] %v599
      %664 = vst [vmem:[%s313 + $0x4] sm:$0xf] %v600
      %665 = vst [vmem:[%s313 + $0x8] sm:$0xf] %v601
      %666 = vst [vmem:[%s313 + $0xc] sm:$0xf] %v602
      %667 = vst [vmem:[%s313 + $0x10] sm:$0xf] %v603
      %668 = vst [vmem:[%s313 + $0x14] sm:$0xf] %v604
      %669 = vst [vmem:[%s313 + $0x18] sm:$0xf] %v605
      %670 = vst [vmem:[%s313 + $0x1c] sm:$0xf] %v606
      %671 = vst [vmem:[%s313 + $0x20] sm:$0xf] %v607
      %672 = vst [vmem:[%s313 + $0x24] sm:$0xf] %v608
      %673 = vst [vmem:[%s313 + $0x28] sm:$0xf] %v609
      %674 = vst [vmem:[%s313 + $0x2c] sm:$0xf] %v610
      %675 = vst [vmem:[%s313 + $0x30] sm:$0xf] %v611
      %676 = vst [vmem:[%s313 + $0x34] sm:$0xf] %v612
      %677 = vst [vmem:[%s313 + $0x38] sm:$0xf] %v613
      %678 = vst [vmem:[%s313 + $0x3c] sm:$0xf] %v614
      %679 = vst [vmem:[%s313 + $0x40] sm:$0xf] %v615
      %680 = vst [vmem:[%s313 + $0x44] sm:$0xf] %v616
      %681 = vst [vmem:[%s313 + $0x48] sm:$0xf] %v617
      %682 = vst [vmem:[%s313 + $0x4c] sm:$0xf] %v618
      %683 = vst [vmem:[%s313 + $0x50] sm:$0xf] %v619
      %684 = vst [vmem:[%s313 + $0x54] sm:$0xf] %v620
      %685 = vst [vmem:[%s313 + $0x58] sm:$0xf] %v621
      %686 = vst [vmem:[%s313 + $0x5c] sm:$0xf] %v622
      %687 = vst [vmem:[%s313 + $0x60] sm:$0xf] %v623
      %688 = vst [vmem:[%s313 + $0x64] sm:$0xf] %v624
      %689 = vst [vmem:[%s313 + $0x68] sm:$0xf] %v625
      %690 = vst [vmem:[%s313 + $0x6c] sm:$0xf] %v626
      %691 = vst [vmem:[%s313 + $0x70] sm:$0xf] %v627
      %692 = vst [vmem:[%s313 + $0x74] sm:$0xf] %v628
      %693 = vst [vmem:[%s313 + $0x78] sm:$0xf] %v629
      %694 = vst [vmem:[%s313 + $0x7c] sm:$0xf] %v630
      %s695 = smul.u32 32, %s20
      %p696 = scmp.lt.s32.totalorder %s695, 63
      %s697 = scalar_select %p696, %s695, 63
      %p698 = scmp.lt.s32.totalorder %s21, 0
      %s699 = scalar_select %p698, %s21, 0
      %s700 = sadd.s32 %s699, %s697
      %s701 = smul.addr %s700, 4
      %s702 = scalar_lea.vmem %s5, %s701
      // Predicated region
      $region41: #{_lambda_.21} parent=39 // pred_check
        %p703 = pneg %p180
      $region42: #{_lambda_.21} parent=39 // pred_check_branch
        %705 = sbr.rel (%p703) target = $region44
      $region43: #{_lambda_.21} parent=39 // pred_region
        %s706 = smul.u32 32, %s20
      $region44: #{_lambda_.21} parent=39 // pred_fallthru
        _
    $region40: #{_lambda_.21} parent=5 // pred_fallthru
      _
    %p707 = scmp.le.s32.totalorder 2, %s11
    // Predicated region
    $region45: #{_lambda_.21} parent=5 // pred_check
      %p708 = pneg %p707
    $region46: #{_lambda_.21} parent=5 // pred_check_branch
      %710 = sbr.rel (%p708) target = $region48
    $region47: #{_lambda_.21} parent=5 // pred_region
      %s711 = ssub.s32 %s11, 2
      // Predicated region
      $region49: #{_lambda_.21} parent=47 // pred_check
        %p712 = pneg %p186
      $region50: #{_lambda_.21} parent=47 // pred_check_branch
        %714 = sbr.rel (%p712) target = $region52
      $region51: #{_lambda_.21} parent=47 // pred_region
        %s715 = smul.u32 32, %s22
        %p716 = scmp.lt.s32.totalorder %s715, 63
        %s717 = scalar_select %p716, %s715, 63
        %p718 = scmp.lt.s32.totalorder %s23, 0
        %s719 = scalar_select %p718, %s23, 0
        %s720 = sadd.s32 %s719, %s717
        %s721 = smul.addr %s720, 4
        %s722 = scalar_lea.vmem %s5, %s721
      $region52: #{_lambda_.21} parent=47 // pred_fallthru
        _
    $region48: #{_lambda_.21} parent=5 // pred_fallthru
      _
  $region6: #{_lambda_.21} parent=0 // loop_footer
    %s15 = sadd.s32 1, %s11
  $region7: #{_lambda_.21} parent=0 // loop_footer_branch
    %10 = sbr.rel target = $region3
  $region8: #{_lambda_.21} parent=0 // loop_exit
    _

// kernel: _lambda_.23
$region0: #{_lambda_.23}
  #allocation0 [shape = 'u32[]', space=smem, size = 0x4, offset = 0x4, fixed_abs, tag = 'smem constant byte address 0x4 - core index']
  #allocation1 [shape = 'u32[144,128]{1,0:T(1,128)}', space=vmem, size = 0x12000, scoped, tag = 'internal scratch']
  #allocation2 [shape = 'f32[1,128]{1,0:T(1,128)}', space=vmem, size = 0x200, scoped, tag = 'scratch operand']
  #allocation3 [shape = 'f32[1,128]{1,0:T(1,128)}', space=vmem, size = 0x200, scoped, tag = 'scratch operand']
  %s0 = inlined_call_operand.vmem [shape: f32[2048,128], index: 0, kind: input, shape index: {}]
  %s1 = inlined_call_operand.vmem [shape: f32[1,128], index: 1, kind: output, shape index: {0}]
  %s2 = inlined_call_operand.vmem [shape: f32[1,128], index: 2, kind: output, shape index: {1}]
  %3 = xla_tuple %s1, %s2
  %s4 = sld [smem:[#allocation0]]
  $region53: #{_lambda_.23} parent=0
    _
  %s6 = ssub.s32 1, %s4
  %s7 = scalar_select 0, %s6, %s4
  loop: start=0, step=1, limit=10
  $region2: #{_lambda_.23} parent=0 // loop_pre_header
    _
  $region3: #{_lambda_.23} parent=0 // loop_header
    %s9 = sphi 0, %s13
    %p10 = scmp.ge.s32.totalorder %s9, 10
    %s16 = sphi 0, %s28
    %s17 = sphi 0, %s24
    %s18 = sphi 0, %s16
    %s19 = sphi 0, %s17
    %s20 = sphi 0, %s18
    %s21 = sphi 0, %s19
    %s33 = sphi 0, %s35
    %s36 = sphi 0, %s33
    %s37 = sphi 0, %s36
    %s53 = sphi 0, %s37
    %s59 = sphi 0, %s61
    %s62 = sphi 0, %s59
    %s63 = sphi 0, %s62
    %s79 = sphi 0, %s63
    %s85 = sphi 0, %s87
    %s88 = sphi 0, %s85
    %s89 = sphi 0, %s88
    %s105 = sphi 0, %s89
  $region4: #{_lambda_.23} parent=0 // loop_header_branch
    %12 = sbr.rel (%p10) target = $region8
  $region5: #{_lambda_.23} parent=0 // loop_body
    %s14 = ssub.s32 %s9, 1
    %s15 = ssub.s32 %s9, 2
    %s22 = sadd.s32 1, %s17
    %p23 = scmp.ge.s32.totalorder %s22, 8
    %s24 = scalar_select %p23, 0, %s22
    %s25 = sadd.s32 1, %s16
    %s26 = scalar_select %p23, %s25, %s16
    %p27 = scmp.ge.s32.totalorder %s26, 1
    %s28 = scalar_select %p27, 0, %s26
    %s29 = ssub.s32 %s17, %s24
    %s30 = ssub.s32 %s16, %s28
    %s31 = sor.u32 %s29, %s30
    %p32 = scmp.eq.s32.totalorder %s31, 0
    %s34 = sadd.s32 %s33, 1
    %s35 = scalar_select %p32, %s33, %s34
    %p38 = pneg %p32
    %p39 = scmp.eq.s32.totalorder %s9, 7
    %p40 = por %p38, %p39
    %p41 = scmp.ne.s32.totalorder %s33, %s36
    %p42 = scmp.eq.s32.totalorder %s9, 0
    %p43 = por %p41, %p42
    %p44 = scmp.ne.s32.totalorder %s33, %s36
    %p45 = scmp.eq.s32.totalorder %s14, 7
    %p46 = por %p44, %p45
    %p47 = scmp.ne.s32.totalorder %s36, %s37
    %p48 = scmp.eq.s32.totalorder %s14, 0
    %p49 = por %p47, %p48
    %p50 = scmp.ne.s32.totalorder %s36, %s37
    %p51 = scmp.eq.s32.totalorder %s15, 7
    %p52 = por %p50, %p51
    %p54 = scmp.ne.s32.totalorder %s37, %s53
    %p55 = scmp.eq.s32.totalorder %s15, 0
    %p56 = por %p54, %p55
    %s57 = ssub.s32 %s16, %s28
    %p58 = scmp.eq.s32.totalorder %s57, 0
    %s60 = sadd.s32 %s59, 1
    %s61 = scalar_select %p58, %s59, %s60
    %p64 = pneg %p58
    %p65 = scmp.eq.s32.totalorder %s9, 7
    %p66 = por %p64, %p65
    %p67 = scmp.ne.s32.totalorder %s59, %s62
    %p68 = scmp.eq.s32.totalorder %s9, 0
    %p69 = por %p67, %p68
    %p70 = scmp.ne.s32.totalorder %s59, %s62
    %p71 = scmp.eq.s32.totalorder %s14, 7
    %p72 = por %p70, %p71
    %p73 = scmp.ne.s32.totalorder %s62, %s63
    %p74 = scmp.eq.s32.totalorder %s14, 0
    %p75 = por %p73, %p74
    %p76 = scmp.ne.s32.totalorder %s62, %s63
    %p77 = scmp.eq.s32.totalorder %s15, 7
    %p78 = por %p76, %p77
    %p80 = scmp.ne.s32.totalorder %s63, %s79
    %p81 = scmp.eq.s32.totalorder %s15, 0
    %p82 = por %p80, %p81
    %s83 = ssub.s32 %s16, %s28
    %p84 = scmp.eq.s32.totalorder %s83, 0
    %s86 = sadd.s32 %s85, 1
    %s87 = scalar_select %p84, %s85, %s86
    %p90 = pneg %p84
    %p91 = scmp.eq.s32.totalorder %s9, 7
    %p92 = por %p90, %p91
    %p93 = scmp.ne.s32.totalorder %s85, %s88
    %p94 = scmp.eq.s32.totalorder %s9, 0
    %p95 = por %p93, %p94
    %p96 = scmp.ne.s32.totalorder %s85, %s88
    %p97 = scmp.eq.s32.totalorder %s14, 7
    %p98 = por %p96, %p97
    %p99 = scmp.ne.s32.totalorder %s88, %s89
    %p100 = scmp.eq.s32.totalorder %s14, 0
    %p101 = por %p99, %p100
    %p102 = scmp.ne.s32.totalorder %s88, %s89
    %p103 = scmp.eq.s32.totalorder %s15, 7
    %p104 = por %p102, %p103
    %p106 = scmp.ne.s32.totalorder %s89, %s105
    %p107 = scmp.eq.s32.totalorder %s15, 0
    %p108 = por %p106, %p107
    %p109 = scmp.le.s32.totalorder 1, %s9
    %p110 = scmp.lt.s32.totalorder %s9, 9
    %p111 = pnand %p109, %p110
    %p112 = pneg %p111
    // Predicated region
    $region9: #{_lambda_.23} parent=5 // pred_check
      _
    $region10: #{_lambda_.23} parent=5 // pred_check_branch
      %114 = sbr.rel (%p111) target = $region12
    $region11: #{_lambda_.23} parent=5 // pred_region
      %s115 = ssub.s32 %s9, 1
    $region12: #{_lambda_.23} parent=5 // pred_fallthru
      _
    %p116 = scmp.lt.s32.totalorder %s9, 8
    // Predicated region
    $region13: #{_lambda_.23} parent=5 // pred_check
      %p117 = pneg %p116
    $region14: #{_lambda_.23} parent=5 // pred_check_branch
      %119 = sbr.rel (%p117) target = $region16
    $region15: #{_lambda_.23} parent=5 // pred_region
      // Predicated region
      $region17: #{_lambda_.23} parent=15 // pred_check
        %p120 = pneg %p43
      $region18: #{_lambda_.23} parent=15 // pred_check_branch
        %122 = sbr.rel (%p120) target = $region20
      $region19: #{_lambda_.23} parent=15 // pred_region
        %s123 = smul.u32 32, %s17
        %p124 = scmp.lt.s32.totalorder %s123, 255
        %s125 = scalar_select %p124, %s123, 255
        %p126 = scmp.lt.s32.totalorder %s16, 0
        %s127 = scalar_select %p126, %s16, 0
        %s128 = sadd.s32 %s127, %s125
        %s129 = smul.addr %s128, 8
        %s130 = scalar_lea.vmem %s0, %s129
        %s131 = smul.u32 32, %s17
      $region20: #{_lambda_.23} parent=15 // pred_fallthru
        _
    $region16: #{_lambda_.23} parent=5 // pred_fallthru
      _
    %p132 = scmp.le.s32.totalorder 1, %s9
    %p133 = scmp.lt.s32.totalorder %s9, 9
    %p134 = pnand %p132, %p133
    %p135 = pneg %p134
    // Predicated region
    $region21: #{_lambda_.23} parent=5 // pred_check
      _
    $region22: #{_lambda_.23} parent=5 // pred_check_branch
      %137 = sbr.rel (%p134) target = $region24
    $region23: #{_lambda_.23} parent=5 // pred_region
      %s138 = ssub.s32 %s9, 1
      %s139 = smul.u32 32, %s19
      %p140 = scmp.lt.s32.totalorder %s139, 255
      %s141 = scalar_select %p140, %s139, 255
      %p142 = scmp.lt.s32.totalorder %s18, 0
      %s143 = scalar_select %p142, %s18, 0
      %s144 = sadd.s32 %s143, %s141
      %s145 = smul.addr %s144, 8
      %s146 = scalar_lea.vmem %s0, %s145
      %p147 = pneg %p49
      %p148 = pneg %p46
      %p149 = pneg %p75
      %p150 = pneg %p72
      %p151 = scmp.lt.s32.totalorder %s18, 0
      %s152 = scalar_select %p151, %s18, 0
      %s153 = scalar_lea.vmem %s1, %s152
      %p154 = pneg %p101
      %p155 = pneg %p98
      %p156 = scmp.lt.s32.totalorder %s18, 0
      %s157 = scalar_select %p156, %s18, 0
      %s158 = scalar_lea.vmem %s2, %s157
      %s159 = smul.u32 32, %s19
      %p160 = scmp.lt.s32.totalorder %s159, 255
      %s161 = scalar_select %p160, %s159, 255
      %p162 = scmp.lt.s32.totalorder %s18, 0
      %s163 = scalar_select %p162, %s18, 0
      %s164 = sadd.s32 %s163, %s161
      %s165 = smul.addr %s164, 8
      %s166 = scalar_lea.vmem %s0, %s165
      %s167 = smul.u32 32, %s19
      %p168 = scmp.lt.s32.totalorder %s18, 0
      %s169 = scalar_select %p168, %s18, 0
      %s170 = scalar_lea.vmem %s1, %s169
      %p171 = scmp.lt.s32.totalorder %s18, 0
      %s172 = scalar_select %p171, %s18, 0
      %s173 = scalar_lea.vmem %s2, %s172
      %p174 = scmp.eq.s32.totalorder %s19, 0
      // Predicated region
      $region25: #{_lambda_.23} parent=23 // pred_check
        %p175 = pneg %p174
      $region26: #{_lambda_.23} parent=23 // pred_check_branch
        %177 = sbr.rel (%p175) target = $region28
      $region27: #{_lambda_.23} parent=23 // pred_region
        %178 = vst [vmem:[#allocation2] sm:$0x1] 0.0
        %179 = vst [vmem:[#allocation3] sm:$0x1] 0.0
      $region28: #{_lambda_.23} parent=23 // pred_fallthru
        _
      %v180 = vld [vmem:[%s166] sm:$0xff]
      %v181 = vld [vmem:[%s166 + $0x8] sm:$0xff]
      %v182 = vld [vmem:[%s166 + $0x10] sm:$0xff]
      %v183 = vld [vmem:[%s166 + $0x18] sm:$0xff]
      %v184 = vld [vmem:[%s166 + $0x20] sm:$0xff]
      %v185 = vld [vmem:[%s166 + $0x28] sm:$0xff]
      %v186 = vld [vmem:[%s166 + $0x30] sm:$0xff]
      %v187 = vld [vmem:[%s166 + $0x38] sm:$0xff]
      %v188 = vld [vmem:[%s166 + $0x40] sm:$0xff]
      %v189 = vld [vmem:[%s166 + $0x48] sm:$0xff]
      %v190 = vld [vmem:[%s166 + $0x50] sm:$0xff]
      %v191 = vld [vmem:[%s166 + $0x58] sm:$0xff]
      %v192 = vld [vmem:[%s166 + $0x60] sm:$0xff]
      %v193 = vld [vmem:[%s166 + $0x68] sm:$0xff]
      %v194 = vld [vmem:[%s166 + $0x70] sm:$0xff]
      %v195 = vld [vmem:[%s166 + $0x78] sm:$0xff]
      %v196 = vld [vmem:[%s166 + $0x80] sm:$0xff]
      %v197 = vld [vmem:[%s166 + $0x88] sm:$0xff]
      %v198 = vld [vmem:[%s166 + $0x90] sm:$0xff]
      %v199 = vld [vmem:[%s166 + $0x98] sm:$0xff]
      %v200 = vld [vmem:[%s166 + $0xa0] sm:$0xff]
      %v201 = vld [vmem:[%s166 + $0xa8] sm:$0xff]
      %v202 = vld [vmem:[%s166 + $0xb0] sm:$0xff]
      %v203 = vld [vmem:[%s166 + $0xb8] sm:$0xff]
      %v204 = vld [vmem:[%s166 + $0xc0] sm:$0xff]
      %v205 = vld [vmem:[%s166 + $0xc8] sm:$0xff]
      %v206 = vld [vmem:[%s166 + $0xd0] sm:$0xff]
      %v207 = vld [vmem:[%s166 + $0xd8] sm:$0xff]
      %v208 = vld [vmem:[%s166 + $0xe0] sm:$0xff]
      %v209 = vld [vmem:[%s166 + $0xe8] sm:$0xff]
      %v210 = vld [vmem:[%s166 + $0xf0] sm:$0xff]
      %v211 = vld [vmem:[%s166 + $0xf8] sm:$0xff]
      %v212 = vld [vmem:[#allocation2] sm:$0x1]
      %v213 = vadd.f32 %v180, %v181
      %v214 = vadd.f32 %v213, %v182
      %v215 = vadd.f32 %v214, %v183
      %v216 = vadd.f32 %v215, %v184
      %v217 = vadd.f32 %v216, %v185
      %v218 = vadd.f32 %v217, %v186
      %v219 = vadd.f32 %v218, %v187
      %v220 = vadd.f32 %v219, %v188
      %v221 = vadd.f32 %v220, %v189
      %v222 = vadd.f32 %v221, %v190
      %v223 = vadd.f32 %v222, %v191
      %v224 = vadd.f32 %v223, %v192
      %v225 = vadd.f32 %v224, %v193
      %v226 = vadd.f32 %v225, %v194
      %v227 = vadd.f32 %v226, %v195
      %v228 = vadd.f32 %v227, %v196
      %v229 = vadd.f32 %v228, %v197
      %v230 = vadd.f32 %v229, %v198
      %v231 = vadd.f32 %v230, %v199
      %v232 = vadd.f32 %v231, %v200
      %v233 = vadd.f32 %v232, %v201
      %v234 = vadd.f32 %v233, %v202
      %v235 = vadd.f32 %v234, %v203
      %v236 = vadd.f32 %v235, %v204
      %v237 = vadd.f32 %v236, %v205
      %v238 = vadd.f32 %v237, %v206
      %v239 = vadd.f32 %v238, %v207
      %v240 = vadd.f32 %v239, %v208
      %v241 = vadd.f32 %v240, %v209
      %v242 = vadd.f32 %v241, %v210
      %v243 = vadd.f32 %v242, %v211
      %v244 = vrot.slane %v243, 4
      %v245 = vadd.f32 %v243, %v244
      %v246 = vrot.slane %v245, 2
      %v247 = vadd.f32 %v245, %v246
      %v248 = vrot.slane %v247, 1
      %v249 = vadd.f32 %v247, %v248
      %v250 = vadd.f32 %v212, %v249
      %251 = vst [vmem:[#allocation2] sm:$0x1] %v250
      %v252 = vld [vmem:[#allocation3] sm:$0x1]
      %v253 = vmul.f32 %v180, %v180
      %v254 = vmul.f32 %v181, %v181
      %v255 = vmul.f32 %v182, %v182
      %v256 = vmul.f32 %v183, %v183
      %v257 = vmul.f32 %v184, %v184
      %v258 = vmul.f32 %v185, %v185
      %v259 = vmul.f32 %v186, %v186
      %v260 = vmul.f32 %v187, %v187
      %v261 = vmul.f32 %v188, %v188
      %v262 = vmul.f32 %v189, %v189
      %v263 = vmul.f32 %v190, %v190
      %v264 = vmul.f32 %v191, %v191
      %v265 = vmul.f32 %v192, %v192
      %v266 = vmul.f32 %v193, %v193
      %v267 = vmul.f32 %v194, %v194
      %v268 = vmul.f32 %v195, %v195
      %v269 = vmul.f32 %v196, %v196
      %v270 = vmul.f32 %v197, %v197
      %v271 = vmul.f32 %v198, %v198
      %v272 = vmul.f32 %v199, %v199
      %v273 = vmul.f32 %v200, %v200
      %v274 = vmul.f32 %v201, %v201
      %v275 = vmul.f32 %v202, %v202
      %v276 = vmul.f32 %v203, %v203
      %v277 = vmul.f32 %v204, %v204
      %v278 = vmul.f32 %v205, %v205
      %v279 = vmul.f32 %v206, %v206
      %v280 = vmul.f32 %v207, %v207
      %v281 = vmul.f32 %v208, %v208
      %v282 = vmul.f32 %v209, %v209
      %v283 = vmul.f32 %v210, %v210
      %v284 = vmul.f32 %v211, %v211
      %v285 = vadd.f32 %v253, %v254
      %v286 = vadd.f32 %v285, %v255
      %v287 = vadd.f32 %v286, %v256
      %v288 = vadd.f32 %v287, %v257
      %v289 = vadd.f32 %v288, %v258
      %v290 = vadd.f32 %v289, %v259
      %v291 = vadd.f32 %v290, %v260
      %v292 = vadd.f32 %v291, %v261
      %v293 = vadd.f32 %v292, %v262
      %v294 = vadd.f32 %v293, %v263
      %v295 = vadd.f32 %v294, %v264
      %v296 = vadd.f32 %v295, %v265
      %v297 = vadd.f32 %v296, %v266
      %v298 = vadd.f32 %v297, %v267
      %v299 = vadd.f32 %v298, %v268
      %v300 = vadd.f32 %v299, %v269
      %v301 = vadd.f32 %v300, %v270
      %v302 = vadd.f32 %v301, %v271
      %v303 = vadd.f32 %v302, %v272
      %v304 = vadd.f32 %v303, %v273
      %v305 = vadd.f32 %v304, %v274
      %v306 = vadd.f32 %v305, %v275
      %v307 = vadd.f32 %v306, %v276
      %v308 = vadd.f32 %v307, %v277
      %v309 = vadd.f32 %v308, %v278
      %v310 = vadd.f32 %v309, %v279
      %v311 = vadd.f32 %v310, %v280
      %v312 = vadd.f32 %v311, %v281
      %v313 = vadd.f32 %v312, %v282
      %v314 = vadd.f32 %v313, %v283
      %v315 = vadd.f32 %v314, %v284
      %v316 = vrot.slane %v315, 4
      %v317 = vadd.f32 %v315, %v316
      %v318 = vrot.slane %v317, 2
      %v319 = vadd.f32 %v317, %v318
      %v320 = vrot.slane %v319, 1
      %v321 = vadd.f32 %v319, %v320
      %v322 = vadd.f32 %v252, %v321
      %323 = vst [vmem:[#allocation3] sm:$0x1] %v322
      %p324 = scmp.eq.s32.totalorder %s19, 7
      // Predicated region
      $region29: #{_lambda_.23} parent=23 // pred_check
        %p325 = pneg %p324
      $region30: #{_lambda_.23} parent=23 // pred_check_branch
        %327 = sbr.rel (%p325) target = $region32
      $region31: #{_lambda_.23} parent=23 // pred_region
        %v328 = vld [vmem:[#allocation2] sm:$0x1]
        %v329 = vmul.f32 %v328, 0.00048828125
        %v330 = vld [vmem:[#allocation3] sm:$0x1]
        %v331 = vmul.f32 %v330, 0.00048828125
        %v332 = vmul.f32 %v329, %v329
        %v333 = vsub.f32 %v331, %v332
        %v334 = vmax.f32 %v333, 0.0
        %335 = vst [vmem:[%s170] sm:$0x1] %v329
        %v336 = vadd.f32 %v334, 1e-05
        %v337 = vrsqrt.pop %v336
        %338 = vst [vmem:[%s173] sm:$0x1] %v337
      $region32: #{_lambda_.23} parent=23 // pred_fallthru
        _
      %p339 = scmp.lt.s32.totalorder %s18, 0
      %s340 = scalar_select %p339, %s18, 0
      %s341 = scalar_lea.vmem %s1, %s340
      %p342 = scmp.lt.s32.totalorder %s18, 0
      %s343 = scalar_select %p342, %s18, 0
      %s344 = scalar_lea.vmem %s2, %s343
      // Predicated region
      $region33: #{_lambda_.23} parent=23 // pred_check
        %p345 = pneg %p72
      $region34: #{_lambda_.23} parent=23 // pred_check_branch
        %347 = sbr.rel (%p345) target = $region36
      $region35: #{_lambda_.23} parent=23 // pred_region
        _
      $region36: #{_lambda_.23} parent=23 // pred_fallthru
        _
      // Predicated region
      $region37: #{_lambda_.23} parent=23 // pred_check
        %p348 = pneg %p98
      $region38: #{_lambda_.23} parent=23 // pred_check_branch
        %350 = sbr.rel (%p348) target = $region40
      $region39: #{_lambda_.23} parent=23 // pred_region
        _
      $region40: #{_lambda_.23} parent=23 // pred_fallthru
        _
      // Predicated region
      $region41: #{_lambda_.23} parent=23 // pred_check
        %p351 = pneg %p72
      $region42: #{_lambda_.23} parent=23 // pred_check_branch
        %353 = sbr.rel (%p351) target = $region44
      $region43: #{_lambda_.23} parent=23 // pred_region
        %p354 = scmp.lt.s32.totalorder %s18, 0
        %s355 = scalar_select %p354, %s18, 0
        %s356 = scalar_lea.vmem %s1, %s355
      $region44: #{_lambda_.23} parent=23 // pred_fallthru
        _
      // Predicated region
      $region45: #{_lambda_.23} parent=23 // pred_check
        %p357 = pneg %p98
      $region46: #{_lambda_.23} parent=23 // pred_check_branch
        %359 = sbr.rel (%p357) target = $region48
      $region47: #{_lambda_.23} parent=23 // pred_region
        %p360 = scmp.lt.s32.totalorder %s18, 0
        %s361 = scalar_select %p360, %s18, 0
        %s362 = scalar_lea.vmem %s2, %s361
      $region48: #{_lambda_.23} parent=23 // pred_fallthru
        _
    $region24: #{_lambda_.23} parent=5 // pred_fallthru
      _
    %p363 = scmp.le.s32.totalorder 2, %s9
    // Predicated region
    $region49: #{_lambda_.23} parent=5 // pred_check
      %p364 = pneg %p363
    $region50: #{_lambda_.23} parent=5 // pred_check_branch
      %366 = sbr.rel (%p364) target = $region52
    $region51: #{_lambda_.23} parent=5 // pred_region
      %s367 = ssub.s32 %s9, 2
    $region52: #{_lambda_.23} parent=5 // pred_fallthru
      _
  $region6: #{_lambda_.23} parent=0 // loop_footer
    %s13 = sadd.s32 1, %s9
  $region7: #{_lambda_.23} parent=0 // loop_footer_branch
    %8 = sbr.rel target = $region3
  $region8: #{_lambda_.23} parent=0 // loop_exit
    _

// kernel: _lambda_.22
$region0: #{_lambda_.22}
  #allocation0 [shape = 'u32[]', space=smem, size = 0x4, offset = 0x4, fixed_abs, tag = 'smem constant byte address 0x4 - core index']
  #allocation1 [shape = 'u32[144,128]{1,0:T(1,128)}', space=vmem, size = 0x12000, scoped, tag = 'internal scratch']
  #allocation2 [shape = 'f32[256,128]{1,0:T(8,128)}', space=vmem, size = 0x20000, scoped, tag = 'scratch operand']
  %s0 = inlined_call_operand.vmem [shape: bf16[4,512,128], index: 0, kind: input, shape index: {}]
  %s1 = inlined_call_operand.vmem [shape: bf16[4,128,128], index: 1, kind: input, shape index: {}]
  %s2 = inlined_call_operand.vmem [shape: f32[4,512,128], index: 2, kind: output, shape index: {}]
  %s3 = sld [smem:[#allocation0]]
  $region49: #{_lambda_.22} parent=0
    _
  %s5 = ssub.s32 1, %s3
  %s6 = scalar_select 0, %s5, %s3
  loop: start=0, step=1, limit=10
  $region2: #{_lambda_.22} parent=0 // loop_pre_header
    _
  $region3: #{_lambda_.22} parent=0 // loop_header
    %s8 = sphi 0, %s12
    %p9 = scmp.ge.s32.totalorder %s8, 10
    %s15 = sphi 0, %s41
    %s16 = sphi 0, %s37
    %s17 = sphi 0, %s33
    %s18 = sphi 0, %s29
    %s19 = sphi 0, %s15
    %s20 = sphi 0, %s16
    %s21 = sphi 0, %s17
    %s22 = sphi 0, %s18
    %s23 = sphi 0, %s19
    %s24 = sphi 0, %s20
    %s25 = sphi 0, %s21
    %s26 = sphi 0, %s22
    %s48 = sphi 0, %s50
    %s51 = sphi 0, %s48
    %s52 = sphi 0, %s51
    %s68 = sphi 0, %s52
    %s78 = sphi 0, %s80
    %s81 = sphi 0, %s78
    %s82 = sphi 0, %s81
    %s98 = sphi 0, %s82
    %s108 = sphi 0, %s110
    %s111 = sphi 0, %s108
    %s112 = sphi 0, %s111
    %s128 = sphi 0, %s112
  $region4: #{_lambda_.22} parent=0 // loop_header_branch
    %11 = sbr.rel (%p9) target = $region8
  $region5: #{_lambda_.22} parent=0 // loop_body
    %s13 = ssub.s32 %s8, 1
    %s14 = ssub.s32 %s8, 2
    %s27 = sadd.s32 1, %s18
    %p28 = scmp.ge.s32.totalorder %s27, 1
    %s29 = scalar_select %p28, 0, %s27
    %s30 = sadd.s32 1, %s17
    %s31 = scalar_select %p28, %s30, %s17
    %p32 = scmp.ge.s32.totalorder %s31, 1
    %s33 = scalar_select %p32, 0, %s31
    %s34 = sadd.s32 1, %s16
    %s35 = scalar_select %p32, %s34, %s16
    %p36 = scmp.ge.s32.totalorder %s35, 2
    %s37 = scalar_select %p36, 0, %s35
    %s38 = sadd.s32 1, %s15
    %s39 = scalar_select %p36, %s38, %s15
    %p40 = scmp.ge.s32.totalorder %s39, 4
    %s41 = scalar_select %p40, 0, %s39
    %s42 = ssub.s32 %s15, %s41
    %s43 = ssub.s32 %s16, %s37
    %s44 = sor.u32 %s42, %s43
    %s45 = ssub.s32 %s18, %s29
    %s46 = sor.u32 %s44, %s45
    %p47 = scmp.eq.s32.totalorder %s46, 0
    %s49 = sadd.s32 %s48, 1
    %s50 = scalar_select %p47, %s48, %s49
    %p53 = pneg %p47
    %p54 = scmp.eq.s32.totalorder %s8, 7
    %p55 = por %p53, %p54
    %p56 = scmp.ne.s32.totalorder %s48, %s51
    %p57 = scmp.eq.s32.totalorder %s8, 0
    %p58 = por %p56, %p57
    %p59 = scmp.ne.s32.totalorder %s48, %s51
    %p60 = scmp.eq.s32.totalorder %s13, 7
    %p61 = por %p59, %p60
    %p62 = scmp.ne.s32.totalorder %s51, %s52
    %p63 = scmp.eq.s32.totalorder %s13, 0
    %p64 = por %p62, %p63
    %p65 = scmp.ne.s32.totalorder %s51, %s52
    %p66 = scmp.eq.s32.totalorder %s14, 7
    %p67 = por %p65, %p66
    %p69 = scmp.ne.s32.totalorder %s52, %s68
    %p70 = scmp.eq.s32.totalorder %s14, 0
    %p71 = por %p69, %p70
    %s72 = ssub.s32 %s15, %s41
    %s73 = ssub.s32 %s18, %s29
    %s74 = sor.u32 %s72, %s73
    %s75 = ssub.s32 %s17, %s33
    %s76 = sor.u32 %s74, %s75
    %p77 = scmp.eq.s32.totalorder %s76, 0
    %s79 = sadd.s32 %s78, 1
    %s80 = scalar_select %p77, %s78, %s79
    %p83 = pneg %p77
    %p84 = scmp.eq.s32.totalorder %s8, 7
    %p85 = por %p83, %p84
    %p86 = scmp.ne.s32.totalorder %s78, %s81
    %p87 = scmp.eq.s32.totalorder %s8, 0
    %p88 = por %p86, %p87
    %p89 = scmp.ne.s32.totalorder %s78, %s81
    %p90 = scmp.eq.s32.totalorder %s13, 7
    %p91 = por %p89, %p90
    %p92 = scmp.ne.s32.totalorder %s81, %s82
    %p93 = scmp.eq.s32.totalorder %s13, 0
    %p94 = por %p92, %p93
    %p95 = scmp.ne.s32.totalorder %s81, %s82
    %p96 = scmp.eq.s32.totalorder %s14, 7
    %p97 = por %p95, %p96
    %p99 = scmp.ne.s32.totalorder %s82, %s98
    %p100 = scmp.eq.s32.totalorder %s14, 0
    %p101 = por %p99, %p100
    %s102 = ssub.s32 %s15, %s41
    %s103 = ssub.s32 %s16, %s37
    %s104 = sor.u32 %s102, %s103
    %s105 = ssub.s32 %s17, %s33
    %s106 = sor.u32 %s104, %s105
    %p107 = scmp.eq.s32.totalorder %s106, 0
    %s109 = sadd.s32 %s108, 1
    %s110 = scalar_select %p107, %s108, %s109
    %p113 = pneg %p107
    %p114 = scmp.eq.s32.totalorder %s8, 7
    %p115 = por %p113, %p114
    %p116 = scmp.ne.s32.totalorder %s108, %s111
    %p117 = scmp.eq.s32.totalorder %s8, 0
    %p118 = por %p116, %p117
    %p119 = scmp.ne.s32.totalorder %s108, %s111
    %p120 = scmp.eq.s32.totalorder %s13, 7
    %p121 = por %p119, %p120
    %p122 = scmp.ne.s32.totalorder %s111, %s112
    %p123 = scmp.eq.s32.totalorder %s13, 0
    %p124 = por %p122, %p123
    %p125 = scmp.ne.s32.totalorder %s111, %s112
    %p126 = scmp.eq.s32.totalorder %s14, 7
    %p127 = por %p125, %p126
    %p129 = scmp.ne.s32.totalorder %s112, %s128
    %p130 = scmp.eq.s32.totalorder %s14, 0
    %p131 = por %p129, %p130
    %p132 = scmp.le.s32.totalorder 1, %s8
    %p133 = scmp.lt.s32.totalorder %s8, 9
    %p134 = pnand %p132, %p133
    %p135 = pneg %p134
    // Predicated region
    $region9: #{_lambda_.22} parent=5 // pred_check
      _
    $region10: #{_lambda_.22} parent=5 // pred_check_branch
      %137 = sbr.rel (%p134) target = $region12
    $region11: #{_lambda_.22} parent=5 // pred_region
      %s138 = ssub.s32 %s8, 1
    $region12: #{_lambda_.22} parent=5 // pred_fallthru
      _
    %p139 = scmp.lt.s32.totalorder %s8, 8
    // Predicated region
    $region13: #{_lambda_.22} parent=5 // pred_check
      %p140 = pneg %p139
    $region14: #{_lambda_.22} parent=5 // pred_check_branch
      %142 = sbr.rel (%p140) target = $region16
    $region15: #{_lambda_.22} parent=5 // pred_region
      // Predicated region
      $region17: #{_lambda_.22} parent=15 // pred_check
        %p143 = pneg %p58
      $region18: #{_lambda_.22} parent=15 // pred_check_branch
        %145 = sbr.rel (%p143) target = $region20
      $region19: #{_lambda_.22} parent=15 // pred_region
        %s146 = smul.u32 32, %s16
        %p147 = scmp.lt.s32.totalorder %s15, 3
        %s148 = scalar_select %p147, %s15, 3
        %p149 = scmp.lt.s32.totalorder %s146, 63
        %s150 = scalar_select %p149, %s146, 63
        %p151 = scmp.lt.s32.totalorder %s18, 0
        %s152 = scalar_select %p151, %s18, 0
        %s153 = sadd.s32 %s152, %s150
        %s154 = smul.addr %s148, 64
        %s155 = sadd.s32 %s153, %s154
        %s156 = smul.addr %s155, 4
        %s157 = scalar_lea.vmem %s0, %s156
        %s158 = smul.u32 32, %s16
      $region20: #{_lambda_.22} parent=15 // pred_fallthru
        _
      // Predicated region
      $region21: #{_lambda_.22} parent=15 // pred_check
        %p159 = pneg %p88
      $region22: #{_lambda_.22} parent=15 // pred_check_branch
        %161 = sbr.rel (%p159) target = $region24
      $region23: #{_lambda_.22} parent=15 // pred_region
        %s162 = smul.u32 16, %s18
        %p163 = scmp.lt.s32.totalorder %s15, 3
        %s164 = scalar_select %p163, %s15, 3
        %p165 = scmp.lt.s32.totalorder %s162, 15
        %s166 = scalar_select %p165, %s162, 15
        %p167 = scmp.lt.s32.totalorder %s17, 0
        %s168 = scalar_select %p167, %s17, 0
        %s169 = sadd.s32 %s168, %s166
        %s170 = smul.addr %s164, 16
        %s171 = sadd.s32 %s169, %s170
        %s172 = smul.addr %s171, 4
        %s173 = scalar_lea.vmem %s1, %s172
        %s174 = smul.u32 16, %s18
      $region24: #{_lambda_.22} parent=15 // pred_fallthru
        _
    $region16: #{_lambda_.22} parent=5 // pred_fallthru
      _
    %p175 = scmp.le.s32.totalorder 1, %s8
    %p176 = scmp.lt.s32.totalorder %s8, 9
    %p177 = pnand %p175, %p176
    %p178 = pneg %p177
    // Predicated region
    $region25: #{_lambda_.22} parent=5 // pred_check
      _
    $region26: #{_lambda_.22} parent=5 // pred_check_branch
      %180 = sbr.rel (%p177) target = $region28
    $region27: #{_lambda_.22} parent=5 // pred_region
      %s181 = ssub.s32 %s8, 1
      %s182 = smul.u32 32, %s20
      %p183 = scmp.lt.s32.totalorder %s19, 3
      %s184 = scalar_select %p183, %s19, 3
      %p185 = scmp.lt.s32.totalorder %s182, 63
      %s186 = scalar_select %p185, %s182, 63
      %p187 = scmp.lt.s32.totalorder %s22, 0
      %s188 = scalar_select %p187, %s22, 0
      %s189 = sadd.s32 %s188, %s186
      %s190 = smul.addr %s184, 64
      %s191 = sadd.s32 %s189, %s190
      %s192 = smul.addr %s191, 4
      %s193 = scalar_lea.vmem %s0, %s192
      %p194 = pneg %p64
      %p195 = pneg %p61
      %s196 = smul.u32 16, %s22
      %p197 = scmp.lt.s32.totalorder %s19, 3
      %s198 = scalar_select %p197, %s19, 3
      %p199 = scmp.lt.s32.totalorder %s196, 15
      %s200 = scalar_select %p199, %s196, 15
      %p201 = scmp.lt.s32.totalorder %s21, 0
      %s202 = scalar_select %p201, %s21, 0
      %s203 = sadd.s32 %s202, %s200
      %s204 = smul.addr %s198, 16
      %s205 = sadd.s32 %s203, %s204
      %s206 = smul.addr %s205, 4
      %s207 = scalar_lea.vmem %s1, %s206
      %p208 = pneg %p94
      %p209 = pneg %p91
      %p210 = pneg %p124
      %p211 = pneg %p121
      %s212 = smul.u32 32, %s20
      %p213 = scmp.lt.s32.totalorder %s19, 3
      %s214 = scalar_select %p213, %s19, 3
      %p215 = scmp.lt.s32.totalorder %s212, 63
      %s216 = scalar_select %p215, %s212, 63
      %p217 = scmp.lt.s32.totalorder %s21, 0
      %s218 = scalar_select %p217, %s21, 0
      %s219 = sadd.s32 %s218, %s216
      %s220 = smul.addr %s214, 64
      %s221 = sadd.s32 %s219, %s220
      %s222 = smul.addr %s221, 8
      %s223 = scalar_lea.vmem %s2, %s222
      %s224 = smul.u32 32, %s20
      %p225 = scmp.lt.s32.totalorder %s19, 3
      %s226 = scalar_select %p225, %s19, 3
      %p227 = scmp.lt.s32.totalorder %s224, 63
      %s228 = scalar_select %p227, %s224, 63
      %p229 = scmp.lt.s32.totalorder %s22, 0
      %s230 = scalar_select %p229, %s22, 0
      %s231 = sadd.s32 %s230, %s228
      %s232 = smul.addr %s226, 64
      %s233 = sadd.s32 %s231, %s232
      %s234 = smul.addr %s233, 4
      %s235 = scalar_lea.vmem %s0, %s234
      %s236 = smul.u32 32, %s20
      %s237 = smul.u32 16, %s22
      %p238 = scmp.lt.s32.totalorder %s19, 3
      %s239 = scalar_select %p238, %s19, 3
      %p240 = scmp.lt.s32.totalorder %s237, 15
      %s241 = scalar_select %p240, %s237, 15
      %p242 = scmp.lt.s32.totalorder %s21, 0
      %s243 = scalar_select %p242, %s21, 0
      %s244 = sadd.s32 %s243, %s241
      %s245 = smul.addr %s239, 16
      %s246 = sadd.s32 %s244, %s245
      %s247 = smul.addr %s246, 4
      %s248 = scalar_lea.vmem %s1, %s247
      %s249 = smul.u32 16, %s22
      %s250 = smul.u32 32, %s20
      %p251 = scmp.lt.s32.totalorder %s19, 3
      %s252 = scalar_select %p251, %s19, 3
      %p253 = scmp.lt.s32.totalorder %s250, 63
      %s254 = scalar_select %p253, %s250, 63
      %p255 = scmp.lt.s32.totalorder %s21, 0
      %s256 = scalar_select %p255, %s21, 0
      %s257 = sadd.s32 %s256, %s254
      %s258 = smul.addr %s252, 64
      %s259 = sadd.s32 %s257, %s258
      %s260 = smul.addr %s259, 8
      %s261 = scalar_lea.vmem %s2, %s260
      %s262 = smul.u32 32, %s20
      %p264 = scmp.eq.s32.totalorder %s22, 0
      // Predicated region
      $region29: #{_lambda_.22} parent=27 // pred_check
        %p265 = pneg %p264
      $region30: #{_lambda_.22} parent=27 // pred_check_branch
        %267 = sbr.rel (%p265) target = $region32
      $region31: #{_lambda_.22} parent=27 // pred_region
        %268 = vst [vmem:[#allocation2] sm:$0xff] 0.0
        %269 = vst [vmem:[#allocation2 + $0x8] sm:$0xff] 0.0
        %270 = vst [vmem:[#allocation2 + $0x10] sm:$0xff] 0.0
        %271 = vst [vmem:[#allocation2 + $0x18] sm:$0xff] 0.0
        %272 = vst [vmem:[#allocation2 + $0x20] sm:$0xff] 0.0
        %273 = vst [vmem:[#allocation2 + $0x28] sm:$0xff] 0.0
        %274 = vst [vmem:[#allocation2 + $0x30] sm:$0xff] 0.0
        %275 = vst [vmem:[#allocation2 + $0x38] sm:$0xff] 0.0
        %276 = vst [vmem:[#allocation2 + $0x40] sm:$0xff] 0.0
        %277 = vst [vmem:[#allocation2 + $0x48] sm:$0xff] 0.0
        %278 = vst [vmem:[#allocation2 + $0x50] sm:$0xff] 0.0
        %279 = vst [vmem:[#allocation2 + $0x58] sm:$0xff] 0.0
        %280 = vst [vmem:[#allocation2 + $0x60] sm:$0xff] 0.0
        %281 = vst [vmem:[#allocation2 + $0x68] sm:$0xff] 0.0
        %282 = vst [vmem:[#allocation2 + $0x70] sm:$0xff] 0.0
        %283 = vst [vmem:[#allocation2 + $0x78] sm:$0xff] 0.0
        %284 = vst [vmem:[#allocation2 + $0x80] sm:$0xff] 0.0
        %285 = vst [vmem:[#allocation2 + $0x88] sm:$0xff] 0.0
        %286 = vst [vmem:[#allocation2 + $0x90] sm:$0xff] 0.0
        %287 = vst [vmem:[#allocation2 + $0x98] sm:$0xff] 0.0
        %288 = vst [vmem:[#allocation2 + $0xa0] sm:$0xff] 0.0
        %289 = vst [vmem:[#allocation2 + $0xa8] sm:$0xff] 0.0
        %290 = vst [vmem:[#allocation2 + $0xb0] sm:$0xff] 0.0
        %291 = vst [vmem:[#allocation2 + $0xb8] sm:$0xff] 0.0
        %292 = vst [vmem:[#allocation2 + $0xc0] sm:$0xff] 0.0
        %293 = vst [vmem:[#allocation2 + $0xc8] sm:$0xff] 0.0
        %294 = vst [vmem:[#allocation2 + $0xd0] sm:$0xff] 0.0
        %295 = vst [vmem:[#allocation2 + $0xd8] sm:$0xff] 0.0
        %296 = vst [vmem:[#allocation2 + $0xe0] sm:$0xff] 0.0
        %297 = vst [vmem:[#allocation2 + $0xe8] sm:$0xff] 0.0
        %298 = vst [vmem:[#allocation2 + $0xf0] sm:$0xff] 0.0
        %299 = vst [vmem:[#allocation2 + $0xf8] sm:$0xff] 0.0
      $region32: #{_lambda_.22} parent=27 // pred_fallthru
        _
      %v300 = vld [vmem:[#allocation2] sm:$0xff]
      %v301 = vld [vmem:[#allocation2 + $0x8] sm:$0xff]
      %v302 = vld [vmem:[#allocation2 + $0x10] sm:$0xff]
      %v303 = vld [vmem:[#allocation2 + $0x18] sm:$0xff]
      %v304 = vld [vmem:[#allocation2 + $0x20] sm:$0xff]
      %v305 = vld [vmem:[#allocation2 + $0x28] sm:$0xff]
      %v306 = vld [vmem:[#allocation2 + $0x30] sm:$0xff]
      %v307 = vld [vmem:[#allocation2 + $0x38] sm:$0xff]
      %v308 = vld [vmem:[#allocation2 + $0x40] sm:$0xff]
      %v309 = vld [vmem:[#allocation2 + $0x48] sm:$0xff]
      %v310 = vld [vmem:[#allocation2 + $0x50] sm:$0xff]
      %v311 = vld [vmem:[#allocation2 + $0x58] sm:$0xff]
      %v312 = vld [vmem:[#allocation2 + $0x60] sm:$0xff]
      %v313 = vld [vmem:[#allocation2 + $0x68] sm:$0xff]
      %v314 = vld [vmem:[#allocation2 + $0x70] sm:$0xff]
      %v315 = vld [vmem:[#allocation2 + $0x78] sm:$0xff]
      %v316 = vld [vmem:[#allocation2 + $0x80] sm:$0xff]
      %v317 = vld [vmem:[#allocation2 + $0x88] sm:$0xff]
      %v318 = vld [vmem:[#allocation2 + $0x90] sm:$0xff]
      %v319 = vld [vmem:[#allocation2 + $0x98] sm:$0xff]
      %v320 = vld [vmem:[#allocation2 + $0xa0] sm:$0xff]
      %v321 = vld [vmem:[#allocation2 + $0xa8] sm:$0xff]
      %v322 = vld [vmem:[#allocation2 + $0xb0] sm:$0xff]
      %v323 = vld [vmem:[#allocation2 + $0xb8] sm:$0xff]
      %v324 = vld [vmem:[#allocation2 + $0xc0] sm:$0xff]
      %v325 = vld [vmem:[#allocation2 + $0xc8] sm:$0xff]
      %v326 = vld [vmem:[#allocation2 + $0xd0] sm:$0xff]
      %v327 = vld [vmem:[#allocation2 + $0xd8] sm:$0xff]
      %v328 = vld [vmem:[#allocation2 + $0xe0] sm:$0xff]
      %v329 = vld [vmem:[#allocation2 + $0xe8] sm:$0xff]
      %v330 = vld [vmem:[#allocation2 + $0xf0] sm:$0xff]
      %v331 = vld [vmem:[#allocation2 + $0xf8] sm:$0xff]
      %v332 = vld [vmem:[%s235] sm:$0xf]
      %v333 = vld [vmem:[%s235 + $0x4] sm:$0xf]
      %v334 = vld [vmem:[%s235 + $0x8] sm:$0xf]
      %v335 = vld [vmem:[%s235 + $0xc] sm:$0xf]
      %v336 = vld [vmem:[%s235 + $0x10] sm:$0xf]
      %v337 = vld [vmem:[%s235 + $0x14] sm:$0xf]
      %v338 = vld [vmem:[%s235 + $0x18] sm:$0xf]
      %v339 = vld [vmem:[%s235 + $0x1c] sm:$0xf]
      %v340 = vld [vmem:[%s235 + $0x20] sm:$0xf]
      %v341 = vld [vmem:[%s235 + $0x24] sm:$0xf]
      %v342 = vld [vmem:[%s235 + $0x28] sm:$0xf]
      %v343 = vld [vmem:[%s235 + $0x2c] sm:$0xf]
      %v344 = vld [vmem:[%s235 + $0x30] sm:$0xf]
      %v345 = vld [vmem:[%s235 + $0x34] sm:$0xf]
      %v346 = vld [vmem:[%s235 + $0x38] sm:$0xf]
      %v347 = vld [vmem:[%s235 + $0x3c] sm:$0xf]
      %v348 = vld [vmem:[%s235 + $0x40] sm:$0xf]
      %v349 = vld [vmem:[%s235 + $0x44] sm:$0xf]
      %v350 = vld [vmem:[%s235 + $0x48] sm:$0xf]
      %v351 = vld [vmem:[%s235 + $0x4c] sm:$0xf]
      %v352 = vld [vmem:[%s235 + $0x50] sm:$0xf]
      %v353 = vld [vmem:[%s235 + $0x54] sm:$0xf]
      %v354 = vld [vmem:[%s235 + $0x58] sm:$0xf]
      %v355 = vld [vmem:[%s235 + $0x5c] sm:$0xf]
      %v356 = vld [vmem:[%s235 + $0x60] sm:$0xf]
      %v357 = vld [vmem:[%s235 + $0x64] sm:$0xf]
      %v358 = vld [vmem:[%s235 + $0x68] sm:$0xf]
      %v359 = vld [vmem:[%s235 + $0x6c] sm:$0xf]
      %v360 = vld [vmem:[%s235 + $0x70] sm:$0xf]
      %v361 = vld [vmem:[%s235 + $0x74] sm:$0xf]
      %v362 = vld [vmem:[%s235 + $0x78] sm:$0xf]
      %v363 = vld [vmem:[%s235 + $0x7c] sm:$0xf]
      %v364 = vld [vmem:[%s248] sm:$0xf]
      %v365 = vld [vmem:[%s248 + $0x4] sm:$0xf]
      %v366 = vld [vmem:[%s248 + $0x8] sm:$0xf]
      %v367 = vld [vmem:[%s248 + $0xc] sm:$0xf]
      %v368 = vld [vmem:[%s248 + $0x10] sm:$0xf]
      %v369 = vld [vmem:[%s248 + $0x14] sm:$0xf]
      %v370 = vld [vmem:[%s248 + $0x18] sm:$0xf]
      %v371 = vld [vmem:[%s248 + $0x1c] sm:$0xf]
      %v372 = vld [vmem:[%s248 + $0x20] sm:$0xf]
      %v373 = vld [vmem:[%s248 + $0x24] sm:$0xf]
      %v374 = vld [vmem:[%s248 + $0x28] sm:$0xf]
      %v375 = vld [vmem:[%s248 + $0x2c] sm:$0xf]
      %v376 = vld [vmem:[%s248 + $0x30] sm:$0xf]
      %v377 = vld [vmem:[%s248 + $0x34] sm:$0xf]
      %v378 = vld [vmem:[%s248 + $0x38] sm:$0xf]
      %v379 = vld [vmem:[%s248 + $0x3c] sm:$0xf]
      %v412 = vunpack.c.l.b16 %v332
      %v413 = vunpack.c.l.b16 %v333
      %v414 = vunpack.c.l.b16 %v334
      %v415 = vunpack.c.l.b16 %v335
      %v416 = vunpack.c.l.b16 %v336
      %v417 = vunpack.c.l.b16 %v337
      %v418 = vunpack.c.l.b16 %v338
      %v419 = vunpack.c.l.b16 %v339
      %v420 = vunpack.c.l.b16 %v340
      %v421 = vunpack.c.l.b16 %v341
      %v422 = vunpack.c.l.b16 %v342
      %v423 = vunpack.c.l.b16 %v343
      %v424 = vunpack.c.l.b16 %v344
      %v425 = vunpack.c.l.b16 %v345
      %v426 = vunpack.c.l.b16 %v346
      %v427 = vunpack.c.l.b16 %v347
      %v428 = vunpack.c.l.b16 %v348
      %v429 = vunpack.c.l.b16 %v349
      %v430 = vunpack.c.l.b16 %v350
      %v431 = vunpack.c.l.b16 %v351
      %v432 = vunpack.c.l.b16 %v352
      %v433 = vunpack.c.l.b16 %v353
      %v434 = vunpack.c.l.b16 %v354
      %v435 = vunpack.c.l.b16 %v355
      %v436 = vunpack.c.l.b16 %v356
      %v437 = vunpack.c.l.b16 %v357
      %v438 = vunpack.c.l.b16 %v358
      %v439 = vunpack.c.l.b16 %v359
      %v440 = vunpack.c.l.b16 %v360
      %v441 = vunpack.c.l.b16 %v361
      %v442 = vunpack.c.l.b16 %v362
      %v443 = vunpack.c.l.b16 %v363
      %v444 = vpack.c.b16 %v413, %v412
      %v445 = vpack.c.b16 %v415, %v414
      %v446 = vpack.c.b16 %v417, %v416
      %v447 = vpack.c.b16 %v419, %v418
      %v448 = vpack.c.b16 %v421, %v420
      %v449 = vpack.c.b16 %v423, %v422
      %v450 = vpack.c.b16 %v425, %v424
      %v451 = vpack.c.b16 %v427, %v426
      %v452 = vpack.c.b16 %v429, %v428
      %v453 = vpack.c.b16 %v431, %v430
      %v454 = vpack.c.b16 %v433, %v432
      %v455 = vpack.c.b16 %v435, %v434
      %v456 = vpack.c.b16 %v437, %v436
      %v457 = vpack.c.b16 %v439, %v438
      %v458 = vpack.c.b16 %v441, %v440
      %v459 = vpack.c.b16 %v443, %v442
      %v492 = vunpack.c.l.b16 %v364
      %v493 = vunpack.c.l.b16 %v365
      %v494 = vunpack.c.l.b16 %v366
      %v495 = vunpack.c.l.b16 %v367
      %v496 = vunpack.c.l.b16 %v368
      %v497 = vunpack.c.l.b16 %v369
      %v498 = vunpack.c.l.b16 %v370
      %v499 = vunpack.c.l.b16 %v371
      %v500 = vunpack.c.l.b16 %v372
      %v501 = vunpack.c.l.b16 %v373
      %v502 = vunpack.c.l.b16 %v374
      %v503 = vunpack.c.l.b16 %v375
      %v504 = vunpack.c.l.b16 %v376
      %v505 = vunpack.c.l.b16 %v377
      %v506 = vunpack.c.l.b16 %v378
      %v507 = vunpack.c.l.b16 %v379
      %v508 = vpack.c.b16 %v493, %v492
      %v509 = vpack.c.b16 %v495, %v494
      %v510 = vpack.c.b16 %v497, %v496
      %v511 = vpack.c.b16 %v499, %v498
      %v512 = vpack.c.b16 %v501, %v500
      %v513 = vpack.c.b16 %v503, %v502
      %v514 = vpack.c.b16 %v505, %v504
      %v515 = vpack.c.b16 %v507, %v506
      %524 = vmatprep.subr.bf16.mxu0 0
      %525 = vmatpush1.bf16.msra.mxu0 %v515
      %526 = vmatprep.subr.bf16.mxu0 0
      %527 = vmatpush1.bf16.msra.mxu0 %v514
      %528 = vmatprep.subr.bf16.mxu0 0
      %529 = vmatpush1.bf16.msra.mxu0 %v513
      %530 = vmatprep.subr.bf16.mxu0 0
      %531 = vmatpush1.bf16.msra.mxu0 %v512
      %532 = vmatprep.subr.bf16.mxu0 0
      %533 = vmatpush1.bf16.msra.mxu0 %v511
      %534 = vmatprep.subr.bf16.mxu0 0
      %535 = vmatpush1.bf16.msra.mxu0 %v510
      %536 = vmatprep.subr.bf16.mxu0 0
      %537 = vmatpush1.bf16.msra.mxu0 %v509
      %538 = vmatprep.subr.bf16.mxu0 0
      %539 = vmatpush1.bf16.msra.mxu0 %v508
      %540 = vmatprep.subr.bf16.mxu0 0
      %541 = vmatpush2.bf16.msra.mxu0 0
      %542 = vmatprep.subr.bf16.mxu0 0
      %543 = vmatpush2.bf16.msra.mxu0 0
      %544 = vmatprep.subr.bf16.mxu0 0
      %545 = vmatpush2.bf16.msra.mxu0 0
      %546 = vmatprep.subr.bf16.mxu0 0
      %547 = vmatpush2.bf16.msra.mxu0 0
      %548 = vmatprep.subr.bf16.mxu0 0
      %549 = vmatpush2.bf16.msra.mxu0 0
      %550 = vmatprep.subr.bf16.mxu0 0
      %551 = vmatpush2.bf16.msra.mxu0 0
      %552 = vmatprep.subr.bf16.mxu0 0
      %553 = vmatpush2.bf16.msra.mxu0 0
      %554 = vmatprep.subr.bf16.mxu0 0
      %555 = vmatpush2.bf16.msra.mxu0 0
      %556 = vmatprep.mubr.bf16.mxu0 0
      %557 = vmatmul.mubr.bf16.gmra.mxu0 %v444
      %v558 = vpop.f32.mrf.mxu0
      %v559 = vadd.f32 0.0, %v558
      %v560 = vpop.f32.mrf.mxu0
      %v561 = vpop.f32.mrf.mxu0
      %v562 = vadd.f32 0.0, %v561
      %v563 = vpop.f32.mrf.mxu0
      %564 = vmatprep.mubr.bf16.mxu0 0
      %565 = vmatmul.mubr.bf16.gmra.mxu0 %v445
      %v566 = vpop.f32.mrf.mxu0
      %v567 = vadd.f32 0.0, %v566
      %v568 = vpop.f32.mrf.mxu0
      %v569 = vpop.f32.mrf.mxu0
      %v570 = vadd.f32 0.0, %v569
      %v571 = vpop.f32.mrf.mxu0
      %572 = vmatprep.mubr.bf16.mxu0 0
      %573 = vmatmul.mubr.bf16.gmra.mxu0 %v446
      %v574 = vpop.f32.mrf.mxu0
      %v575 = vadd.f32 0.0, %v574
      %v576 = vpop.f32.mrf.mxu0
      %v577 = vpop.f32.mrf.mxu0
      %v578 = vadd.f32 0.0, %v577
      %v579 = vpop.f32.mrf.mxu0
      %580 = vmatprep.mubr.bf16.mxu0 0
      %581 = vmatmul.mubr.bf16.gmra.mxu0 %v447
      %v582 = vpop.f32.mrf.mxu0
      %v583 = vadd.f32 0.0, %v582
      %v584 = vpop.f32.mrf.mxu0
      %v585 = vpop.f32.mrf.mxu0
      %v586 = vadd.f32 0.0, %v585
      %v587 = vpop.f32.mrf.mxu0
      %588 = vmatprep.mubr.bf16.mxu0 0
      %589 = vmatmul.mubr.bf16.gmra.mxu0 %v448
      %v590 = vpop.f32.mrf.mxu0
      %v591 = vadd.f32 0.0, %v590
      %v592 = vpop.f32.mrf.mxu0
      %v593 = vpop.f32.mrf.mxu0
      %v594 = vadd.f32 0.0, %v593
      %v595 = vpop.f32.mrf.mxu0
      %596 = vmatprep.mubr.bf16.mxu0 0
      %597 = vmatmul.mubr.bf16.gmra.mxu0 %v449
      %v598 = vpop.f32.mrf.mxu0
      %v599 = vadd.f32 0.0, %v598
      %v600 = vpop.f32.mrf.mxu0
      %v601 = vpop.f32.mrf.mxu0
      %v602 = vadd.f32 0.0, %v601
      %v603 = vpop.f32.mrf.mxu0
      %604 = vmatprep.mubr.bf16.mxu0 0
      %605 = vmatmul.mubr.bf16.gmra.mxu0 %v450
      %v606 = vpop.f32.mrf.mxu0
      %v607 = vadd.f32 0.0, %v606
      %v608 = vpop.f32.mrf.mxu0
      %v609 = vpop.f32.mrf.mxu0
      %v610 = vadd.f32 0.0, %v609
      %v611 = vpop.f32.mrf.mxu0
      %612 = vmatprep.mubr.bf16.mxu0 0
      %613 = vmatmul.mubr.bf16.gmra.mxu0 %v451
      %v614 = vpop.f32.mrf.mxu0
      %v615 = vadd.f32 0.0, %v614
      %v616 = vpop.f32.mrf.mxu0
      %v617 = vpop.f32.mrf.mxu0
      %v618 = vadd.f32 0.0, %v617
      %v619 = vpop.f32.mrf.mxu0
      %620 = vmatprep.mubr.bf16.mxu0 0
      %621 = vmatmul.mubr.bf16.gmra.mxu0 %v452
      %v622 = vpop.f32.mrf.mxu0
      %v623 = vadd.f32 0.0, %v622
      %v624 = vpop.f32.mrf.mxu0
      %v625 = vpop.f32.mrf.mxu0
      %v626 = vadd.f32 0.0, %v625
      %v627 = vpop.f32.mrf.mxu0
      %628 = vmatprep.mubr.bf16.mxu0 0
      %629 = vmatmul.mubr.bf16.gmra.mxu0 %v453
      %v630 = vpop.f32.mrf.mxu0
      %v631 = vadd.f32 0.0, %v630
      %v632 = vpop.f32.mrf.mxu0
      %v633 = vpop.f32.mrf.mxu0
      %v634 = vadd.f32 0.0, %v633
      %v635 = vpop.f32.mrf.mxu0
      %636 = vmatprep.mubr.bf16.mxu0 0
      %637 = vmatmul.mubr.bf16.gmra.mxu0 %v454
      %v638 = vpop.f32.mrf.mxu0
      %v639 = vadd.f32 0.0, %v638
      %v640 = vpop.f32.mrf.mxu0
      %v641 = vpop.f32.mrf.mxu0
      %v642 = vadd.f32 0.0, %v641
      %v643 = vpop.f32.mrf.mxu0
      %644 = vmatprep.mubr.bf16.mxu0 0
      %645 = vmatmul.mubr.bf16.gmra.mxu0 %v455
      %v646 = vpop.f32.mrf.mxu0
      %v647 = vadd.f32 0.0, %v646
      %v648 = vpop.f32.mrf.mxu0
      %v649 = vpop.f32.mrf.mxu0
      %v650 = vadd.f32 0.0, %v649
      %v651 = vpop.f32.mrf.mxu0
      %652 = vmatprep.mubr.bf16.mxu0 0
      %653 = vmatmul.mubr.bf16.gmra.mxu0 %v456
      %v654 = vpop.f32.mrf.mxu0
      %v655 = vadd.f32 0.0, %v654
      %v656 = vpop.f32.mrf.mxu0
      %v657 = vpop.f32.mrf.mxu0
      %v658 = vadd.f32 0.0, %v657
      %v659 = vpop.f32.mrf.mxu0
      %660 = vmatprep.mubr.bf16.mxu0 0
      %661 = vmatmul.mubr.bf16.gmra.mxu0 %v457
      %v662 = vpop.f32.mrf.mxu0
      %v663 = vadd.f32 0.0, %v662
      %v664 = vpop.f32.mrf.mxu0
      %v665 = vpop.f32.mrf.mxu0
      %v666 = vadd.f32 0.0, %v665
      %v667 = vpop.f32.mrf.mxu0
      %668 = vmatprep.mubr.bf16.mxu0 0
      %669 = vmatmul.mubr.bf16.gmra.mxu0 %v458
      %v670 = vpop.f32.mrf.mxu0
      %v671 = vadd.f32 0.0, %v670
      %v672 = vpop.f32.mrf.mxu0
      %v673 = vpop.f32.mrf.mxu0
      %v674 = vadd.f32 0.0, %v673
      %v675 = vpop.f32.mrf.mxu0
      %676 = vmatprep.mubr.bf16.mxu0 0
      %677 = vmatmul.mubr.bf16.gmra.mxu0 %v459
      %v678 = vpop.f32.mrf.mxu0
      %v679 = vadd.f32 0.0, %v678
      %v680 = vpop.f32.mrf.mxu0
      %v681 = vpop.f32.mrf.mxu0
      %v682 = vadd.f32 0.0, %v681
      %v683 = vpop.f32.mrf.mxu0
      %684 = vdwg.mxu0
      %v685 = vadd.f32 %v300, %v559
      %v686 = vadd.f32 %v301, %v562
      %v687 = vadd.f32 %v302, %v567
      %v688 = vadd.f32 %v303, %v570
      %v689 = vadd.f32 %v304, %v575
      %v690 = vadd.f32 %v305, %v578
      %v691 = vadd.f32 %v306, %v583
      %v692 = vadd.f32 %v307, %v586
      %v693 = vadd.f32 %v308, %v591
      %v694 = vadd.f32 %v309, %v594
      %v695 = vadd.f32 %v310, %v599
      %v696 = vadd.f32 %v311, %v602
      %v697 = vadd.f32 %v312, %v607
      %v698 = vadd.f32 %v313, %v610
      %v699 = vadd.f32 %v314, %v615
      %v700 = vadd.f32 %v315, %v618
      %v701 = vadd.f32 %v316, %v623
      %v702 = vadd.f32 %v317, %v626
      %v703 = vadd.f32 %v318, %v631
      %v704 = vadd.f32 %v319, %v634
      %v705 = vadd.f32 %v320, %v639
      %v706 = vadd.f32 %v321, %v642
      %v707 = vadd.f32 %v322, %v647
      %v708 = vadd.f32 %v323, %v650
      %v709 = vadd.f32 %v324, %v655
      %v710 = vadd.f32 %v325, %v658
      %v711 = vadd.f32 %v326, %v663
      %v712 = vadd.f32 %v327, %v666
      %v713 = vadd.f32 %v328, %v671
      %v714 = vadd.f32 %v329, %v674
      %v715 = vadd.f32 %v330, %v679
      %v716 = vadd.f32 %v331, %v682
      %717 = vst [vmem:[#allocation2] sm:$0xff] %v685
      %718 = vst [vmem:[#allocation2 + $0x8] sm:$0xff] %v686
      %719 = vst [vmem:[#allocation2 + $0x10] sm:$0xff] %v687
      %720 = vst [vmem:[#allocation2 + $0x18] sm:$0xff] %v688
      %721 = vst [vmem:[#allocation2 + $0x20] sm:$0xff] %v689
      %722 = vst [vmem:[#allocation2 + $0x28] sm:$0xff] %v690
      %723 = vst [vmem:[#allocation2 + $0x30] sm:$0xff] %v691
      %724 = vst [vmem:[#allocation2 + $0x38] sm:$0xff] %v692
      %725 = vst [vmem:[#allocation2 + $0x40] sm:$0xff] %v693
      %726 = vst [vmem:[#allocation2 + $0x48] sm:$0xff] %v694
      %727 = vst [vmem:[#allocation2 + $0x50] sm:$0xff] %v695
      %728 = vst [vmem:[#allocation2 + $0x58] sm:$0xff] %v696
      %729 = vst [vmem:[#allocation2 + $0x60] sm:$0xff] %v697
      %730 = vst [vmem:[#allocation2 + $0x68] sm:$0xff] %v698
      %731 = vst [vmem:[#allocation2 + $0x70] sm:$0xff] %v699
      %732 = vst [vmem:[#allocation2 + $0x78] sm:$0xff] %v700
      %733 = vst [vmem:[#allocation2 + $0x80] sm:$0xff] %v701
      %734 = vst [vmem:[#allocation2 + $0x88] sm:$0xff] %v702
      %735 = vst [vmem:[#allocation2 + $0x90] sm:$0xff] %v703
      %736 = vst [vmem:[#allocation2 + $0x98] sm:$0xff] %v704
      %737 = vst [vmem:[#allocation2 + $0xa0] sm:$0xff] %v705
      %738 = vst [vmem:[#allocation2 + $0xa8] sm:$0xff] %v706
      %739 = vst [vmem:[#allocation2 + $0xb0] sm:$0xff] %v707
      %740 = vst [vmem:[#allocation2 + $0xb8] sm:$0xff] %v708
      %741 = vst [vmem:[#allocation2 + $0xc0] sm:$0xff] %v709
      %742 = vst [vmem:[#allocation2 + $0xc8] sm:$0xff] %v710
      %743 = vst [vmem:[#allocation2 + $0xd0] sm:$0xff] %v711
      %744 = vst [vmem:[#allocation2 + $0xd8] sm:$0xff] %v712
      %745 = vst [vmem:[#allocation2 + $0xe0] sm:$0xff] %v713
      %746 = vst [vmem:[#allocation2 + $0xe8] sm:$0xff] %v714
      %747 = vst [vmem:[#allocation2 + $0xf0] sm:$0xff] %v715
      %748 = vst [vmem:[#allocation2 + $0xf8] sm:$0xff] %v716
      // Predicated region
      $region33: #{_lambda_.22} parent=27 // pred_check
        %p749 = pneg %p264
      $region34: #{_lambda_.22} parent=27 // pred_check_branch
        %751 = sbr.rel (%p749) target = $region36
      $region35: #{_lambda_.22} parent=27 // pred_region
        %v752 = vld [vmem:[#allocation2] sm:$0xff]
        %v753 = vld [vmem:[#allocation2 + $0x8] sm:$0xff]
        %v754 = vld [vmem:[#allocation2 + $0x10] sm:$0xff]
        %v755 = vld [vmem:[#allocation2 + $0x18] sm:$0xff]
        %v756 = vld [vmem:[#allocation2 + $0x20] sm:$0xff]
        %v757 = vld [vmem:[#allocation2 + $0x28] sm:$0xff]
        %v758 = vld [vmem:[#allocation2 + $0x30] sm:$0xff]
        %v759 = vld [vmem:[#allocation2 + $0x38] sm:$0xff]
        %v760 = vld [vmem:[#allocation2 + $0x40] sm:$0xff]
        %v761 = vld [vmem:[#allocation2 + $0x48] sm:$0xff]
        %v762 = vld [vmem:[#allocation2 + $0x50] sm:$0xff]
        %v763 = vld [vmem:[#allocation2 + $0x58] sm:$0xff]
        %v764 = vld [vmem:[#allocation2 + $0x60] sm:$0xff]
        %v765 = vld [vmem:[#allocation2 + $0x68] sm:$0xff]
        %v766 = vld [vmem:[#allocation2 + $0x70] sm:$0xff]
        %v767 = vld [vmem:[#allocation2 + $0x78] sm:$0xff]
        %v768 = vld [vmem:[#allocation2 + $0x80] sm:$0xff]
        %v769 = vld [vmem:[#allocation2 + $0x88] sm:$0xff]
        %v770 = vld [vmem:[#allocation2 + $0x90] sm:$0xff]
        %v771 = vld [vmem:[#allocation2 + $0x98] sm:$0xff]
        %v772 = vld [vmem:[#allocation2 + $0xa0] sm:$0xff]
        %v773 = vld [vmem:[#allocation2 + $0xa8] sm:$0xff]
        %v774 = vld [vmem:[#allocation2 + $0xb0] sm:$0xff]
        %v775 = vld [vmem:[#allocation2 + $0xb8] sm:$0xff]
        %v776 = vld [vmem:[#allocation2 + $0xc0] sm:$0xff]
        %v777 = vld [vmem:[#allocation2 + $0xc8] sm:$0xff]
        %v778 = vld [vmem:[#allocation2 + $0xd0] sm:$0xff]
        %v779 = vld [vmem:[#allocation2 + $0xd8] sm:$0xff]
        %v780 = vld [vmem:[#allocation2 + $0xe0] sm:$0xff]
        %v781 = vld [vmem:[#allocation2 + $0xe8] sm:$0xff]
        %v782 = vld [vmem:[#allocation2 + $0xf0] sm:$0xff]
        %v783 = vld [vmem:[#allocation2 + $0xf8] sm:$0xff]
        %784 = vst [vmem:[%s261] sm:$0xff] %v752
        %785 = vst [vmem:[%s261 + $0x8] sm:$0xff] %v753
        %786 = vst [vmem:[%s261 + $0x10] sm:$0xff] %v754
        %787 = vst [vmem:[%s261 + $0x18] sm:$0xff] %v755
        %788 = vst [vmem:[%s261 + $0x20] sm:$0xff] %v756
        %789 = vst [vmem:[%s261 + $0x28] sm:$0xff] %v757
        %790 = vst [vmem:[%s261 + $0x30] sm:$0xff] %v758
        %791 = vst [vmem:[%s261 + $0x38] sm:$0xff] %v759
        %792 = vst [vmem:[%s261 + $0x40] sm:$0xff] %v760
        %793 = vst [vmem:[%s261 + $0x48] sm:$0xff] %v761
        %794 = vst [vmem:[%s261 + $0x50] sm:$0xff] %v762
        %795 = vst [vmem:[%s261 + $0x58] sm:$0xff] %v763
        %796 = vst [vmem:[%s261 + $0x60] sm:$0xff] %v764
        %797 = vst [vmem:[%s261 + $0x68] sm:$0xff] %v765
        %798 = vst [vmem:[%s261 + $0x70] sm:$0xff] %v766
        %799 = vst [vmem:[%s261 + $0x78] sm:$0xff] %v767
        %800 = vst [vmem:[%s261 + $0x80] sm:$0xff] %v768
        %801 = vst [vmem:[%s261 + $0x88] sm:$0xff] %v769
        %802 = vst [vmem:[%s261 + $0x90] sm:$0xff] %v770
        %803 = vst [vmem:[%s261 + $0x98] sm:$0xff] %v771
        %804 = vst [vmem:[%s261 + $0xa0] sm:$0xff] %v772
        %805 = vst [vmem:[%s261 + $0xa8] sm:$0xff] %v773
        %806 = vst [vmem:[%s261 + $0xb0] sm:$0xff] %v774
        %807 = vst [vmem:[%s261 + $0xb8] sm:$0xff] %v775
        %808 = vst [vmem:[%s261 + $0xc0] sm:$0xff] %v776
        %809 = vst [vmem:[%s261 + $0xc8] sm:$0xff] %v777
        %810 = vst [vmem:[%s261 + $0xd0] sm:$0xff] %v778
        %811 = vst [vmem:[%s261 + $0xd8] sm:$0xff] %v779
        %812 = vst [vmem:[%s261 + $0xe0] sm:$0xff] %v780
        %813 = vst [vmem:[%s261 + $0xe8] sm:$0xff] %v781
        %814 = vst [vmem:[%s261 + $0xf0] sm:$0xff] %v782
        %815 = vst [vmem:[%s261 + $0xf8] sm:$0xff] %v783
      $region36: #{_lambda_.22} parent=27 // pred_fallthru
        _
      %s816 = smul.u32 32, %s20
      %p817 = scmp.lt.s32.totalorder %s19, 3
      %s818 = scalar_select %p817, %s19, 3
      %p819 = scmp.lt.s32.totalorder %s816, 63
      %s820 = scalar_select %p819, %s816, 63
      %p821 = scmp.lt.s32.totalorder %s21, 0
      %s822 = scalar_select %p821, %s21, 0
      %s823 = sadd.s32 %s822, %s820
      %s824 = smul.addr %s818, 64
      %s825 = sadd.s32 %s823, %s824
      %s826 = smul.addr %s825, 8
      %s827 = scalar_lea.vmem %s2, %s826
      // Predicated region
      $region37: #{_lambda_.22} parent=27 // pred_check
        %p828 = pneg %p121
      $region38: #{_lambda_.22} parent=27 // pred_check_branch
        %830 = sbr.rel (%p828) target = $region40
      $region39: #{_lambda_.22} parent=27 // pred_region
        %s831 = smul.u32 32, %s20
      $region40: #{_lambda_.22} parent=27 // pred_fallthru
        _
    $region28: #{_lambda_.22} parent=5 // pred_fallthru
      _
    %p832 = scmp.le.s32.totalorder 2, %s8
    // Predicated region
    $region41: #{_lambda_.22} parent=5 // pred_check
      %p833 = pneg %p832
    $region42: #{_lambda_.22} parent=5 // pred_check_branch
      %835 = sbr.rel (%p833) target = $region44
    $region43: #{_lambda_.22} parent=5 // pred_region
      %s836 = ssub.s32 %s8, 2
      // Predicated region
      $region45: #{_lambda_.22} parent=43 // pred_check
        %p837 = pneg %p127
      $region46: #{_lambda_.22} parent=43 // pred_check_branch
        %839 = sbr.rel (%p837) target = $region48
      $region47: #{_lambda_.22} parent=43 // pred_region
        %s840 = smul.u32 32, %s24
        %p841 = scmp.lt.s32.totalorder %s23, 3
        %s842 = scalar_select %p841, %s23, 3
        %p843 = scmp.lt.s32.totalorder %s840, 63
        %s844 = scalar_select %p843, %s840, 63
        %p845 = scmp.lt.s32.totalorder %s25, 0
        %s846 = scalar_select %p845, %s25, 0
        %s847 = sadd.s32 %s846, %s844
        %s848 = smul.addr %s842, 64
        %s849 = sadd.s32 %s847, %s848
        %s850 = smul.addr %s849, 8
        %s851 = scalar_lea.vmem %s2, %s850
      $region48: #{_lambda_.22} parent=43 // pred_fallthru
        _
    $region44: #{_lambda_.22} parent=5 // pred_fallthru
      _
  $region6: #{_lambda_.22} parent=0 // loop_footer
    %s12 = sadd.s32 1, %s8
  $region7: #{_lambda_.22} parent=0 // loop_footer_branch
    %7 = sbr.rel target = $region3
  $region8: #{_lambda_.22} parent=0 // loop_exit
    _

// kernel: _lambda_.24
$region0: #{_lambda_.24}
  #allocation0 [shape = 'u32[]', space=smem, size = 0x4, offset = 0x4, fixed_abs, tag = 'smem constant byte address 0x4 - core index']
  #allocation1 [shape = 'u32[144,128]{1,0:T(1,128)}', space=vmem, size = 0x12000, scoped, tag = 'internal scratch']
  %s0 = inlined_call_operand.vmem [shape: f32[2048,128], index: 0, kind: input, shape index: {}]
  %s1 = inlined_call_operand.vmem [shape: f32[1,128], index: 1, kind: input, shape index: {}]
  %s2 = inlined_call_operand.vmem [shape: f32[1,128], index: 2, kind: input, shape index: {}]
  %s3 = inlined_call_operand.vmem [shape: f32[1,128], index: 3, kind: input, shape index: {}]
  %s4 = inlined_call_operand.vmem [shape: f32[1,128], index: 4, kind: input, shape index: {}]
  %s5 = inlined_call_operand.vmem [shape: bf16[2048,128], index: 5, kind: output, shape index: {}]
  %s6 = sld [smem:[#allocation0]]
  $region53: #{_lambda_.24} parent=0
    _
  %s8 = ssub.s32 1, %s6
  %s9 = scalar_select 0, %s8, %s6
  loop: start=0, step=1, limit=10
  $region2: #{_lambda_.24} parent=0 // loop_pre_header
    _
  $region3: #{_lambda_.24} parent=0 // loop_header
    %s11 = sphi 0, %s15
    %p12 = scmp.ge.s32.totalorder %s11, 10
    %s18 = sphi 0, %s30
    %s19 = sphi 0, %s26
    %s20 = sphi 0, %s18
    %s21 = sphi 0, %s19
    %s22 = sphi 0, %s20
    %s23 = sphi 0, %s21
    %s35 = sphi 0, %s37
    %s38 = sphi 0, %s35
    %s39 = sphi 0, %s38
    %s55 = sphi 0, %s39
    %s61 = sphi 0, %s63
    %s64 = sphi 0, %s61
    %s65 = sphi 0, %s64
    %s81 = sphi 0, %s65
    %s87 = sphi 0, %s89
    %s90 = sphi 0, %s87
    %s91 = sphi 0, %s90
    %s107 = sphi 0, %s91
    %s113 = sphi 0, %s115
    %s116 = sphi 0, %s113
    %s117 = sphi 0, %s116
    %s133 = sphi 0, %s117
    %s139 = sphi 0, %s141
    %s142 = sphi 0, %s139
    %s143 = sphi 0, %s142
    %s159 = sphi 0, %s143
    %s167 = sphi 0, %s169
    %s170 = sphi 0, %s167
    %s171 = sphi 0, %s170
    %s187 = sphi 0, %s171
  $region4: #{_lambda_.24} parent=0 // loop_header_branch
    %14 = sbr.rel (%p12) target = $region8
  $region5: #{_lambda_.24} parent=0 // loop_body
    %s16 = ssub.s32 %s11, 1
    %s17 = ssub.s32 %s11, 2
    %s24 = sadd.s32 1, %s19
    %p25 = scmp.ge.s32.totalorder %s24, 1
    %s26 = scalar_select %p25, 0, %s24
    %s27 = sadd.s32 1, %s18
    %s28 = scalar_select %p25, %s27, %s18
    %p29 = scmp.ge.s32.totalorder %s28, 8
    %s30 = scalar_select %p29, 0, %s28
    %s31 = ssub.s32 %s18, %s30
    %s32 = ssub.s32 %s19, %s26
    %s33 = sor.u32 %s31, %s32
    %p34 = scmp.eq.s32.totalorder %s33, 0
    %s36 = sadd.s32 %s35, 1
    %s37 = scalar_select %p34, %s35, %s36
    %p40 = pneg %p34
    %p41 = scmp.eq.s32.totalorder %s11, 7
    %p42 = por %p40, %p41
    %p43 = scmp.ne.s32.totalorder %s35, %s38
    %p44 = scmp.eq.s32.totalorder %s11, 0
    %p45 = por %p43, %p44
    %p46 = scmp.ne.s32.totalorder %s35, %s38
    %p47 = scmp.eq.s32.totalorder %s16, 7
    %p48 = por %p46, %p47
    %p49 = scmp.ne.s32.totalorder %s38, %s39
    %p50 = scmp.eq.s32.totalorder %s16, 0
    %p51 = por %p49, %p50
    %p52 = scmp.ne.s32.totalorder %s38, %s39
    %p53 = scmp.eq.s32.totalorder %s17, 7
    %p54 = por %p52, %p53
    %p56 = scmp.ne.s32.totalorder %s39, %s55
    %p57 = scmp.eq.s32.totalorder %s17, 0
    %p58 = por %p56, %p57
    %s59 = ssub.s32 %s19, %s26
    %p60 = scmp.eq.s32.totalorder %s59, 0
    %s62 = sadd.s32 %s61, 1
    %s63 = scalar_select %p60, %s61, %s62
    %p66 = pneg %p60
    %p67 = scmp.eq.s32.totalorder %s11, 7
    %p68 = por %p66, %p67
    %p69 = scmp.ne.s32.totalorder %s61, %s64
    %p70 = scmp.eq.s32.totalorder %s11, 0
    %p71 = por %p69, %p70
    %p72 = scmp.ne.s32.totalorder %s61, %s64
    %p73 = scmp.eq.s32.totalorder %s16, 7
    %p74 = por %p72, %p73
    %p75 = scmp.ne.s32.totalorder %s64, %s65
    %p76 = scmp.eq.s32.totalorder %s16, 0
    %p77 = por %p75, %p76
    %p78 = scmp.ne.s32.totalorder %s64, %s65
    %p79 = scmp.eq.s32.totalorder %s17, 7
    %p80 = por %p78, %p79
    %p82 = scmp.ne.s32.totalorder %s65, %s81
    %p83 = scmp.eq.s32.totalorder %s17, 0
    %p84 = por %p82, %p83
    %s85 = ssub.s32 %s19, %s26
    %p86 = scmp.eq.s32.totalorder %s85, 0
    %s88 = sadd.s32 %s87, 1
    %s89 = scalar_select %p86, %s87, %s88
    %p92 = pneg %p86
    %p93 = scmp.eq.s32.totalorder %s11, 7
    %p94 = por %p92, %p93
    %p95 = scmp.ne.s32.totalorder %s87, %s90
    %p96 = scmp.eq.s32.totalorder %s11, 0
    %p97 = por %p95, %p96
    %p98 = scmp.ne.s32.totalorder %s87, %s90
    %p99 = scmp.eq.s32.totalorder %s16, 7
    %p100 = por %p98, %p99
    %p101 = scmp.ne.s32.totalorder %s90, %s91
    %p102 = scmp.eq.s32.totalorder %s16, 0
    %p103 = por %p101, %p102
    %p104 = scmp.ne.s32.totalorder %s90, %s91
    %p105 = scmp.eq.s32.totalorder %s17, 7
    %p106 = por %p104, %p105
    %p108 = scmp.ne.s32.totalorder %s91, %s107
    %p109 = scmp.eq.s32.totalorder %s17, 0
    %p110 = por %p108, %p109
    %s111 = ssub.s32 %s19, %s26
    %p112 = scmp.eq.s32.totalorder %s111, 0
    %s114 = sadd.s32 %s113, 1
    %s115 = scalar_select %p112, %s113, %s114
    %p118 = pneg %p112
    %p119 = scmp.eq.s32.totalorder %s11, 7
    %p120 = por %p118, %p119
    %p121 = scmp.ne.s32.totalorder %s113, %s116
    %p122 = scmp.eq.s32.totalorder %s11, 0
    %p123 = por %p121, %p122
    %p124 = scmp.ne.s32.totalorder %s113, %s116
    %p125 = scmp.eq.s32.totalorder %s16, 7
    %p126 = por %p124, %p125
    %p127 = scmp.ne.s32.totalorder %s116, %s117
    %p128 = scmp.eq.s32.totalorder %s16, 0
    %p129 = por %p127, %p128
    %p130 = scmp.ne.s32.totalorder %s116, %s117
    %p131 = scmp.eq.s32.totalorder %s17, 7
    %p132 = por %p130, %p131
    %p134 = scmp.ne.s32.totalorder %s117, %s133
    %p135 = scmp.eq.s32.totalorder %s17, 0
    %p136 = por %p134, %p135
    %s137 = ssub.s32 %s19, %s26
    %p138 = scmp.eq.s32.totalorder %s137, 0
    %s140 = sadd.s32 %s139, 1
    %s141 = scalar_select %p138, %s139, %s140
    %p144 = pneg %p138
    %p145 = scmp.eq.s32.totalorder %s11, 7
    %p146 = por %p144, %p145
    %p147 = scmp.ne.s32.totalorder %s139, %s142
    %p148 = scmp.eq.s32.totalorder %s11, 0
    %p149 = por %p147, %p148
    %p150 = scmp.ne.s32.totalorder %s139, %s142
    %p151 = scmp.eq.s32.totalorder %s16, 7
    %p152 = por %p150, %p151
    %p153 = scmp.ne.s32.totalorder %s142, %s143
    %p154 = scmp.eq.s32.totalorder %s16, 0
    %p155 = por %p153, %p154
    %p156 = scmp.ne.s32.totalorder %s142, %s143
    %p157 = scmp.eq.s32.totalorder %s17, 7
    %p158 = por %p156, %p157
    %p160 = scmp.ne.s32.totalorder %s143, %s159
    %p161 = scmp.eq.s32.totalorder %s17, 0
    %p162 = por %p160, %p161
    %s163 = ssub.s32 %s18, %s30
    %s164 = ssub.s32 %s19, %s26
    %s165 = sor.u32 %s163, %s164
    %p166 = scmp.eq.s32.totalorder %s165, 0
    %s168 = sadd.s32 %s167, 1
    %s169 = scalar_select %p166, %s167, %s168
    %p172 = pneg %p166
    %p173 = scmp.eq.s32.totalorder %s11, 7
    %p174 = por %p172, %p173
    %p175 = scmp.ne.s32.totalorder %s167, %s170
    %p176 = scmp.eq.s32.totalorder %s11, 0
    %p177 = por %p175, %p176
    %p178 = scmp.ne.s32.totalorder %s167, %s170
    %p179 = scmp.eq.s32.totalorder %s16, 7
    %p180 = por %p178, %p179
    %p181 = scmp.ne.s32.totalorder %s170, %s171
    %p182 = scmp.eq.s32.totalorder %s16, 0
    %p183 = por %p181, %p182
    %p184 = scmp.ne.s32.totalorder %s170, %s171
    %p185 = scmp.eq.s32.totalorder %s17, 7
    %p186 = por %p184, %p185
    %p188 = scmp.ne.s32.totalorder %s171, %s187
    %p189 = scmp.eq.s32.totalorder %s17, 0
    %p190 = por %p188, %p189
    %p191 = scmp.le.s32.totalorder 1, %s11
    %p192 = scmp.lt.s32.totalorder %s11, 9
    %p193 = pnand %p191, %p192
    %p194 = pneg %p193
    // Predicated region
    $region9: #{_lambda_.24} parent=5 // pred_check
      _
    $region10: #{_lambda_.24} parent=5 // pred_check_branch
      %196 = sbr.rel (%p193) target = $region12
    $region11: #{_lambda_.24} parent=5 // pred_region
      %s197 = ssub.s32 %s11, 1
      // Predicated region
      $region13: #{_lambda_.24} parent=11 // pred_check
        %p198 = pneg %p77
      $region14: #{_lambda_.24} parent=11 // pred_check_branch
        %200 = sbr.rel (%p198) target = $region16
      $region15: #{_lambda_.24} parent=11 // pred_region
        %p201 = scmp.lt.s32.totalorder %s21, 0
        %s202 = scalar_select %p201, %s21, 0
        %s203 = scalar_lea.vmem %s1, %s202
      $region16: #{_lambda_.24} parent=11 // pred_fallthru
        _
      // Predicated region
      $region17: #{_lambda_.24} parent=11 // pred_check
        %p204 = pneg %p103
      $region18: #{_lambda_.24} parent=11 // pred_check_branch
        %206 = sbr.rel (%p204) target = $region20
      $region19: #{_lambda_.24} parent=11 // pred_region
        %p207 = scmp.lt.s32.totalorder %s21, 0
        %s208 = scalar_select %p207, %s21, 0
        %s209 = scalar_lea.vmem %s2, %s208
      $region20: #{_lambda_.24} parent=11 // pred_fallthru
        _
      // Predicated region
      $region21: #{_lambda_.24} parent=11 // pred_check
        %p210 = pneg %p129
      $region22: #{_lambda_.24} parent=11 // pred_check_branch
        %212 = sbr.rel (%p210) target = $region24
      $region23: #{_lambda_.24} parent=11 // pred_region
        %p213 = scmp.lt.s32.totalorder %s21, 0
        %s214 = scalar_select %p213, %s21, 0
        %s215 = scalar_lea.vmem %s3, %s214
      $region24: #{_lambda_.24} parent=11 // pred_fallthru
        _
      // Predicated region
      $region25: #{_lambda_.24} parent=11 // pred_check
        %p216 = pneg %p155
      $region26: #{_lambda_.24} parent=11 // pred_check_branch
        %218 = sbr.rel (%p216) target = $region28
      $region27: #{_lambda_.24} parent=11 // pred_region
        %p219 = scmp.lt.s32.totalorder %s21, 0
        %s220 = scalar_select %p219, %s21, 0
        %s221 = scalar_lea.vmem %s4, %s220
      $region28: #{_lambda_.24} parent=11 // pred_fallthru
        _
    $region12: #{_lambda_.24} parent=5 // pred_fallthru
      _
    %p222 = scmp.lt.s32.totalorder %s11, 8
    // Predicated region
    $region29: #{_lambda_.24} parent=5 // pred_check
      %p223 = pneg %p222
    $region30: #{_lambda_.24} parent=5 // pred_check_branch
      %225 = sbr.rel (%p223) target = $region32
    $region31: #{_lambda_.24} parent=5 // pred_region
      // Predicated region
      $region33: #{_lambda_.24} parent=31 // pred_check
        %p226 = pneg %p45
      $region34: #{_lambda_.24} parent=31 // pred_check_branch
        %228 = sbr.rel (%p226) target = $region36
      $region35: #{_lambda_.24} parent=31 // pred_region
        %s229 = smul.u32 32, %s18
        %p230 = scmp.lt.s32.totalorder %s229, 255
        %s231 = scalar_select %p230, %s229, 255
        %p232 = scmp.lt.s32.totalorder %s19, 0
        %s233 = scalar_select %p232, %s19, 0
        %s234 = sadd.s32 %s233, %s231
        %s235 = smul.addr %s234, 8
        %s236 = scalar_lea.vmem %s0, %s235
        %s237 = smul.u32 32, %s18
      $region36: #{_lambda_.24} parent=31 // pred_fallthru
        _
    $region32: #{_lambda_.24} parent=5 // pred_fallthru
      _
    %p238 = scmp.le.s32.totalorder 1, %s11
    %p239 = scmp.lt.s32.totalorder %s11, 9
    %p240 = pnand %p238, %p239
    %p241 = pneg %p240
    // Predicated region
    $region37: #{_lambda_.24} parent=5 // pred_check
      _
    $region38: #{_lambda_.24} parent=5 // pred_check_branch
      %243 = sbr.rel (%p240) target = $region40
    $region39: #{_lambda_.24} parent=5 // pred_region
      %s244 = ssub.s32 %s11, 1
      %s245 = smul.u32 32, %s20
      %p246 = scmp.lt.s32.totalorder %s245, 255
      %s247 = scalar_select %p246, %s245, 255
      %p248 = scmp.lt.s32.totalorder %s21, 0
      %s249 = scalar_select %p248, %s21, 0
      %s250 = sadd.s32 %s249, %s247
      %s251 = smul.addr %s250, 8
      %s252 = scalar_lea.vmem %s0, %s251
      %p253 = pneg %p51
      %p254 = pneg %p48
      %p255 = scmp.lt.s32.totalorder %s21, 0
      %s256 = scalar_select %p255, %s21, 0
      %s257 = scalar_lea.vmem %s1, %s256
      %p258 = pneg %p77
      %p259 = pneg %p74
      %p260 = scmp.lt.s32.totalorder %s21, 0
      %s261 = scalar_select %p260, %s21, 0
      %s262 = scalar_lea.vmem %s2, %s261
      %p263 = pneg %p103
      %p264 = pneg %p100
      %p265 = scmp.lt.s32.totalorder %s21, 0
      %s266 = scalar_select %p265, %s21, 0
      %s267 = scalar_lea.vmem %s3, %s266
      %p268 = pneg %p129
      %p269 = pneg %p126
      %p270 = scmp.lt.s32.totalorder %s21, 0
      %s271 = scalar_select %p270, %s21, 0
      %s272 = scalar_lea.vmem %s4, %s271
      %p273 = pneg %p155
      %p274 = pneg %p152
      %p275 = pneg %p183
      %p276 = pneg %p180
      %s277 = smul.u32 32, %s20
      %p278 = scmp.lt.s32.totalorder %s277, 255
      %s279 = scalar_select %p278, %s277, 255
      %p280 = scmp.lt.s32.totalorder %s21, 0
      %s281 = scalar_select %p280, %s21, 0
      %s282 = sadd.s32 %s281, %s279
      %s283 = smul.addr %s282, 4
      %s284 = scalar_lea.vmem %s5, %s283
      %s285 = smul.u32 32, %s20
      %p286 = scmp.lt.s32.totalorder %s285, 255
      %s287 = scalar_select %p286, %s285, 255
      %p288 = scmp.lt.s32.totalorder %s21, 0
      %s289 = scalar_select %p288, %s21, 0
      %s290 = sadd.s32 %s289, %s287
      %s291 = smul.addr %s290, 8
      %s292 = scalar_lea.vmem %s0, %s291
      %s293 = smul.u32 32, %s20
      %p294 = scmp.lt.s32.totalorder %s21, 0
      %s295 = scalar_select %p294, %s21, 0
      %s296 = scalar_lea.vmem %s1, %s295
      %p297 = scmp.lt.s32.totalorder %s21, 0
      %s298 = scalar_select %p297, %s21, 0
      %s299 = scalar_lea.vmem %s2, %s298
      %p300 = scmp.lt.s32.totalorder %s21, 0
      %s301 = scalar_select %p300, %s21, 0
      %s302 = scalar_lea.vmem %s3, %s301
      %p303 = scmp.lt.s32.totalorder %s21, 0
      %s304 = scalar_select %p303, %s21, 0
      %s305 = scalar_lea.vmem %s4, %s304
      %s306 = smul.u32 32, %s20
      %p307 = scmp.lt.s32.totalorder %s306, 255
      %s308 = scalar_select %p307, %s306, 255
      %p309 = scmp.lt.s32.totalorder %s21, 0
      %s310 = scalar_select %p309, %s21, 0
      %s311 = sadd.s32 %s310, %s308
      %s312 = smul.addr %s311, 4
      %s313 = scalar_lea.vmem %s5, %s312
      %s314 = smul.u32 32, %s20
      %v315 = vld [vmem:[%s292] sm:$0xff]
      %v316 = vld [vmem:[%s292 + $0x8] sm:$0xff]
      %v317 = vld [vmem:[%s292 + $0x10] sm:$0xff]
      %v318 = vld [vmem:[%s292 + $0x18] sm:$0xff]
      %v319 = vld [vmem:[%s292 + $0x20] sm:$0xff]
      %v320 = vld [vmem:[%s292 + $0x28] sm:$0xff]
      %v321 = vld [vmem:[%s292 + $0x30] sm:$0xff]
      %v322 = vld [vmem:[%s292 + $0x38] sm:$0xff]
      %v323 = vld [vmem:[%s292 + $0x40] sm:$0xff]
      %v324 = vld [vmem:[%s292 + $0x48] sm:$0xff]
      %v325 = vld [vmem:[%s292 + $0x50] sm:$0xff]
      %v326 = vld [vmem:[%s292 + $0x58] sm:$0xff]
      %v327 = vld [vmem:[%s292 + $0x60] sm:$0xff]
      %v328 = vld [vmem:[%s292 + $0x68] sm:$0xff]
      %v329 = vld [vmem:[%s292 + $0x70] sm:$0xff]
      %v330 = vld [vmem:[%s292 + $0x78] sm:$0xff]
      %v331 = vld [vmem:[%s292 + $0x80] sm:$0xff]
      %v332 = vld [vmem:[%s292 + $0x88] sm:$0xff]
      %v333 = vld [vmem:[%s292 + $0x90] sm:$0xff]
      %v334 = vld [vmem:[%s292 + $0x98] sm:$0xff]
      %v335 = vld [vmem:[%s292 + $0xa0] sm:$0xff]
      %v336 = vld [vmem:[%s292 + $0xa8] sm:$0xff]
      %v337 = vld [vmem:[%s292 + $0xb0] sm:$0xff]
      %v338 = vld [vmem:[%s292 + $0xb8] sm:$0xff]
      %v339 = vld [vmem:[%s292 + $0xc0] sm:$0xff]
      %v340 = vld [vmem:[%s292 + $0xc8] sm:$0xff]
      %v341 = vld [vmem:[%s292 + $0xd0] sm:$0xff]
      %v342 = vld [vmem:[%s292 + $0xd8] sm:$0xff]
      %v343 = vld [vmem:[%s292 + $0xe0] sm:$0xff]
      %v344 = vld [vmem:[%s292 + $0xe8] sm:$0xff]
      %v345 = vld [vmem:[%s292 + $0xf0] sm:$0xff]
      %v346 = vld [vmem:[%s292 + $0xf8] sm:$0xff]
      %v347 = vld [vmem:[%s296] sm:$0x1]
      %v349 = vlaneseq
      %v350 = vshrl.u32 %v349, 7
      %v351 = vsub.s32 0, %v350
      %v352 = vrot.slane %v347, %v351
      %v354 = vsub.f32 %v315, %v352
      %v355 = vsub.f32 %v316, %v352
      %v356 = vsub.f32 %v317, %v352
      %v357 = vsub.f32 %v318, %v352
      %v358 = vsub.f32 %v319, %v352
      %v359 = vsub.f32 %v320, %v352
      %v360 = vsub.f32 %v321, %v352
      %v361 = vsub.f32 %v322, %v352
      %v362 = vsub.f32 %v323, %v352
      %v363 = vsub.f32 %v324, %v352
      %v364 = vsub.f32 %v325, %v352
      %v365 = vsub.f32 %v326, %v352
      %v366 = vsub.f32 %v327, %v352
      %v367 = vsub.f32 %v328, %v352
      %v368 = vsub.f32 %v329, %v352
      %v369 = vsub.f32 %v330, %v352
      %v370 = vsub.f32 %v331, %v352
      %v371 = vsub.f32 %v332, %v352
      %v372 = vsub.f32 %v333, %v352
      %v373 = vsub.f32 %v334, %v352
      %v374 = vsub.f32 %v335, %v352
      %v375 = vsub.f32 %v336, %v352
      %v376 = vsub.f32 %v337, %v352
      %v377 = vsub.f32 %v338, %v352
      %v378 = vsub.f32 %v339, %v352
      %v379 = vsub.f32 %v340, %v352
      %v380 = vsub.f32 %v341, %v352
      %v381 = vsub.f32 %v342, %v352
      %v382 = vsub.f32 %v343, %v352
      %v383 = vsub.f32 %v344, %v352
      %v384 = vsub.f32 %v345, %v352
      %v385 = vsub.f32 %v346, %v352
      %v386 = vld [vmem:[%s299] sm:$0x1]
      %v388 = vlaneseq
      %v389 = vshrl.u32 %v388, 7
      %v390 = vsub.s32 0, %v389
      %v391 = vrot.slane %v386, %v390
      %v393 = vmul.f32 %v354, %v391
      %v394 = vmul.f32 %v355, %v391
      %v395 = vmul.f32 %v356, %v391
      %v396 = vmul.f32 %v357, %v391
      %v397 = vmul.f32 %v358, %v391
      %v398 = vmul.f32 %v359, %v391
      %v399 = vmul.f32 %v360, %v391
      %v400 = vmul.f32 %v361, %v391
      %v401 = vmul.f32 %v362, %v391
      %v402 = vmul.f32 %v363, %v391
      %v403 = vmul.f32 %v364, %v391
      %v404 = vmul.f32 %v365, %v391
      %v405 = vmul.f32 %v366, %v391
      %v406 = vmul.f32 %v367, %v391
      %v407 = vmul.f32 %v368, %v391
      %v408 = vmul.f32 %v369, %v391
      %v409 = vmul.f32 %v370, %v391
      %v410 = vmul.f32 %v371, %v391
      %v411 = vmul.f32 %v372, %v391
      %v412 = vmul.f32 %v373, %v391
      %v413 = vmul.f32 %v374, %v391
      %v414 = vmul.f32 %v375, %v391
      %v415 = vmul.f32 %v376, %v391
      %v416 = vmul.f32 %v377, %v391
      %v417 = vmul.f32 %v378, %v391
      %v418 = vmul.f32 %v379, %v391
      %v419 = vmul.f32 %v380, %v391
      %v420 = vmul.f32 %v381, %v391
      %v421 = vmul.f32 %v382, %v391
      %v422 = vmul.f32 %v383, %v391
      %v423 = vmul.f32 %v384, %v391
      %v424 = vmul.f32 %v385, %v391
      %v425 = vld [vmem:[%s302] sm:$0x1]
      %v427 = vlaneseq
      %v428 = vshrl.u32 %v427, 7
      %v429 = vsub.s32 0, %v428
      %v430 = vrot.slane %v425, %v429
      %v432 = vmul.f32 %v393, %v430
      %v433 = vmul.f32 %v394, %v430
      %v434 = vmul.f32 %v395, %v430
      %v435 = vmul.f32 %v396, %v430
      %v436 = vmul.f32 %v397, %v430
      %v437 = vmul.f32 %v398, %v430
      %v438 = vmul.f32 %v399, %v430
      %v439 = vmul.f32 %v400, %v430
      %v440 = vmul.f32 %v401, %v430
      %v441 = vmul.f32 %v402, %v430
      %v442 = vmul.f32 %v403, %v430
      %v443 = vmul.f32 %v404, %v430
      %v444 = vmul.f32 %v405, %v430
      %v445 = vmul.f32 %v406, %v430
      %v446 = vmul.f32 %v407, %v430
      %v447 = vmul.f32 %v408, %v430
      %v448 = vmul.f32 %v409, %v430
      %v449 = vmul.f32 %v410, %v430
      %v450 = vmul.f32 %v411, %v430
      %v451 = vmul.f32 %v412, %v430
      %v452 = vmul.f32 %v413, %v430
      %v453 = vmul.f32 %v414, %v430
      %v454 = vmul.f32 %v415, %v430
      %v455 = vmul.f32 %v416, %v430
      %v456 = vmul.f32 %v417, %v430
      %v457 = vmul.f32 %v418, %v430
      %v458 = vmul.f32 %v419, %v430
      %v459 = vmul.f32 %v420, %v430
      %v460 = vmul.f32 %v421, %v430
      %v461 = vmul.f32 %v422, %v430
      %v462 = vmul.f32 %v423, %v430
      %v463 = vmul.f32 %v424, %v430
      %v464 = vld [vmem:[%s305] sm:$0x1]
      %v466 = vlaneseq
      %v467 = vshrl.u32 %v466, 7
      %v468 = vsub.s32 0, %v467
      %v469 = vrot.slane %v464, %v468
      %v471 = vadd.f32 %v432, %v469
      %v472 = vadd.f32 %v433, %v469
      %v473 = vadd.f32 %v434, %v469
      %v474 = vadd.f32 %v435, %v469
      %v475 = vadd.f32 %v436, %v469
      %v476 = vadd.f32 %v437, %v469
      %v477 = vadd.f32 %v438, %v469
      %v478 = vadd.f32 %v439, %v469
      %v479 = vadd.f32 %v440, %v469
      %v480 = vadd.f32 %v441, %v469
      %v481 = vadd.f32 %v442, %v469
      %v482 = vadd.f32 %v443, %v469
      %v483 = vadd.f32 %v444, %v469
      %v484 = vadd.f32 %v445, %v469
      %v485 = vadd.f32 %v446, %v469
      %v486 = vadd.f32 %v447, %v469
      %v487 = vadd.f32 %v448, %v469
      %v488 = vadd.f32 %v449, %v469
      %v489 = vadd.f32 %v450, %v469
      %v490 = vadd.f32 %v451, %v469
      %v491 = vadd.f32 %v452, %v469
      %v492 = vadd.f32 %v453, %v469
      %v493 = vadd.f32 %v454, %v469
      %v494 = vadd.f32 %v455, %v469
      %v495 = vadd.f32 %v456, %v469
      %v496 = vadd.f32 %v457, %v469
      %v497 = vadd.f32 %v458, %v469
      %v498 = vadd.f32 %v459, %v469
      %v499 = vadd.f32 %v460, %v469
      %v500 = vadd.f32 %v461, %v469
      %v501 = vadd.f32 %v462, %v469
      %v502 = vadd.f32 %v463, %v469
      %v503 = vmax.f32 %v471, 0.0
      %v504 = vmax.f32 %v472, 0.0
      %v505 = vmax.f32 %v473, 0.0
      %v506 = vmax.f32 %v474, 0.0
      %v507 = vmax.f32 %v475, 0.0
      %v508 = vmax.f32 %v476, 0.0
      %v509 = vmax.f32 %v477, 0.0
      %v510 = vmax.f32 %v478, 0.0
      %v511 = vmax.f32 %v479, 0.0
      %v512 = vmax.f32 %v480, 0.0
      %v513 = vmax.f32 %v481, 0.0
      %v514 = vmax.f32 %v482, 0.0
      %v515 = vmax.f32 %v483, 0.0
      %v516 = vmax.f32 %v484, 0.0
      %v517 = vmax.f32 %v485, 0.0
      %v518 = vmax.f32 %v486, 0.0
      %v519 = vmax.f32 %v487, 0.0
      %v520 = vmax.f32 %v488, 0.0
      %v521 = vmax.f32 %v489, 0.0
      %v522 = vmax.f32 %v490, 0.0
      %v523 = vmax.f32 %v491, 0.0
      %v524 = vmax.f32 %v492, 0.0
      %v525 = vmax.f32 %v493, 0.0
      %v526 = vmax.f32 %v494, 0.0
      %v527 = vmax.f32 %v495, 0.0
      %v528 = vmax.f32 %v496, 0.0
      %v529 = vmax.f32 %v497, 0.0
      %v530 = vmax.f32 %v498, 0.0
      %v531 = vmax.f32 %v499, 0.0
      %v532 = vmax.f32 %v500, 0.0
      %v533 = vmax.f32 %v501, 0.0
      %v534 = vmax.f32 %v502, 0.0
      %v535 = vpack.c.bf16 %v504, %v503
      %v536 = vpack.c.bf16 %v506, %v505
      %v537 = vpack.c.bf16 %v508, %v507
      %v538 = vpack.c.bf16 %v510, %v509
      %v539 = vpack.c.bf16 %v512, %v511
      %v540 = vpack.c.bf16 %v514, %v513
      %v541 = vpack.c.bf16 %v516, %v515
      %v542 = vpack.c.bf16 %v518, %v517
      %v543 = vpack.c.bf16 %v520, %v519
      %v544 = vpack.c.bf16 %v522, %v521
      %v545 = vpack.c.bf16 %v524, %v523
      %v546 = vpack.c.bf16 %v526, %v525
      %v547 = vpack.c.bf16 %v528, %v527
      %v548 = vpack.c.bf16 %v530, %v529
      %v549 = vpack.c.bf16 %v532, %v531
      %v550 = vpack.c.bf16 %v534, %v533
      %v567 = vunpack.c.l.b16 %v535
      %v568 = vunpack.c.h.b16 %v535
      %v569 = vunpack.c.l.b16 %v536
      %v570 = vunpack.c.h.b16 %v536
      %v571 = vunpack.c.l.b16 %v537
      %v572 = vunpack.c.h.b16 %v537
      %v573 = vunpack.c.l.b16 %v538
      %v574 = vunpack.c.h.b16 %v538
      %v575 = vunpack.c.l.b16 %v539
      %v576 = vunpack.c.h.b16 %v539
      %v577 = vunpack.c.l.b16 %v540
      %v578 = vunpack.c.h.b16 %v540
      %v579 = vunpack.c.l.b16 %v541
      %v580 = vunpack.c.h.b16 %v541
      %v581 = vunpack.c.l.b16 %v542
      %v582 = vunpack.c.h.b16 %v542
      %v583 = vunpack.c.l.b16 %v543
      %v584 = vunpack.c.h.b16 %v543
      %v585 = vunpack.c.l.b16 %v544
      %v586 = vunpack.c.h.b16 %v544
      %v587 = vunpack.c.l.b16 %v545
      %v588 = vunpack.c.h.b16 %v545
      %v589 = vunpack.c.l.b16 %v546
      %v590 = vunpack.c.h.b16 %v546
      %v591 = vunpack.c.l.b16 %v547
      %v592 = vunpack.c.h.b16 %v547
      %v593 = vunpack.c.l.b16 %v548
      %v594 = vunpack.c.h.b16 %v548
      %v595 = vunpack.c.l.b16 %v549
      %v596 = vunpack.c.h.b16 %v549
      %v597 = vunpack.c.l.b16 %v550
      %v598 = vunpack.c.h.b16 %v550
      %v599 = vpack.c.b16 %v567, %v567
      %v600 = vpack.c.b16 %v568, %v568
      %v601 = vpack.c.b16 %v569, %v569
      %v602 = vpack.c.b16 %v570, %v570
      %v603 = vpack.c.b16 %v571, %v571
      %v604 = vpack.c.b16 %v572, %v572
      %v605 = vpack.c.b16 %v573, %v573
      %v606 = vpack.c.b16 %v574, %v574
      %v607 = vpack.c.b16 %v575, %v575
      %v608 = vpack.c.b16 %v576, %v576
      %v609 = vpack.c.b16 %v577, %v577
      %v610 = vpack.c.b16 %v578, %v578
      %v611 = vpack.c.b16 %v579, %v579
      %v612 = vpack.c.b16 %v580, %v580
      %v613 = vpack.c.b16 %v581, %v581
      %v614 = vpack.c.b16 %v582, %v582
      %v615 = vpack.c.b16 %v583, %v583
      %v616 = vpack.c.b16 %v584, %v584
      %v617 = vpack.c.b16 %v585, %v585
      %v618 = vpack.c.b16 %v586, %v586
      %v619 = vpack.c.b16 %v587, %v587
      %v620 = vpack.c.b16 %v588, %v588
      %v621 = vpack.c.b16 %v589, %v589
      %v622 = vpack.c.b16 %v590, %v590
      %v623 = vpack.c.b16 %v591, %v591
      %v624 = vpack.c.b16 %v592, %v592
      %v625 = vpack.c.b16 %v593, %v593
      %v626 = vpack.c.b16 %v594, %v594
      %v627 = vpack.c.b16 %v595, %v595
      %v628 = vpack.c.b16 %v596, %v596
      %v629 = vpack.c.b16 %v597, %v597
      %v630 = vpack.c.b16 %v598, %v598
      %663 = vst [vmem:[%s313] sm:$0xf] %v599
      %664 = vst [vmem:[%s313 + $0x4] sm:$0xf] %v600
      %665 = vst [vmem:[%s313 + $0x8] sm:$0xf] %v601
      %666 = vst [vmem:[%s313 + $0xc] sm:$0xf] %v602
      %667 = vst [vmem:[%s313 + $0x10] sm:$0xf] %v603
      %668 = vst [vmem:[%s313 + $0x14] sm:$0xf] %v604
      %669 = vst [vmem:[%s313 + $0x18] sm:$0xf] %v605
      %670 = vst [vmem:[%s313 + $0x1c] sm:$0xf] %v606
      %671 = vst [vmem:[%s313 + $0x20] sm:$0xf] %v607
      %672 = vst [vmem:[%s313 + $0x24] sm:$0xf] %v608
      %673 = vst [vmem:[%s313 + $0x28] sm:$0xf] %v609
      %674 = vst [vmem:[%s313 + $0x2c] sm:$0xf] %v610
      %675 = vst [vmem:[%s313 + $0x30] sm:$0xf] %v611
      %676 = vst [vmem:[%s313 + $0x34] sm:$0xf] %v612
      %677 = vst [vmem:[%s313 + $0x38] sm:$0xf] %v613
      %678 = vst [vmem:[%s313 + $0x3c] sm:$0xf] %v614
      %679 = vst [vmem:[%s313 + $0x40] sm:$0xf] %v615
      %680 = vst [vmem:[%s313 + $0x44] sm:$0xf] %v616
      %681 = vst [vmem:[%s313 + $0x48] sm:$0xf] %v617
      %682 = vst [vmem:[%s313 + $0x4c] sm:$0xf] %v618
      %683 = vst [vmem:[%s313 + $0x50] sm:$0xf] %v619
      %684 = vst [vmem:[%s313 + $0x54] sm:$0xf] %v620
      %685 = vst [vmem:[%s313 + $0x58] sm:$0xf] %v621
      %686 = vst [vmem:[%s313 + $0x5c] sm:$0xf] %v622
      %687 = vst [vmem:[%s313 + $0x60] sm:$0xf] %v623
      %688 = vst [vmem:[%s313 + $0x64] sm:$0xf] %v624
      %689 = vst [vmem:[%s313 + $0x68] sm:$0xf] %v625
      %690 = vst [vmem:[%s313 + $0x6c] sm:$0xf] %v626
      %691 = vst [vmem:[%s313 + $0x70] sm:$0xf] %v627
      %692 = vst [vmem:[%s313 + $0x74] sm:$0xf] %v628
      %693 = vst [vmem:[%s313 + $0x78] sm:$0xf] %v629
      %694 = vst [vmem:[%s313 + $0x7c] sm:$0xf] %v630
      %s695 = smul.u32 32, %s20
      %p696 = scmp.lt.s32.totalorder %s695, 255
      %s697 = scalar_select %p696, %s695, 255
      %p698 = scmp.lt.s32.totalorder %s21, 0
      %s699 = scalar_select %p698, %s21, 0
      %s700 = sadd.s32 %s699, %s697
      %s701 = smul.addr %s700, 4
      %s702 = scalar_lea.vmem %s5, %s701
      // Predicated region
      $region41: #{_lambda_.24} parent=39 // pred_check
        %p703 = pneg %p180
      $region42: #{_lambda_.24} parent=39 // pred_check_branch
        %705 = sbr.rel (%p703) target = $region44
      $region43: #{_lambda_.24} parent=39 // pred_region
        %s706 = smul.u32 32, %s20
      $region44: #{_lambda_.24} parent=39 // pred_fallthru
        _
    $region40: #{_lambda_.24} parent=5 // pred_fallthru
      _
    %p707 = scmp.le.s32.totalorder 2, %s11
    // Predicated region
    $region45: #{_lambda_.24} parent=5 // pred_check
      %p708 = pneg %p707
    $region46: #{_lambda_.24} parent=5 // pred_check_branch
      %710 = sbr.rel (%p708) target = $region48
    $region47: #{_lambda_.24} parent=5 // pred_region
      %s711 = ssub.s32 %s11, 2
      // Predicated region
      $region49: #{_lambda_.24} parent=47 // pred_check
        %p712 = pneg %p186
      $region50: #{_lambda_.24} parent=47 // pred_check_branch
        %714 = sbr.rel (%p712) target = $region52
      $region51: #{_lambda_.24} parent=47 // pred_region
        %s715 = smul.u32 32, %s22
        %p716 = scmp.lt.s32.totalorder %s715, 255
        %s717 = scalar_select %p716, %s715, 255
        %p718 = scmp.lt.s32.totalorder %s23, 0
        %s719 = scalar_select %p718, %s23, 0
        %s720 = sadd.s32 %s719, %s717
        %s721 = smul.addr %s720, 4
        %s722 = scalar_lea.vmem %s5, %s721
      $region52: #{_lambda_.24} parent=47 // pred_fallthru
        _
    $region48: #{_lambda_.24} parent=5 // pred_fallthru
      _
  $region6: #{_lambda_.24} parent=0 // loop_footer
    %s15 = sadd.s32 1, %s11
  $region7: #{_lambda_.24} parent=0 // loop_footer_branch
    %10 = sbr.rel target = $region3
  $region8: #{_lambda_.24} parent=0 // loop_exit
    _

// kernel: _lambda_.25
$region0: #{_lambda_.25}
  #allocation0 [shape = 'u32[]', space=smem, size = 0x4, offset = 0x4, fixed_abs, tag = 'smem constant byte address 0x4 - core index']
  #allocation1 [shape = 'u32[144,128]{1,0:T(1,128)}', space=vmem, size = 0x12000, scoped, tag = 'internal scratch']
  #allocation2 [shape = 'f32[256,128]{1,0:T(8,128)}', space=vmem, size = 0x20000, scoped, tag = 'scratch operand']
  %s0 = inlined_call_operand.vmem [shape: bf16[4,2048,128], index: 0, kind: input, shape index: {}]
  %s1 = inlined_call_operand.vmem [shape: bf16[4,128,128], index: 1, kind: input, shape index: {}]
  %s2 = inlined_call_operand.vmem [shape: f32[4,2048,128], index: 2, kind: output, shape index: {}]
  %s3 = sld [smem:[#allocation0]]
  $region49: #{_lambda_.25} parent=0
    _
  %s5 = ssub.s32 1, %s3
  %s6 = scalar_select 0, %s5, %s3
  loop: start=0, step=1, limit=34
  $region2: #{_lambda_.25} parent=0 // loop_pre_header
    _
  $region3: #{_lambda_.25} parent=0 // loop_header
    %s8 = sphi 0, %s12
    %p9 = scmp.ge.s32.totalorder %s8, 34
    %s15 = sphi 0, %s41
    %s16 = sphi 0, %s37
    %s17 = sphi 0, %s33
    %s18 = sphi 0, %s29
    %s19 = sphi 0, %s15
    %s20 = sphi 0, %s16
    %s21 = sphi 0, %s17
    %s22 = sphi 0, %s18
    %s23 = sphi 0, %s19
    %s24 = sphi 0, %s20
    %s25 = sphi 0, %s21
    %s26 = sphi 0, %s22
    %s48 = sphi 0, %s50
    %s51 = sphi 0, %s48
    %s52 = sphi 0, %s51
    %s68 = sphi 0, %s52
    %s78 = sphi 0, %s80
    %s81 = sphi 0, %s78
    %s82 = sphi 0, %s81
    %s98 = sphi 0, %s82
    %s108 = sphi 0, %s110
    %s111 = sphi 0, %s108
    %s112 = sphi 0, %s111
    %s128 = sphi 0, %s112
  $region4: #{_lambda_.25} parent=0 // loop_header_branch
    %11 = sbr.rel (%p9) target = $region8
  $region5: #{_lambda_.25} parent=0 // loop_body
    %s13 = ssub.s32 %s8, 1
    %s14 = ssub.s32 %s8, 2
    %s27 = sadd.s32 1, %s18
    %p28 = scmp.ge.s32.totalorder %s27, 1
    %s29 = scalar_select %p28, 0, %s27
    %s30 = sadd.s32 1, %s17
    %s31 = scalar_select %p28, %s30, %s17
    %p32 = scmp.ge.s32.totalorder %s31, 1
    %s33 = scalar_select %p32, 0, %s31
    %s34 = sadd.s32 1, %s16
    %s35 = scalar_select %p32, %s34, %s16
    %p36 = scmp.ge.s32.totalorder %s35, 8
    %s37 = scalar_select %p36, 0, %s35
    %s38 = sadd.s32 1, %s15
    %s39 = scalar_select %p36, %s38, %s15
    %p40 = scmp.ge.s32.totalorder %s39, 4
    %s41 = scalar_select %p40, 0, %s39
    %s42 = ssub.s32 %s15, %s41
    %s43 = ssub.s32 %s16, %s37
    %s44 = sor.u32 %s42, %s43
    %s45 = ssub.s32 %s18, %s29
    %s46 = sor.u32 %s44, %s45
    %p47 = scmp.eq.s32.totalorder %s46, 0
    %s49 = sadd.s32 %s48, 1
    %s50 = scalar_select %p47, %s48, %s49
    %p53 = pneg %p47
    %p54 = scmp.eq.s32.totalorder %s8, 31
    %p55 = por %p53, %p54
    %p56 = scmp.ne.s32.totalorder %s48, %s51
    %p57 = scmp.eq.s32.totalorder %s8, 0
    %p58 = por %p56, %p57
    %p59 = scmp.ne.s32.totalorder %s48, %s51
    %p60 = scmp.eq.s32.totalorder %s13, 31
    %p61 = por %p59, %p60
    %p62 = scmp.ne.s32.totalorder %s51, %s52
    %p63 = scmp.eq.s32.totalorder %s13, 0
    %p64 = por %p62, %p63
    %p65 = scmp.ne.s32.totalorder %s51, %s52
    %p66 = scmp.eq.s32.totalorder %s14, 31
    %p67 = por %p65, %p66
    %p69 = scmp.ne.s32.totalorder %s52, %s68
    %p70 = scmp.eq.s32.totalorder %s14, 0
    %p71 = por %p69, %p70
    %s72 = ssub.s32 %s15, %s41
    %s73 = ssub.s32 %s18, %s29
    %s74 = sor.u32 %s72, %s73
    %s75 = ssub.s32 %s17, %s33
    %s76 = sor.u32 %s74, %s75
    %p77 = scmp.eq.s32.totalorder %s76, 0
    %s79 = sadd.s32 %s78, 1
    %s80 = scalar_select %p77, %s78, %s79
    %p83 = pneg %p77
    %p84 = scmp.eq.s32.totalorder %s8, 31
    %p85 = por %p83, %p84
    %p86 = scmp.ne.s32.totalorder %s78, %s81
    %p87 = scmp.eq.s32.totalorder %s8, 0
    %p88 = por %p86, %p87
    %p89 = scmp.ne.s32.totalorder %s78, %s81
    %p90 = scmp.eq.s32.totalorder %s13, 31
    %p91 = por %p89, %p90
    %p92 = scmp.ne.s32.totalorder %s81, %s82
    %p93 = scmp.eq.s32.totalorder %s13, 0
    %p94 = por %p92, %p93
    %p95 = scmp.ne.s32.totalorder %s81, %s82
    %p96 = scmp.eq.s32.totalorder %s14, 31
    %p97 = por %p95, %p96
    %p99 = scmp.ne.s32.totalorder %s82, %s98
    %p100 = scmp.eq.s32.totalorder %s14, 0
    %p101 = por %p99, %p100
    %s102 = ssub.s32 %s15, %s41
    %s103 = ssub.s32 %s16, %s37
    %s104 = sor.u32 %s102, %s103
    %s105 = ssub.s32 %s17, %s33
    %s106 = sor.u32 %s104, %s105
    %p107 = scmp.eq.s32.totalorder %s106, 0
    %s109 = sadd.s32 %s108, 1
    %s110 = scalar_select %p107, %s108, %s109
    %p113 = pneg %p107
    %p114 = scmp.eq.s32.totalorder %s8, 31
    %p115 = por %p113, %p114
    %p116 = scmp.ne.s32.totalorder %s108, %s111
    %p117 = scmp.eq.s32.totalorder %s8, 0
    %p118 = por %p116, %p117
    %p119 = scmp.ne.s32.totalorder %s108, %s111
    %p120 = scmp.eq.s32.totalorder %s13, 31
    %p121 = por %p119, %p120
    %p122 = scmp.ne.s32.totalorder %s111, %s112
    %p123 = scmp.eq.s32.totalorder %s13, 0
    %p124 = por %p122, %p123
    %p125 = scmp.ne.s32.totalorder %s111, %s112
    %p126 = scmp.eq.s32.totalorder %s14, 31
    %p127 = por %p125, %p126
    %p129 = scmp.ne.s32.totalorder %s112, %s128
    %p130 = scmp.eq.s32.totalorder %s14, 0
    %p131 = por %p129, %p130
    %p132 = scmp.le.s32.totalorder 1, %s8
    %p133 = scmp.lt.s32.totalorder %s8, 33
    %p134 = pnand %p132, %p133
    %p135 = pneg %p134
    // Predicated region
    $region9: #{_lambda_.25} parent=5 // pred_check
      _
    $region10: #{_lambda_.25} parent=5 // pred_check_branch
      %137 = sbr.rel (%p134) target = $region12
    $region11: #{_lambda_.25} parent=5 // pred_region
      %s138 = ssub.s32 %s8, 1
    $region12: #{_lambda_.25} parent=5 // pred_fallthru
      _
    %p139 = scmp.lt.s32.totalorder %s8, 32
    // Predicated region
    $region13: #{_lambda_.25} parent=5 // pred_check
      %p140 = pneg %p139
    $region14: #{_lambda_.25} parent=5 // pred_check_branch
      %142 = sbr.rel (%p140) target = $region16
    $region15: #{_lambda_.25} parent=5 // pred_region
      // Predicated region
      $region17: #{_lambda_.25} parent=15 // pred_check
        %p143 = pneg %p58
      $region18: #{_lambda_.25} parent=15 // pred_check_branch
        %145 = sbr.rel (%p143) target = $region20
      $region19: #{_lambda_.25} parent=15 // pred_region
        %s146 = smul.u32 32, %s16
        %p147 = scmp.lt.s32.totalorder %s15, 3
        %s148 = scalar_select %p147, %s15, 3
        %p149 = scmp.lt.s32.totalorder %s146, 255
        %s150 = scalar_select %p149, %s146, 255
        %p151 = scmp.lt.s32.totalorder %s18, 0
        %s152 = scalar_select %p151, %s18, 0
        %s153 = sadd.s32 %s152, %s150
        %s154 = smul.addr %s148, 256
        %s155 = sadd.s32 %s153, %s154
        %s156 = smul.addr %s155, 4
        %s157 = scalar_lea.vmem %s0, %s156
        %s158 = smul.u32 32, %s16
      $region20: #{_lambda_.25} parent=15 // pred_fallthru
        _
      // Predicated region
      $region21: #{_lambda_.25} parent=15 // pred_check
        %p159 = pneg %p88
      $region22: #{_lambda_.25} parent=15 // pred_check_branch
        %161 = sbr.rel (%p159) target = $region24
      $region23: #{_lambda_.25} parent=15 // pred_region
        %s162 = smul.u32 16, %s18
        %p163 = scmp.lt.s32.totalorder %s15, 3
        %s164 = scalar_select %p163, %s15, 3
        %p165 = scmp.lt.s32.totalorder %s162, 15
        %s166 = scalar_select %p165, %s162, 15
        %p167 = scmp.lt.s32.totalorder %s17, 0
        %s168 = scalar_select %p167, %s17, 0
        %s169 = sadd.s32 %s168, %s166
        %s170 = smul.addr %s164, 16
        %s171 = sadd.s32 %s169, %s170
        %s172 = smul.addr %s171, 4
        %s173 = scalar_lea.vmem %s1, %s172
        %s174 = smul.u32 16, %s18
      $region24: #{_lambda_.25} parent=15 // pred_fallthru
        _
    $region16: #{_lambda_.25} parent=5 // pred_fallthru
      _
    %p175 = scmp.le.s32.totalorder 1, %s8
    %p176 = scmp.lt.s32.totalorder %s8, 33
    %p177 = pnand %p175, %p176
    %p178 = pneg %p177
    // Predicated region
    $region25: #{_lambda_.25} parent=5 // pred_check
      _
    $region26: #{_lambda_.25} parent=5 // pred_check_branch
      %180 = sbr.rel (%p177) target = $region28
    $region27: #{_lambda_.25} parent=5 // pred_region
      %s181 = ssub.s32 %s8, 1
      %s182 = smul.u32 32, %s20
      %p183 = scmp.lt.s32.totalorder %s19, 3
      %s184 = scalar_select %p183, %s19, 3
      %p185 = scmp.lt.s32.totalorder %s182, 255
      %s186 = scalar_select %p185, %s182, 255
      %p187 = scmp.lt.s32.totalorder %s22, 0
      %s188 = scalar_select %p187, %s22, 0
      %s189 = sadd.s32 %s188, %s186
      %s190 = smul.addr %s184, 256
      %s191 = sadd.s32 %s189, %s190
      %s192 = smul.addr %s191, 4
      %s193 = scalar_lea.vmem %s0, %s192
      %p194 = pneg %p64
      %p195 = pneg %p61
      %s196 = smul.u32 16, %s22
      %p197 = scmp.lt.s32.totalorder %s19, 3
      %s198 = scalar_select %p197, %s19, 3
      %p199 = scmp.lt.s32.totalorder %s196, 15
      %s200 = scalar_select %p199, %s196, 15
      %p201 = scmp.lt.s32.totalorder %s21, 0
      %s202 = scalar_select %p201, %s21, 0
      %s203 = sadd.s32 %s202, %s200
      %s204 = smul.addr %s198, 16
      %s205 = sadd.s32 %s203, %s204
      %s206 = smul.addr %s205, 4
      %s207 = scalar_lea.vmem %s1, %s206
      %p208 = pneg %p94
      %p209 = pneg %p91
      %p210 = pneg %p124
      %p211 = pneg %p121
      %s212 = smul.u32 32, %s20
      %p213 = scmp.lt.s32.totalorder %s19, 3
      %s214 = scalar_select %p213, %s19, 3
      %p215 = scmp.lt.s32.totalorder %s212, 255
      %s216 = scalar_select %p215, %s212, 255
      %p217 = scmp.lt.s32.totalorder %s21, 0
      %s218 = scalar_select %p217, %s21, 0
      %s219 = sadd.s32 %s218, %s216
      %s220 = smul.addr %s214, 256
      %s221 = sadd.s32 %s219, %s220
      %s222 = smul.addr %s221, 8
      %s223 = scalar_lea.vmem %s2, %s222
      %s224 = smul.u32 32, %s20
      %p225 = scmp.lt.s32.totalorder %s19, 3
      %s226 = scalar_select %p225, %s19, 3
      %p227 = scmp.lt.s32.totalorder %s224, 255
      %s228 = scalar_select %p227, %s224, 255
      %p229 = scmp.lt.s32.totalorder %s22, 0
      %s230 = scalar_select %p229, %s22, 0
      %s231 = sadd.s32 %s230, %s228
      %s232 = smul.addr %s226, 256
      %s233 = sadd.s32 %s231, %s232
      %s234 = smul.addr %s233, 4
      %s235 = scalar_lea.vmem %s0, %s234
      %s236 = smul.u32 32, %s20
      %s237 = smul.u32 16, %s22
      %p238 = scmp.lt.s32.totalorder %s19, 3
      %s239 = scalar_select %p238, %s19, 3
      %p240 = scmp.lt.s32.totalorder %s237, 15
      %s241 = scalar_select %p240, %s237, 15
      %p242 = scmp.lt.s32.totalorder %s21, 0
      %s243 = scalar_select %p242, %s21, 0
      %s244 = sadd.s32 %s243, %s241
      %s245 = smul.addr %s239, 16
      %s246 = sadd.s32 %s244, %s245
      %s247 = smul.addr %s246, 4
      %s248 = scalar_lea.vmem %s1, %s247
      %s249 = smul.u32 16, %s22
      %s250 = smul.u32 32, %s20
      %p251 = scmp.lt.s32.totalorder %s19, 3
      %s252 = scalar_select %p251, %s19, 3
      %p253 = scmp.lt.s32.totalorder %s250, 255
      %s254 = scalar_select %p253, %s250, 255
      %p255 = scmp.lt.s32.totalorder %s21, 0
      %s256 = scalar_select %p255, %s21, 0
      %s257 = sadd.s32 %s256, %s254
      %s258 = smul.addr %s252, 256
      %s259 = sadd.s32 %s257, %s258
      %s260 = smul.addr %s259, 8
      %s261 = scalar_lea.vmem %s2, %s260
      %s262 = smul.u32 32, %s20
      %p264 = scmp.eq.s32.totalorder %s22, 0
      // Predicated region
      $region29: #{_lambda_.25} parent=27 // pred_check
        %p265 = pneg %p264
      $region30: #{_lambda_.25} parent=27 // pred_check_branch
        %267 = sbr.rel (%p265) target = $region32
      $region31: #{_lambda_.25} parent=27 // pred_region
        %268 = vst [vmem:[#allocation2] sm:$0xff] 0.0
        %269 = vst [vmem:[#allocation2 + $0x8] sm:$0xff] 0.0
        %270 = vst [vmem:[#allocation2 + $0x10] sm:$0xff] 0.0
        %271 = vst [vmem:[#allocation2 + $0x18] sm:$0xff] 0.0
        %272 = vst [vmem:[#allocation2 + $0x20] sm:$0xff] 0.0
        %273 = vst [vmem:[#allocation2 + $0x28] sm:$0xff] 0.0
        %274 = vst [vmem:[#allocation2 + $0x30] sm:$0xff] 0.0
        %275 = vst [vmem:[#allocation2 + $0x38] sm:$0xff] 0.0
        %276 = vst [vmem:[#allocation2 + $0x40] sm:$0xff] 0.0
        %277 = vst [vmem:[#allocation2 + $0x48] sm:$0xff] 0.0
        %278 = vst [vmem:[#allocation2 + $0x50] sm:$0xff] 0.0
        %279 = vst [vmem:[#allocation2 + $0x58] sm:$0xff] 0.0
        %280 = vst [vmem:[#allocation2 + $0x60] sm:$0xff] 0.0
        %281 = vst [vmem:[#allocation2 + $0x68] sm:$0xff] 0.0
        %282 = vst [vmem:[#allocation2 + $0x70] sm:$0xff] 0.0
        %283 = vst [vmem:[#allocation2 + $0x78] sm:$0xff] 0.0
        %284 = vst [vmem:[#allocation2 + $0x80] sm:$0xff] 0.0
        %285 = vst [vmem:[#allocation2 + $0x88] sm:$0xff] 0.0
        %286 = vst [vmem:[#allocation2 + $0x90] sm:$0xff] 0.0
        %287 = vst [vmem:[#allocation2 + $0x98] sm:$0xff] 0.0
        %288 = vst [vmem:[#allocation2 + $0xa0] sm:$0xff] 0.0
        %289 = vst [vmem:[#allocation2 + $0xa8] sm:$0xff] 0.0
        %290 = vst [vmem:[#allocation2 + $0xb0] sm:$0xff] 0.0
        %291 = vst [vmem:[#allocation2 + $0xb8] sm:$0xff] 0.0
        %292 = vst [vmem:[#allocation2 + $0xc0] sm:$0xff] 0.0
        %293 = vst [vmem:[#allocation2 + $0xc8] sm:$0xff] 0.0
        %294 = vst [vmem:[#allocation2 + $0xd0] sm:$0xff] 0.0
        %295 = vst [vmem:[#allocation2 + $0xd8] sm:$0xff] 0.0
        %296 = vst [vmem:[#allocation2 + $0xe0] sm:$0xff] 0.0
        %297 = vst [vmem:[#allocation2 + $0xe8] sm:$0xff] 0.0
        %298 = vst [vmem:[#allocation2 + $0xf0] sm:$0xff] 0.0
        %299 = vst [vmem:[#allocation2 + $0xf8] sm:$0xff] 0.0
      $region32: #{_lambda_.25} parent=27 // pred_fallthru
        _
      %v300 = vld [vmem:[#allocation2] sm:$0xff]
      %v301 = vld [vmem:[#allocation2 + $0x8] sm:$0xff]
      %v302 = vld [vmem:[#allocation2 + $0x10] sm:$0xff]
      %v303 = vld [vmem:[#allocation2 + $0x18] sm:$0xff]
      %v304 = vld [vmem:[#allocation2 + $0x20] sm:$0xff]
      %v305 = vld [vmem:[#allocation2 + $0x28] sm:$0xff]
      %v306 = vld [vmem:[#allocation2 + $0x30] sm:$0xff]
      %v307 = vld [vmem:[#allocation2 + $0x38] sm:$0xff]
      %v308 = vld [vmem:[#allocation2 + $0x40] sm:$0xff]
      %v309 = vld [vmem:[#allocation2 + $0x48] sm:$0xff]
      %v310 = vld [vmem:[#allocation2 + $0x50] sm:$0xff]
      %v311 = vld [vmem:[#allocation2 + $0x58] sm:$0xff]
      %v312 = vld [vmem:[#allocation2 + $0x60] sm:$0xff]
      %v313 = vld [vmem:[#allocation2 + $0x68] sm:$0xff]
      %v314 = vld [vmem:[#allocation2 + $0x70] sm:$0xff]
      %v315 = vld [vmem:[#allocation2 + $0x78] sm:$0xff]
      %v316 = vld [vmem:[#allocation2 + $0x80] sm:$0xff]
      %v317 = vld [vmem:[#allocation2 + $0x88] sm:$0xff]
      %v318 = vld [vmem:[#allocation2 + $0x90] sm:$0xff]
      %v319 = vld [vmem:[#allocation2 + $0x98] sm:$0xff]
      %v320 = vld [vmem:[#allocation2 + $0xa0] sm:$0xff]
      %v321 = vld [vmem:[#allocation2 + $0xa8] sm:$0xff]
      %v322 = vld [vmem:[#allocation2 + $0xb0] sm:$0xff]
      %v323 = vld [vmem:[#allocation2 + $0xb8] sm:$0xff]
      %v324 = vld [vmem:[#allocation2 + $0xc0] sm:$0xff]
      %v325 = vld [vmem:[#allocation2 + $0xc8] sm:$0xff]
      %v326 = vld [vmem:[#allocation2 + $0xd0] sm:$0xff]
      %v327 = vld [vmem:[#allocation2 + $0xd8] sm:$0xff]
      %v328 = vld [vmem:[#allocation2 + $0xe0] sm:$0xff]
      %v329 = vld [vmem:[#allocation2 + $0xe8] sm:$0xff]
      %v330 = vld [vmem:[#allocation2 + $0xf0] sm:$0xff]
      %v331 = vld [vmem:[#allocation2 + $0xf8] sm:$0xff]
      %v332 = vld [vmem:[%s235] sm:$0xf]
      %v333 = vld [vmem:[%s235 + $0x4] sm:$0xf]
      %v334 = vld [vmem:[%s235 + $0x8] sm:$0xf]
      %v335 = vld [vmem:[%s235 + $0xc] sm:$0xf]
      %v336 = vld [vmem:[%s235 + $0x10] sm:$0xf]
      %v337 = vld [vmem:[%s235 + $0x14] sm:$0xf]
      %v338 = vld [vmem:[%s235 + $0x18] sm:$0xf]
      %v339 = vld [vmem:[%s235 + $0x1c] sm:$0xf]
      %v340 = vld [vmem:[%s235 + $0x20] sm:$0xf]
      %v341 = vld [vmem:[%s235 + $0x24] sm:$0xf]
      %v342 = vld [vmem:[%s235 + $0x28] sm:$0xf]
      %v343 = vld [vmem:[%s235 + $0x2c] sm:$0xf]
      %v344 = vld [vmem:[%s235 + $0x30] sm:$0xf]
      %v345 = vld [vmem:[%s235 + $0x34] sm:$0xf]
      %v346 = vld [vmem:[%s235 + $0x38] sm:$0xf]
      %v347 = vld [vmem:[%s235 + $0x3c] sm:$0xf]
      %v348 = vld [vmem:[%s235 + $0x40] sm:$0xf]
      %v349 = vld [vmem:[%s235 + $0x44] sm:$0xf]
      %v350 = vld [vmem:[%s235 + $0x48] sm:$0xf]
      %v351 = vld [vmem:[%s235 + $0x4c] sm:$0xf]
      %v352 = vld [vmem:[%s235 + $0x50] sm:$0xf]
      %v353 = vld [vmem:[%s235 + $0x54] sm:$0xf]
      %v354 = vld [vmem:[%s235 + $0x58] sm:$0xf]
      %v355 = vld [vmem:[%s235 + $0x5c] sm:$0xf]
      %v356 = vld [vmem:[%s235 + $0x60] sm:$0xf]
      %v357 = vld [vmem:[%s235 + $0x64] sm:$0xf]
      %v358 = vld [vmem:[%s235 + $0x68] sm:$0xf]
      %v359 = vld [vmem:[%s235 + $0x6c] sm:$0xf]
      %v360 = vld [vmem:[%s235 + $0x70] sm:$0xf]
      %v361 = vld [vmem:[%s235 + $0x74] sm:$0xf]
      %v362 = vld [vmem:[%s235 + $0x78] sm:$0xf]
      %v363 = vld [vmem:[%s235 + $0x7c] sm:$0xf]
      %v364 = vld [vmem:[%s248] sm:$0xf]
      %v365 = vld [vmem:[%s248 + $0x4] sm:$0xf]
      %v366 = vld [vmem:[%s248 + $0x8] sm:$0xf]
      %v367 = vld [vmem:[%s248 + $0xc] sm:$0xf]
      %v368 = vld [vmem:[%s248 + $0x10] sm:$0xf]
      %v369 = vld [vmem:[%s248 + $0x14] sm:$0xf]
      %v370 = vld [vmem:[%s248 + $0x18] sm:$0xf]
      %v371 = vld [vmem:[%s248 + $0x1c] sm:$0xf]
      %v372 = vld [vmem:[%s248 + $0x20] sm:$0xf]
      %v373 = vld [vmem:[%s248 + $0x24] sm:$0xf]
      %v374 = vld [vmem:[%s248 + $0x28] sm:$0xf]
      %v375 = vld [vmem:[%s248 + $0x2c] sm:$0xf]
      %v376 = vld [vmem:[%s248 + $0x30] sm:$0xf]
      %v377 = vld [vmem:[%s248 + $0x34] sm:$0xf]
      %v378 = vld [vmem:[%s248 + $0x38] sm:$0xf]
      %v379 = vld [vmem:[%s248 + $0x3c] sm:$0xf]
      %v412 = vunpack.c.l.b16 %v332
      %v413 = vunpack.c.l.b16 %v333
      %v414 = vunpack.c.l.b16 %v334
      %v415 = vunpack.c.l.b16 %v335
      %v416 = vunpack.c.l.b16 %v336
      %v417 = vunpack.c.l.b16 %v337
      %v418 = vunpack.c.l.b16 %v338
      %v419 = vunpack.c.l.b16 %v339
      %v420 = vunpack.c.l.b16 %v340
      %v421 = vunpack.c.l.b16 %v341
      %v422 = vunpack.c.l.b16 %v342
      %v423 = vunpack.c.l.b16 %v343
      %v424 = vunpack.c.l.b16 %v344
      %v425 = vunpack.c.l.b16 %v345
      %v426 = vunpack.c.l.b16 %v346
      %v427 = vunpack.c.l.b16 %v347
      %v428 = vunpack.c.l.b16 %v348
      %v429 = vunpack.c.l.b16 %v349
      %v430 = vunpack.c.l.b16 %v350
      %v431 = vunpack.c.l.b16 %v351
      %v432 = vunpack.c.l.b16 %v352
      %v433 = vunpack.c.l.b16 %v353
      %v434 = vunpack.c.l.b16 %v354
      %v435 = vunpack.c.l.b16 %v355
      %v436 = vunpack.c.l.b16 %v356
      %v437 = vunpack.c.l.b16 %v357
      %v438 = vunpack.c.l.b16 %v358
      %v439 = vunpack.c.l.b16 %v359
      %v440 = vunpack.c.l.b16 %v360
      %v441 = vunpack.c.l.b16 %v361
      %v442 = vunpack.c.l.b16 %v362
      %v443 = vunpack.c.l.b16 %v363
      %v444 = vpack.c.b16 %v413, %v412
      %v445 = vpack.c.b16 %v415, %v414
      %v446 = vpack.c.b16 %v417, %v416
      %v447 = vpack.c.b16 %v419, %v418
      %v448 = vpack.c.b16 %v421, %v420
      %v449 = vpack.c.b16 %v423, %v422
      %v450 = vpack.c.b16 %v425, %v424
      %v451 = vpack.c.b16 %v427, %v426
      %v452 = vpack.c.b16 %v429, %v428
      %v453 = vpack.c.b16 %v431, %v430
      %v454 = vpack.c.b16 %v433, %v432
      %v455 = vpack.c.b16 %v435, %v434
      %v456 = vpack.c.b16 %v437, %v436
      %v457 = vpack.c.b16 %v439, %v438
      %v458 = vpack.c.b16 %v441, %v440
      %v459 = vpack.c.b16 %v443, %v442
      %v492 = vunpack.c.l.b16 %v364
      %v493 = vunpack.c.l.b16 %v365
      %v494 = vunpack.c.l.b16 %v366
      %v495 = vunpack.c.l.b16 %v367
      %v496 = vunpack.c.l.b16 %v368
      %v497 = vunpack.c.l.b16 %v369
      %v498 = vunpack.c.l.b16 %v370
      %v499 = vunpack.c.l.b16 %v371
      %v500 = vunpack.c.l.b16 %v372
      %v501 = vunpack.c.l.b16 %v373
      %v502 = vunpack.c.l.b16 %v374
      %v503 = vunpack.c.l.b16 %v375
      %v504 = vunpack.c.l.b16 %v376
      %v505 = vunpack.c.l.b16 %v377
      %v506 = vunpack.c.l.b16 %v378
      %v507 = vunpack.c.l.b16 %v379
      %v508 = vpack.c.b16 %v493, %v492
      %v509 = vpack.c.b16 %v495, %v494
      %v510 = vpack.c.b16 %v497, %v496
      %v511 = vpack.c.b16 %v499, %v498
      %v512 = vpack.c.b16 %v501, %v500
      %v513 = vpack.c.b16 %v503, %v502
      %v514 = vpack.c.b16 %v505, %v504
      %v515 = vpack.c.b16 %v507, %v506
      %524 = vmatprep.subr.bf16.mxu0 0
      %525 = vmatpush1.bf16.msra.mxu0 %v515
      %526 = vmatprep.subr.bf16.mxu0 0
      %527 = vmatpush1.bf16.msra.mxu0 %v514
      %528 = vmatprep.subr.bf16.mxu0 0
      %529 = vmatpush1.bf16.msra.mxu0 %v513
      %530 = vmatprep.subr.bf16.mxu0 0
      %531 = vmatpush1.bf16.msra.mxu0 %v512
      %532 = vmatprep.subr.bf16.mxu0 0
      %533 = vmatpush1.bf16.msra.mxu0 %v511
      %534 = vmatprep.subr.bf16.mxu0 0
      %535 = vmatpush1.bf16.msra.mxu0 %v510
      %536 = vmatprep.subr.bf16.mxu0 0
      %537 = vmatpush1.bf16.msra.mxu0 %v509
      %538 = vmatprep.subr.bf16.mxu0 0
      %539 = vmatpush1.bf16.msra.mxu0 %v508
      %540 = vmatprep.subr.bf16.mxu0 0
      %541 = vmatpush2.bf16.msra.mxu0 0
      %542 = vmatprep.subr.bf16.mxu0 0
      %543 = vmatpush2.bf16.msra.mxu0 0
      %544 = vmatprep.subr.bf16.mxu0 0
      %545 = vmatpush2.bf16.msra.mxu0 0
      %546 = vmatprep.subr.bf16.mxu0 0
      %547 = vmatpush2.bf16.msra.mxu0 0
      %548 = vmatprep.subr.bf16.mxu0 0
      %549 = vmatpush2.bf16.msra.mxu0 0
      %550 = vmatprep.subr.bf16.mxu0 0
      %551 = vmatpush2.bf16.msra.mxu0 0
      %552 = vmatprep.subr.bf16.mxu0 0
      %553 = vmatpush2.bf16.msra.mxu0 0
      %554 = vmatprep.subr.bf16.mxu0 0
      %555 = vmatpush2.bf16.msra.mxu0 0
      %556 = vmatprep.mubr.bf16.mxu0 0
      %557 = vmatmul.mubr.bf16.gmra.mxu0 %v444
      %v558 = vpop.f32.mrf.mxu0
      %v559 = vadd.f32 0.0, %v558
      %v560 = vpop.f32.mrf.mxu0
      %v561 = vpop.f32.mrf.mxu0
      %v562 = vadd.f32 0.0, %v561
      %v563 = vpop.f32.mrf.mxu0
      %564 = vmatprep.mubr.bf16.mxu0 0
      %565 = vmatmul.mubr.bf16.gmra.mxu0 %v445
      %v566 = vpop.f32.mrf.mxu0
      %v567 = vadd.f32 0.0, %v566
      %v568 = vpop.f32.mrf.mxu0
      %v569 = vpop.f32.mrf.mxu0
      %v570 = vadd.f32 0.0, %v569
      %v571 = vpop.f32.mrf.mxu0
      %572 = vmatprep.mubr.bf16.mxu0 0
      %573 = vmatmul.mubr.bf16.gmra.mxu0 %v446
      %v574 = vpop.f32.mrf.mxu0
      %v575 = vadd.f32 0.0, %v574
      %v576 = vpop.f32.mrf.mxu0
      %v577 = vpop.f32.mrf.mxu0
      %v578 = vadd.f32 0.0, %v577
      %v579 = vpop.f32.mrf.mxu0
      %580 = vmatprep.mubr.bf16.mxu0 0
      %581 = vmatmul.mubr.bf16.gmra.mxu0 %v447
      %v582 = vpop.f32.mrf.mxu0
      %v583 = vadd.f32 0.0, %v582
      %v584 = vpop.f32.mrf.mxu0
      %v585 = vpop.f32.mrf.mxu0
      %v586 = vadd.f32 0.0, %v585
      %v587 = vpop.f32.mrf.mxu0
      %588 = vmatprep.mubr.bf16.mxu0 0
      %589 = vmatmul.mubr.bf16.gmra.mxu0 %v448
      %v590 = vpop.f32.mrf.mxu0
      %v591 = vadd.f32 0.0, %v590
      %v592 = vpop.f32.mrf.mxu0
      %v593 = vpop.f32.mrf.mxu0
      %v594 = vadd.f32 0.0, %v593
      %v595 = vpop.f32.mrf.mxu0
      %596 = vmatprep.mubr.bf16.mxu0 0
      %597 = vmatmul.mubr.bf16.gmra.mxu0 %v449
      %v598 = vpop.f32.mrf.mxu0
      %v599 = vadd.f32 0.0, %v598
      %v600 = vpop.f32.mrf.mxu0
      %v601 = vpop.f32.mrf.mxu0
      %v602 = vadd.f32 0.0, %v601
      %v603 = vpop.f32.mrf.mxu0
      %604 = vmatprep.mubr.bf16.mxu0 0
      %605 = vmatmul.mubr.bf16.gmra.mxu0 %v450
      %v606 = vpop.f32.mrf.mxu0
      %v607 = vadd.f32 0.0, %v606
      %v608 = vpop.f32.mrf.mxu0
      %v609 = vpop.f32.mrf.mxu0
      %v610 = vadd.f32 0.0, %v609
      %v611 = vpop.f32.mrf.mxu0
      %612 = vmatprep.mubr.bf16.mxu0 0
      %613 = vmatmul.mubr.bf16.gmra.mxu0 %v451
      %v614 = vpop.f32.mrf.mxu0
      %v615 = vadd.f32 0.0, %v614
      %v616 = vpop.f32.mrf.mxu0
      %v617 = vpop.f32.mrf.mxu0
      %v618 = vadd.f32 0.0, %v617
      %v619 = vpop.f32.mrf.mxu0
      %620 = vmatprep.mubr.bf16.mxu0 0
      %621 = vmatmul.mubr.bf16.gmra.mxu0 %v452
      %v622 = vpop.f32.mrf.mxu0
      %v623 = vadd.f32 0.0, %v622
      %v624 = vpop.f32.mrf.mxu0
      %v625 = vpop.f32.mrf.mxu0
      %v626 = vadd.f32 0.0, %v625
      %v627 = vpop.f32.mrf.mxu0
      %628 = vmatprep.mubr.bf16.mxu0 0
      %629 = vmatmul.mubr.bf16.gmra.mxu0 %v453
      %v630 = vpop.f32.mrf.mxu0
      %v631 = vadd.f32 0.0, %v630
      %v632 = vpop.f32.mrf.mxu0
      %v633 = vpop.f32.mrf.mxu0
      %v634 = vadd.f32 0.0, %v633
      %v635 = vpop.f32.mrf.mxu0
      %636 = vmatprep.mubr.bf16.mxu0 0
      %637 = vmatmul.mubr.bf16.gmra.mxu0 %v454
      %v638 = vpop.f32.mrf.mxu0
      %v639 = vadd.f32 0.0, %v638
      %v640 = vpop.f32.mrf.mxu0
      %v641 = vpop.f32.mrf.mxu0
      %v642 = vadd.f32 0.0, %v641
      %v643 = vpop.f32.mrf.mxu0
      %644 = vmatprep.mubr.bf16.mxu0 0
      %645 = vmatmul.mubr.bf16.gmra.mxu0 %v455
      %v646 = vpop.f32.mrf.mxu0
      %v647 = vadd.f32 0.0, %v646
      %v648 = vpop.f32.mrf.mxu0
      %v649 = vpop.f32.mrf.mxu0
      %v650 = vadd.f32 0.0, %v649
      %v651 = vpop.f32.mrf.mxu0
      %652 = vmatprep.mubr.bf16.mxu0 0
      %653 = vmatmul.mubr.bf16.gmra.mxu0 %v456
      %v654 = vpop.f32.mrf.mxu0
      %v655 = vadd.f32 0.0, %v654
      %v656 = vpop.f32.mrf.mxu0
      %v657 = vpop.f32.mrf.mxu0
      %v658 = vadd.f32 0.0, %v657
      %v659 = vpop.f32.mrf.mxu0
      %660 = vmatprep.mubr.bf16.mxu0 0
      %661 = vmatmul.mubr.bf16.gmra.mxu0 %v457
      %v662 = vpop.f32.mrf.mxu0
      %v663 = vadd.f32 0.0, %v662
      %v664 = vpop.f32.mrf.mxu0
      %v665 = vpop.f32.mrf.mxu0
      %v666 = vadd.f32 0.0, %v665
      %v667 = vpop.f32.mrf.mxu0
      %668 = vmatprep.mubr.bf16.mxu0 0
      %669 = vmatmul.mubr.bf16.gmra.mxu0 %v458
      %v670 = vpop.f32.mrf.mxu0
      %v671 = vadd.f32 0.0, %v670
      %v672 = vpop.f32.mrf.mxu0
      %v673 = vpop.f32.mrf.mxu0
      %v674 = vadd.f32 0.0, %v673
      %v675 = vpop.f32.mrf.mxu0
      %676 = vmatprep.mubr.bf16.mxu0 0
      %677 = vmatmul.mubr.bf16.gmra.mxu0 %v459
      %v678 = vpop.f32.mrf.mxu0
      %v679 = vadd.f32 0.0, %v678
      %v680 = vpop.f32.mrf.mxu0
      %v681 = vpop.f32.mrf.mxu0
      %v682 = vadd.f32 0.0, %v681
      %v683 = vpop.f32.mrf.mxu0
      %684 = vdwg.mxu0
      %v685 = vadd.f32 %v300, %v559
      %v686 = vadd.f32 %v301, %v562
      %v687 = vadd.f32 %v302, %v567
      %v688 = vadd.f32 %v303, %v570
      %v689 = vadd.f32 %v304, %v575
      %v690 = vadd.f32 %v305, %v578
      %v691 = vadd.f32 %v306, %v583
      %v692 = vadd.f32 %v307, %v586
      %v693 = vadd.f32 %v308, %v591
      %v694 = vadd.f32 %v309, %v594
      %v695 = vadd.f32 %v310, %v599
      %v696 = vadd.f32 %v311, %v602
      %v697 = vadd.f32 %v312, %v607
      %v698 = vadd.f32 %v313, %v610
      %v699 = vadd.f32 %v314, %v615
      %v700 = vadd.f32 %v315, %v618
      %v701 = vadd.f32 %v316, %v623
      %v702 = vadd.f32 %v317, %v626
      %v703 = vadd.f32 %v318, %v631
      %v704 = vadd.f32 %v319, %v634
      %v705 = vadd.f32 %v320, %v639
      %v706 = vadd.f32 %v321, %v642
      %v707 = vadd.f32 %v322, %v647
      %v708 = vadd.f32 %v323, %v650
      %v709 = vadd.f32 %v324, %v655
      %v710 = vadd.f32 %v325, %v658
      %v711 = vadd.f32 %v326, %v663
      %v712 = vadd.f32 %v327, %v666
      %v713 = vadd.f32 %v328, %v671
      %v714 = vadd.f32 %v329, %v674
      %v715 = vadd.f32 %v330, %v679
      %v716 = vadd.f32 %v331, %v682
      %717 = vst [vmem:[#allocation2] sm:$0xff] %v685
      %718 = vst [vmem:[#allocation2 + $0x8] sm:$0xff] %v686
      %719 = vst [vmem:[#allocation2 + $0x10] sm:$0xff] %v687
      %720 = vst [vmem:[#allocation2 + $0x18] sm:$0xff] %v688
      %721 = vst [vmem:[#allocation2 + $0x20] sm:$0xff] %v689
      %722 = vst [vmem:[#allocation2 + $0x28] sm:$0xff] %v690
      %723 = vst [vmem:[#allocation2 + $0x30] sm:$0xff] %v691
      %724 = vst [vmem:[#allocation2 + $0x38] sm:$0xff] %v692
      %725 = vst [vmem:[#allocation2 + $0x40] sm:$0xff] %v693
      %726 = vst [vmem:[#allocation2 + $0x48] sm:$0xff] %v694
      %727 = vst [vmem:[#allocation2 + $0x50] sm:$0xff] %v695
      %728 = vst [vmem:[#allocation2 + $0x58] sm:$0xff] %v696
      %729 = vst [vmem:[#allocation2 + $0x60] sm:$0xff] %v697
      %730 = vst [vmem:[#allocation2 + $0x68] sm:$0xff] %v698
      %731 = vst [vmem:[#allocation2 + $0x70] sm:$0xff] %v699
      %732 = vst [vmem:[#allocation2 + $0x78] sm:$0xff] %v700
      %733 = vst [vmem:[#allocation2 + $0x80] sm:$0xff] %v701
      %734 = vst [vmem:[#allocation2 + $0x88] sm:$0xff] %v702
      %735 = vst [vmem:[#allocation2 + $0x90] sm:$0xff] %v703
      %736 = vst [vmem:[#allocation2 + $0x98] sm:$0xff] %v704
      %737 = vst [vmem:[#allocation2 + $0xa0] sm:$0xff] %v705
      %738 = vst [vmem:[#allocation2 + $0xa8] sm:$0xff] %v706
      %739 = vst [vmem:[#allocation2 + $0xb0] sm:$0xff] %v707
      %740 = vst [vmem:[#allocation2 + $0xb8] sm:$0xff] %v708
      %741 = vst [vmem:[#allocation2 + $0xc0] sm:$0xff] %v709
      %742 = vst [vmem:[#allocation2 + $0xc8] sm:$0xff] %v710
      %743 = vst [vmem:[#allocation2 + $0xd0] sm:$0xff] %v711
      %744 = vst [vmem:[#allocation2 + $0xd8] sm:$0xff] %v712
      %745 = vst [vmem:[#allocation2 + $0xe0] sm:$0xff] %v713
      %746 = vst [vmem:[#allocation2 + $0xe8] sm:$0xff] %v714
      %747 = vst [vmem:[#allocation2 + $0xf0] sm:$0xff] %v715
      %748 = vst [vmem:[#allocation2 + $0xf8] sm:$0xff] %v716
      // Predicated region
      $region33: #{_lambda_.25} parent=27 // pred_check
        %p749 = pneg %p264
      $region34: #{_lambda_.25} parent=27 // pred_check_branch
        %751 = sbr.rel (%p749) target = $region36
      $region35: #{_lambda_.25} parent=27 // pred_region
        %v752 = vld [vmem:[#allocation2] sm:$0xff]
        %v753 = vld [vmem:[#allocation2 + $0x8] sm:$0xff]
        %v754 = vld [vmem:[#allocation2 + $0x10] sm:$0xff]
        %v755 = vld [vmem:[#allocation2 + $0x18] sm:$0xff]
        %v756 = vld [vmem:[#allocation2 + $0x20] sm:$0xff]
        %v757 = vld [vmem:[#allocation2 + $0x28] sm:$0xff]
        %v758 = vld [vmem:[#allocation2 + $0x30] sm:$0xff]
        %v759 = vld [vmem:[#allocation2 + $0x38] sm:$0xff]
        %v760 = vld [vmem:[#allocation2 + $0x40] sm:$0xff]
        %v761 = vld [vmem:[#allocation2 + $0x48] sm:$0xff]
        %v762 = vld [vmem:[#allocation2 + $0x50] sm:$0xff]
        %v763 = vld [vmem:[#allocation2 + $0x58] sm:$0xff]
        %v764 = vld [vmem:[#allocation2 + $0x60] sm:$0xff]
        %v765 = vld [vmem:[#allocation2 + $0x68] sm:$0xff]
        %v766 = vld [vmem:[#allocation2 + $0x70] sm:$0xff]
        %v767 = vld [vmem:[#allocation2 + $0x78] sm:$0xff]
        %v768 = vld [vmem:[#allocation2 + $0x80] sm:$0xff]
        %v769 = vld [vmem:[#allocation2 + $0x88] sm:$0xff]
        %v770 = vld [vmem:[#allocation2 + $0x90] sm:$0xff]
        %v771 = vld [vmem:[#allocation2 + $0x98] sm:$0xff]
        %v772 = vld [vmem:[#allocation2 + $0xa0] sm:$0xff]
        %v773 = vld [vmem:[#allocation2 + $0xa8] sm:$0xff]
        %v774 = vld [vmem:[#allocation2 + $0xb0] sm:$0xff]
        %v775 = vld [vmem:[#allocation2 + $0xb8] sm:$0xff]
        %v776 = vld [vmem:[#allocation2 + $0xc0] sm:$0xff]
        %v777 = vld [vmem:[#allocation2 + $0xc8] sm:$0xff]
        %v778 = vld [vmem:[#allocation2 + $0xd0] sm:$0xff]
        %v779 = vld [vmem:[#allocation2 + $0xd8] sm:$0xff]
        %v780 = vld [vmem:[#allocation2 + $0xe0] sm:$0xff]
        %v781 = vld [vmem:[#allocation2 + $0xe8] sm:$0xff]
        %v782 = vld [vmem:[#allocation2 + $0xf0] sm:$0xff]
        %v783 = vld [vmem:[#allocation2 + $0xf8] sm:$0xff]
        %v784 = vtanh.pop %v752
        %v785 = vtanh.pop %v753
        %v786 = vtanh.pop %v754
        %v787 = vtanh.pop %v755
        %v788 = vtanh.pop %v756
        %v789 = vtanh.pop %v757
        %v790 = vtanh.pop %v758
        %v791 = vtanh.pop %v759
        %v792 = vtanh.pop %v760
        %v793 = vtanh.pop %v761
        %v794 = vtanh.pop %v762
        %v795 = vtanh.pop %v763
        %v796 = vtanh.pop %v764
        %v797 = vtanh.pop %v765
        %v798 = vtanh.pop %v766
        %v799 = vtanh.pop %v767
        %v800 = vtanh.pop %v768
        %v801 = vtanh.pop %v769
        %v802 = vtanh.pop %v770
        %v803 = vtanh.pop %v771
        %v804 = vtanh.pop %v772
        %v805 = vtanh.pop %v773
        %v806 = vtanh.pop %v774
        %v807 = vtanh.pop %v775
        %v808 = vtanh.pop %v776
        %v809 = vtanh.pop %v777
        %v810 = vtanh.pop %v778
        %v811 = vtanh.pop %v779
        %v812 = vtanh.pop %v780
        %v813 = vtanh.pop %v781
        %v814 = vtanh.pop %v782
        %v815 = vtanh.pop %v783
        %816 = vst [vmem:[%s261] sm:$0xff] %v784
        %817 = vst [vmem:[%s261 + $0x8] sm:$0xff] %v785
        %818 = vst [vmem:[%s261 + $0x10] sm:$0xff] %v786
        %819 = vst [vmem:[%s261 + $0x18] sm:$0xff] %v787
        %820 = vst [vmem:[%s261 + $0x20] sm:$0xff] %v788
        %821 = vst [vmem:[%s261 + $0x28] sm:$0xff] %v789
        %822 = vst [vmem:[%s261 + $0x30] sm:$0xff] %v790
        %823 = vst [vmem:[%s261 + $0x38] sm:$0xff] %v791
        %824 = vst [vmem:[%s261 + $0x40] sm:$0xff] %v792
        %825 = vst [vmem:[%s261 + $0x48] sm:$0xff] %v793
        %826 = vst [vmem:[%s261 + $0x50] sm:$0xff] %v794
        %827 = vst [vmem:[%s261 + $0x58] sm:$0xff] %v795
        %828 = vst [vmem:[%s261 + $0x60] sm:$0xff] %v796
        %829 = vst [vmem:[%s261 + $0x68] sm:$0xff] %v797
        %830 = vst [vmem:[%s261 + $0x70] sm:$0xff] %v798
        %831 = vst [vmem:[%s261 + $0x78] sm:$0xff] %v799
        %832 = vst [vmem:[%s261 + $0x80] sm:$0xff] %v800
        %833 = vst [vmem:[%s261 + $0x88] sm:$0xff] %v801
        %834 = vst [vmem:[%s261 + $0x90] sm:$0xff] %v802
        %835 = vst [vmem:[%s261 + $0x98] sm:$0xff] %v803
        %836 = vst [vmem:[%s261 + $0xa0] sm:$0xff] %v804
        %837 = vst [vmem:[%s261 + $0xa8] sm:$0xff] %v805
        %838 = vst [vmem:[%s261 + $0xb0] sm:$0xff] %v806
        %839 = vst [vmem:[%s261 + $0xb8] sm:$0xff] %v807
        %840 = vst [vmem:[%s261 + $0xc0] sm:$0xff] %v808
        %841 = vst [vmem:[%s261 + $0xc8] sm:$0xff] %v809
        %842 = vst [vmem:[%s261 + $0xd0] sm:$0xff] %v810
        %843 = vst [vmem:[%s261 + $0xd8] sm:$0xff] %v811
        %844 = vst [vmem:[%s261 + $0xe0] sm:$0xff] %v812
        %845 = vst [vmem:[%s261 + $0xe8] sm:$0xff] %v813
        %846 = vst [vmem:[%s261 + $0xf0] sm:$0xff] %v814
        %847 = vst [vmem:[%s261 + $0xf8] sm:$0xff] %v815
      $region36: #{_lambda_.25} parent=27 // pred_fallthru
        _
      %s848 = smul.u32 32, %s20
      %p849 = scmp.lt.s32.totalorder %s19, 3
      %s850 = scalar_select %p849, %s19, 3
      %p851 = scmp.lt.s32.totalorder %s848, 255
      %s852 = scalar_select %p851, %s848, 255
      %p853 = scmp.lt.s32.totalorder %s21, 0
      %s854 = scalar_select %p853, %s21, 0
      %s855 = sadd.s32 %s854, %s852
      %s856 = smul.addr %s850, 256
      %s857 = sadd.s32 %s855, %s856
      %s858 = smul.addr %s857, 8
      %s859 = scalar_lea.vmem %s2, %s858
      // Predicated region
      $region37: #{_lambda_.25} parent=27 // pred_check
        %p860 = pneg %p121
      $region38: #{_lambda_.25} parent=27 // pred_check_branch
        %862 = sbr.rel (%p860) target = $region40
      $region39: #{_lambda_.25} parent=27 // pred_region
        %s863 = smul.u32 32, %s20
      $region40: #{_lambda_.25} parent=27 // pred_fallthru
        _
    $region28: #{_lambda_.25} parent=5 // pred_fallthru
      _
    %p864 = scmp.le.s32.totalorder 2, %s8
    // Predicated region
    $region41: #{_lambda_.25} parent=5 // pred_check
      %p865 = pneg %p864
    $region42: #{_lambda_.25} parent=5 // pred_check_branch
      %867 = sbr.rel (%p865) target = $region44
    $region43: #{_lambda_.25} parent=5 // pred_region
      %s868 = ssub.s32 %s8, 2
      // Predicated region
      $region45: #{_lambda_.25} parent=43 // pred_check
        %p869 = pneg %p127
      $region46: #{_lambda_.25} parent=43 // pred_check_branch
        %871 = sbr.rel (%p869) target = $region48
      $region47: #{_lambda_.25} parent=43 // pred_region
        %s872 = smul.u32 32, %s24
        %p873 = scmp.lt.s32.totalorder %s23, 3
        %s874 = scalar_select %p873, %s23, 3
        %p875 = scmp.lt.s32.totalorder %s872, 255
        %s876 = scalar_select %p875, %s872, 255
        %p877 = scmp.lt.s32.totalorder %s25, 0
        %s878 = scalar_select %p877, %s25, 0
        %s879 = sadd.s32 %s878, %s876
        %s880 = smul.addr %s874, 256
        %s881 = sadd.s32 %s879, %s880
        %s882 = smul.addr %s881, 8
        %s883 = scalar_lea.vmem %s2, %s882
      $region48: #{_lambda_.25} parent=43 // pred_fallthru
        _
    $region44: #{_lambda_.25} parent=5 // pred_fallthru
      _
  $region6: #{_lambda_.25} parent=0 // loop_footer
    %s12 = sadd.s32 1, %s8
  $region7: #{_lambda_.25} parent=0 // loop_footer_branch
    %7 = sbr.rel target = $region3
  $region8: #{_lambda_.25} parent=0 // loop_exit
    _

</llo_original>
